<compile_context>
chip_gen: v5e
topology: v5e:2x2
jax: 0.10.0
libtpu: 0.0.40
codegen_flags: <defaults>
</compile_context>

<pallas_src>
import functools
import math

import jax
import jax.numpy as jnp
from jax.experimental import pallas as pl
from jax.experimental.pallas import tpu as pltpu


# ----------------------------------------------------------------------------
# Pallas kernel 1: matmul + bias + relu + training-mode BatchNorm (over rows)
# ----------------------------------------------------------------------------
def _mm_relu_bn_kernel(a_ref, w_ref, b_ref, o_ref, *, bn_eps):
    x = jnp.dot(a_ref[...], w_ref[...], preferred_element_type=jnp.float32)
    x = jax.nn.relu(x + b_ref[...])
    mu = jnp.mean(x, axis=0, keepdims=True)
    var = jnp.mean((x - mu) ** 2, axis=0, keepdims=True)
    o_ref[...] = (x - mu) * jax.lax.rsqrt(var + bn_eps)


def mm_relu_bn(a, w, b, bn_eps=1e-5):
    """BN(relu(a @ w + b)) with batch statistics, fused in one Pallas kernel."""
    a = a.astype(jnp.float32)
    w = w.astype(jnp.float32)
    M, _ = a.shape
    Nc = w.shape[1]
    b2 = b.astype(jnp.float32).reshape(1, Nc)
    return pl.pallas_call(
        functools.partial(_mm_relu_bn_kernel, bn_eps=bn_eps),
        out_shape=jax.ShapeDtypeStruct((M, Nc), jnp.float32),
    )(a, w, b2)


# ----------------------------------------------------------------------------
# Pallas kernel 2: fc(+relu+bn3) -> pairwise fc2/fc1 logits -> gumbel-softmax
#                  mean over samples -> row normalization (D^-1 @ S)
# Returns support^T (exactly the orientation the fused DCRNN kernel consumes).
# ----------------------------------------------------------------------------
def support_pallas(x_flat, fc_w, fc_b, fc2_w, fc2_b, fc1_w, fc1_b, u_t,
                   *, temperature=0.1, eps=1e-10, bn_eps=1e-5):
    n, _ = x_flat.shape
    H = fc_w.shape[1]
    S = u_t.shape[0]
    fc2_wa = fc2_w[:H, :]          # "sender" half (h[i] part of the concat)
    fc2_wb = fc2_w[H:, :]          # "receiver" half (h[j] part of the concat)

    def kernel(x_ref, fcw_ref, fcb_ref, wa_ref, wb_ref, b2_ref, w1_ref, b1_ref,
               u_ref, o_ref):
        h = jnp.dot(x_ref[...], fcw_ref[...],
                    preferred_element_type=jnp.float32) + fcb_ref[...]
        h = jax.nn.relu(h)
        mu = jnp.mean(h, axis=0, keepdims=True)
        var = jnp.mean((h - mu) ** 2, axis=0, keepdims=True)
        h = (h - mu) * jax.lax.rsqrt(var + bn_eps)                    # [n, H]

        # logits[i, j] = fc1(relu(h[i] @ Wa + h[j] @ Wb + b2))
        # Built as logits^T, one lane-column at a time (column i == row i).
        P = jnp.dot(h, wa_ref[...], preferred_element_type=jnp.float32)
        Q = jnp.dot(h, wb_ref[...],
                    preferred_element_type=jnp.float32) + b2_ref[...]
        lane = jax.lax.broadcasted_iota(jnp.int32, (n, n), 1)
        logits_t = jnp.zeros((n, n), jnp.float32)
        for i in range(n):
            pre = jax.nn.relu(P[i:i + 1, :] + Q)                      # [n, H]
            col = jnp.dot(pre, w1_ref[...],
                          preferred_element_type=jnp.float32) + b1_ref[...]
            logits_t = jnp.where(lane == i, col, logits_t)

        # gumbel-softmax over original dim -1 (the sublane axis of logits^T),
        # averaged over samples, then support = D^-1 @ S  (column-wise here).
        acc = jnp.zeros((n, n), jnp.float32)
        for s in range(S):
            g = -jnp.log(-jnp.log(u_ref[s] + eps) + eps)
            z = (logits_t + g) / temperature
            z = z - jnp.max(z, axis=0, keepdims=True)
            e = jnp.exp(z)
            acc = acc + e / jnp.sum(e, axis=0, keepdims=True)
        sup_t = acc * (1.0 / S)
        d = jnp.sum(sup_t, axis=0, keepdims=True)     # row sums of support
        o_ref[...] = sup_t / d

    return pl.pallas_call(
        kernel,
        out_shape=jax.ShapeDtypeStruct((n, n), jnp.float32),
    )(x_flat.astype(jnp.float32), fc_w.astype(jnp.float32),
      fc_b.astype(jnp.float32).reshape(1, -1),
      fc2_wa.astype(jnp.float32), fc2_wb.astype(jnp.float32),
      fc2_b.astype(jnp.float32).reshape(1, -1),
      fc1_w.astype(jnp.float32), fc1_b.astype(jnp.float32).reshape(1, -1),
      u_t.astype(jnp.float32))


# ----------------------------------------------------------------------------
# Pallas kernel 3: the FULL DCRNN (encoder + decoder + output projection)
# ----------------------------------------------------------------------------
def dcrnn_fused_pallas(support_t, inputs, enc_params, dec_params, out_w, out_b,
                       *, hidden, k_hop, n_pred, output_dim):
    """Runs encoder (n_layers x T) + decoder (n_pred x n_layers + projection)
    inside one pallas_call. Activations are transposed ([C, N]) in-kernel."""
    B, T, N, input_dim = inputs.shape
    n_layers = len(enc_params)

    cells = list(enc_params) + list(dec_params)
    cell_in_sizes = ([input_dim] + [hidden] * (n_layers - 1)
                     + [output_dim] + [hidden] * (n_layers - 1))

    # Transposed weights (W^T: [Cout, (k_hop+1)*Cin]) and column biases.
    flat_w = []
    for p in cells:
        flat_w += [p["ru_W"].T, p["ru_b"].reshape(-1, 1),
                   p["c_W"].T, p["c_b"].reshape(-1, 1)]
    out_w_t = out_w.T                       # [output_dim, hidden]
    out_b_c = out_b.reshape(-1, 1)          # [output_dim, 1]
    inputs_t = jnp.transpose(inputs, (0, 1, 3, 2)).astype(jnp.float32)  # [B,T,Cin,N]

    n_cell_args = len(flat_w)
    max_rows = (k_hop + 1) * max(c + hidden for c in cell_in_sizes)

    def kernel(*refs):
        sup_ref = refs[0]
        x_ref = refs[1]
        w_refs = refs[2:2 + n_cell_args]
        ow_ref = refs[2 + n_cell_args]
        ob_ref = refs[3 + n_cell_args]
        o_ref = refs[-2]
        xcat_ref = refs[-1]                  # VMEM scratch [max_rows, N]

        A_t = sup_ref[...]                   # == A^T  (support transposed)

        def gconv_t(parts, w_ref, b_ref):
            """Dense k-hop diffusion conv on transposed activations.
            parts: list of ([rows, N] value, rows) stacked to X^T; the hop
            pyramid [X; AX; ...; A^kX]^T is built in VMEM scratch, then a
            SINGLE MXU dot contracts it with the full (transposed) weight."""
            off = 0
            for v, r in parts:
                xcat_ref[off:off + r, :] = v
                off += r
            hop_rows = off
            for k in range(k_hop):
                prev = xcat_ref[k * hop_rows:(k + 1) * hop_rows, :]
                xcat_ref[(k + 1) * hop_rows:(k + 2) * hop_rows, :] = jnp.dot(
                    prev, A_t, preferred_element_type=jnp.float32)
            xc = xcat_ref[0:(k_hop + 1) * hop_rows, :]
            return jnp.dot(w_ref[...], xc,
                           preferred_element_type=jnp.float32) + b_ref[...]

        def cell(x_t, st_t, idx, cin):
            rw, rb, cw, cb = w_refs[4 * idx:4 * idx + 4]
            ru = jax.nn.sigmoid(gconv_t([(x_t, cin), (st_t, hidden)], rw, rb))
            r = ru[:hidden, :]
            u = ru[hidden:, :]
            c = jnp.tanh(gconv_t([(x_t, cin), (r * st_t, hidden)], cw, cb))
            return u * st_t + (1.0 - u) * c

        # ---- encoder (layer-major loop, matching DCRNNEncoder) ----
        xs = [x_ref[0, t] for t in range(T)]                 # each [Cin, N]
        states = []
        for l in range(n_layers):
            st = jnp.zeros((hidden, N), jnp.float32)
            for t in range(T):
                st = cell(xs[t], st, l, cell_in_sizes[l])
                xs[t] = st
            states.append(st)

        # ---- decoder (with fused output projection) ----
        x = x_ref[0, T - 1][:output_dim, :]                  # [output_dim, N]
        for p_step in range(n_pred):
            for l in range(n_layers):
                idx = n_layers + l
                states[l] = cell(x, states[l], idx, cell_in_sizes[idx])
                x = states[l]
            y = jnp.dot(ow_ref[...], x,
                        preferred_element_type=jnp.float32) + ob_ref[...]
            o_ref[0, p_step] = y
            x = y

    in_arrays = ([support_t.astype(jnp.float32), inputs_t]
                 + [w.astype(jnp.float32) for w in flat_w]
                 + [out_w_t.astype(jnp.float32), out_b_c.astype(jnp.float32)])

    in_specs = [pl.BlockSpec(support_t.shape, lambda b: (0, 0)),
                pl.BlockSpec((1, T, input_dim, N), lambda b: (b, 0, 0, 0))]
    for arr in in_arrays[2:]:
        nd = arr.ndim
        in_specs.append(pl.BlockSpec(arr.shape, lambda b, _nd=nd: (0,) * _nd))
    out_specs = pl.BlockSpec((1, n_pred, output_dim, N), lambda b: (b, 0, 0, 0))

    # Advisory cost estimate so XLA can schedule glue around this custom call.
    def _gconv_flops(cin, cout):
        return 2 * N * N * cin * k_hop + 2 * N * (k_hop + 1) * cin * cout

    def _cell_flops(cin):
        return (_gconv_flops(cin + hidden, 2 * hidden)
                + _gconv_flops(cin + hidden, hidden))

    flops = B * (sum(T * _cell_flops(c) for c in cell_in_sizes[:n_layers])
                 + sum(n_pred * _cell_flops(c) for c in cell_in_sizes[n_layers:])
                 + n_pred * 2 * N * hidden * output_dim)
    trans = B * (T + n_pred) * n_layers * N * 3 * hidden
    bytes_accessed = (sum(int(math.prod(a.shape)) * 4 for a in in_arrays)
                      + B * n_pred * N * output_dim * 4)

    out_t = pl.pallas_call(
        kernel,
        out_shape=jax.ShapeDtypeStruct((B, n_pred, output_dim, N), jnp.float32),
        grid=(B,),
        in_specs=in_specs,
        out_specs=out_specs,
        scratch_shapes=[pltpu.VMEM((max_rows, N), jnp.float32)],
        compiler_params=pltpu.CompilerParams(dimension_semantics=("parallel",)),
        cost_estimate=pl.CostEstimate(flops=flops, transcendentals=trans,
                                      bytes_accessed=bytes_accessed),
    )(*in_arrays)
    return jnp.transpose(out_t, (0, 1, 3, 2))                # [B, n_pred, N, out]


# ----------------------------------------------------------------------------
# Node-feature encoder (im2col / flatten glue in plain JAX, compute in Pallas)
# ----------------------------------------------------------------------------
def nf_encode_forward(p, node_fea, key, sample_num):
    """Returns the TRANSPOSED learned support (A^T)."""
    T, n = node_fea.shape
    K = p["conv1_w"].shape[-1]
    x = node_fea.astype(jnp.float32).T                                  # [n, T]

    # conv1 (+relu+bn1)
    L1 = T - K + 1
    cols1 = jnp.stack([x[:, k:k + L1] for k in range(K)], axis=-1)      # [n,L1,K]
    cols1 = cols1.reshape(n * L1, K)
    C1 = p["conv1_w"].shape[0]
    w1 = p["conv1_w"].reshape(C1, K).T                                  # [K, C1]
    x1 = mm_relu_bn(cols1, w1, p["conv1_b"])                            # [n*L1, C1]

    # conv2 (+relu+bn2)
    K2 = p["conv2_w"].shape[-1]
    L2 = L1 - K2 + 1
    x1r = x1.reshape(n, L1, C1)
    cols2 = jnp.stack([x1r[:, k:k + L2, :] for k in range(K2)], axis=-1)  # [n,L2,C1,K2]
    cols2 = cols2.reshape(n * L2, C1 * K2)
    C2 = p["conv2_w"].shape[0]
    w2 = p["conv2_w"].reshape(C2, C1 * K2).T                            # [C1*K2, C2]
    x2 = mm_relu_bn(cols2, w2, p["conv2_b"])                            # [n*L2, C2]

    # flatten exactly like torch `x.view(n, -1)` on a [n, C2, L2] tensor
    x_flat = x2.reshape(n, L2, C2).transpose(0, 2, 1).reshape(n, C2 * L2)

    # gumbel uniform noise (transposed so the kernel builds logits^T directly)
    U = jax.random.uniform(key, (sample_num, n, n), dtype=jnp.float32)
    u_t = jnp.transpose(U, (0, 2, 1))

    return support_pallas(x_flat, p["fc_w"], p["fc_b"], p["fc2_w"], p["fc2_b"],
                          p["fc1_w"], p["fc1_b"], u_t)


# ----------------------------------------------------------------------------
# Full forward
# ----------------------------------------------------------------------------
def egc_stage1_forward(params, inputs, node_fea, gumbel_key, cfg, batch_seen=0):
    support_t = nf_encode_forward(params["nf"], node_fea, gumbel_key,
                                  cfg["sample_num_st"])
    # sampling threshold (unused here since targets=None), kept for fidelity
    _ = cfg["cl_decay_steps"] / (cfg["cl_decay_steps"]
                                 + math.exp(batch_seen / cfg["cl_decay_steps"]))
    return dcrnn_fused_pallas(
        support_t, inputs, params["encoder"], params["decoder"],
        params["dec_out_w"], params["dec_out_b"],
        hidden=cfg["hidden_size"], k_hop=cfg["k_hop"],
        n_pred=cfg["n_pred"], output_dim=cfg["output_dim"])


# ----------------------------------------------------------------------------
# Deterministic parameter initialization
# ----------------------------------------------------------------------------
def _lin(key, fan_in, fan_out, scale=0.1):
    kw, kb = jax.random.split(key)
    W = jax.random.normal(kw, (fan_in, fan_out), jnp.float32) * scale
    b = jax.random.normal(kb, (fan_out,), jnp.float32) * scale
    return W, b


def init_cell(key, in_size, hidden, k_hop):
    k1, k2 = jax.random.split(key)
    nmat = k_hop + 1                                   # n_supports = 1
    ru_W, ru_b = _lin(k1, nmat * (in_size + hidden), 2 * hidden)
    c_W, c_b = _lin(k2, nmat * (in_size + hidden), hidden)
    return dict(ru_W=ru_W, ru_b=ru_b, c_W=c_W, c_b=c_b)


def init_params(key, cfg):
    ks = jax.random.split(key, 16)
    H_st = cfg["hidden_size_st"]
    nf = {}
    nf["conv1_w"] = jax.random.normal(ks[0], (8, 1, 10), jnp.float32) * 0.1
    nf["conv1_b"] = jax.random.normal(ks[1], (8,), jnp.float32) * 0.1
    nf["conv2_w"] = jax.random.normal(ks[2], (16, 8, 10), jnp.float32) * 0.1
    nf["conv2_b"] = jax.random.normal(ks[3], (16,), jnp.float32) * 0.1
    nf["fc_w"], nf["fc_b"] = _lin(ks[4], cfg["fc_dim"], H_st)
    nf["fc2_w"], nf["fc2_b"] = _lin(ks[5], 2 * H_st, H_st)
    nf["fc1_w"], nf["fc1_b"] = _lin(ks[6], H_st, 1)

    enc = [init_cell(ks[7], cfg["input_dim"], cfg["hidden_size"], cfg["k_hop"])]
    for i in range(1, cfg["n_rnn_layers"]):
        enc.append(init_cell(ks[7 + i], cfg["hidden_size"], cfg["hidden_size"],
                             cfg["k_hop"]))
    dec = [init_cell(ks[10], cfg["output_dim"], cfg["hidden_size"], cfg["k_hop"])]
    for i in range(1, cfg["n_rnn_layers"]):
        dec.append(init_cell(ks[10 + i], cfg["hidden_size"], cfg["hidden_size"],
                             cfg["k_hop"]))
    out_w, out_b = _lin(ks[13], cfg["hidden_size"], cfg["output_dim"])
    return dict(nf=nf, encoder=enc, decoder=dec, dec_out_w=out_w, dec_out_b=out_b)


# ----------------------------------------------------------------------------
if __name__ == "__main__":
    cfg = dict(
        n_pred=3,
        hidden_size=8,
        num_nodes=6,
        hidden_size_st=8,
        sample_num_st=3,
        fc_dim=16 * (26 - 18),     # node_fea T=26 -> after two k=10 convs: 16*8
        k_hop=2,
        n_rnn_layers=2,
        input_dim=2,
        output_dim=1,
        cl_decay_steps=2000,
    )
    B, T_hist, N, T_fea = 2, 4, cfg["num_nodes"], 26

    key = jax.random.PRNGKey(0)
    k_param, k_in, k_nf, k_gumbel = jax.random.split(key, 4)

    params = init_params(k_param, cfg)
    inputs = jax.random.normal(k_in, (B, T_hist, N, cfg["input_dim"]), jnp.float32)
    node_fea = jax.random.normal(k_nf, (T_fea, N), jnp.float32)

    fwd = jax.jit(functools.partial(egc_stage1_forward, cfg=cfg, batch_seen=0))
    out = fwd(params, inputs, node_fea, k_gumbel)
    out = jax.block_until_ready(out)

    assert out.shape == (B, cfg["n_pred"], N, cfg["output_dim"]), out.shape
    assert bool(jnp.all(jnp.isfinite(out)))
    print("KERNEL_OK")
</pallas_src>

<mosaic_0001>
module attributes {stable_mosaic.version = 11 : i64} {
  func.func @_mm_relu_bn_kernel(%arg0: memref<102x10xf32, #tpu.memory_space<vmem>>, %arg1: memref<10x8xf32, #tpu.memory_space<vmem>>, %arg2: memref<1x8xf32, #tpu.memory_space<vmem>>, %arg3: memref<102x8xf32, #tpu.memory_space<vmem>>) attributes {dimension_semantics = [], scalar_prefetch = 0 : i64, scratch_operands = 0 : i64, tpu.core_type = #tpu.core_type<tc>} {
    %c0 = arith.constant 0 : index
    %c0_0 = arith.constant 0 : index
    %0 = vector.load %arg0[%c0, %c0_0] : memref<102x10xf32, #tpu.memory_space<vmem>>, vector<102x10xf32>
    %c0_1 = arith.constant 0 : index
    %c0_2 = arith.constant 0 : index
    %1 = vector.load %arg1[%c0_1, %c0_2] : memref<10x8xf32, #tpu.memory_space<vmem>>, vector<10x8xf32>
    %cst = arith.constant dense<0.000000e+00> : vector<102x8xf32>
    %2 = tpu.matmul %0, %1, %cst {dimension_numbers = #tpu.dot_dimension_numbers<[1], [0], [0], [1], [0, 0, 1, 1], [], []>} : vector<102x10xf32>, vector<10x8xf32>, vector<102x8xf32> -> vector<102x8xf32>
    %c0_3 = arith.constant 0 : index
    %c0_4 = arith.constant 0 : index
    %3 = vector.load %arg2[%c0_3, %c0_4] : memref<1x8xf32, #tpu.memory_space<vmem>>, vector<1x8xf32>
    %4 = vector.broadcast %3 : vector<1x8xf32> to vector<102x8xf32>
    %5 = arith.addf %2, %4 : vector<102x8xf32>
    %cst_5 = arith.constant 0.000000e+00 : f32
    %6 = vector.broadcast %cst_5 : f32 to vector<102x8xf32>
    %7 = arith.maximumf %5, %6 : vector<102x8xf32>
    %cst_6 = arith.constant dense<0.000000e+00> : vector<8xf32>
    %8 = vector.multi_reduction <add>, %7, %cst_6 [0] : vector<102x8xf32> to vector<8xf32>
    %9 = vector.shape_cast %8 : vector<8xf32> to vector<1x8xf32>
    %cst_7 = arith.constant 1.020000e+02 : f32
    %10 = vector.broadcast %cst_7 : f32 to vector<1x8xf32>
    %11 = arith.divf %9, %10 : vector<1x8xf32>
    %12 = vector.broadcast %11 : vector<1x8xf32> to vector<102x8xf32>
    %13 = arith.subf %7, %12 : vector<102x8xf32>
    %14 = arith.mulf %13, %13 : vector<102x8xf32>
    %cst_8 = arith.constant dense<0.000000e+00> : vector<8xf32>
    %15 = vector.multi_reduction <add>, %14, %cst_8 [0] : vector<102x8xf32> to vector<8xf32>
    %16 = vector.shape_cast %15 : vector<8xf32> to vector<1x8xf32>
    %cst_9 = arith.constant 1.020000e+02 : f32
    %17 = vector.broadcast %cst_9 : f32 to vector<1x8xf32>
    %18 = arith.divf %16, %17 : vector<1x8xf32>
    %19 = vector.broadcast %11 : vector<1x8xf32> to vector<102x8xf32>
    %20 = arith.subf %7, %19 : vector<102x8xf32>
    %cst_10 = arith.constant 9.99999974E-6 : f32
    %21 = vector.broadcast %cst_10 : f32 to vector<1x8xf32>
    %22 = arith.addf %18, %21 : vector<1x8xf32>
    %23 = math.rsqrt %22 : vector<1x8xf32>
    %24 = vector.broadcast %23 : vector<1x8xf32> to vector<102x8xf32>
    %25 = arith.mulf %20, %24 : vector<102x8xf32>
    %c0_11 = arith.constant 0 : index
    %c0_12 = arith.constant 0 : index
    %26 = vector.load %arg3[%c0_11, %c0_12] : memref<102x8xf32, #tpu.memory_space<vmem>>, vector<102x8xf32>
    tpu.vector_store %arg3[%c0_11, %c0_12], %25 {strides = array<i32>} : memref<102x8xf32, #tpu.memory_space<vmem>>, vector<102x8xf32>,
    return
  }
}

module attributes {stable_mosaic.version = 11 : i64} {
  func.func @_mm_relu_bn_kernel(%arg0: memref<48x80xf32, #tpu.memory_space<vmem>>, %arg1: memref<80x16xf32, #tpu.memory_space<vmem>>, %arg2: memref<1x16xf32, #tpu.memory_space<vmem>>, %arg3: memref<48x16xf32, #tpu.memory_space<vmem>>) attributes {dimension_semantics = [], scalar_prefetch = 0 : i64, scratch_operands = 0 : i64, tpu.core_type = #tpu.core_type<tc>} {
    %c0 = arith.constant 0 : index
    %c0_0 = arith.constant 0 : index
    %0 = vector.load %arg0[%c0, %c0_0] : memref<48x80xf32, #tpu.memory_space<vmem>>, vector<48x80xf32>
    %c0_1 = arith.constant 0 : index
    %c0_2 = arith.constant 0 : index
    %1 = vector.load %arg1[%c0_1, %c0_2] : memref<80x16xf32, #tpu.memory_space<vmem>>, vector<80x16xf32>
    %cst = arith.constant dense<0.000000e+00> : vector<48x16xf32>
    %2 = tpu.matmul %0, %1, %cst {dimension_numbers = #tpu.dot_dimension_numbers<[1], [0], [0], [1], [0, 0, 1, 1], [], []>} : vector<48x80xf32>, vector<80x16xf32>, vector<48x16xf32> -> vector<48x16xf32>
    %c0_3 = arith.constant 0 : index
    %c0_4 = arith.constant 0 : index
    %3 = vector.load %arg2[%c0_3, %c0_4] : memref<1x16xf32, #tpu.memory_space<vmem>>, vector<1x16xf32>
    %4 = vector.broadcast %3 : vector<1x16xf32> to vector<48x16xf32>
    %5 = arith.addf %2, %4 : vector<48x16xf32>
    %cst_5 = arith.constant 0.000000e+00 : f32
    %6 = vector.broadcast %cst_5 : f32 to vector<48x16xf32>
    %7 = arith.maximumf %5, %6 : vector<48x16xf32>
    %cst_6 = arith.constant dense<0.000000e+00> : vector<16xf32>
    %8 = vector.multi_reduction <add>, %7, %cst_6 [0] : vector<48x16xf32> to vector<16xf32>
    %9 = vector.shape_cast %8 : vector<16xf32> to vector<1x16xf32>
    %cst_7 = arith.constant 4.800000e+01 : f32
    %10 = vector.broadcast %cst_7 : f32 to vector<1x16xf32>
    %11 = arith.divf %9, %10 : vector<1x16xf32>
    %12 = vector.broadcast %11 : vector<1x16xf32> to vector<48x16xf32>
    %13 = arith.subf %7, %12 : vector<48x16xf32>
    %14 = arith.mulf %13, %13 : vector<48x16xf32>
    %cst_8 = arith.constant dense<0.000000e+00> : vector<16xf32>
    %15 = vector.multi_reduction <add>, %14, %cst_8 [0] : vector<48x16xf32> to vector<16xf32>
    %16 = vector.shape_cast %15 : vector<16xf32> to vector<1x16xf32>
    %cst_9 = arith.constant 4.800000e+01 : f32
    %17 = vector.broadcast %cst_9 : f32 to vector<1x16xf32>
    %18 = arith.divf %16, %17 : vector<1x16xf32>
    %19 = vector.broadcast %11 : vector<1x16xf32> to vector<48x16xf32>
    %20 = arith.subf %7, %19 : vector<48x16xf32>
    %cst_10 = arith.constant 9.99999974E-6 : f32
    %21 = vector.broadcast %cst_10 : f32 to vector<1x16xf32>
    %22 = arith.addf %18, %21 : vector<1x16xf32>
    %23 = math.rsqrt %22 : vector<1x16xf32>
    %24 = vector.broadcast %23 : vector<1x16xf32> to vector<48x16xf32>
    %25 = arith.mulf %20, %24 : vector<48x16xf32>
    %c0_11 = arith.constant 0 : index
    %c0_12 = arith.constant 0 : index
    %26 = vector.load %arg3[%c0_11, %c0_12] : memref<48x16xf32, #tpu.memory_space<vmem>>, vector<48x16xf32>
    tpu.vector_store %arg3[%c0_11, %c0_12], %25 {strides = array<i32>} : memref<48x16xf32, #tpu.memory_space<vmem>>, vector<48x16xf32>,
    return
  }
}

module attributes {stable_mosaic.version = 11 : i64} {
  func.func @kernel(%arg0: memref<6x128xf32, #tpu.memory_space<vmem>>, %arg1: memref<128x8xf32, #tpu.memory_space<vmem>>, %arg2: memref<1x8xf32, #tpu.memory_space<vmem>>, %arg3: memref<8x8xf32, #tpu.memory_space<vmem>>, %arg4: memref<8x8xf32, #tpu.memory_space<vmem>>, %arg5: memref<1x8xf32, #tpu.memory_space<vmem>>, %arg6: memref<8x1xf32, #tpu.memory_space<vmem>>, %arg7: memref<1x1xf32, #tpu.memory_space<vmem>>, %arg8: memref<3x6x6xf32, #tpu.memory_space<vmem>>, %arg9: memref<6x6xf32, #tpu.memory_space<vmem>>) attributes {dimension_semantics = [], scalar_prefetch = 0 : i64, scratch_operands = 0 : i64, tpu.core_type = #tpu.core_type<tc>} {
    %c0 = arith.constant 0 : index
    %c0_0 = arith.constant 0 : index
    %0 = vector.load %arg0[%c0, %c0_0] : memref<6x128xf32, #tpu.memory_space<vmem>>, vector<6x128xf32>
    %c0_1 = arith.constant 0 : index
    %c0_2 = arith.constant 0 : index
    %1 = vector.load %arg1[%c0_1, %c0_2] : memref<128x8xf32, #tpu.memory_space<vmem>>, vector<128x8xf32>
    %cst = arith.constant dense<0.000000e+00> : vector<6x8xf32>
    %2 = tpu.matmul %0, %1, %cst {dimension_numbers = #tpu.dot_dimension_numbers<[1], [0], [0], [1], [0, 0, 1, 1], [], []>} : vector<6x128xf32>, vector<128x8xf32>, vector<6x8xf32> -> vector<6x8xf32>
    %c0_3 = arith.constant 0 : index
    %c0_4 = arith.constant 0 : index
    %3 = vector.load %arg2[%c0_3, %c0_4] : memref<1x8xf32, #tpu.memory_space<vmem>>, vector<1x8xf32>
    %4 = vector.broadcast %3 : vector<1x8xf32> to vector<6x8xf32>
    %5 = arith.addf %2, %4 : vector<6x8xf32>
    %cst_5 = arith.constant 0.000000e+00 : f32
    %6 = vector.broadcast %cst_5 : f32 to vector<6x8xf32>
    %7 = arith.maximumf %5, %6 : vector<6x8xf32>
    %cst_6 = arith.constant dense<0.000000e+00> : vector<8xf32>
    %8 = vector.multi_reduction <add>, %7, %cst_6 [0] : vector<6x8xf32> to vector<8xf32>
    %9 = vector.shape_cast %8 : vector<8xf32> to vector<1x8xf32>
    %cst_7 = arith.constant 6.000000e+00 : f32
    %10 = vector.broadcast %cst_7 : f32 to vector<1x8xf32>
    %11 = arith.divf %9, %10 : vector<1x8xf32>
    %12 = vector.broadcast %11 : vector<1x8xf32> to vector<6x8xf32>
    %13 = arith.subf %7, %12 : vector<6x8xf32>
    %14 = arith.mulf %13, %13 : vector<6x8xf32>
    %cst_8 = arith.constant dense<0.000000e+00> : vector<8xf32>
    %15 = vector.multi_reduction <add>, %14, %cst_8 [0] : vector<6x8xf32> to vector<8xf32>
    %16 = vector.shape_cast %15 : vector<8xf32> to vector<1x8xf32>
    %cst_9 = arith.constant 6.000000e+00 : f32
    %17 = vector.broadcast %cst_9 : f32 to vector<1x8xf32>
    %18 = arith.divf %16, %17 : vector<1x8xf32>
    %19 = vector.broadcast %11 : vector<1x8xf32> to vector<6x8xf32>
    %20 = arith.subf %7, %19 : vector<6x8xf32>
    %cst_10 = arith.constant 9.99999974E-6 : f32
    %21 = vector.broadcast %cst_10 : f32 to vector<1x8xf32>
    %22 = arith.addf %18, %21 : vector<1x8xf32>
    %23 = math.rsqrt %22 : vector<1x8xf32>
    %24 = vector.broadcast %23 : vector<1x8xf32> to vector<6x8xf32>
    %25 = arith.mulf %20, %24 : vector<6x8xf32>
    %c0_11 = arith.constant 0 : index
    %c0_12 = arith.constant 0 : index
    %26 = vector.load %arg3[%c0_11, %c0_12] : memref<8x8xf32, #tpu.memory_space<vmem>>, vector<8x8xf32>
    %cst_13 = arith.constant dense<0.000000e+00> : vector<6x8xf32>
    %27 = tpu.matmul %25, %26, %cst_13 {dimension_numbers = #tpu.dot_dimension_numbers<[1], [0], [0], [1], [0, 0, 1, 1], [], []>} : vector<6x8xf32>, vector<8x8xf32>, vector<6x8xf32> -> vector<6x8xf32>
    %c0_14 = arith.constant 0 : index
    %c0_15 = arith.constant 0 : index
    %28 = vector.load %arg4[%c0_14, %c0_15] : memref<8x8xf32, #tpu.memory_space<vmem>>, vector<8x8xf32>
    %cst_16 = arith.constant dense<0.000000e+00> : vector<6x8xf32>
    %29 = tpu.matmul %25, %28, %cst_16 {dimension_numbers = #tpu.dot_dimension_numbers<[1], [0], [0], [1], [0, 0, 1, 1], [], []>} : vector<6x8xf32>, vector<8x8xf32>, vector<6x8xf32> -> vector<6x8xf32>
    %c0_17 = arith.constant 0 : index
    %c0_18 = arith.constant 0 : index
    %30 = vector.load %arg5[%c0_17, %c0_18] : memref<1x8xf32, #tpu.memory_space<vmem>>, vector<1x8xf32>
    %31 = vector.broadcast %30 : vector<1x8xf32> to vector<6x8xf32>
    %32 = arith.addf %29, %31 : vector<6x8xf32>
    %33 = tpu.iota {dimensions = array<i32: 1>} : vector<6x6xi32>
    %cst_19 = arith.constant 0.000000e+00 : f32
    %34 = vector.broadcast %cst_19 : f32 to vector<6x6xf32>
    %35 = vector.extract_strided_slice %27 {offsets = [0, 0], sizes = [1, 8], strides = [1, 1]} : vector<6x8xf32> to vector<1x8xf32>
    %36 = vector.broadcast %35 : vector<1x8xf32> to vector<6x8xf32>
    %37 = arith.addf %36, %32 : vector<6x8xf32>
    %cst_20 = arith.constant 0.000000e+00 : f32
    %38 = vector.broadcast %cst_20 : f32 to vector<6x8xf32>
    %39 = arith.maximumf %37, %38 : vector<6x8xf32>
    %c0_21 = arith.constant 0 : index
    %c0_22 = arith.constant 0 : index
    %40 = vector.load %arg6[%c0_21, %c0_22] : memref<8x1xf32, #tpu.memory_space<vmem>>, vector<8x1xf32>
    %cst_23 = arith.constant dense<0.000000e+00> : vector<6x1xf32>
    %41 = tpu.matmul %39, %40, %cst_23 {dimension_numbers = #tpu.dot_dimension_numbers<[1], [0], [0], [1], [0, 0, 1, 1], [], []>} : vector<6x8xf32>, vector<8x1xf32>, vector<6x1xf32> -> vector<6x1xf32>
    %c0_24 = arith.constant 0 : index
    %c0_25 = arith.constant 0 : index
    %42 = vector.load %arg7[%c0_24, %c0_25] : memref<1x1xf32, #tpu.memory_space<vmem>>, vector<1x1xf32>
    %43 = vector.broadcast %42 : vector<1x1xf32> to vector<6x1xf32>
    %44 = arith.addf %41, %43 : vector<6x1xf32>
    %c0_i32 = arith.constant 0 : i32
    %45 = vector.broadcast %c0_i32 : i32 to vector<6x6xi32>
    %46 = arith.cmpi eq, %33, %45 : vector<6x6xi32>
    %47 = vector.shape_cast %44 : vector<6x1xf32> to vector<6x1xf32>
    %48 = vector.broadcast %47 : vector<6x1xf32> to vector<6x6xf32>
    %49 = arith.select %46, %48, %34 : vector<6x6xi1>, vector<6x6xf32>
    %50 = vector.extract_strided_slice %27 {offsets = [1, 0], sizes = [1, 8], strides = [1, 1]} : vector<6x8xf32> to vector<1x8xf32>
    %51 = vector.broadcast %50 : vector<1x8xf32> to vector<6x8xf32>
    %52 = arith.addf %51, %32 : vector<6x8xf32>
    %cst_26 = arith.constant 0.000000e+00 : f32
    %53 = vector.broadcast %cst_26 : f32 to vector<6x8xf32>
    %54 = arith.maximumf %52, %53 : vector<6x8xf32>
    %c0_27 = arith.constant 0 : index
    %c0_28 = arith.constant 0 : index
    %55 = vector.load %arg6[%c0_27, %c0_28] : memref<8x1xf32, #tpu.memory_space<vmem>>, vector<8x1xf32>
    %cst_29 = arith.constant dense<0.000000e+00> : vector<6x1xf32>
    %56 = tpu.matmul %54, %55, %cst_29 {dimension_numbers = #tpu.dot_dimension_numbers<[1], [0], [0], [1], [0, 0, 1, 1], [], []>} : vector<6x8xf32>, vector<8x1xf32>, vector<6x1xf32> -> vector<6x1xf32>
    %c0_30 = arith.constant 0 : index
    %c0_31 = arith.constant 0 : index
    %57 = vector.load %arg7[%c0_30, %c0_31] : memref<1x1xf32, #tpu.memory_space<vmem>>, vector<1x1xf32>
    %58 = vector.broadcast %57 : vector<1x1xf32> to vector<6x1xf32>
    %59 = arith.addf %56, %58 : vector<6x1xf32>
    %c1_i32 = arith.constant 1 : i32
    %60 = vector.broadcast %c1_i32 : i32 to vector<6x6xi32>
    %61 = arith.cmpi eq, %33, %60 : vector<6x6xi32>
    %62 = vector.shape_cast %59 : vector<6x1xf32> to vector<6x1xf32>
    %63 = vector.broadcast %62 : vector<6x1xf32> to vector<6x6xf32>
    %64 = arith.select %61, %63, %49 : vector<6x6xi1>, vector<6x6xf32>
    %65 = vector.extract_strided_slice %27 {offsets = [2, 0], sizes = [1, 8], strides = [1, 1]} : vector<6x8xf32> to vector<1x8xf32>
    %66 = vector.broadcast %65 : vector<1x8xf32> to vector<6x8xf32>
    %67 = arith.addf %66, %32 : vector<6x8xf32>
    %cst_32 = arith.constant 0.000000e+00 : f32
    %68 = vector.broadcast %cst_32 : f32 to vector<6x8xf32>
    %69 = arith.maximumf %67, %68 : vector<6x8xf32>
    %c0_33 = arith.constant 0 : index
    %c0_34 = arith.constant 0 : index
    %70 = vector.load %arg6[%c0_33, %c0_34] : memref<8x1xf32, #tpu.memory_space<vmem>>, vector<8x1xf32>
    %cst_35 = arith.constant dense<0.000000e+00> : vector<6x1xf32>
    %71 = tpu.matmul %69, %70, %cst_35 {dimension_numbers = #tpu.dot_dimension_numbers<[1], [0], [0], [1], [0, 0, 1, 1], [], []>} : vector<6x8xf32>, vector<8x1xf32>, vector<6x1xf32> -> vector<6x1xf32>
    %c0_36 = arith.constant 0 : index
    %c0_37 = arith.constant 0 : index
    %72 = vector.load %arg7[%c0_36, %c0_37] : memref<1x1xf32, #tpu.memory_space<vmem>>, vector<1x1xf32>
    %73 = vector.broadcast %72 : vector<1x1xf32> to vector<6x1xf32>
    %74 = arith.addf %71, %73 : vector<6x1xf32>
    %c2_i32 = arith.constant 2 : i32
    %75 = vector.broadcast %c2_i32 : i32 to vector<6x6xi32>
    %76 = arith.cmpi eq, %33, %75 : vector<6x6xi32>
    %77 = vector.shape_cast %74 : vector<6x1xf32> to vector<6x1xf32>
    %78 = vector.broadcast %77 : vector<6x1xf32> to vector<6x6xf32>
    %79 = arith.select %76, %78, %64 : vector<6x6xi1>, vector<6x6xf32>
    %80 = vector.extract_strided_slice %27 {offsets = [3, 0], sizes = [1, 8], strides = [1, 1]} : vector<6x8xf32> to vector<1x8xf32>
    %81 = vector.broadcast %80 : vector<1x8xf32> to vector<6x8xf32>
    %82 = arith.addf %81, %32 : vector<6x8xf32>
    %cst_38 = arith.constant 0.000000e+00 : f32
    %83 = vector.broadcast %cst_38 : f32 to vector<6x8xf32>
    %84 = arith.maximumf %82, %83 : vector<6x8xf32>
    %c0_39 = arith.constant 0 : index
    %c0_40 = arith.constant 0 : index
    %85 = vector.load %arg6[%c0_39, %c0_40] : memref<8x1xf32, #tpu.memory_space<vmem>>, vector<8x1xf32>
    %cst_41 = arith.constant dense<0.000000e+00> : vector<6x1xf32>
    %86 = tpu.matmul %84, %85, %cst_41 {dimension_numbers = #tpu.dot_dimension_numbers<[1], [0], [0], [1], [0, 0, 1, 1], [], []>} : vector<6x8xf32>, vector<8x1xf32>, vector<6x1xf32> -> vector<6x1xf32>
    %c0_42 = arith.constant 0 : index
    %c0_43 = arith.constant 0 : index
    %87 = vector.load %arg7[%c0_42, %c0_43] : memref<1x1xf32, #tpu.memory_space<vmem>>, vector<1x1xf32>
    %88 = vector.broadcast %87 : vector<1x1xf32> to vector<6x1xf32>
    %89 = arith.addf %86, %88 : vector<6x1xf32>
    %c3_i32 = arith.constant 3 : i32
    %90 = vector.broadcast %c3_i32 : i32 to vector<6x6xi32>
    %91 = arith.cmpi eq, %33, %90 : vector<6x6xi32>
    %92 = vector.shape_cast %89 : vector<6x1xf32> to vector<6x1xf32>
    %93 = vector.broadcast %92 : vector<6x1xf32> to vector<6x6xf32>
    %94 = arith.select %91, %93, %79 : vector<6x6xi1>, vector<6x6xf32>
    %95 = vector.extract_strided_slice %27 {offsets = [4, 0], sizes = [1, 8], strides = [1, 1]} : vector<6x8xf32> to vector<1x8xf32>
    %96 = vector.broadcast %95 : vector<1x8xf32> to vector<6x8xf32>
    %97 = arith.addf %96, %32 : vector<6x8xf32>
    %cst_44 = arith.constant 0.000000e+00 : f32
    %98 = vector.broadcast %cst_44 : f32 to vector<6x8xf32>
    %99 = arith.maximumf %97, %98 : vector<6x8xf32>
    %c0_45 = arith.constant 0 : index
    %c0_46 = arith.constant 0 : index
    %100 = vector.load %arg6[%c0_45, %c0_46] : memref<8x1xf32, #tpu.memory_space<vmem>>, vector<8x1xf32>
    %cst_47 = arith.constant dense<0.000000e+00> : vector<6x1xf32>
    %101 = tpu.matmul %99, %100, %cst_47 {dimension_numbers = #tpu.dot_dimension_numbers<[1], [0], [0], [1], [0, 0, 1, 1], [], []>} : vector<6x8xf32>, vector<8x1xf32>, vector<6x1xf32> -> vector<6x1xf32>
    %c0_48 = arith.constant 0 : index
    %c0_49 = arith.constant 0 : index
    %102 = vector.load %arg7[%c0_48, %c0_49] : memref<1x1xf32, #tpu.memory_space<vmem>>, vector<1x1xf32>
    %103 = vector.broadcast %102 : vector<1x1xf32> to vector<6x1xf32>
    %104 = arith.addf %101, %103 : vector<6x1xf32>
    %c4_i32 = arith.constant 4 : i32
    %105 = vector.broadcast %c4_i32 : i32 to vector<6x6xi32>
    %106 = arith.cmpi eq, %33, %105 : vector<6x6xi32>
    %107 = vector.shape_cast %104 : vector<6x1xf32> to vector<6x1xf32>
    %108 = vector.broadcast %107 : vector<6x1xf32> to vector<6x6xf32>
    %109 = arith.select %106, %108, %94 : vector<6x6xi1>, vector<6x6xf32>
    %110 = vector.extract_strided_slice %27 {offsets = [5, 0], sizes = [1, 8], strides = [1, 1]} : vector<6x8xf32> to vector<1x8xf32>
    %111 = vector.broadcast %110 : vector<1x8xf32> to vector<6x8xf32>
    %112 = arith.addf %111, %32 : vector<6x8xf32>
    %cst_50 = arith.constant 0.000000e+00 : f32
    %113 = vector.broadcast %cst_50 : f32 to vector<6x8xf32>
    %114 = arith.maximumf %112, %113 : vector<6x8xf32>
    %c0_51 = arith.constant 0 : index
    %c0_52 = arith.constant 0 : index
    %115 = vector.load %arg6[%c0_51, %c0_52] : memref<8x1xf32, #tpu.memory_space<vmem>>, vector<8x1xf32>
    %cst_53 = arith.constant dense<0.000000e+00> : vector<6x1xf32>
    %116 = tpu.matmul %114, %115, %cst_53 {dimension_numbers = #tpu.dot_dimension_numbers<[1], [0], [0], [1], [0, 0, 1, 1], [], []>} : vector<6x8xf32>, vector<8x1xf32>, vector<6x1xf32> -> vector<6x1xf32>
    %c0_54 = arith.constant 0 : index
    %c0_55 = arith.constant 0 : index
    %117 = vector.load %arg7[%c0_54, %c0_55] : memref<1x1xf32, #tpu.memory_space<vmem>>, vector<1x1xf32>
    %118 = vector.broadcast %117 : vector<1x1xf32> to vector<6x1xf32>
    %119 = arith.addf %116, %118 : vector<6x1xf32>
    %c5_i32 = arith.constant 5 : i32
    %120 = vector.broadcast %c5_i32 : i32 to vector<6x6xi32>
    %121 = arith.cmpi eq, %33, %120 : vector<6x6xi32>
    %122 = vector.shape_cast %119 : vector<6x1xf32> to vector<6x1xf32>
    %123 = vector.broadcast %122 : vector<6x1xf32> to vector<6x6xf32>
    %124 = arith.select %121, %123, %109 : vector<6x6xi1>, vector<6x6xf32>
    %cst_56 = arith.constant 0.000000e+00 : f32
    %125 = vector.broadcast %cst_56 : f32 to vector<6x6xf32>
    %c0_57 = arith.constant 0 : index
    %c0_58 = arith.constant 0 : index
    %c0_59 = arith.constant 0 : index
    %126 = vector.load %arg8[%c0_57, %c0_58, %c0_59] : memref<3x6x6xf32, #tpu.memory_space<vmem>>, vector<1x6x6xf32>
    %127 = vector.shape_cast %126 : vector<1x6x6xf32> to vector<6x6xf32>
    %cst_60 = arith.constant 1.000000e-10 : f32
    %128 = vector.broadcast %cst_60 : f32 to vector<6x6xf32>
    %129 = arith.addf %127, %128 : vector<6x6xf32>
    %130 = math.log %129 : vector<6x6xf32>
    %cst_61 = arith.constant 0.000000e+00 : f32
    %131 = vector.broadcast %cst_61 : f32 to vector<6x6xf32>
    %132 = arith.subf %131, %130 : vector<6x6xf32>
    %cst_62 = arith.constant 1.000000e-10 : f32
    %133 = vector.broadcast %cst_62 : f32 to vector<6x6xf32>
    %134 = arith.addf %132, %133 : vector<6x6xf32>
    %135 = math.log %134 : vector<6x6xf32>
    %cst_63 = arith.constant 0.000000e+00 : f32
    %136 = vector.broadcast %cst_63 : f32 to vector<6x6xf32>
    %137 = arith.subf %136, %135 : vector<6x6xf32>
    %138 = arith.addf %124, %137 : vector<6x6xf32>
    %cst_64 = arith.constant 1.000000e-01 : f32
    %139 = vector.broadcast %cst_64 : f32 to vector<6x6xf32>
    %140 = arith.divf %138, %139 : vector<6x6xf32>
    %cst_65 = arith.constant dense<0xFF800000> : vector<6xf32>
    %141 = vector.multi_reduction <maximumf>, %140, %cst_65 [0] : vector<6x6xf32> to vector<6xf32>
    %142 = vector.shape_cast %141 : vector<6xf32> to vector<1x6xf32>
    %143 = vector.broadcast %142 : vector<1x6xf32> to vector<6x6xf32>
    %144 = arith.subf %140, %143 : vector<6x6xf32>
    %145 = math.exp %144 : vector<6x6xf32>
    %cst_66 = arith.constant dense<0.000000e+00> : vector<6xf32>
    %146 = vector.multi_reduction <add>, %145, %cst_66 [0] : vector<6x6xf32> to vector<6xf32>
    %147 = vector.shape_cast %146 : vector<6xf32> to vector<1x6xf32>
    %148 = vector.broadcast %147 : vector<1x6xf32> to vector<6x6xf32>
    %149 = arith.divf %145, %148 : vector<6x6xf32>
    %150 = arith.addf %125, %149 : vector<6x6xf32>
    %c1 = arith.constant 1 : index
    %c0_67 = arith.constant 0 : index
    %c0_68 = arith.constant 0 : index
    %151 = vector.load %arg8[%c1, %c0_67, %c0_68] : memref<3x6x6xf32, #tpu.memory_space<vmem>>, vector<1x6x6xf32>
    %152 = vector.shape_cast %151 : vector<1x6x6xf32> to vector<6x6xf32>
    %cst_69 = arith.constant 1.000000e-10 : f32
    %153 = vector.broadcast %cst_69 : f32 to vector<6x6xf32>
    %154 = arith.addf %152, %153 : vector<6x6xf32>
    %155 = math.log %154 : vector<6x6xf32>
    %cst_70 = arith.constant 0.000000e+00 : f32
    %156 = vector.broadcast %cst_70 : f32 to vector<6x6xf32>
    %157 = arith.subf %156, %155 : vector<6x6xf32>
    %cst_71 = arith.constant 1.000000e-10 : f32
    %158 = vector.broadcast %cst_71 : f32 to vector<6x6xf32>
    %159 = arith.addf %157, %158 : vector<6x6xf32>
    %160 = math.log %159 : vector<6x6xf32>
    %cst_72 = arith.constant 0.000000e+00 : f32
    %161 = vector.broadcast %cst_72 : f32 to vector<6x6xf32>
    %162 = arith.subf %161, %160 : vector<6x6xf32>
    %163 = arith.addf %124, %162 : vector<6x6xf32>
    %cst_73 = arith.constant 1.000000e-01 : f32
    %164 = vector.broadcast %cst_73 : f32 to vector<6x6xf32>
    %165 = arith.divf %163, %164 : vector<6x6xf32>
    %cst_74 = arith.constant dense<0xFF800000> : vector<6xf32>
    %166 = vector.multi_reduction <maximumf>, %165, %cst_74 [0] : vector<6x6xf32> to vector<6xf32>
    %167 = vector.shape_cast %166 : vector<6xf32> to vector<1x6xf32>
    %168 = vector.broadcast %167 : vector<1x6xf32> to vector<6x6xf32>
    %169 = arith.subf %165, %168 : vector<6x6xf32>
    %170 = math.exp %169 : vector<6x6xf32>
    %cst_75 = arith.constant dense<0.000000e+00> : vector<6xf32>
    %171 = vector.multi_reduction <add>, %170, %cst_75 [0] : vector<6x6xf32> to vector<6xf32>
    %172 = vector.shape_cast %171 : vector<6xf32> to vector<1x6xf32>
    %173 = vector.broadcast %172 : vector<1x6xf32> to vector<6x6xf32>
    %174 = arith.divf %170, %173 : vector<6x6xf32>
    %175 = arith.addf %150, %174 : vector<6x6xf32>
    %c2 = arith.constant 2 : index
    %c0_76 = arith.constant 0 : index
    %c0_77 = arith.constant 0 : index
    %176 = vector.load %arg8[%c2, %c0_76, %c0_77] : memref<3x6x6xf32, #tpu.memory_space<vmem>>, vector<1x6x6xf32>
    %177 = vector.shape_cast %176 : vector<1x6x6xf32> to vector<6x6xf32>
    %cst_78 = arith.constant 1.000000e-10 : f32
    %178 = vector.broadcast %cst_78 : f32 to vector<6x6xf32>
    %179 = arith.addf %177, %178 : vector<6x6xf32>
    %180 = math.log %179 : vector<6x6xf32>
    %cst_79 = arith.constant 0.000000e+00 : f32
    %181 = vector.broadcast %cst_79 : f32 to vector<6x6xf32>
    %182 = arith.subf %181, %180 : vector<6x6xf32>
    %cst_80 = arith.constant 1.000000e-10 : f32
    %183 = vector.broadcast %cst_80 : f32 to vector<6x6xf32>
    %184 = arith.addf %182, %183 : vector<6x6xf32>
    %185 = math.log %184 : vector<6x6xf32>
    %cst_81 = arith.constant 0.000000e+00 : f32
    %186 = vector.broadcast %cst_81 : f32 to vector<6x6xf32>
    %187 = arith.subf %186, %185 : vector<6x6xf32>
    %188 = arith.addf %124, %187 : vector<6x6xf32>
    %cst_82 = arith.constant 1.000000e-01 : f32
    %189 = vector.broadcast %cst_82 : f32 to vector<6x6xf32>
    %190 = arith.divf %188, %189 : vector<6x6xf32>
    %cst_83 = arith.constant dense<0xFF800000> : vector<6xf32>
    %191 = vector.multi_reduction <maximumf>, %190, %cst_83 [0] : vector<6x6xf32> to vector<6xf32>
    %192 = vector.shape_cast %191 : vector<6xf32> to vector<1x6xf32>
    %193 = vector.broadcast %192 : vector<1x6xf32> to vector<6x6xf32>
    %194 = arith.subf %190, %193 : vector<6x6xf32>
    %195 = math.exp %194 : vector<6x6xf32>
    %cst_84 = arith.constant dense<0.000000e+00> : vector<6xf32>
    %196 = vector.multi_reduction <add>, %195, %cst_84 [0] : vector<6x6xf32> to vector<6xf32>
    %197 = vector.shape_cast %196 : vector<6xf32> to vector<1x6xf32>
    %198 = vector.broadcast %197 : vector<1x6xf32> to vector<6x6xf32>
    %199 = arith.divf %195, %198 : vector<6x6xf32>
    %200 = arith.addf %175, %199 : vector<6x6xf32>
    %cst_85 = arith.constant 0.333333343 : f32
    %201 = vector.broadcast %cst_85 : f32 to vector<6x6xf32>
    %202 = arith.mulf %200, %201 : vector<6x6xf32>
    %cst_86 = arith.constant dense<0.000000e+00> : vector<6xf32>
    %203 = vector.multi_reduction <add>, %202, %cst_86 [0] : vector<6x6xf32> to vector<6xf32>
    %204 = vector.shape_cast %203 : vector<6xf32> to vector<1x6xf32>
    %205 = vector.broadcast %204 : vector<1x6xf32> to vector<6x6xf32>
    %206 = arith.divf %202, %205 : vector<6x6xf32>
    %c0_87 = arith.constant 0 : index
    %c0_88 = arith.constant 0 : index
    %207 = vector.load %arg9[%c0_87, %c0_88] : memref<6x6xf32, #tpu.memory_space<vmem>>, vector<6x6xf32>
    tpu.vector_store %arg9[%c0_87, %c0_88], %206 {strides = array<i32>} : memref<6x6xf32, #tpu.memory_space<vmem>>, vector<6x6xf32>,
    return
  }
}

module attributes {stable_mosaic.version = 11 : i64} {
  func.func @kernel(%arg0: i32, %arg1: memref<6x6xf32, #tpu.memory_space<vmem>>, %arg2: memref<1x4x2x6xf32, #tpu.memory_space<vmem>>, %arg3: memref<16x30xf32, #tpu.memory_space<vmem>>, %arg4: memref<16x1xf32, #tpu.memory_space<vmem>>, %arg5: memref<8x30xf32, #tpu.memory_space<vmem>>, %arg6: memref<8x1xf32, #tpu.memory_space<vmem>>, %arg7: memref<16x48xf32, #tpu.memory_space<vmem>>, %arg8: memref<16x1xf32, #tpu.memory_space<vmem>>, %arg9: memref<8x48xf32, #tpu.memory_space<vmem>>, %arg10: memref<8x1xf32, #tpu.memory_space<vmem>>, %arg11: memref<16x27xf32, #tpu.memory_space<vmem>>, %arg12: memref<16x1xf32, #tpu.memory_space<vmem>>, %arg13: memref<8x27xf32, #tpu.memory_space<vmem>>, %arg14: memref<8x1xf32, #tpu.memory_space<vmem>>, %arg15: memref<16x48xf32, #tpu.memory_space<vmem>>, %arg16: memref<16x1xf32, #tpu.memory_space<vmem>>, %arg17: memref<8x48xf32, #tpu.memory_space<vmem>>, %arg18: memref<8x1xf32, #tpu.memory_space<vmem>>, %arg19: memref<1x8xf32, #tpu.memory_space<vmem>>, %arg20: memref<1x1xf32, #tpu.memory_space<vmem>>, %arg21: memref<1x3x1x6xf32, #tpu.memory_space<vmem>>, %arg22: memref<48x6xf32, #tpu.memory_space<vmem>>) attributes {dimension_semantics = [#tpu.dimension_semantics<parallel>], iteration_bounds = array<i64: 2>, scalar_prefetch = 0 : i64, scratch_operands = 1 : i64, tpu.core_type = #tpu.core_type<tc>, window_params = [{pipeline_mode = #tpu.pipeline_mode<synchronous>, transform_indices = @transform_0, window_bounds = array<i64: 6, 6>}, {transform_indices = @transform_1, window_bounds = array<i64: 1, 4, 2, 6>}, {pipeline_mode = #tpu.pipeline_mode<synchronous>, transform_indices = @transform_2, window_bounds = array<i64: 16, 30>}, {pipeline_mode = #tpu.pipeline_mode<synchronous>, transform_indices = @transform_3, window_bounds = array<i64: 16, 1>}, {pipeline_mode = #tpu.pipeline_mode<synchronous>, transform_indices = @transform_4, window_bounds = array<i64: 8, 30>}, {pipeline_mode = #tpu.pipeline_mode<synchronous>, transform_indices = @transform_5, window_bounds = array<i64: 8, 1>}, {pipeline_mode = #tpu.pipeline_mode<synchronous>, transform_indices = @transform_6, window_bounds = array<i64: 16, 48>}, {pipeline_mode = #tpu.pipeline_mode<synchronous>, transform_indices = @transform_7, window_bounds = array<i64: 16, 1>}, {pipeline_mode = #tpu.pipeline_mode<synchronous>, transform_indices = @transform_8, window_bounds = array<i64: 8, 48>}, {pipeline_mode = #tpu.pipeline_mode<synchronous>, transform_indices = @transform_9, window_bounds = array<i64: 8, 1>}, {pipeline_mode = #tpu.pipeline_mode<synchronous>, transform_indices = @transform_10, window_bounds = array<i64: 16, 27>}, {pipeline_mode = #tpu.pipeline_mode<synchronous>, transform_indices = @transform_11, window_bounds = array<i64: 16, 1>}, {pipeline_mode = #tpu.pipeline_mode<synchronous>, transform_indices = @transform_12, window_bounds = array<i64: 8, 27>}, {pipeline_mode = #tpu.pipeline_mode<synchronous>, transform_indices = @transform_13, window_bounds = array<i64: 8, 1>}, {pipeline_mode = #tpu.pipeline_mode<synchronous>, transform_indices = @transform_14, window_bounds = array<i64: 16, 48>}, {pipeline_mode = #tpu.pipeline_mode<synchronous>, transform_indices = @transform_15, window_bounds = array<i64: 16, 1>}, {pipeline_mode = #tpu.pipeline_mode<synchronous>, transform_indices = @transform_16, window_bounds = array<i64: 8, 48>}, {pipeline_mode = #tpu.pipeline_mode<synchronous>, transform_indices = @transform_17, window_bounds = array<i64: 8, 1>}, {pipeline_mode = #tpu.pipeline_mode<synchronous>, transform_indices = @transform_18, window_bounds = array<i64: 1, 8>}, {pipeline_mode = #tpu.pipeline_mode<synchronous>, transform_indices = @transform_19, window_bounds = array<i64: 1, 1>}, {transform_indices = @transform_20, window_bounds = array<i64: 1, 3, 1, 6>}]} {
    %c0 = arith.constant 0 : index
    %c0_0 = arith.constant 0 : index
    %0 = vector.load %arg1[%c0, %c0_0] : memref<6x6xf32, #tpu.memory_space<vmem>>, vector<6x6xf32>
    %c0_1 = arith.constant 0 : index
    %c0_2 = arith.constant 0 : index
    %c0_3 = arith.constant 0 : index
    %c0_4 = arith.constant 0 : index
    %1 = vector.load %arg2[%c0_1, %c0_2, %c0_3, %c0_4] : memref<1x4x2x6xf32, #tpu.memory_space<vmem>>, vector<1x1x2x6xf32>
    %2 = vector.shape_cast %1 : vector<1x1x2x6xf32> to vector<2x6xf32>
    %c0_5 = arith.constant 0 : index
    %c1 = arith.constant 1 : index
    %c0_6 = arith.constant 0 : index
    %c0_7 = arith.constant 0 : index
    %3 = vector.load %arg2[%c0_5, %c1, %c0_6, %c0_7] : memref<1x4x2x6xf32, #tpu.memory_space<vmem>>, vector<1x1x2x6xf32>
    %4 = vector.shape_cast %3 : vector<1x1x2x6xf32> to vector<2x6xf32>
    %c0_8 = arith.constant 0 : index
    %c2 = arith.constant 2 : index
    %c0_9 = arith.constant 0 : index
    %c0_10 = arith.constant 0 : index
    %5 = vector.load %arg2[%c0_8, %c2, %c0_9, %c0_10] : memref<1x4x2x6xf32, #tpu.memory_space<vmem>>, vector<1x1x2x6xf32>
    %6 = vector.shape_cast %5 : vector<1x1x2x6xf32> to vector<2x6xf32>
    %c0_11 = arith.constant 0 : index
    %c3 = arith.constant 3 : index
    %c0_12 = arith.constant 0 : index
    %c0_13 = arith.constant 0 : index
    %7 = vector.load %arg2[%c0_11, %c3, %c0_12, %c0_13] : memref<1x4x2x6xf32, #tpu.memory_space<vmem>>, vector<1x1x2x6xf32>
    %8 = vector.shape_cast %7 : vector<1x1x2x6xf32> to vector<2x6xf32>
    %cst = arith.constant 0.000000e+00 : f32
    %9 = vector.broadcast %cst : f32 to vector<8x6xf32>
    %c0_14 = arith.constant 0 : index
    %c0_15 = arith.constant 0 : index
    %10 = vector.load %arg22[%c0_14, %c0_15] : memref<48x6xf32, #tpu.memory_space<vmem>>, vector<2x6xf32>
    tpu.vector_store %arg22[%c0_14, %c0_15], %2 {strides = array<i32>} : memref<48x6xf32, #tpu.memory_space<vmem>>, vector<2x6xf32>,
    %c2_16 = arith.constant 2 : index
    %c0_17 = arith.constant 0 : index
    %11 = vector.load %arg22[%c2_16, %c0_17] : memref<48x6xf32, #tpu.memory_space<vmem>>, vector<8x6xf32>
    tpu.vector_store %arg22[%c2_16, %c0_17], %9 {strides = array<i32>} : memref<48x6xf32, #tpu.memory_space<vmem>>, vector<8x6xf32>,
    %c0_18 = arith.constant 0 : index
    %c0_19 = arith.constant 0 : index
    %12 = vector.load %arg22[%c0_18, %c0_19] : memref<48x6xf32, #tpu.memory_space<vmem>>, vector<10x6xf32>
    %cst_20 = arith.constant dense<0.000000e+00> : vector<10x6xf32>
    %13 = tpu.matmul %12, %0, %cst_20 {dimension_numbers = #tpu.dot_dimension_numbers<[1], [0], [0], [1], [0, 0, 1, 1], [], []>} : vector<10x6xf32>, vector<6x6xf32>, vector<10x6xf32> -> vector<10x6xf32>
    %c10 = arith.constant 10 : index
    %c0_21 = arith.constant 0 : index
    %14 = vector.load %arg22[%c10, %c0_21] : memref<48x6xf32, #tpu.memory_space<vmem>>, vector<10x6xf32>
    tpu.vector_store %arg22[%c10, %c0_21], %13 {strides = array<i32>} : memref<48x6xf32, #tpu.memory_space<vmem>>, vector<10x6xf32>,
    %c10_22 = arith.constant 10 : index
    %c0_23 = arith.constant 0 : index
    %15 = vector.load %arg22[%c10_22, %c0_23] : memref<48x6xf32, #tpu.memory_space<vmem>>, vector<10x6xf32>
    %cst_24 = arith.constant dense<0.000000e+00> : vector<10x6xf32>
    %16 = tpu.matmul %15, %0, %cst_24 {dimension_numbers = #tpu.dot_dimension_numbers<[1], [0], [0], [1], [0, 0, 1, 1], [], []>} : vector<10x6xf32>, vector<6x6xf32>, vector<10x6xf32> -> vector<10x6xf32>
    %c20 = arith.constant 20 : index
    %c0_25 = arith.constant 0 : index
    %17 = vector.load %arg22[%c20, %c0_25] : memref<48x6xf32, #tpu.memory_space<vmem>>, vector<10x6xf32>
    tpu.vector_store %arg22[%c20, %c0_25], %16 {strides = array<i32>} : memref<48x6xf32, #tpu.memory_space<vmem>>, vector<10x6xf32>,
    %c0_26 = arith.constant 0 : index
    %c0_27 = arith.constant 0 : index
    %18 = vector.load %arg22[%c0_26, %c0_27] : memref<48x6xf32, #tpu.memory_space<vmem>>, vector<30x6xf32>
    %c0_28 = arith.constant 0 : index
    %c0_29 = arith.constant 0 : index
    %19 = vector.load %arg3[%c0_28, %c0_29] : memref<16x30xf32, #tpu.memory_space<vmem>>, vector<16x30xf32>
    %cst_30 = arith.constant dense<0.000000e+00> : vector<16x6xf32>
    %20 = tpu.matmul %19, %18, %cst_30 {dimension_numbers = #tpu.dot_dimension_numbers<[1], [0], [0], [1], [0, 0, 1, 1], [], []>} : vector<16x30xf32>, vector<30x6xf32>, vector<16x6xf32> -> vector<16x6xf32>
    %c0_31 = arith.constant 0 : index
    %c0_32 = arith.constant 0 : index
    %21 = vector.load %arg4[%c0_31, %c0_32] : memref<16x1xf32, #tpu.memory_space<vmem>>, vector<16x1xf32>
    %22 = vector.broadcast %21 : vector<16x1xf32> to vector<16x6xf32>
    %23 = arith.addf %20, %22 : vector<16x6xf32>
    %24 = arith.negf %23 : vector<16x6xf32>
    %25 = math.exp %24 : vector<16x6xf32>
    %cst_33 = arith.constant 1.000000e+00 : f32
    %26 = vector.broadcast %cst_33 : f32 to vector<16x6xf32>
    %27 = arith.addf %26, %25 : vector<16x6xf32>
    %28 = arith.divf %26, %27 : vector<16x6xf32>
    %29 = vector.extract_strided_slice %28 {offsets = [0, 0], sizes = [8, 6], strides = [1, 1]} : vector<16x6xf32> to vector<8x6xf32>
    %30 = vector.extract_strided_slice %28 {offsets = [8, 0], sizes = [8, 6], strides = [1, 1]} : vector<16x6xf32> to vector<8x6xf32>
    %31 = arith.mulf %29, %9 : vector<8x6xf32>
    %c0_34 = arith.constant 0 : index
    %c0_35 = arith.constant 0 : index
    %32 = vector.load %arg22[%c0_34, %c0_35] : memref<48x6xf32, #tpu.memory_space<vmem>>, vector<2x6xf32>
    tpu.vector_store %arg22[%c0_34, %c0_35], %2 {strides = array<i32>} : memref<48x6xf32, #tpu.memory_space<vmem>>, vector<2x6xf32>,
    %c2_36 = arith.constant 2 : index
    %c0_37 = arith.constant 0 : index
    %33 = vector.load %arg22[%c2_36, %c0_37] : memref<48x6xf32, #tpu.memory_space<vmem>>, vector<8x6xf32>
    tpu.vector_store %arg22[%c2_36, %c0_37], %31 {strides = array<i32>} : memref<48x6xf32, #tpu.memory_space<vmem>>, vector<8x6xf32>,
    %c0_38 = arith.constant 0 : index
    %c0_39 = arith.constant 0 : index
    %34 = vector.load %arg22[%c0_38, %c0_39] : memref<48x6xf32, #tpu.memory_space<vmem>>, vector<10x6xf32>
    %cst_40 = arith.constant dense<0.000000e+00> : vector<10x6xf32>
    %35 = tpu.matmul %34, %0, %cst_40 {dimension_numbers = #tpu.dot_dimension_numbers<[1], [0], [0], [1], [0, 0, 1, 1], [], []>} : vector<10x6xf32>, vector<6x6xf32>, vector<10x6xf32> -> vector<10x6xf32>
    %c10_41 = arith.constant 10 : index
    %c0_42 = arith.constant 0 : index
    %36 = vector.load %arg22[%c10_41, %c0_42] : memref<48x6xf32, #tpu.memory_space<vmem>>, vector<10x6xf32>
    tpu.vector_store %arg22[%c10_41, %c0_42], %35 {strides = array<i32>} : memref<48x6xf32, #tpu.memory_space<vmem>>, vector<10x6xf32>,
    %c10_43 = arith.constant 10 : index
    %c0_44 = arith.constant 0 : index
    %37 = vector.load %arg22[%c10_43, %c0_44] : memref<48x6xf32, #tpu.memory_space<vmem>>, vector<10x6xf32>
    %cst_45 = arith.constant dense<0.000000e+00> : vector<10x6xf32>
    %38 = tpu.matmul %37, %0, %cst_45 {dimension_numbers = #tpu.dot_dimension_numbers<[1], [0], [0], [1], [0, 0, 1, 1], [], []>} : vector<10x6xf32>, vector<6x6xf32>, vector<10x6xf32> -> vector<10x6xf32>
    %c20_46 = arith.constant 20 : index
    %c0_47 = arith.constant 0 : index
    %39 = vector.load %arg22[%c20_46, %c0_47] : memref<48x6xf32, #tpu.memory_space<vmem>>, vector<10x6xf32>
    tpu.vector_store %arg22[%c20_46, %c0_47], %38 {strides = array<i32>} : memref<48x6xf32, #tpu.memory_space<vmem>>, vector<10x6xf32>,
    %c0_48 = arith.constant 0 : index
    %c0_49 = arith.constant 0 : index
    %40 = vector.load %arg22[%c0_48, %c0_49] : memref<48x6xf32, #tpu.memory_space<vmem>>, vector<30x6xf32>
    %c0_50 = arith.constant 0 : index
    %c0_51 = arith.constant 0 : index
    %41 = vector.load %arg5[%c0_50, %c0_51] : memref<8x30xf32, #tpu.memory_space<vmem>>, vector<8x30xf32>
    %cst_52 = arith.constant dense<0.000000e+00> : vector<8x6xf32>
    %42 = tpu.matmul %41, %40, %cst_52 {dimension_numbers = #tpu.dot_dimension_numbers<[1], [0], [0], [1], [0, 0, 1, 1], [], []>} : vector<8x30xf32>, vector<30x6xf32>, vector<8x6xf32> -> vector<8x6xf32>
    %c0_53 = arith.constant 0 : index
    %c0_54 = arith.constant 0 : index
    %43 = vector.load %arg6[%c0_53, %c0_54] : memref<8x1xf32, #tpu.memory_space<vmem>>, vector<8x1xf32>
    %44 = vector.broadcast %43 : vector<8x1xf32> to vector<8x6xf32>
    %45 = arith.addf %42, %44 : vector<8x6xf32>
    %46 = math.tanh %45 : vector<8x6xf32>
    %47 = arith.mulf %30, %9 : vector<8x6xf32>
    %cst_55 = arith.constant 1.000000e+00 : f32
    %48 = vector.broadcast %cst_55 : f32 to vector<8x6xf32>
    %49 = arith.subf %48, %30 : vector<8x6xf32>
    %50 = arith.mulf %49, %46 : vector<8x6xf32>
    %51 = arith.addf %47, %50 : vector<8x6xf32>
    %c0_56 = arith.constant 0 : index
    %c0_57 = arith.constant 0 : index
    %52 = vector.load %arg22[%c0_56, %c0_57] : memref<48x6xf32, #tpu.memory_space<vmem>>, vector<2x6xf32>
    tpu.vector_store %arg22[%c0_56, %c0_57], %4 {strides = array<i32>} : memref<48x6xf32, #tpu.memory_space<vmem>>, vector<2x6xf32>,
    %c2_58 = arith.constant 2 : index
    %c0_59 = arith.constant 0 : index
    %53 = vector.load %arg22[%c2_58, %c0_59] : memref<48x6xf32, #tpu.memory_space<vmem>>, vector<8x6xf32>
    tpu.vector_store %arg22[%c2_58, %c0_59], %51 {strides = array<i32>} : memref<48x6xf32, #tpu.memory_space<vmem>>, vector<8x6xf32>,
    %c0_60 = arith.constant 0 : index
    %c0_61 = arith.constant 0 : index
    %54 = vector.load %arg22[%c0_60, %c0_61] : memref<48x6xf32, #tpu.memory_space<vmem>>, vector<10x6xf32>
    %cst_62 = arith.constant dense<0.000000e+00> : vector<10x6xf32>
    %55 = tpu.matmul %54, %0, %cst_62 {dimension_numbers = #tpu.dot_dimension_numbers<[1], [0], [0], [1], [0, 0, 1, 1], [], []>} : vector<10x6xf32>, vector<6x6xf32>, vector<10x6xf32> -> vector<10x6xf32>
    %c10_63 = arith.constant 10 : index
    %c0_64 = arith.constant 0 : index
    %56 = vector.load %arg22[%c10_63, %c0_64] : memref<48x6xf32, #tpu.memory_space<vmem>>, vector<10x6xf32>
    tpu.vector_store %arg22[%c10_63, %c0_64], %55 {strides = array<i32>} : memref<48x6xf32, #tpu.memory_space<vmem>>, vector<10x6xf32>,
    %c10_65 = arith.constant 10 : index
    %c0_66 = arith.constant 0 : index
    %57 = vector.load %arg22[%c10_65, %c0_66] : memref<48x6xf32, #tpu.memory_space<vmem>>, vector<10x6xf32>
    %cst_67 = arith.constant dense<0.000000e+00> : vector<10x6xf32>
    %58 = tpu.matmul %57, %0, %cst_67 {dimension_numbers = #tpu.dot_dimension_numbers<[1], [0], [0], [1], [0, 0, 1, 1], [], []>} : vector<10x6xf32>, vector<6x6xf32>, vector<10x6xf32> -> vector<10x6xf32>
    %c20_68 = arith.constant 20 : index
    %c0_69 = arith.constant 0 : index
    %59 = vector.load %arg22[%c20_68, %c0_69] : memref<48x6xf32, #tpu.memory_space<vmem>>, vector<10x6xf32>
    tpu.vector_store %arg22[%c20_68, %c0_69], %58 {strides = array<i32>} : memref<48x6xf32, #tpu.memory_space<vmem>>, vector<10x6xf32>,
    %c0_70 = arith.constant 0 : index
    %c0_71 = arith.constant 0 : index
    %60 = vector.load %arg22[%c0_70, %c0_71] : memref<48x6xf32, #tpu.memory_space<vmem>>, vector<30x6xf32>
    %c0_72 = arith.constant 0 : index
    %c0_73 = arith.constant 0 : index
    %61 = vector.load %arg3[%c0_72, %c0_73] : memref<16x30xf32, #tpu.memory_space<vmem>>, vector<16x30xf32>
    %cst_74 = arith.constant dense<0.000000e+00> : vector<16x6xf32>
    %62 = tpu.matmul %61, %60, %cst_74 {dimension_numbers = #tpu.dot_dimension_numbers<[1], [0], [0], [1], [0, 0, 1, 1], [], []>} : vector<16x30xf32>, vector<30x6xf32>, vector<16x6xf32> -> vector<16x6xf32>
    %c0_75 = arith.constant 0 : index
    %c0_76 = arith.constant 0 : index
    %63 = vector.load %arg4[%c0_75, %c0_76] : memref<16x1xf32, #tpu.memory_space<vmem>>, vector<16x1xf32>
    %64 = vector.broadcast %63 : vector<16x1xf32> to vector<16x6xf32>
    %65 = arith.addf %62, %64 : vector<16x6xf32>
    %66 = arith.negf %65 : vector<16x6xf32>
    %67 = math.exp %66 : vector<16x6xf32>
    %cst_77 = arith.constant 1.000000e+00 : f32
    %68 = vector.broadcast %cst_77 : f32 to vector<16x6xf32>
    %69 = arith.addf %68, %67 : vector<16x6xf32>
    %70 = arith.divf %68, %69 : vector<16x6xf32>
    %71 = vector.extract_strided_slice %70 {offsets = [0, 0], sizes = [8, 6], strides = [1, 1]} : vector<16x6xf32> to vector<8x6xf32>
    %72 = vector.extract_strided_slice %70 {offsets = [8, 0], sizes = [8, 6], strides = [1, 1]} : vector<16x6xf32> to vector<8x6xf32>
    %73 = arith.mulf %71, %51 : vector<8x6xf32>
    %c0_78 = arith.constant 0 : index
    %c0_79 = arith.constant 0 : index
    %74 = vector.load %arg22[%c0_78, %c0_79] : memref<48x6xf32, #tpu.memory_space<vmem>>, vector<2x6xf32>
    tpu.vector_store %arg22[%c0_78, %c0_79], %4 {strides = array<i32>} : memref<48x6xf32, #tpu.memory_space<vmem>>, vector<2x6xf32>,
    %c2_80 = arith.constant 2 : index
    %c0_81 = arith.constant 0 : index
    %75 = vector.load %arg22[%c2_80, %c0_81] : memref<48x6xf32, #tpu.memory_space<vmem>>, vector<8x6xf32>
    tpu.vector_store %arg22[%c2_80, %c0_81], %73 {strides = array<i32>} : memref<48x6xf32, #tpu.memory_space<vmem>>, vector<8x6xf32>,
    %c0_82 = arith.constant 0 : index
    %c0_83 = arith.constant 0 : index
    %76 = vector.load %arg22[%c0_82, %c0_83] : memref<48x6xf32, #tpu.memory_space<vmem>>, vector<10x6xf32>
    %cst_84 = arith.constant dense<0.000000e+00> : vector<10x6xf32>
    %77 = tpu.matmul %76, %0, %cst_84 {dimension_numbers = #tpu.dot_dimension_numbers<[1], [0], [0], [1], [0, 0, 1, 1], [], []>} : vector<10x6xf32>, vector<6x6xf32>, vector<10x6xf32> -> vector<10x6xf32>
    %c10_85 = arith.constant 10 : index
    %c0_86 = arith.constant 0 : index
    %78 = vector.load %arg22[%c10_85, %c0_86] : memref<48x6xf32, #tpu.memory_space<vmem>>, vector<10x6xf32>
    tpu.vector_store %arg22[%c10_85, %c0_86], %77 {strides = array<i32>} : memref<48x6xf32, #tpu.memory_space<vmem>>, vector<10x6xf32>,
    %c10_87 = arith.constant 10 : index
    %c0_88 = arith.constant 0 : index
    %79 = vector.load %arg22[%c10_87, %c0_88] : memref<48x6xf32, #tpu.memory_space<vmem>>, vector<10x6xf32>
    %cst_89 = arith.constant dense<0.000000e+00> : vector<10x6xf32>
    %80 = tpu.matmul %79, %0, %cst_89 {dimension_numbers = #tpu.dot_dimension_numbers<[1], [0], [0], [1], [0, 0, 1, 1], [], []>} : vector<10x6xf32>, vector<6x6xf32>, vector<10x6xf32> -> vector<10x6xf32>
    %c20_90 = arith.constant 20 : index
    %c0_91 = arith.constant 0 : index
    %81 = vector.load %arg22[%c20_90, %c0_91] : memref<48x6xf32, #tpu.memory_space<vmem>>, vector<10x6xf32>
    tpu.vector_store %arg22[%c20_90, %c0_91], %80 {strides = array<i32>} : memref<48x6xf32, #tpu.memory_space<vmem>>, vector<10x6xf32>,
    %c0_92 = arith.constant 0 : index
    %c0_93 = arith.constant 0 : index
    %82 = vector.load %arg22[%c0_92, %c0_93] : memref<48x6xf32, #tpu.memory_space<vmem>>, vector<30x6xf32>
    %c0_94 = arith.constant 0 : index
    %c0_95 = arith.constant 0 : index
    %83 = vector.load %arg5[%c0_94, %c0_95] : memref<8x30xf32, #tpu.memory_space<vmem>>, vector<8x30xf32>
    %cst_96 = arith.constant dense<0.000000e+00> : vector<8x6xf32>
    %84 = tpu.matmul %83, %82, %cst_96 {dimension_numbers = #tpu.dot_dimension_numbers<[1], [0], [0], [1], [0, 0, 1, 1], [], []>} : vector<8x30xf32>, vector<30x6xf32>, vector<8x6xf32> -> vector<8x6xf32>
    %c0_97 = arith.constant 0 : index
    %c0_98 = arith.constant 0 : index
    %85 = vector.load %arg6[%c0_97, %c0_98] : memref<8x1xf32, #tpu.memory_space<vmem>>, vector<8x1xf32>
    %86 = vector.broadcast %85 : vector<8x1xf32> to vector<8x6xf32>
    %87 = arith.addf %84, %86 : vector<8x6xf32>
    %88 = math.tanh %87 : vector<8x6xf32>
    %89 = arith.mulf %72, %51 : vector<8x6xf32>
    %cst_99 = arith.constant 1.000000e+00 : f32
    %90 = vector.broadcast %cst_99 : f32 to vector<8x6xf32>
    %91 = arith.subf %90, %72 : vector<8x6xf32>
    %92 = arith.mulf %91, %88 : vector<8x6xf32>
    %93 = arith.addf %89, %92 : vector<8x6xf32>
    %c0_100 = arith.constant 0 : index
    %c0_101 = arith.constant 0 : index
    %94 = vector.load %arg22[%c0_100, %c0_101] : memref<48x6xf32, #tpu.memory_space<vmem>>, vector<2x6xf32>
    tpu.vector_store %arg22[%c0_100, %c0_101], %6 {strides = array<i32>} : memref<48x6xf32, #tpu.memory_space<vmem>>, vector<2x6xf32>,
    %c2_102 = arith.constant 2 : index
    %c0_103 = arith.constant 0 : index
    %95 = vector.load %arg22[%c2_102, %c0_103] : memref<48x6xf32, #tpu.memory_space<vmem>>, vector<8x6xf32>
    tpu.vector_store %arg22[%c2_102, %c0_103], %93 {strides = array<i32>} : memref<48x6xf32, #tpu.memory_space<vmem>>, vector<8x6xf32>,
    %c0_104 = arith.constant 0 : index
    %c0_105 = arith.constant 0 : index
    %96 = vector.load %arg22[%c0_104, %c0_105] : memref<48x6xf32, #tpu.memory_space<vmem>>, vector<10x6xf32>
    %cst_106 = arith.constant dense<0.000000e+00> : vector<10x6xf32>
    %97 = tpu.matmul %96, %0, %cst_106 {dimension_numbers = #tpu.dot_dimension_numbers<[1], [0], [0], [1], [0, 0, 1, 1], [], []>} : vector<10x6xf32>, vector<6x6xf32>, vector<10x6xf32> -> vector<10x6xf32>
    %c10_107 = arith.constant 10 : index
    %c0_108 = arith.constant 0 : index
    %98 = vector.load %arg22[%c10_107, %c0_108] : memref<48x6xf32, #tpu.memory_space<vmem>>, vector<10x6xf32>
    tpu.vector_store %arg22[%c10_107, %c0_108], %97 {strides = array<i32>} : memref<48x6xf32, #tpu.memory_space<vmem>>, vector<10x6xf32>,
    %c10_109 = arith.constant 10 : index
    %c0_110 = arith.constant 0 : index
    %99 = vector.load %arg22[%c10_109, %c0_110] : memref<48x6xf32, #tpu.memory_space<vmem>>, vector<10x6xf32>
    %cst_111 = arith.constant dense<0.000000e+00> : vector<10x6xf32>
    %100 = tpu.matmul %99, %0, %cst_111 {dimension_numbers = #tpu.dot_dimension_numbers<[1], [0], [0], [1], [0, 0, 1, 1], [], []>} : vector<10x6xf32>, vector<6x6xf32>, vector<10x6xf32> -> vector<10x6xf32>
    %c20_112 = arith.constant 20 : index
    %c0_113 = arith.constant 0 : index
    %101 = vector.load %arg22[%c20_112, %c0_113] : memref<48x6xf32, #tpu.memory_space<vmem>>, vector<10x6xf32>
    tpu.vector_store %arg22[%c20_112, %c0_113], %100 {strides = array<i32>} : memref<48x6xf32, #tpu.memory_space<vmem>>, vector<10x6xf32>,
    %c0_114 = arith.constant 0 : index
    %c0_115 = arith.constant 0 : index
    %102 = vector.load %arg22[%c0_114, %c0_115] : memref<48x6xf32, #tpu.memory_space<vmem>>, vector<30x6xf32>
    %c0_116 = arith.constant 0 : index
    %c0_117 = arith.constant 0 : index
    %103 = vector.load %arg3[%c0_116, %c0_117] : memref<16x30xf32, #tpu.memory_space<vmem>>, vector<16x30xf32>
    %cst_118 = arith.constant dense<0.000000e+00> : vector<16x6xf32>
    %104 = tpu.matmul %103, %102, %cst_118 {dimension_numbers = #tpu.dot_dimension_numbers<[1], [0], [0], [1], [0, 0, 1, 1], [], []>} : vector<16x30xf32>, vector<30x6xf32>, vector<16x6xf32> -> vector<16x6xf32>
    %c0_119 = arith.constant 0 : index
    %c0_120 = arith.constant 0 : index
    %105 = vector.load %arg4[%c0_119, %c0_120] : memref<16x1xf32, #tpu.memory_space<vmem>>, vector<16x1xf32>
    %106 = vector.broadcast %105 : vector<16x1xf32> to vector<16x6xf32>
    %107 = arith.addf %104, %106 : vector<16x6xf32>
    %108 = arith.negf %107 : vector<16x6xf32>
    %109 = math.exp %108 : vector<16x6xf32>
    %cst_121 = arith.constant 1.000000e+00 : f32
    %110 = vector.broadcast %cst_121 : f32 to vector<16x6xf32>
    %111 = arith.addf %110, %109 : vector<16x6xf32>
    %112 = arith.divf %110, %111 : vector<16x6xf32>
    %113 = vector.extract_strided_slice %112 {offsets = [0, 0], sizes = [8, 6], strides = [1, 1]} : vector<16x6xf32> to vector<8x6xf32>
    %114 = vector.extract_strided_slice %112 {offsets = [8, 0], sizes = [8, 6], strides = [1, 1]} : vector<16x6xf32> to vector<8x6xf32>
    %115 = arith.mulf %113, %93 : vector<8x6xf32>
    %c0_122 = arith.constant 0 : index
    %c0_123 = arith.constant 0 : index
    %116 = vector.load %arg22[%c0_122, %c0_123] : memref<48x6xf32, #tpu.memory_space<vmem>>, vector<2x6xf32>
    tpu.vector_store %arg22[%c0_122, %c0_123], %6 {strides = array<i32>} : memref<48x6xf32, #tpu.memory_space<vmem>>, vector<2x6xf32>,
    %c2_124 = arith.constant 2 : index
    %c0_125 = arith.constant 0 : index
    %117 = vector.load %arg22[%c2_124, %c0_125] : memref<48x6xf32, #tpu.memory_space<vmem>>, vector<8x6xf32>
    tpu.vector_store %arg22[%c2_124, %c0_125], %115 {strides = array<i32>} : memref<48x6xf32, #tpu.memory_space<vmem>>, vector<8x6xf32>,
    %c0_126 = arith.constant 0 : index
    %c0_127 = arith.constant 0 : index
    %118 = vector.load %arg22[%c0_126, %c0_127] : memref<48x6xf32, #tpu.memory_space<vmem>>, vector<10x6xf32>
    %cst_128 = arith.constant dense<0.000000e+00> : vector<10x6xf32>
    %119 = tpu.matmul %118, %0, %cst_128 {dimension_numbers = #tpu.dot_dimension_numbers<[1], [0], [0], [1], [0, 0, 1, 1], [], []>} : vector<10x6xf32>, vector<6x6xf32>, vector<10x6xf32> -> vector<10x6xf32>
    %c10_129 = arith.constant 10 : index
    %c0_130 = arith.constant 0 : index
    %120 = vector.load %arg22[%c10_129, %c0_130] : memref<48x6xf32, #tpu.memory_space<vmem>>, vector<10x6xf32>
    tpu.vector_store %arg22[%c10_129, %c0_130], %119 {strides = array<i32>} : memref<48x6xf32, #tpu.memory_space<vmem>>, vector<10x6xf32>,
    %c10_131 = arith.constant 10 : index
    %c0_132 = arith.constant 0 : index
    %121 = vector.load %arg22[%c10_131, %c0_132] : memref<48x6xf32, #tpu.memory_space<vmem>>, vector<10x6xf32>
    %cst_133 = arith.constant dense<0.000000e+00> : vector<10x6xf32>
    %122 = tpu.matmul %121, %0, %cst_133 {dimension_numbers = #tpu.dot_dimension_numbers<[1], [0], [0], [1], [0, 0, 1, 1], [], []>} : vector<10x6xf32>, vector<6x6xf32>, vector<10x6xf32> -> vector<10x6xf32>
    %c20_134 = arith.constant 20 : index
    %c0_135 = arith.constant 0 : index
    %123 = vector.load %arg22[%c20_134, %c0_135] : memref<48x6xf32, #tpu.memory_space<vmem>>, vector<10x6xf32>
    tpu.vector_store %arg22[%c20_134, %c0_135], %122 {strides = array<i32>} : memref<48x6xf32, #tpu.memory_space<vmem>>, vector<10x6xf32>,
    %c0_136 = arith.constant 0 : index
    %c0_137 = arith.constant 0 : index
    %124 = vector.load %arg22[%c0_136, %c0_137] : memref<48x6xf32, #tpu.memory_space<vmem>>, vector<30x6xf32>
    %c0_138 = arith.constant 0 : index
    %c0_139 = arith.constant 0 : index
    %125 = vector.load %arg5[%c0_138, %c0_139] : memref<8x30xf32, #tpu.memory_space<vmem>>, vector<8x30xf32>
    %cst_140 = arith.constant dense<0.000000e+00> : vector<8x6xf32>
    %126 = tpu.matmul %125, %124, %cst_140 {dimension_numbers = #tpu.dot_dimension_numbers<[1], [0], [0], [1], [0, 0, 1, 1], [], []>} : vector<8x30xf32>, vector<30x6xf32>, vector<8x6xf32> -> vector<8x6xf32>
    %c0_141 = arith.constant 0 : index
    %c0_142 = arith.constant 0 : index
    %127 = vector.load %arg6[%c0_141, %c0_142] : memref<8x1xf32, #tpu.memory_space<vmem>>, vector<8x1xf32>
    %128 = vector.broadcast %127 : vector<8x1xf32> to vector<8x6xf32>
    %129 = arith.addf %126, %128 : vector<8x6xf32>
    %130 = math.tanh %129 : vector<8x6xf32>
    %131 = arith.mulf %114, %93 : vector<8x6xf32>
    %cst_143 = arith.constant 1.000000e+00 : f32
    %132 = vector.broadcast %cst_143 : f32 to vector<8x6xf32>
    %133 = arith.subf %132, %114 : vector<8x6xf32>
    %134 = arith.mulf %133, %130 : vector<8x6xf32>
    %135 = arith.addf %131, %134 : vector<8x6xf32>
    %c0_144 = arith.constant 0 : index
    %c0_145 = arith.constant 0 : index
    %136 = vector.load %arg22[%c0_144, %c0_145] : memref<48x6xf32, #tpu.memory_space<vmem>>, vector<2x6xf32>
    tpu.vector_store %arg22[%c0_144, %c0_145], %8 {strides = array<i32>} : memref<48x6xf32, #tpu.memory_space<vmem>>, vector<2x6xf32>,
    %c2_146 = arith.constant 2 : index
    %c0_147 = arith.constant 0 : index
    %137 = vector.load %arg22[%c2_146, %c0_147] : memref<48x6xf32, #tpu.memory_space<vmem>>, vector<8x6xf32>
    tpu.vector_store %arg22[%c2_146, %c0_147], %135 {strides = array<i32>} : memref<48x6xf32, #tpu.memory_space<vmem>>, vector<8x6xf32>,
    %c0_148 = arith.constant 0 : index
    %c0_149 = arith.constant 0 : index
    %138 = vector.load %arg22[%c0_148, %c0_149] : memref<48x6xf32, #tpu.memory_space<vmem>>, vector<10x6xf32>
    %cst_150 = arith.constant dense<0.000000e+00> : vector<10x6xf32>
    %139 = tpu.matmul %138, %0, %cst_150 {dimension_numbers = #tpu.dot_dimension_numbers<[1], [0], [0], [1], [0, 0, 1, 1], [], []>} : vector<10x6xf32>, vector<6x6xf32>, vector<10x6xf32> -> vector<10x6xf32>
    %c10_151 = arith.constant 10 : index
    %c0_152 = arith.constant 0 : index
    %140 = vector.load %arg22[%c10_151, %c0_152] : memref<48x6xf32, #tpu.memory_space<vmem>>, vector<10x6xf32>
    tpu.vector_store %arg22[%c10_151, %c0_152], %139 {strides = array<i32>} : memref<48x6xf32, #tpu.memory_space<vmem>>, vector<10x6xf32>,
    %c10_153 = arith.constant 10 : index
    %c0_154 = arith.constant 0 : index
    %141 = vector.load %arg22[%c10_153, %c0_154] : memref<48x6xf32, #tpu.memory_space<vmem>>, vector<10x6xf32>
    %cst_155 = arith.constant dense<0.000000e+00> : vector<10x6xf32>
    %142 = tpu.matmul %141, %0, %cst_155 {dimension_numbers = #tpu.dot_dimension_numbers<[1], [0], [0], [1], [0, 0, 1, 1], [], []>} : vector<10x6xf32>, vector<6x6xf32>, vector<10x6xf32> -> vector<10x6xf32>
    %c20_156 = arith.constant 20 : index
    %c0_157 = arith.constant 0 : index
    %143 = vector.load %arg22[%c20_156, %c0_157] : memref<48x6xf32, #tpu.memory_space<vmem>>, vector<10x6xf32>
    tpu.vector_store %arg22[%c20_156, %c0_157], %142 {strides = array<i32>} : memref<48x6xf32, #tpu.memory_space<vmem>>, vector<10x6xf32>,
    %c0_158 = arith.constant 0 : index
    %c0_159 = arith.constant 0 : index
    %144 = vector.load %arg22[%c0_158, %c0_159] : memref<48x6xf32, #tpu.memory_space<vmem>>, vector<30x6xf32>
    %c0_160 = arith.constant 0 : index
    %c0_161 = arith.constant 0 : index
    %145 = vector.load %arg3[%c0_160, %c0_161] : memref<16x30xf32, #tpu.memory_space<vmem>>, vector<16x30xf32>
    %cst_162 = arith.constant dense<0.000000e+00> : vector<16x6xf32>
    %146 = tpu.matmul %145, %144, %cst_162 {dimension_numbers = #tpu.dot_dimension_numbers<[1], [0], [0], [1], [0, 0, 1, 1], [], []>} : vector<16x30xf32>, vector<30x6xf32>, vector<16x6xf32> -> vector<16x6xf32>
    %c0_163 = arith.constant 0 : index
    %c0_164 = arith.constant 0 : index
    %147 = vector.load %arg4[%c0_163, %c0_164] : memref<16x1xf32, #tpu.memory_space<vmem>>, vector<16x1xf32>
    %148 = vector.broadcast %147 : vector<16x1xf32> to vector<16x6xf32>
    %149 = arith.addf %146, %148 : vector<16x6xf32>
    %150 = arith.negf %149 : vector<16x6xf32>
    %151 = math.exp %150 : vector<16x6xf32>
    %cst_165 = arith.constant 1.000000e+00 : f32
    %152 = vector.broadcast %cst_165 : f32 to vector<16x6xf32>
    %153 = arith.addf %152, %151 : vector<16x6xf32>
    %154 = arith.divf %152, %153 : vector<16x6xf32>
    %155 = vector.extract_strided_slice %154 {offsets = [0, 0], sizes = [8, 6], strides = [1, 1]} : vector<16x6xf32> to vector<8x6xf32>
    %156 = vector.extract_strided_slice %154 {offsets = [8, 0], sizes = [8, 6], strides = [1, 1]} : vector<16x6xf32> to vector<8x6xf32>
    %157 = arith.mulf %155, %135 : vector<8x6xf32>
    %c0_166 = arith.constant 0 : index
    %c0_167 = arith.constant 0 : index
    %158 = vector.load %arg22[%c0_166, %c0_167] : memref<48x6xf32, #tpu.memory_space<vmem>>, vector<2x6xf32>
    tpu.vector_store %arg22[%c0_166, %c0_167], %8 {strides = array<i32>} : memref<48x6xf32, #tpu.memory_space<vmem>>, vector<2x6xf32>,
    %c2_168 = arith.constant 2 : index
    %c0_169 = arith.constant 0 : index
    %159 = vector.load %arg22[%c2_168, %c0_169] : memref<48x6xf32, #tpu.memory_space<vmem>>, vector<8x6xf32>
    tpu.vector_store %arg22[%c2_168, %c0_169], %157 {strides = array<i32>} : memref<48x6xf32, #tpu.memory_space<vmem>>, vector<8x6xf32>,
    %c0_170 = arith.constant 0 : index
    %c0_171 = arith.constant 0 : index
    %160 = vector.load %arg22[%c0_170, %c0_171] : memref<48x6xf32, #tpu.memory_space<vmem>>, vector<10x6xf32>
    %cst_172 = arith.constant dense<0.000000e+00> : vector<10x6xf32>
    %161 = tpu.matmul %160, %0, %cst_172 {dimension_numbers = #tpu.dot_dimension_numbers<[1], [0], [0], [1], [0, 0, 1, 1], [], []>} : vector<10x6xf32>, vector<6x6xf32>, vector<10x6xf32> -> vector<10x6xf32>
    %c10_173 = arith.constant 10 : index
    %c0_174 = arith.constant 0 : index
    %162 = vector.load %arg22[%c10_173, %c0_174] : memref<48x6xf32, #tpu.memory_space<vmem>>, vector<10x6xf32>
    tpu.vector_store %arg22[%c10_173, %c0_174], %161 {strides = array<i32>} : memref<48x6xf32, #tpu.memory_space<vmem>>, vector<10x6xf32>,
    %c10_175 = arith.constant 10 : index
    %c0_176 = arith.constant 0 : index
    %163 = vector.load %arg22[%c10_175, %c0_176] : memref<48x6xf32, #tpu.memory_space<vmem>>, vector<10x6xf32>
    %cst_177 = arith.constant dense<0.000000e+00> : vector<10x6xf32>
    %164 = tpu.matmul %163, %0, %cst_177 {dimension_numbers = #tpu.dot_dimension_numbers<[1], [0], [0], [1], [0, 0, 1, 1], [], []>} : vector<10x6xf32>, vector<6x6xf32>, vector<10x6xf32> -> vector<10x6xf32>
    %c20_178 = arith.constant 20 : index
    %c0_179 = arith.constant 0 : index
    %165 = vector.load %arg22[%c20_178, %c0_179] : memref<48x6xf32, #tpu.memory_space<vmem>>, vector<10x6xf32>
    tpu.vector_store %arg22[%c20_178, %c0_179], %164 {strides = array<i32>} : memref<48x6xf32, #tpu.memory_space<vmem>>, vector<10x6xf32>,
    %c0_180 = arith.constant 0 : index
    %c0_181 = arith.constant 0 : index
    %166 = vector.load %arg22[%c0_180, %c0_181] : memref<48x6xf32, #tpu.memory_space<vmem>>, vector<30x6xf32>
    %c0_182 = arith.constant 0 : index
    %c0_183 = arith.constant 0 : index
    %167 = vector.load %arg5[%c0_182, %c0_183] : memref<8x30xf32, #tpu.memory_space<vmem>>, vector<8x30xf32>
    %cst_184 = arith.constant dense<0.000000e+00> : vector<8x6xf32>
    %168 = tpu.matmul %167, %166, %cst_184 {dimension_numbers = #tpu.dot_dimension_numbers<[1], [0], [0], [1], [0, 0, 1, 1], [], []>} : vector<8x30xf32>, vector<30x6xf32>, vector<8x6xf32> -> vector<8x6xf32>
    %c0_185 = arith.constant 0 : index
    %c0_186 = arith.constant 0 : index
    %169 = vector.load %arg6[%c0_185, %c0_186] : memref<8x1xf32, #tpu.memory_space<vmem>>, vector<8x1xf32>
    %170 = vector.broadcast %169 : vector<8x1xf32> to vector<8x6xf32>
    %171 = arith.addf %168, %170 : vector<8x6xf32>
    %172 = math.tanh %171 : vector<8x6xf32>
    %173 = arith.mulf %156, %135 : vector<8x6xf32>
    %cst_187 = arith.constant 1.000000e+00 : f32
    %174 = vector.broadcast %cst_187 : f32 to vector<8x6xf32>
    %175 = arith.subf %174, %156 : vector<8x6xf32>
    %176 = arith.mulf %175, %172 : vector<8x6xf32>
    %177 = arith.addf %173, %176 : vector<8x6xf32>
    %cst_188 = arith.constant 0.000000e+00 : f32
    %178 = vector.broadcast %cst_188 : f32 to vector<8x6xf32>
    %c0_189 = arith.constant 0 : index
    %c0_190 = arith.constant 0 : index
    %179 = vector.load %arg22[%c0_189, %c0_190] : memref<48x6xf32, #tpu.memory_space<vmem>>, vector<8x6xf32>
    tpu.vector_store %arg22[%c0_189, %c0_190], %51 {strides = array<i32>} : memref<48x6xf32, #tpu.memory_space<vmem>>, vector<8x6xf32>,
    %c8 = arith.constant 8 : index
    %c0_191 = arith.constant 0 : index
    %180 = vector.load %arg22[%c8, %c0_191] : memref<48x6xf32, #tpu.memory_space<vmem>>, vector<8x6xf32>
    tpu.vector_store %arg22[%c8, %c0_191], %178 {strides = array<i32>} : memref<48x6xf32, #tpu.memory_space<vmem>>, vector<8x6xf32>,
    %c0_192 = arith.constant 0 : index
    %c0_193 = arith.constant 0 : index
    %181 = vector.load %arg22[%c0_192, %c0_193] : memref<48x6xf32, #tpu.memory_space<vmem>>, vector<16x6xf32>
    %cst_194 = arith.constant dense<0.000000e+00> : vector<16x6xf32>
    %182 = tpu.matmul %181, %0, %cst_194 {dimension_numbers = #tpu.dot_dimension_numbers<[1], [0], [0], [1], [0, 0, 1, 1], [], []>} : vector<16x6xf32>, vector<6x6xf32>, vector<16x6xf32> -> vector<16x6xf32>
    %c16 = arith.constant 16 : index
    %c0_195 = arith.constant 0 : index
    %183 = vector.load %arg22[%c16, %c0_195] : memref<48x6xf32, #tpu.memory_space<vmem>>, vector<16x6xf32>
    tpu.vector_store %arg22[%c16, %c0_195], %182 {strides = array<i32>} : memref<48x6xf32, #tpu.memory_space<vmem>>, vector<16x6xf32>,
    %c16_196 = arith.constant 16 : index
    %c0_197 = arith.constant 0 : index
    %184 = vector.load %arg22[%c16_196, %c0_197] : memref<48x6xf32, #tpu.memory_space<vmem>>, vector<16x6xf32>
    %cst_198 = arith.constant dense<0.000000e+00> : vector<16x6xf32>
    %185 = tpu.matmul %184, %0, %cst_198 {dimension_numbers = #tpu.dot_dimension_numbers<[1], [0], [0], [1], [0, 0, 1, 1], [], []>} : vector<16x6xf32>, vector<6x6xf32>, vector<16x6xf32> -> vector<16x6xf32>
    %c32 = arith.constant 32 : index
    %c0_199 = arith.constant 0 : index
    %186 = vector.load %arg22[%c32, %c0_199] : memref<48x6xf32, #tpu.memory_space<vmem>>, vector<16x6xf32>
    tpu.vector_store %arg22[%c32, %c0_199], %185 {strides = array<i32>} : memref<48x6xf32, #tpu.memory_space<vmem>>, vector<16x6xf32>,
    %c0_200 = arith.constant 0 : index
    %c0_201 = arith.constant 0 : index
    %187 = vector.load %arg22[%c0_200, %c0_201] : memref<48x6xf32, #tpu.memory_space<vmem>>, vector<48x6xf32>
    %c0_202 = arith.constant 0 : index
    %c0_203 = arith.constant 0 : index
    %188 = vector.load %arg7[%c0_202, %c0_203] : memref<16x48xf32, #tpu.memory_space<vmem>>, vector<16x48xf32>
    %cst_204 = arith.constant dense<0.000000e+00> : vector<16x6xf32>
    %189 = tpu.matmul %188, %187, %cst_204 {dimension_numbers = #tpu.dot_dimension_numbers<[1], [0], [0], [1], [0, 0, 1, 1], [], []>} : vector<16x48xf32>, vector<48x6xf32>, vector<16x6xf32> -> vector<16x6xf32>
    %c0_205 = arith.constant 0 : index
    %c0_206 = arith.constant 0 : index
    %190 = vector.load %arg8[%c0_205, %c0_206] : memref<16x1xf32, #tpu.memory_space<vmem>>, vector<16x1xf32>
    %191 = vector.broadcast %190 : vector<16x1xf32> to vector<16x6xf32>
    %192 = arith.addf %189, %191 : vector<16x6xf32>
    %193 = arith.negf %192 : vector<16x6xf32>
    %194 = math.exp %193 : vector<16x6xf32>
    %cst_207 = arith.constant 1.000000e+00 : f32
    %195 = vector.broadcast %cst_207 : f32 to vector<16x6xf32>
    %196 = arith.addf %195, %194 : vector<16x6xf32>
    %197 = arith.divf %195, %196 : vector<16x6xf32>
    %198 = vector.extract_strided_slice %197 {offsets = [0, 0], sizes = [8, 6], strides = [1, 1]} : vector<16x6xf32> to vector<8x6xf32>
    %199 = vector.extract_strided_slice %197 {offsets = [8, 0], sizes = [8, 6], strides = [1, 1]} : vector<16x6xf32> to vector<8x6xf32>
    %200 = arith.mulf %198, %178 : vector<8x6xf32>
    %c0_208 = arith.constant 0 : index
    %c0_209 = arith.constant 0 : index
    %201 = vector.load %arg22[%c0_208, %c0_209] : memref<48x6xf32, #tpu.memory_space<vmem>>, vector<8x6xf32>
    tpu.vector_store %arg22[%c0_208, %c0_209], %51 {strides = array<i32>} : memref<48x6xf32, #tpu.memory_space<vmem>>, vector<8x6xf32>,
    %c8_210 = arith.constant 8 : index
    %c0_211 = arith.constant 0 : index
    %202 = vector.load %arg22[%c8_210, %c0_211] : memref<48x6xf32, #tpu.memory_space<vmem>>, vector<8x6xf32>
    tpu.vector_store %arg22[%c8_210, %c0_211], %200 {strides = array<i32>} : memref<48x6xf32, #tpu.memory_space<vmem>>, vector<8x6xf32>,
    %c0_212 = arith.constant 0 : index
    %c0_213 = arith.constant 0 : index
    %203 = vector.load %arg22[%c0_212, %c0_213] : memref<48x6xf32, #tpu.memory_space<vmem>>, vector<16x6xf32>
    %cst_214 = arith.constant dense<0.000000e+00> : vector<16x6xf32>
    %204 = tpu.matmul %203, %0, %cst_214 {dimension_numbers = #tpu.dot_dimension_numbers<[1], [0], [0], [1], [0, 0, 1, 1], [], []>} : vector<16x6xf32>, vector<6x6xf32>, vector<16x6xf32> -> vector<16x6xf32>
    %c16_215 = arith.constant 16 : index
    %c0_216 = arith.constant 0 : index
    %205 = vector.load %arg22[%c16_215, %c0_216] : memref<48x6xf32, #tpu.memory_space<vmem>>, vector<16x6xf32>
    tpu.vector_store %arg22[%c16_215, %c0_216], %204 {strides = array<i32>} : memref<48x6xf32, #tpu.memory_space<vmem>>, vector<16x6xf32>,
    %c16_217 = arith.constant 16 : index
    %c0_218 = arith.constant 0 : index
    %206 = vector.load %arg22[%c16_217, %c0_218] : memref<48x6xf32, #tpu.memory_space<vmem>>, vector<16x6xf32>
    %cst_219 = arith.constant dense<0.000000e+00> : vector<16x6xf32>
    %207 = tpu.matmul %206, %0, %cst_219 {dimension_numbers = #tpu.dot_dimension_numbers<[1], [0], [0], [1], [0, 0, 1, 1], [], []>} : vector<16x6xf32>, vector<6x6xf32>, vector<16x6xf32> -> vector<16x6xf32>
    %c32_220 = arith.constant 32 : index
    %c0_221 = arith.constant 0 : index
    %208 = vector.load %arg22[%c32_220, %c0_221] : memref<48x6xf32, #tpu.memory_space<vmem>>, vector<16x6xf32>
    tpu.vector_store %arg22[%c32_220, %c0_221], %207 {strides = array<i32>} : memref<48x6xf32, #tpu.memory_space<vmem>>, vector<16x6xf32>,
    %c0_222 = arith.constant 0 : index
    %c0_223 = arith.constant 0 : index
    %209 = vector.load %arg22[%c0_222, %c0_223] : memref<48x6xf32, #tpu.memory_space<vmem>>, vector<48x6xf32>
    %c0_224 = arith.constant 0 : index
    %c0_225 = arith.constant 0 : index
    %210 = vector.load %arg9[%c0_224, %c0_225] : memref<8x48xf32, #tpu.memory_space<vmem>>, vector<8x48xf32>
    %cst_226 = arith.constant dense<0.000000e+00> : vector<8x6xf32>
    %211 = tpu.matmul %210, %209, %cst_226 {dimension_numbers = #tpu.dot_dimension_numbers<[1], [0], [0], [1], [0, 0, 1, 1], [], []>} : vector<8x48xf32>, vector<48x6xf32>, vector<8x6xf32> -> vector<8x6xf32>
    %c0_227 = arith.constant 0 : index
    %c0_228 = arith.constant 0 : index
    %212 = vector.load %arg10[%c0_227, %c0_228] : memref<8x1xf32, #tpu.memory_space<vmem>>, vector<8x1xf32>
    %213 = vector.broadcast %212 : vector<8x1xf32> to vector<8x6xf32>
    %214 = arith.addf %211, %213 : vector<8x6xf32>
    %215 = math.tanh %214 : vector<8x6xf32>
    %216 = arith.mulf %199, %178 : vector<8x6xf32>
    %cst_229 = arith.constant 1.000000e+00 : f32
    %217 = vector.broadcast %cst_229 : f32 to vector<8x6xf32>
    %218 = arith.subf %217, %199 : vector<8x6xf32>
    %219 = arith.mulf %218, %215 : vector<8x6xf32>
    %220 = arith.addf %216, %219 : vector<8x6xf32>
    %c0_230 = arith.constant 0 : index
    %c0_231 = arith.constant 0 : index
    %221 = vector.load %arg22[%c0_230, %c0_231] : memref<48x6xf32, #tpu.memory_space<vmem>>, vector<8x6xf32>
    tpu.vector_store %arg22[%c0_230, %c0_231], %93 {strides = array<i32>} : memref<48x6xf32, #tpu.memory_space<vmem>>, vector<8x6xf32>,
    %c8_232 = arith.constant 8 : index
    %c0_233 = arith.constant 0 : index
    %222 = vector.load %arg22[%c8_232, %c0_233] : memref<48x6xf32, #tpu.memory_space<vmem>>, vector<8x6xf32>
    tpu.vector_store %arg22[%c8_232, %c0_233], %220 {strides = array<i32>} : memref<48x6xf32, #tpu.memory_space<vmem>>, vector<8x6xf32>,
    %c0_234 = arith.constant 0 : index
    %c0_235 = arith.constant 0 : index
    %223 = vector.load %arg22[%c0_234, %c0_235] : memref<48x6xf32, #tpu.memory_space<vmem>>, vector<16x6xf32>
    %cst_236 = arith.constant dense<0.000000e+00> : vector<16x6xf32>
    %224 = tpu.matmul %223, %0, %cst_236 {dimension_numbers = #tpu.dot_dimension_numbers<[1], [0], [0], [1], [0, 0, 1, 1], [], []>} : vector<16x6xf32>, vector<6x6xf32>, vector<16x6xf32> -> vector<16x6xf32>
    %c16_237 = arith.constant 16 : index
    %c0_238 = arith.constant 0 : index
    %225 = vector.load %arg22[%c16_237, %c0_238] : memref<48x6xf32, #tpu.memory_space<vmem>>, vector<16x6xf32>
    tpu.vector_store %arg22[%c16_237, %c0_238], %224 {strides = array<i32>} : memref<48x6xf32, #tpu.memory_space<vmem>>, vector<16x6xf32>,
    %c16_239 = arith.constant 16 : index
    %c0_240 = arith.constant 0 : index
    %226 = vector.load %arg22[%c16_239, %c0_240] : memref<48x6xf32, #tpu.memory_space<vmem>>, vector<16x6xf32>
    %cst_241 = arith.constant dense<0.000000e+00> : vector<16x6xf32>
    %227 = tpu.matmul %226, %0, %cst_241 {dimension_numbers = #tpu.dot_dimension_numbers<[1], [0], [0], [1], [0, 0, 1, 1], [], []>} : vector<16x6xf32>, vector<6x6xf32>, vector<16x6xf32> -> vector<16x6xf32>
    %c32_242 = arith.constant 32 : index
    %c0_243 = arith.constant 0 : index
    %228 = vector.load %arg22[%c32_242, %c0_243] : memref<48x6xf32, #tpu.memory_space<vmem>>, vector<16x6xf32>
    tpu.vector_store %arg22[%c32_242, %c0_243], %227 {strides = array<i32>} : memref<48x6xf32, #tpu.memory_space<vmem>>, vector<16x6xf32>,
    %c0_244 = arith.constant 0 : index
    %c0_245 = arith.constant 0 : index
    %229 = vector.load %arg22[%c0_244, %c0_245] : memref<48x6xf32, #tpu.memory_space<vmem>>, vector<48x6xf32>
    %c0_246 = arith.constant 0 : index
    %c0_247 = arith.constant 0 : index
    %230 = vector.load %arg7[%c0_246, %c0_247] : memref<16x48xf32, #tpu.memory_space<vmem>>, vector<16x48xf32>
    %cst_248 = arith.constant dense<0.000000e+00> : vector<16x6xf32>
    %231 = tpu.matmul %230, %229, %cst_248 {dimension_numbers = #tpu.dot_dimension_numbers<[1], [0], [0], [1], [0, 0, 1, 1], [], []>} : vector<16x48xf32>, vector<48x6xf32>, vector<16x6xf32> -> vector<16x6xf32>
    %c0_249 = arith.constant 0 : index
    %c0_250 = arith.constant 0 : index
    %232 = vector.load %arg8[%c0_249, %c0_250] : memref<16x1xf32, #tpu.memory_space<vmem>>, vector<16x1xf32>
    %233 = vector.broadcast %232 : vector<16x1xf32> to vector<16x6xf32>
    %234 = arith.addf %231, %233 : vector<16x6xf32>
    %235 = arith.negf %234 : vector<16x6xf32>
    %236 = math.exp %235 : vector<16x6xf32>
    %cst_251 = arith.constant 1.000000e+00 : f32
    %237 = vector.broadcast %cst_251 : f32 to vector<16x6xf32>
    %238 = arith.addf %237, %236 : vector<16x6xf32>
    %239 = arith.divf %237, %238 : vector<16x6xf32>
    %240 = vector.extract_strided_slice %239 {offsets = [0, 0], sizes = [8, 6], strides = [1, 1]} : vector<16x6xf32> to vector<8x6xf32>
    %241 = vector.extract_strided_slice %239 {offsets = [8, 0], sizes = [8, 6], strides = [1, 1]} : vector<16x6xf32> to vector<8x6xf32>
    %242 = arith.mulf %240, %220 : vector<8x6xf32>
    %c0_252 = arith.constant 0 : index
    %c0_253 = arith.constant 0 : index
    %243 = vector.load %arg22[%c0_252, %c0_253] : memref<48x6xf32, #tpu.memory_space<vmem>>, vector<8x6xf32>
    tpu.vector_store %arg22[%c0_252, %c0_253], %93 {strides = array<i32>} : memref<48x6xf32, #tpu.memory_space<vmem>>, vector<8x6xf32>,
    %c8_254 = arith.constant 8 : index
    %c0_255 = arith.constant 0 : index
    %244 = vector.load %arg22[%c8_254, %c0_255] : memref<48x6xf32, #tpu.memory_space<vmem>>, vector<8x6xf32>
    tpu.vector_store %arg22[%c8_254, %c0_255], %242 {strides = array<i32>} : memref<48x6xf32, #tpu.memory_space<vmem>>, vector<8x6xf32>,
    %c0_256 = arith.constant 0 : index
    %c0_257 = arith.constant 0 : index
    %245 = vector.load %arg22[%c0_256, %c0_257] : memref<48x6xf32, #tpu.memory_space<vmem>>, vector<16x6xf32>
    %cst_258 = arith.constant dense<0.000000e+00> : vector<16x6xf32>
    %246 = tpu.matmul %245, %0, %cst_258 {dimension_numbers = #tpu.dot_dimension_numbers<[1], [0], [0], [1], [0, 0, 1, 1], [], []>} : vector<16x6xf32>, vector<6x6xf32>, vector<16x6xf32> -> vector<16x6xf32>
    %c16_259 = arith.constant 16 : index
    %c0_260 = arith.constant 0 : index
    %247 = vector.load %arg22[%c16_259, %c0_260] : memref<48x6xf32, #tpu.memory_space<vmem>>, vector<16x6xf32>
    tpu.vector_store %arg22[%c16_259, %c0_260], %246 {strides = array<i32>} : memref<48x6xf32, #tpu.memory_space<vmem>>, vector<16x6xf32>,
    %c16_261 = arith.constant 16 : index
    %c0_262 = arith.constant 0 : index
    %248 = vector.load %arg22[%c16_261, %c0_262] : memref<48x6xf32, #tpu.memory_space<vmem>>, vector<16x6xf32>
    %cst_263 = arith.constant dense<0.000000e+00> : vector<16x6xf32>
    %249 = tpu.matmul %248, %0, %cst_263 {dimension_numbers = #tpu.dot_dimension_numbers<[1], [0], [0], [1], [0, 0, 1, 1], [], []>} : vector<16x6xf32>, vector<6x6xf32>, vector<16x6xf32> -> vector<16x6xf32>
    %c32_264 = arith.constant 32 : index
    %c0_265 = arith.constant 0 : index
    %250 = vector.load %arg22[%c32_264, %c0_265] : memref<48x6xf32, #tpu.memory_space<vmem>>, vector<16x6xf32>
    tpu.vector_store %arg22[%c32_264, %c0_265], %249 {strides = array<i32>} : memref<48x6xf32, #tpu.memory_space<vmem>>, vector<16x6xf32>,
    %c0_266 = arith.constant 0 : index
    %c0_267 = arith.constant 0 : index
    %251 = vector.load %arg22[%c0_266, %c0_267] : memref<48x6xf32, #tpu.memory_space<vmem>>, vector<48x6xf32>
    %c0_268 = arith.constant 0 : index
    %c0_269 = arith.constant 0 : index
    %252 = vector.load %arg9[%c0_268, %c0_269] : memref<8x48xf32, #tpu.memory_space<vmem>>, vector<8x48xf32>
    %cst_270 = arith.constant dense<0.000000e+00> : vector<8x6xf32>
    %253 = tpu.matmul %252, %251, %cst_270 {dimension_numbers = #tpu.dot_dimension_numbers<[1], [0], [0], [1], [0, 0, 1, 1], [], []>} : vector<8x48xf32>, vector<48x6xf32>, vector<8x6xf32> -> vector<8x6xf32>
    %c0_271 = arith.constant 0 : index
    %c0_272 = arith.constant 0 : index
    %254 = vector.load %arg10[%c0_271, %c0_272] : memref<8x1xf32, #tpu.memory_space<vmem>>, vector<8x1xf32>
    %255 = vector.broadcast %254 : vector<8x1xf32> to vector<8x6xf32>
    %256 = arith.addf %253, %255 : vector<8x6xf32>
    %257 = math.tanh %256 : vector<8x6xf32>
    %258 = arith.mulf %241, %220 : vector<8x6xf32>
    %cst_273 = arith.constant 1.000000e+00 : f32
    %259 = vector.broadcast %cst_273 : f32 to vector<8x6xf32>
    %260 = arith.subf %259, %241 : vector<8x6xf32>
    %261 = arith.mulf %260, %257 : vector<8x6xf32>
    %262 = arith.addf %258, %261 : vector<8x6xf32>
    %c0_274 = arith.constant 0 : index
    %c0_275 = arith.constant 0 : index
    %263 = vector.load %arg22[%c0_274, %c0_275] : memref<48x6xf32, #tpu.memory_space<vmem>>, vector<8x6xf32>
    tpu.vector_store %arg22[%c0_274, %c0_275], %135 {strides = array<i32>} : memref<48x6xf32, #tpu.memory_space<vmem>>, vector<8x6xf32>,
    %c8_276 = arith.constant 8 : index
    %c0_277 = arith.constant 0 : index
    %264 = vector.load %arg22[%c8_276, %c0_277] : memref<48x6xf32, #tpu.memory_space<vmem>>, vector<8x6xf32>
    tpu.vector_store %arg22[%c8_276, %c0_277], %262 {strides = array<i32>} : memref<48x6xf32, #tpu.memory_space<vmem>>, vector<8x6xf32>,
    %c0_278 = arith.constant 0 : index
    %c0_279 = arith.constant 0 : index
    %265 = vector.load %arg22[%c0_278, %c0_279] : memref<48x6xf32, #tpu.memory_space<vmem>>, vector<16x6xf32>
    %cst_280 = arith.constant dense<0.000000e+00> : vector<16x6xf32>
    %266 = tpu.matmul %265, %0, %cst_280 {dimension_numbers = #tpu.dot_dimension_numbers<[1], [0], [0], [1], [0, 0, 1, 1], [], []>} : vector<16x6xf32>, vector<6x6xf32>, vector<16x6xf32> -> vector<16x6xf32>
    %c16_281 = arith.constant 16 : index
    %c0_282 = arith.constant 0 : index
    %267 = vector.load %arg22[%c16_281, %c0_282] : memref<48x6xf32, #tpu.memory_space<vmem>>, vector<16x6xf32>
    tpu.vector_store %arg22[%c16_281, %c0_282], %266 {strides = array<i32>} : memref<48x6xf32, #tpu.memory_space<vmem>>, vector<16x6xf32>,
    %c16_283 = arith.constant 16 : index
    %c0_284 = arith.constant 0 : index
    %268 = vector.load %arg22[%c16_283, %c0_284] : memref<48x6xf32, #tpu.memory_space<vmem>>, vector<16x6xf32>
    %cst_285 = arith.constant dense<0.000000e+00> : vector<16x6xf32>
    %269 = tpu.matmul %268, %0, %cst_285 {dimension_numbers = #tpu.dot_dimension_numbers<[1], [0], [0], [1], [0, 0, 1, 1], [], []>} : vector<16x6xf32>, vector<6x6xf32>, vector<16x6xf32> -> vector<16x6xf32>
    %c32_286 = arith.constant 32 : index
    %c0_287 = arith.constant 0 : index
    %270 = vector.load %arg22[%c32_286, %c0_287] : memref<48x6xf32, #tpu.memory_space<vmem>>, vector<16x6xf32>
    tpu.vector_store %arg22[%c32_286, %c0_287], %269 {strides = array<i32>} : memref<48x6xf32, #tpu.memory_space<vmem>>, vector<16x6xf32>,
    %c0_288 = arith.constant 0 : index
    %c0_289 = arith.constant 0 : index
    %271 = vector.load %arg22[%c0_288, %c0_289] : memref<48x6xf32, #tpu.memory_space<vmem>>, vector<48x6xf32>
    %c0_290 = arith.constant 0 : index
    %c0_291 = arith.constant 0 : index
    %272 = vector.load %arg7[%c0_290, %c0_291] : memref<16x48xf32, #tpu.memory_space<vmem>>, vector<16x48xf32>
    %cst_292 = arith.constant dense<0.000000e+00> : vector<16x6xf32>
    %273 = tpu.matmul %272, %271, %cst_292 {dimension_numbers = #tpu.dot_dimension_numbers<[1], [0], [0], [1], [0, 0, 1, 1], [], []>} : vector<16x48xf32>, vector<48x6xf32>, vector<16x6xf32> -> vector<16x6xf32>
    %c0_293 = arith.constant 0 : index
    %c0_294 = arith.constant 0 : index
    %274 = vector.load %arg8[%c0_293, %c0_294] : memref<16x1xf32, #tpu.memory_space<vmem>>, vector<16x1xf32>
    %275 = vector.broadcast %274 : vector<16x1xf32> to vector<16x6xf32>
    %276 = arith.addf %273, %275 : vector<16x6xf32>
    %277 = arith.negf %276 : vector<16x6xf32>
    %278 = math.exp %277 : vector<16x6xf32>
    %cst_295 = arith.constant 1.000000e+00 : f32
    %279 = vector.broadcast %cst_295 : f32 to vector<16x6xf32>
    %280 = arith.addf %279, %278 : vector<16x6xf32>
    %281 = arith.divf %279, %280 : vector<16x6xf32>
    %282 = vector.extract_strided_slice %281 {offsets = [0, 0], sizes = [8, 6], strides = [1, 1]} : vector<16x6xf32> to vector<8x6xf32>
    %283 = vector.extract_strided_slice %281 {offsets = [8, 0], sizes = [8, 6], strides = [1, 1]} : vector<16x6xf32> to vector<8x6xf32>
    %284 = arith.mulf %282, %262 : vector<8x6xf32>
    %c0_296 = arith.constant 0 : index
    %c0_297 = arith.constant 0 : index
    %285 = vector.load %arg22[%c0_296, %c0_297] : memref<48x6xf32, #tpu.memory_space<vmem>>, vector<8x6xf32>
    tpu.vector_store %arg22[%c0_296, %c0_297], %135 {strides = array<i32>} : memref<48x6xf32, #tpu.memory_space<vmem>>, vector<8x6xf32>,
    %c8_298 = arith.constant 8 : index
    %c0_299 = arith.constant 0 : index
    %286 = vector.load %arg22[%c8_298, %c0_299] : memref<48x6xf32, #tpu.memory_space<vmem>>, vector<8x6xf32>
    tpu.vector_store %arg22[%c8_298, %c0_299], %284 {strides = array<i32>} : memref<48x6xf32, #tpu.memory_space<vmem>>, vector<8x6xf32>,
    %c0_300 = arith.constant 0 : index
    %c0_301 = arith.constant 0 : index
    %287 = vector.load %arg22[%c0_300, %c0_301] : memref<48x6xf32, #tpu.memory_space<vmem>>, vector<16x6xf32>
    %cst_302 = arith.constant dense<0.000000e+00> : vector<16x6xf32>
    %288 = tpu.matmul %287, %0, %cst_302 {dimension_numbers = #tpu.dot_dimension_numbers<[1], [0], [0], [1], [0, 0, 1, 1], [], []>} : vector<16x6xf32>, vector<6x6xf32>, vector<16x6xf32> -> vector<16x6xf32>
    %c16_303 = arith.constant 16 : index
    %c0_304 = arith.constant 0 : index
    %289 = vector.load %arg22[%c16_303, %c0_304] : memref<48x6xf32, #tpu.memory_space<vmem>>, vector<16x6xf32>
    tpu.vector_store %arg22[%c16_303, %c0_304], %288 {strides = array<i32>} : memref<48x6xf32, #tpu.memory_space<vmem>>, vector<16x6xf32>,
    %c16_305 = arith.constant 16 : index
    %c0_306 = arith.constant 0 : index
    %290 = vector.load %arg22[%c16_305, %c0_306] : memref<48x6xf32, #tpu.memory_space<vmem>>, vector<16x6xf32>
    %cst_307 = arith.constant dense<0.000000e+00> : vector<16x6xf32>
    %291 = tpu.matmul %290, %0, %cst_307 {dimension_numbers = #tpu.dot_dimension_numbers<[1], [0], [0], [1], [0, 0, 1, 1], [], []>} : vector<16x6xf32>, vector<6x6xf32>, vector<16x6xf32> -> vector<16x6xf32>
    %c32_308 = arith.constant 32 : index
    %c0_309 = arith.constant 0 : index
    %292 = vector.load %arg22[%c32_308, %c0_309] : memref<48x6xf32, #tpu.memory_space<vmem>>, vector<16x6xf32>
    tpu.vector_store %arg22[%c32_308, %c0_309], %291 {strides = array<i32>} : memref<48x6xf32, #tpu.memory_space<vmem>>, vector<16x6xf32>,
    %c0_310 = arith.constant 0 : index
    %c0_311 = arith.constant 0 : index
    %293 = vector.load %arg22[%c0_310, %c0_311] : memref<48x6xf32, #tpu.memory_space<vmem>>, vector<48x6xf32>
    %c0_312 = arith.constant 0 : index
    %c0_313 = arith.constant 0 : index
    %294 = vector.load %arg9[%c0_312, %c0_313] : memref<8x48xf32, #tpu.memory_space<vmem>>, vector<8x48xf32>
    %cst_314 = arith.constant dense<0.000000e+00> : vector<8x6xf32>
    %295 = tpu.matmul %294, %293, %cst_314 {dimension_numbers = #tpu.dot_dimension_numbers<[1], [0], [0], [1], [0, 0, 1, 1], [], []>} : vector<8x48xf32>, vector<48x6xf32>, vector<8x6xf32> -> vector<8x6xf32>
    %c0_315 = arith.constant 0 : index
    %c0_316 = arith.constant 0 : index
    %296 = vector.load %arg10[%c0_315, %c0_316] : memref<8x1xf32, #tpu.memory_space<vmem>>, vector<8x1xf32>
    %297 = vector.broadcast %296 : vector<8x1xf32> to vector<8x6xf32>
    %298 = arith.addf %295, %297 : vector<8x6xf32>
    %299 = math.tanh %298 : vector<8x6xf32>
    %300 = arith.mulf %283, %262 : vector<8x6xf32>
    %cst_317 = arith.constant 1.000000e+00 : f32
    %301 = vector.broadcast %cst_317 : f32 to vector<8x6xf32>
    %302 = arith.subf %301, %283 : vector<8x6xf32>
    %303 = arith.mulf %302, %299 : vector<8x6xf32>
    %304 = arith.addf %300, %303 : vector<8x6xf32>
    %c0_318 = arith.constant 0 : index
    %c0_319 = arith.constant 0 : index
    %305 = vector.load %arg22[%c0_318, %c0_319] : memref<48x6xf32, #tpu.memory_space<vmem>>, vector<8x6xf32>
    tpu.vector_store %arg22[%c0_318, %c0_319], %177 {strides = array<i32>} : memref<48x6xf32, #tpu.memory_space<vmem>>, vector<8x6xf32>,
    %c8_320 = arith.constant 8 : index
    %c0_321 = arith.constant 0 : index
    %306 = vector.load %arg22[%c8_320, %c0_321] : memref<48x6xf32, #tpu.memory_space<vmem>>, vector<8x6xf32>
    tpu.vector_store %arg22[%c8_320, %c0_321], %304 {strides = array<i32>} : memref<48x6xf32, #tpu.memory_space<vmem>>, vector<8x6xf32>,
    %c0_322 = arith.constant 0 : index
    %c0_323 = arith.constant 0 : index
    %307 = vector.load %arg22[%c0_322, %c0_323] : memref<48x6xf32, #tpu.memory_space<vmem>>, vector<16x6xf32>
    %cst_324 = arith.constant dense<0.000000e+00> : vector<16x6xf32>
    %308 = tpu.matmul %307, %0, %cst_324 {dimension_numbers = #tpu.dot_dimension_numbers<[1], [0], [0], [1], [0, 0, 1, 1], [], []>} : vector<16x6xf32>, vector<6x6xf32>, vector<16x6xf32> -> vector<16x6xf32>
    %c16_325 = arith.constant 16 : index
    %c0_326 = arith.constant 0 : index
    %309 = vector.load %arg22[%c16_325, %c0_326] : memref<48x6xf32, #tpu.memory_space<vmem>>, vector<16x6xf32>
    tpu.vector_store %arg22[%c16_325, %c0_326], %308 {strides = array<i32>} : memref<48x6xf32, #tpu.memory_space<vmem>>, vector<16x6xf32>,
    %c16_327 = arith.constant 16 : index
    %c0_328 = arith.constant 0 : index
    %310 = vector.load %arg22[%c16_327, %c0_328] : memref<48x6xf32, #tpu.memory_space<vmem>>, vector<16x6xf32>
    %cst_329 = arith.constant dense<0.000000e+00> : vector<16x6xf32>
    %311 = tpu.matmul %310, %0, %cst_329 {dimension_numbers = #tpu.dot_dimension_numbers<[1], [0], [0], [1], [0, 0, 1, 1], [], []>} : vector<16x6xf32>, vector<6x6xf32>, vector<16x6xf32> -> vector<16x6xf32>
    %c32_330 = arith.constant 32 : index
    %c0_331 = arith.constant 0 : index
    %312 = vector.load %arg22[%c32_330, %c0_331] : memref<48x6xf32, #tpu.memory_space<vmem>>, vector<16x6xf32>
    tpu.vector_store %arg22[%c32_330, %c0_331], %311 {strides = array<i32>} : memref<48x6xf32, #tpu.memory_space<vmem>>, vector<16x6xf32>,
    %c0_332 = arith.constant 0 : index
    %c0_333 = arith.constant 0 : index
    %313 = vector.load %arg22[%c0_332, %c0_333] : memref<48x6xf32, #tpu.memory_space<vmem>>, vector<48x6xf32>
    %c0_334 = arith.constant 0 : index
    %c0_335 = arith.constant 0 : index
    %314 = vector.load %arg7[%c0_334, %c0_335] : memref<16x48xf32, #tpu.memory_space<vmem>>, vector<16x48xf32>
    %cst_336 = arith.constant dense<0.000000e+00> : vector<16x6xf32>
    %315 = tpu.matmul %314, %313, %cst_336 {dimension_numbers = #tpu.dot_dimension_numbers<[1], [0], [0], [1], [0, 0, 1, 1], [], []>} : vector<16x48xf32>, vector<48x6xf32>, vector<16x6xf32> -> vector<16x6xf32>
    %c0_337 = arith.constant 0 : index
    %c0_338 = arith.constant 0 : index
    %316 = vector.load %arg8[%c0_337, %c0_338] : memref<16x1xf32, #tpu.memory_space<vmem>>, vector<16x1xf32>
    %317 = vector.broadcast %316 : vector<16x1xf32> to vector<16x6xf32>
    %318 = arith.addf %315, %317 : vector<16x6xf32>
    %319 = arith.negf %318 : vector<16x6xf32>
    %320 = math.exp %319 : vector<16x6xf32>
    %cst_339 = arith.constant 1.000000e+00 : f32
    %321 = vector.broadcast %cst_339 : f32 to vector<16x6xf32>
    %322 = arith.addf %321, %320 : vector<16x6xf32>
    %323 = arith.divf %321, %322 : vector<16x6xf32>
    %324 = vector.extract_strided_slice %323 {offsets = [0, 0], sizes = [8, 6], strides = [1, 1]} : vector<16x6xf32> to vector<8x6xf32>
    %325 = vector.extract_strided_slice %323 {offsets = [8, 0], sizes = [8, 6], strides = [1, 1]} : vector<16x6xf32> to vector<8x6xf32>
    %326 = arith.mulf %324, %304 : vector<8x6xf32>
    %c0_340 = arith.constant 0 : index
    %c0_341 = arith.constant 0 : index
    %327 = vector.load %arg22[%c0_340, %c0_341] : memref<48x6xf32, #tpu.memory_space<vmem>>, vector<8x6xf32>
    tpu.vector_store %arg22[%c0_340, %c0_341], %177 {strides = array<i32>} : memref<48x6xf32, #tpu.memory_space<vmem>>, vector<8x6xf32>,
    %c8_342 = arith.constant 8 : index
    %c0_343 = arith.constant 0 : index
    %328 = vector.load %arg22[%c8_342, %c0_343] : memref<48x6xf32, #tpu.memory_space<vmem>>, vector<8x6xf32>
    tpu.vector_store %arg22[%c8_342, %c0_343], %326 {strides = array<i32>} : memref<48x6xf32, #tpu.memory_space<vmem>>, vector<8x6xf32>,
    %c0_344 = arith.constant 0 : index
    %c0_345 = arith.constant 0 : index
    %329 = vector.load %arg22[%c0_344, %c0_345] : memref<48x6xf32, #tpu.memory_space<vmem>>, vector<16x6xf32>
    %cst_346 = arith.constant dense<0.000000e+00> : vector<16x6xf32>
    %330 = tpu.matmul %329, %0, %cst_346 {dimension_numbers = #tpu.dot_dimension_numbers<[1], [0], [0], [1], [0, 0, 1, 1], [], []>} : vector<16x6xf32>, vector<6x6xf32>, vector<16x6xf32> -> vector<16x6xf32>
    %c16_347 = arith.constant 16 : index
    %c0_348 = arith.constant 0 : index
    %331 = vector.load %arg22[%c16_347, %c0_348] : memref<48x6xf32, #tpu.memory_space<vmem>>, vector<16x6xf32>
    tpu.vector_store %arg22[%c16_347, %c0_348], %330 {strides = array<i32>} : memref<48x6xf32, #tpu.memory_space<vmem>>, vector<16x6xf32>,
    %c16_349 = arith.constant 16 : index
    %c0_350 = arith.constant 0 : index
    %332 = vector.load %arg22[%c16_349, %c0_350] : memref<48x6xf32, #tpu.memory_space<vmem>>, vector<16x6xf32>
    %cst_351 = arith.constant dense<0.000000e+00> : vector<16x6xf32>
    %333 = tpu.matmul %332, %0, %cst_351 {dimension_numbers = #tpu.dot_dimension_numbers<[1], [0], [0], [1], [0, 0, 1, 1], [], []>} : vector<16x6xf32>, vector<6x6xf32>, vector<16x6xf32> -> vector<16x6xf32>
    %c32_352 = arith.constant 32 : index
    %c0_353 = arith.constant 0 : index
    %334 = vector.load %arg22[%c32_352, %c0_353] : memref<48x6xf32, #tpu.memory_space<vmem>>, vector<16x6xf32>
    tpu.vector_store %arg22[%c32_352, %c0_353], %333 {strides = array<i32>} : memref<48x6xf32, #tpu.memory_space<vmem>>, vector<16x6xf32>,
    %c0_354 = arith.constant 0 : index
    %c0_355 = arith.constant 0 : index
    %335 = vector.load %arg22[%c0_354, %c0_355] : memref<48x6xf32, #tpu.memory_space<vmem>>, vector<48x6xf32>
    %c0_356 = arith.constant 0 : index
    %c0_357 = arith.constant 0 : index
    %336 = vector.load %arg9[%c0_356, %c0_357] : memref<8x48xf32, #tpu.memory_space<vmem>>, vector<8x48xf32>
    %cst_358 = arith.constant dense<0.000000e+00> : vector<8x6xf32>
    %337 = tpu.matmul %336, %335, %cst_358 {dimension_numbers = #tpu.dot_dimension_numbers<[1], [0], [0], [1], [0, 0, 1, 1], [], []>} : vector<8x48xf32>, vector<48x6xf32>, vector<8x6xf32> -> vector<8x6xf32>
    %c0_359 = arith.constant 0 : index
    %c0_360 = arith.constant 0 : index
    %338 = vector.load %arg10[%c0_359, %c0_360] : memref<8x1xf32, #tpu.memory_space<vmem>>, vector<8x1xf32>
    %339 = vector.broadcast %338 : vector<8x1xf32> to vector<8x6xf32>
    %340 = arith.addf %337, %339 : vector<8x6xf32>
    %341 = math.tanh %340 : vector<8x6xf32>
    %342 = arith.mulf %325, %304 : vector<8x6xf32>
    %cst_361 = arith.constant 1.000000e+00 : f32
    %343 = vector.broadcast %cst_361 : f32 to vector<8x6xf32>
    %344 = arith.subf %343, %325 : vector<8x6xf32>
    %345 = arith.mulf %344, %341 : vector<8x6xf32>
    %346 = arith.addf %342, %345 : vector<8x6xf32>
    %c0_362 = arith.constant 0 : index
    %c3_363 = arith.constant 3 : index
    %c0_364 = arith.constant 0 : index
    %c0_365 = arith.constant 0 : index
    %347 = vector.load %arg2[%c0_362, %c3_363, %c0_364, %c0_365] : memref<1x4x2x6xf32, #tpu.memory_space<vmem>>, vector<1x1x2x6xf32>
    %348 = vector.shape_cast %347 : vector<1x1x2x6xf32> to vector<2x6xf32>
    %349 = vector.extract_strided_slice %348 {offsets = [0, 0], sizes = [1, 6], strides = [1, 1]} : vector<2x6xf32> to vector<1x6xf32>
    %c0_366 = arith.constant 0 : index
    %c0_367 = arith.constant 0 : index
    %350 = vector.load %arg22[%c0_366, %c0_367] : memref<48x6xf32, #tpu.memory_space<vmem>>, vector<1x6xf32>
    tpu.vector_store %arg22[%c0_366, %c0_367], %349 {strides = array<i32>} : memref<48x6xf32, #tpu.memory_space<vmem>>, vector<1x6xf32>,
    %c1_368 = arith.constant 1 : index
    %c0_369 = arith.constant 0 : index
    %351 = vector.load %arg22[%c1_368, %c0_369] : memref<48x6xf32, #tpu.memory_space<vmem>>, vector<8x6xf32>
    tpu.vector_store %arg22[%c1_368, %c0_369], %177 {strides = array<i32>} : memref<48x6xf32, #tpu.memory_space<vmem>>, vector<8x6xf32>,
    %c0_370 = arith.constant 0 : index
    %c0_371 = arith.constant 0 : index
    %352 = vector.load %arg22[%c0_370, %c0_371] : memref<48x6xf32, #tpu.memory_space<vmem>>, vector<9x6xf32>
    %cst_372 = arith.constant dense<0.000000e+00> : vector<9x6xf32>
    %353 = tpu.matmul %352, %0, %cst_372 {dimension_numbers = #tpu.dot_dimension_numbers<[1], [0], [0], [1], [0, 0, 1, 1], [], []>} : vector<9x6xf32>, vector<6x6xf32>, vector<9x6xf32> -> vector<9x6xf32>
    %c9 = arith.constant 9 : index
    %c0_373 = arith.constant 0 : index
    %354 = vector.load %arg22[%c9, %c0_373] : memref<48x6xf32, #tpu.memory_space<vmem>>, vector<9x6xf32>
    tpu.vector_store %arg22[%c9, %c0_373], %353 {strides = array<i32>} : memref<48x6xf32, #tpu.memory_space<vmem>>, vector<9x6xf32>,
    %c9_374 = arith.constant 9 : index
    %c0_375 = arith.constant 0 : index
    %355 = vector.load %arg22[%c9_374, %c0_375] : memref<48x6xf32, #tpu.memory_space<vmem>>, vector<9x6xf32>
    %cst_376 = arith.constant dense<0.000000e+00> : vector<9x6xf32>
    %356 = tpu.matmul %355, %0, %cst_376 {dimension_numbers = #tpu.dot_dimension_numbers<[1], [0], [0], [1], [0, 0, 1, 1], [], []>} : vector<9x6xf32>, vector<6x6xf32>, vector<9x6xf32> -> vector<9x6xf32>
    %c18 = arith.constant 18 : index
    %c0_377 = arith.constant 0 : index
    %357 = vector.load %arg22[%c18, %c0_377] : memref<48x6xf32, #tpu.memory_space<vmem>>, vector<9x6xf32>
    tpu.vector_store %arg22[%c18, %c0_377], %356 {strides = array<i32>} : memref<48x6xf32, #tpu.memory_space<vmem>>, vector<9x6xf32>,
    %c0_378 = arith.constant 0 : index
    %c0_379 = arith.constant 0 : index
    %358 = vector.load %arg22[%c0_378, %c0_379] : memref<48x6xf32, #tpu.memory_space<vmem>>, vector<27x6xf32>
    %c0_380 = arith.constant 0 : index
    %c0_381 = arith.constant 0 : index
    %359 = vector.load %arg11[%c0_380, %c0_381] : memref<16x27xf32, #tpu.memory_space<vmem>>, vector<16x27xf32>
    %cst_382 = arith.constant dense<0.000000e+00> : vector<16x6xf32>
    %360 = tpu.matmul %359, %358, %cst_382 {dimension_numbers = #tpu.dot_dimension_numbers<[1], [0], [0], [1], [0, 0, 1, 1], [], []>} : vector<16x27xf32>, vector<27x6xf32>, vector<16x6xf32> -> vector<16x6xf32>
    %c0_383 = arith.constant 0 : index
    %c0_384 = arith.constant 0 : index
    %361 = vector.load %arg12[%c0_383, %c0_384] : memref<16x1xf32, #tpu.memory_space<vmem>>, vector<16x1xf32>
    %362 = vector.broadcast %361 : vector<16x1xf32> to vector<16x6xf32>
    %363 = arith.addf %360, %362 : vector<16x6xf32>
    %364 = arith.negf %363 : vector<16x6xf32>
    %365 = math.exp %364 : vector<16x6xf32>
    %cst_385 = arith.constant 1.000000e+00 : f32
    %366 = vector.broadcast %cst_385 : f32 to vector<16x6xf32>
    %367 = arith.addf %366, %365 : vector<16x6xf32>
    %368 = arith.divf %366, %367 : vector<16x6xf32>
    %369 = vector.extract_strided_slice %368 {offsets = [0, 0], sizes = [8, 6], strides = [1, 1]} : vector<16x6xf32> to vector<8x6xf32>
    %370 = vector.extract_strided_slice %368 {offsets = [8, 0], sizes = [8, 6], strides = [1, 1]} : vector<16x6xf32> to vector<8x6xf32>
    %371 = arith.mulf %369, %177 : vector<8x6xf32>
    %c0_386 = arith.constant 0 : index
    %c0_387 = arith.constant 0 : index
    %372 = vector.load %arg22[%c0_386, %c0_387] : memref<48x6xf32, #tpu.memory_space<vmem>>, vector<1x6xf32>
    tpu.vector_store %arg22[%c0_386, %c0_387], %349 {strides = array<i32>} : memref<48x6xf32, #tpu.memory_space<vmem>>, vector<1x6xf32>,
    %c1_388 = arith.constant 1 : index
    %c0_389 = arith.constant 0 : index
    %373 = vector.load %arg22[%c1_388, %c0_389] : memref<48x6xf32, #tpu.memory_space<vmem>>, vector<8x6xf32>
    tpu.vector_store %arg22[%c1_388, %c0_389], %371 {strides = array<i32>} : memref<48x6xf32, #tpu.memory_space<vmem>>, vector<8x6xf32>,
    %c0_390 = arith.constant 0 : index
    %c0_391 = arith.constant 0 : index
    %374 = vector.load %arg22[%c0_390, %c0_391] : memref<48x6xf32, #tpu.memory_space<vmem>>, vector<9x6xf32>
    %cst_392 = arith.constant dense<0.000000e+00> : vector<9x6xf32>
    %375 = tpu.matmul %374, %0, %cst_392 {dimension_numbers = #tpu.dot_dimension_numbers<[1], [0], [0], [1], [0, 0, 1, 1], [], []>} : vector<9x6xf32>, vector<6x6xf32>, vector<9x6xf32> -> vector<9x6xf32>
    %c9_393 = arith.constant 9 : index
    %c0_394 = arith.constant 0 : index
    %376 = vector.load %arg22[%c9_393, %c0_394] : memref<48x6xf32, #tpu.memory_space<vmem>>, vector<9x6xf32>
    tpu.vector_store %arg22[%c9_393, %c0_394], %375 {strides = array<i32>} : memref<48x6xf32, #tpu.memory_space<vmem>>, vector<9x6xf32>,
    %c9_395 = arith.constant 9 : index
    %c0_396 = arith.constant 0 : index
    %377 = vector.load %arg22[%c9_395, %c0_396] : memref<48x6xf32, #tpu.memory_space<vmem>>, vector<9x6xf32>
    %cst_397 = arith.constant dense<0.000000e+00> : vector<9x6xf32>
    %378 = tpu.matmul %377, %0, %cst_397 {dimension_numbers = #tpu.dot_dimension_numbers<[1], [0], [0], [1], [0, 0, 1, 1], [], []>} : vector<9x6xf32>, vector<6x6xf32>, vector<9x6xf32> -> vector<9x6xf32>
    %c18_398 = arith.constant 18 : index
    %c0_399 = arith.constant 0 : index
    %379 = vector.load %arg22[%c18_398, %c0_399] : memref<48x6xf32, #tpu.memory_space<vmem>>, vector<9x6xf32>
    tpu.vector_store %arg22[%c18_398, %c0_399], %378 {strides = array<i32>} : memref<48x6xf32, #tpu.memory_space<vmem>>, vector<9x6xf32>,
    %c0_400 = arith.constant 0 : index
    %c0_401 = arith.constant 0 : index
    %380 = vector.load %arg22[%c0_400, %c0_401] : memref<48x6xf32, #tpu.memory_space<vmem>>, vector<27x6xf32>
    %c0_402 = arith.constant 0 : index
    %c0_403 = arith.constant 0 : index
    %381 = vector.load %arg13[%c0_402, %c0_403] : memref<8x27xf32, #tpu.memory_space<vmem>>, vector<8x27xf32>
    %cst_404 = arith.constant dense<0.000000e+00> : vector<8x6xf32>
    %382 = tpu.matmul %381, %380, %cst_404 {dimension_numbers = #tpu.dot_dimension_numbers<[1], [0], [0], [1], [0, 0, 1, 1], [], []>} : vector<8x27xf32>, vector<27x6xf32>, vector<8x6xf32> -> vector<8x6xf32>
    %c0_405 = arith.constant 0 : index
    %c0_406 = arith.constant 0 : index
    %383 = vector.load %arg14[%c0_405, %c0_406] : memref<8x1xf32, #tpu.memory_space<vmem>>, vector<8x1xf32>
    %384 = vector.broadcast %383 : vector<8x1xf32> to vector<8x6xf32>
    %385 = arith.addf %382, %384 : vector<8x6xf32>
    %386 = math.tanh %385 : vector<8x6xf32>
    %387 = arith.mulf %370, %177 : vector<8x6xf32>
    %cst_407 = arith.constant 1.000000e+00 : f32
    %388 = vector.broadcast %cst_407 : f32 to vector<8x6xf32>
    %389 = arith.subf %388, %370 : vector<8x6xf32>
    %390 = arith.mulf %389, %386 : vector<8x6xf32>
    %391 = arith.addf %387, %390 : vector<8x6xf32>
    %c0_408 = arith.constant 0 : index
    %c0_409 = arith.constant 0 : index
    %392 = vector.load %arg22[%c0_408, %c0_409] : memref<48x6xf32, #tpu.memory_space<vmem>>, vector<8x6xf32>
    tpu.vector_store %arg22[%c0_408, %c0_409], %391 {strides = array<i32>} : memref<48x6xf32, #tpu.memory_space<vmem>>, vector<8x6xf32>,
    %c8_410 = arith.constant 8 : index
    %c0_411 = arith.constant 0 : index
    %393 = vector.load %arg22[%c8_410, %c0_411] : memref<48x6xf32, #tpu.memory_space<vmem>>, vector<8x6xf32>
    tpu.vector_store %arg22[%c8_410, %c0_411], %346 {strides = array<i32>} : memref<48x6xf32, #tpu.memory_space<vmem>>, vector<8x6xf32>,
    %c0_412 = arith.constant 0 : index
    %c0_413 = arith.constant 0 : index
    %394 = vector.load %arg22[%c0_412, %c0_413] : memref<48x6xf32, #tpu.memory_space<vmem>>, vector<16x6xf32>
    %cst_414 = arith.constant dense<0.000000e+00> : vector<16x6xf32>
    %395 = tpu.matmul %394, %0, %cst_414 {dimension_numbers = #tpu.dot_dimension_numbers<[1], [0], [0], [1], [0, 0, 1, 1], [], []>} : vector<16x6xf32>, vector<6x6xf32>, vector<16x6xf32> -> vector<16x6xf32>
    %c16_415 = arith.constant 16 : index
    %c0_416 = arith.constant 0 : index
    %396 = vector.load %arg22[%c16_415, %c0_416] : memref<48x6xf32, #tpu.memory_space<vmem>>, vector<16x6xf32>
    tpu.vector_store %arg22[%c16_415, %c0_416], %395 {strides = array<i32>} : memref<48x6xf32, #tpu.memory_space<vmem>>, vector<16x6xf32>,
    %c16_417 = arith.constant 16 : index
    %c0_418 = arith.constant 0 : index
    %397 = vector.load %arg22[%c16_417, %c0_418] : memref<48x6xf32, #tpu.memory_space<vmem>>, vector<16x6xf32>
    %cst_419 = arith.constant dense<0.000000e+00> : vector<16x6xf32>
    %398 = tpu.matmul %397, %0, %cst_419 {dimension_numbers = #tpu.dot_dimension_numbers<[1], [0], [0], [1], [0, 0, 1, 1], [], []>} : vector<16x6xf32>, vector<6x6xf32>, vector<16x6xf32> -> vector<16x6xf32>
    %c32_420 = arith.constant 32 : index
    %c0_421 = arith.constant 0 : index
    %399 = vector.load %arg22[%c32_420, %c0_421] : memref<48x6xf32, #tpu.memory_space<vmem>>, vector<16x6xf32>
    tpu.vector_store %arg22[%c32_420, %c0_421], %398 {strides = array<i32>} : memref<48x6xf32, #tpu.memory_space<vmem>>, vector<16x6xf32>,
    %c0_422 = arith.constant 0 : index
    %c0_423 = arith.constant 0 : index
    %400 = vector.load %arg22[%c0_422, %c0_423] : memref<48x6xf32, #tpu.memory_space<vmem>>, vector<48x6xf32>
    %c0_424 = arith.constant 0 : index
    %c0_425 = arith.constant 0 : index
    %401 = vector.load %arg15[%c0_424, %c0_425] : memref<16x48xf32, #tpu.memory_space<vmem>>, vector<16x48xf32>
    %cst_426 = arith.constant dense<0.000000e+00> : vector<16x6xf32>
    %402 = tpu.matmul %401, %400, %cst_426 {dimension_numbers = #tpu.dot_dimension_numbers<[1], [0], [0], [1], [0, 0, 1, 1], [], []>} : vector<16x48xf32>, vector<48x6xf32>, vector<16x6xf32> -> vector<16x6xf32>
    %c0_427 = arith.constant 0 : index
    %c0_428 = arith.constant 0 : index
    %403 = vector.load %arg16[%c0_427, %c0_428] : memref<16x1xf32, #tpu.memory_space<vmem>>, vector<16x1xf32>
    %404 = vector.broadcast %403 : vector<16x1xf32> to vector<16x6xf32>
    %405 = arith.addf %402, %404 : vector<16x6xf32>
    %406 = arith.negf %405 : vector<16x6xf32>
    %407 = math.exp %406 : vector<16x6xf32>
    %cst_429 = arith.constant 1.000000e+00 : f32
    %408 = vector.broadcast %cst_429 : f32 to vector<16x6xf32>
    %409 = arith.addf %408, %407 : vector<16x6xf32>
    %410 = arith.divf %408, %409 : vector<16x6xf32>
    %411 = vector.extract_strided_slice %410 {offsets = [0, 0], sizes = [8, 6], strides = [1, 1]} : vector<16x6xf32> to vector<8x6xf32>
    %412 = vector.extract_strided_slice %410 {offsets = [8, 0], sizes = [8, 6], strides = [1, 1]} : vector<16x6xf32> to vector<8x6xf32>
    %413 = arith.mulf %411, %346 : vector<8x6xf32>
    %c0_430 = arith.constant 0 : index
    %c0_431 = arith.constant 0 : index
    %414 = vector.load %arg22[%c0_430, %c0_431] : memref<48x6xf32, #tpu.memory_space<vmem>>, vector<8x6xf32>
    tpu.vector_store %arg22[%c0_430, %c0_431], %391 {strides = array<i32>} : memref<48x6xf32, #tpu.memory_space<vmem>>, vector<8x6xf32>,
    %c8_432 = arith.constant 8 : index
    %c0_433 = arith.constant 0 : index
    %415 = vector.load %arg22[%c8_432, %c0_433] : memref<48x6xf32, #tpu.memory_space<vmem>>, vector<8x6xf32>
    tpu.vector_store %arg22[%c8_432, %c0_433], %413 {strides = array<i32>} : memref<48x6xf32, #tpu.memory_space<vmem>>, vector<8x6xf32>,
    %c0_434 = arith.constant 0 : index
    %c0_435 = arith.constant 0 : index
    %416 = vector.load %arg22[%c0_434, %c0_435] : memref<48x6xf32, #tpu.memory_space<vmem>>, vector<16x6xf32>
    %cst_436 = arith.constant dense<0.000000e+00> : vector<16x6xf32>
    %417 = tpu.matmul %416, %0, %cst_436 {dimension_numbers = #tpu.dot_dimension_numbers<[1], [0], [0], [1], [0, 0, 1, 1], [], []>} : vector<16x6xf32>, vector<6x6xf32>, vector<16x6xf32> -> vector<16x6xf32>
    %c16_437 = arith.constant 16 : index
    %c0_438 = arith.constant 0 : index
    %418 = vector.load %arg22[%c16_437, %c0_438] : memref<48x6xf32, #tpu.memory_space<vmem>>, vector<16x6xf32>
    tpu.vector_store %arg22[%c16_437, %c0_438], %417 {strides = array<i32>} : memref<48x6xf32, #tpu.memory_space<vmem>>, vector<16x6xf32>,
    %c16_439 = arith.constant 16 : index
    %c0_440 = arith.constant 0 : index
    %419 = vector.load %arg22[%c16_439, %c0_440] : memref<48x6xf32, #tpu.memory_space<vmem>>, vector<16x6xf32>
    %cst_441 = arith.constant dense<0.000000e+00> : vector<16x6xf32>
    %420 = tpu.matmul %419, %0, %cst_441 {dimension_numbers = #tpu.dot_dimension_numbers<[1], [0], [0], [1], [0, 0, 1, 1], [], []>} : vector<16x6xf32>, vector<6x6xf32>, vector<16x6xf32> -> vector<16x6xf32>
    %c32_442 = arith.constant 32 : index
    %c0_443 = arith.constant 0 : index
    %421 = vector.load %arg22[%c32_442, %c0_443] : memref<48x6xf32, #tpu.memory_space<vmem>>, vector<16x6xf32>
    tpu.vector_store %arg22[%c32_442, %c0_443], %420 {strides = array<i32>} : memref<48x6xf32, #tpu.memory_space<vmem>>, vector<16x6xf32>,
    %c0_444 = arith.constant 0 : index
    %c0_445 = arith.constant 0 : index
    %422 = vector.load %arg22[%c0_444, %c0_445] : memref<48x6xf32, #tpu.memory_space<vmem>>, vector<48x6xf32>
    %c0_446 = arith.constant 0 : index
    %c0_447 = arith.constant 0 : index
    %423 = vector.load %arg17[%c0_446, %c0_447] : memref<8x48xf32, #tpu.memory_space<vmem>>, vector<8x48xf32>
    %cst_448 = arith.constant dense<0.000000e+00> : vector<8x6xf32>
    %424 = tpu.matmul %423, %422, %cst_448 {dimension_numbers = #tpu.dot_dimension_numbers<[1], [0], [0], [1], [0, 0, 1, 1], [], []>} : vector<8x48xf32>, vector<48x6xf32>, vector<8x6xf32> -> vector<8x6xf32>
    %c0_449 = arith.constant 0 : index
    %c0_450 = arith.constant 0 : index
    %425 = vector.load %arg18[%c0_449, %c0_450] : memref<8x1xf32, #tpu.memory_space<vmem>>, vector<8x1xf32>
    %426 = vector.broadcast %425 : vector<8x1xf32> to vector<8x6xf32>
    %427 = arith.addf %424, %426 : vector<8x6xf32>
    %428 = math.tanh %427 : vector<8x6xf32>
    %429 = arith.mulf %412, %346 : vector<8x6xf32>
    %cst_451 = arith.constant 1.000000e+00 : f32
    %430 = vector.broadcast %cst_451 : f32 to vector<8x6xf32>
    %431 = arith.subf %430, %412 : vector<8x6xf32>
    %432 = arith.mulf %431, %428 : vector<8x6xf32>
    %433 = arith.addf %429, %432 : vector<8x6xf32>
    %c0_452 = arith.constant 0 : index
    %c0_453 = arith.constant 0 : index
    %434 = vector.load %arg19[%c0_452, %c0_453] : memref<1x8xf32, #tpu.memory_space<vmem>>, vector<1x8xf32>
    %cst_454 = arith.constant dense<0.000000e+00> : vector<1x6xf32>
    %435 = tpu.matmul %434, %433, %cst_454 {dimension_numbers = #tpu.dot_dimension_numbers<[1], [0], [0], [1], [0, 0, 1, 1], [], []>} : vector<1x8xf32>, vector<8x6xf32>, vector<1x6xf32> -> vector<1x6xf32>
    %c0_455 = arith.constant 0 : index
    %c0_456 = arith.constant 0 : index
    %436 = vector.load %arg20[%c0_455, %c0_456] : memref<1x1xf32, #tpu.memory_space<vmem>>, vector<1x1xf32>
    %437 = vector.broadcast %436 : vector<1x1xf32> to vector<1x6xf32>
    %438 = arith.addf %435, %437 : vector<1x6xf32>
    %c0_457 = arith.constant 0 : index
    %c0_458 = arith.constant 0 : index
    %c0_459 = arith.constant 0 : index
    %c0_460 = arith.constant 0 : index
    %439 = vector.load %arg21[%c0_457, %c0_458, %c0_459, %c0_460] : memref<1x3x1x6xf32, #tpu.memory_space<vmem>>, vector<1x1x1x6xf32>
    %440 = vector.shape_cast %439 : vector<1x1x1x6xf32> to vector<1x6xf32>
    %441 = vector.shape_cast %438 : vector<1x6xf32> to vector<1x1x1x6xf32>
    tpu.vector_store %arg21[%c0_457, %c0_458, %c0_459, %c0_460], %441 {strides = array<i32>} : memref<1x3x1x6xf32, #tpu.memory_space<vmem>>, vector<1x1x1x6xf32>,
    %c0_461 = arith.constant 0 : index
    %c0_462 = arith.constant 0 : index
    %442 = vector.load %arg22[%c0_461, %c0_462] : memref<48x6xf32, #tpu.memory_space<vmem>>, vector<1x6xf32>
    tpu.vector_store %arg22[%c0_461, %c0_462], %438 {strides = array<i32>} : memref<48x6xf32, #tpu.memory_space<vmem>>, vector<1x6xf32>,
    %c1_463 = arith.constant 1 : index
    %c0_464 = arith.constant 0 : index
    %443 = vector.load %arg22[%c1_463, %c0_464] : memref<48x6xf32, #tpu.memory_space<vmem>>, vector<8x6xf32>
    tpu.vector_store %arg22[%c1_463, %c0_464], %391 {strides = array<i32>} : memref<48x6xf32, #tpu.memory_space<vmem>>, vector<8x6xf32>,
    %c0_465 = arith.constant 0 : index
    %c0_466 = arith.constant 0 : index
    %444 = vector.load %arg22[%c0_465, %c0_466] : memref<48x6xf32, #tpu.memory_space<vmem>>, vector<9x6xf32>
    %cst_467 = arith.constant dense<0.000000e+00> : vector<9x6xf32>
    %445 = tpu.matmul %444, %0, %cst_467 {dimension_numbers = #tpu.dot_dimension_numbers<[1], [0], [0], [1], [0, 0, 1, 1], [], []>} : vector<9x6xf32>, vector<6x6xf32>, vector<9x6xf32> -> vector<9x6xf32>
    %c9_468 = arith.constant 9 : index
    %c0_469 = arith.constant 0 : index
    %446 = vector.load %arg22[%c9_468, %c0_469] : memref<48x6xf32, #tpu.memory_space<vmem>>, vector<9x6xf32>
    tpu.vector_store %arg22[%c9_468, %c0_469], %445 {strides = array<i32>} : memref<48x6xf32, #tpu.memory_space<vmem>>, vector<9x6xf32>,
    %c9_470 = arith.constant 9 : index
    %c0_471 = arith.constant 0 : index
    %447 = vector.load %arg22[%c9_470, %c0_471] : memref<48x6xf32, #tpu.memory_space<vmem>>, vector<9x6xf32>
    %cst_472 = arith.constant dense<0.000000e+00> : vector<9x6xf32>
    %448 = tpu.matmul %447, %0, %cst_472 {dimension_numbers = #tpu.dot_dimension_numbers<[1], [0], [0], [1], [0, 0, 1, 1], [], []>} : vector<9x6xf32>, vector<6x6xf32>, vector<9x6xf32> -> vector<9x6xf32>
    %c18_473 = arith.constant 18 : index
    %c0_474 = arith.constant 0 : index
    %449 = vector.load %arg22[%c18_473, %c0_474] : memref<48x6xf32, #tpu.memory_space<vmem>>, vector<9x6xf32>
    tpu.vector_store %arg22[%c18_473, %c0_474], %448 {strides = array<i32>} : memref<48x6xf32, #tpu.memory_space<vmem>>, vector<9x6xf32>,
    %c0_475 = arith.constant 0 : index
    %c0_476 = arith.constant 0 : index
    %450 = vector.load %arg22[%c0_475, %c0_476] : memref<48x6xf32, #tpu.memory_space<vmem>>, vector<27x6xf32>
    %c0_477 = arith.constant 0 : index
    %c0_478 = arith.constant 0 : index
    %451 = vector.load %arg11[%c0_477, %c0_478] : memref<16x27xf32, #tpu.memory_space<vmem>>, vector<16x27xf32>
    %cst_479 = arith.constant dense<0.000000e+00> : vector<16x6xf32>
    %452 = tpu.matmul %451, %450, %cst_479 {dimension_numbers = #tpu.dot_dimension_numbers<[1], [0], [0], [1], [0, 0, 1, 1], [], []>} : vector<16x27xf32>, vector<27x6xf32>, vector<16x6xf32> -> vector<16x6xf32>
    %c0_480 = arith.constant 0 : index
    %c0_481 = arith.constant 0 : index
    %453 = vector.load %arg12[%c0_480, %c0_481] : memref<16x1xf32, #tpu.memory_space<vmem>>, vector<16x1xf32>
    %454 = vector.broadcast %453 : vector<16x1xf32> to vector<16x6xf32>
    %455 = arith.addf %452, %454 : vector<16x6xf32>
    %456 = arith.negf %455 : vector<16x6xf32>
    %457 = math.exp %456 : vector<16x6xf32>
    %cst_482 = arith.constant 1.000000e+00 : f32
    %458 = vector.broadcast %cst_482 : f32 to vector<16x6xf32>
    %459 = arith.addf %458, %457 : vector<16x6xf32>
    %460 = arith.divf %458, %459 : vector<16x6xf32>
    %461 = vector.extract_strided_slice %460 {offsets = [0, 0], sizes = [8, 6], strides = [1, 1]} : vector<16x6xf32> to vector<8x6xf32>
    %462 = vector.extract_strided_slice %460 {offsets = [8, 0], sizes = [8, 6], strides = [1, 1]} : vector<16x6xf32> to vector<8x6xf32>
    %463 = arith.mulf %461, %391 : vector<8x6xf32>
    %c0_483 = arith.constant 0 : index
    %c0_484 = arith.constant 0 : index
    %464 = vector.load %arg22[%c0_483, %c0_484] : memref<48x6xf32, #tpu.memory_space<vmem>>, vector<1x6xf32>
    tpu.vector_store %arg22[%c0_483, %c0_484], %438 {strides = array<i32>} : memref<48x6xf32, #tpu.memory_space<vmem>>, vector<1x6xf32>,
    %c1_485 = arith.constant 1 : index
    %c0_486 = arith.constant 0 : index
    %465 = vector.load %arg22[%c1_485, %c0_486] : memref<48x6xf32, #tpu.memory_space<vmem>>, vector<8x6xf32>
    tpu.vector_store %arg22[%c1_485, %c0_486], %463 {strides = array<i32>} : memref<48x6xf32, #tpu.memory_space<vmem>>, vector<8x6xf32>,
    %c0_487 = arith.constant 0 : index
    %c0_488 = arith.constant 0 : index
    %466 = vector.load %arg22[%c0_487, %c0_488] : memref<48x6xf32, #tpu.memory_space<vmem>>, vector<9x6xf32>
    %cst_489 = arith.constant dense<0.000000e+00> : vector<9x6xf32>
    %467 = tpu.matmul %466, %0, %cst_489 {dimension_numbers = #tpu.dot_dimension_numbers<[1], [0], [0], [1], [0, 0, 1, 1], [], []>} : vector<9x6xf32>, vector<6x6xf32>, vector<9x6xf32> -> vector<9x6xf32>
    %c9_490 = arith.constant 9 : index
    %c0_491 = arith.constant 0 : index
    %468 = vector.load %arg22[%c9_490, %c0_491] : memref<48x6xf32, #tpu.memory_space<vmem>>, vector<9x6xf32>
    tpu.vector_store %arg22[%c9_490, %c0_491], %467 {strides = array<i32>} : memref<48x6xf32, #tpu.memory_space<vmem>>, vector<9x6xf32>,
    %c9_492 = arith.constant 9 : index
    %c0_493 = arith.constant 0 : index
    %469 = vector.load %arg22[%c9_492, %c0_493] : memref<48x6xf32, #tpu.memory_space<vmem>>, vector<9x6xf32>
    %cst_494 = arith.constant dense<0.000000e+00> : vector<9x6xf32>
    %470 = tpu.matmul %469, %0, %cst_494 {dimension_numbers = #tpu.dot_dimension_numbers<[1], [0], [0], [1], [0, 0, 1, 1], [], []>} : vector<9x6xf32>, vector<6x6xf32>, vector<9x6xf32> -> vector<9x6xf32>
    %c18_495 = arith.constant 18 : index
    %c0_496 = arith.constant 0 : index
    %471 = vector.load %arg22[%c18_495, %c0_496] : memref<48x6xf32, #tpu.memory_space<vmem>>, vector<9x6xf32>
    tpu.vector_store %arg22[%c18_495, %c0_496], %470 {strides = array<i32>} : memref<48x6xf32, #tpu.memory_space<vmem>>, vector<9x6xf32>,
    %c0_497 = arith.constant 0 : index
    %c0_498 = arith.constant 0 : index
    %472 = vector.load %arg22[%c0_497, %c0_498] : memref<48x6xf32, #tpu.memory_space<vmem>>, vector<27x6xf32>
    %c0_499 = arith.constant 0 : index
    %c0_500 = arith.constant 0 : index
    %473 = vector.load %arg13[%c0_499, %c0_500] : memref<8x27xf32, #tpu.memory_space<vmem>>, vector<8x27xf32>
    %cst_501 = arith.constant dense<0.000000e+00> : vector<8x6xf32>
    %474 = tpu.matmul %473, %472, %cst_501 {dimension_numbers = #tpu.dot_dimension_numbers<[1], [0], [0], [1], [0, 0, 1, 1], [], []>} : vector<8x27xf32>, vector<27x6xf32>, vector<8x6xf32> -> vector<8x6xf32>
    %c0_502 = arith.constant 0 : index
    %c0_503 = arith.constant 0 : index
    %475 = vector.load %arg14[%c0_502, %c0_503] : memref<8x1xf32, #tpu.memory_space<vmem>>, vector<8x1xf32>
    %476 = vector.broadcast %475 : vector<8x1xf32> to vector<8x6xf32>
    %477 = arith.addf %474, %476 : vector<8x6xf32>
    %478 = math.tanh %477 : vector<8x6xf32>
    %479 = arith.mulf %462, %391 : vector<8x6xf32>
    %cst_504 = arith.constant 1.000000e+00 : f32
    %480 = vector.broadcast %cst_504 : f32 to vector<8x6xf32>
    %481 = arith.subf %480, %462 : vector<8x6xf32>
    %482 = arith.mulf %481, %478 : vector<8x6xf32>
    %483 = arith.addf %479, %482 : vector<8x6xf32>
    %c0_505 = arith.constant 0 : index
    %c0_506 = arith.constant 0 : index
    %484 = vector.load %arg22[%c0_505, %c0_506] : memref<48x6xf32, #tpu.memory_space<vmem>>, vector<8x6xf32>
    tpu.vector_store %arg22[%c0_505, %c0_506], %483 {strides = array<i32>} : memref<48x6xf32, #tpu.memory_space<vmem>>, vector<8x6xf32>,
    %c8_507 = arith.constant 8 : index
    %c0_508 = arith.constant 0 : index
    %485 = vector.load %arg22[%c8_507, %c0_508] : memref<48x6xf32, #tpu.memory_space<vmem>>, vector<8x6xf32>
    tpu.vector_store %arg22[%c8_507, %c0_508], %433 {strides = array<i32>} : memref<48x6xf32, #tpu.memory_space<vmem>>, vector<8x6xf32>,
    %c0_509 = arith.constant 0 : index
    %c0_510 = arith.constant 0 : index
    %486 = vector.load %arg22[%c0_509, %c0_510] : memref<48x6xf32, #tpu.memory_space<vmem>>, vector<16x6xf32>
    %cst_511 = arith.constant dense<0.000000e+00> : vector<16x6xf32>
    %487 = tpu.matmul %486, %0, %cst_511 {dimension_numbers = #tpu.dot_dimension_numbers<[1], [0], [0], [1], [0, 0, 1, 1], [], []>} : vector<16x6xf32>, vector<6x6xf32>, vector<16x6xf32> -> vector<16x6xf32>
    %c16_512 = arith.constant 16 : index
    %c0_513 = arith.constant 0 : index
    %488 = vector.load %arg22[%c16_512, %c0_513] : memref<48x6xf32, #tpu.memory_space<vmem>>, vector<16x6xf32>
    tpu.vector_store %arg22[%c16_512, %c0_513], %487 {strides = array<i32>} : memref<48x6xf32, #tpu.memory_space<vmem>>, vector<16x6xf32>,
    %c16_514 = arith.constant 16 : index
    %c0_515 = arith.constant 0 : index
    %489 = vector.load %arg22[%c16_514, %c0_515] : memref<48x6xf32, #tpu.memory_space<vmem>>, vector<16x6xf32>
    %cst_516 = arith.constant dense<0.000000e+00> : vector<16x6xf32>
    %490 = tpu.matmul %489, %0, %cst_516 {dimension_numbers = #tpu.dot_dimension_numbers<[1], [0], [0], [1], [0, 0, 1, 1], [], []>} : vector<16x6xf32>, vector<6x6xf32>, vector<16x6xf32> -> vector<16x6xf32>
    %c32_517 = arith.constant 32 : index
    %c0_518 = arith.constant 0 : index
    %491 = vector.load %arg22[%c32_517, %c0_518] : memref<48x6xf32, #tpu.memory_space<vmem>>, vector<16x6xf32>
    tpu.vector_store %arg22[%c32_517, %c0_518], %490 {strides = array<i32>} : memref<48x6xf32, #tpu.memory_space<vmem>>, vector<16x6xf32>,
    %c0_519 = arith.constant 0 : index
    %c0_520 = arith.constant 0 : index
    %492 = vector.load %arg22[%c0_519, %c0_520] : memref<48x6xf32, #tpu.memory_space<vmem>>, vector<48x6xf32>
    %c0_521 = arith.constant 0 : index
    %c0_522 = arith.constant 0 : index
    %493 = vector.load %arg15[%c0_521, %c0_522] : memref<16x48xf32, #tpu.memory_space<vmem>>, vector<16x48xf32>
    %cst_523 = arith.constant dense<0.000000e+00> : vector<16x6xf32>
    %494 = tpu.matmul %493, %492, %cst_523 {dimension_numbers = #tpu.dot_dimension_numbers<[1], [0], [0], [1], [0, 0, 1, 1], [], []>} : vector<16x48xf32>, vector<48x6xf32>, vector<16x6xf32> -> vector<16x6xf32>
    %c0_524 = arith.constant 0 : index
    %c0_525 = arith.constant 0 : index
    %495 = vector.load %arg16[%c0_524, %c0_525] : memref<16x1xf32, #tpu.memory_space<vmem>>, vector<16x1xf32>
    %496 = vector.broadcast %495 : vector<16x1xf32> to vector<16x6xf32>
    %497 = arith.addf %494, %496 : vector<16x6xf32>
    %498 = arith.negf %497 : vector<16x6xf32>
    %499 = math.exp %498 : vector<16x6xf32>
    %cst_526 = arith.constant 1.000000e+00 : f32
    %500 = vector.broadcast %cst_526 : f32 to vector<16x6xf32>
    %501 = arith.addf %500, %499 : vector<16x6xf32>
    %502 = arith.divf %500, %501 : vector<16x6xf32>
    %503 = vector.extract_strided_slice %502 {offsets = [0, 0], sizes = [8, 6], strides = [1, 1]} : vector<16x6xf32> to vector<8x6xf32>
    %504 = vector.extract_strided_slice %502 {offsets = [8, 0], sizes = [8, 6], strides = [1, 1]} : vector<16x6xf32> to vector<8x6xf32>
    %505 = arith.mulf %503, %433 : vector<8x6xf32>
    %c0_527 = arith.constant 0 : index
    %c0_528 = arith.constant 0 : index
    %506 = vector.load %arg22[%c0_527, %c0_528] : memref<48x6xf32, #tpu.memory_space<vmem>>, vector<8x6xf32>
    tpu.vector_store %arg22[%c0_527, %c0_528], %483 {strides = array<i32>} : memref<48x6xf32, #tpu.memory_space<vmem>>, vector<8x6xf32>,
    %c8_529 = arith.constant 8 : index
    %c0_530 = arith.constant 0 : index
    %507 = vector.load %arg22[%c8_529, %c0_530] : memref<48x6xf32, #tpu.memory_space<vmem>>, vector<8x6xf32>
    tpu.vector_store %arg22[%c8_529, %c0_530], %505 {strides = array<i32>} : memref<48x6xf32, #tpu.memory_space<vmem>>, vector<8x6xf32>,
    %c0_531 = arith.constant 0 : index
    %c0_532 = arith.constant 0 : index
    %508 = vector.load %arg22[%c0_531, %c0_532] : memref<48x6xf32, #tpu.memory_space<vmem>>, vector<16x6xf32>
    %cst_533 = arith.constant dense<0.000000e+00> : vector<16x6xf32>
    %509 = tpu.matmul %508, %0, %cst_533 {dimension_numbers = #tpu.dot_dimension_numbers<[1], [0], [0], [1], [0, 0, 1, 1], [], []>} : vector<16x6xf32>, vector<6x6xf32>, vector<16x6xf32> -> vector<16x6xf32>
    %c16_534 = arith.constant 16 : index
    %c0_535 = arith.constant 0 : index
    %510 = vector.load %arg22[%c16_534, %c0_535] : memref<48x6xf32, #tpu.memory_space<vmem>>, vector<16x6xf32>
    tpu.vector_store %arg22[%c16_534, %c0_535], %509 {strides = array<i32>} : memref<48x6xf32, #tpu.memory_space<vmem>>, vector<16x6xf32>,
    %c16_536 = arith.constant 16 : index
    %c0_537 = arith.constant 0 : index
    %511 = vector.load %arg22[%c16_536, %c0_537] : memref<48x6xf32, #tpu.memory_space<vmem>>, vector<16x6xf32>
    %cst_538 = arith.constant dense<0.000000e+00> : vector<16x6xf32>
    %512 = tpu.matmul %511, %0, %cst_538 {dimension_numbers = #tpu.dot_dimension_numbers<[1], [0], [0], [1], [0, 0, 1, 1], [], []>} : vector<16x6xf32>, vector<6x6xf32>, vector<16x6xf32> -> vector<16x6xf32>
    %c32_539 = arith.constant 32 : index
    %c0_540 = arith.constant 0 : index
    %513 = vector.load %arg22[%c32_539, %c0_540] : memref<48x6xf32, #tpu.memory_space<vmem>>, vector<16x6xf32>
    tpu.vector_store %arg22[%c32_539, %c0_540], %512 {strides = array<i32>} : memref<48x6xf32, #tpu.memory_space<vmem>>, vector<16x6xf32>,
    %c0_541 = arith.constant 0 : index
    %c0_542 = arith.constant 0 : index
    %514 = vector.load %arg22[%c0_541, %c0_542] : memref<48x6xf32, #tpu.memory_space<vmem>>, vector<48x6xf32>
    %c0_543 = arith.constant 0 : index
    %c0_544 = arith.constant 0 : index
    %515 = vector.load %arg17[%c0_543, %c0_544] : memref<8x48xf32, #tpu.memory_space<vmem>>, vector<8x48xf32>
    %cst_545 = arith.constant dense<0.000000e+00> : vector<8x6xf32>
    %516 = tpu.matmul %515, %514, %cst_545 {dimension_numbers = #tpu.dot_dimension_numbers<[1], [0], [0], [1], [0, 0, 1, 1], [], []>} : vector<8x48xf32>, vector<48x6xf32>, vector<8x6xf32> -> vector<8x6xf32>
    %c0_546 = arith.constant 0 : index
    %c0_547 = arith.constant 0 : index
    %517 = vector.load %arg18[%c0_546, %c0_547] : memref<8x1xf32, #tpu.memory_space<vmem>>, vector<8x1xf32>
    %518 = vector.broadcast %517 : vector<8x1xf32> to vector<8x6xf32>
    %519 = arith.addf %516, %518 : vector<8x6xf32>
    %520 = math.tanh %519 : vector<8x6xf32>
    %521 = arith.mulf %504, %433 : vector<8x6xf32>
    %cst_548 = arith.constant 1.000000e+00 : f32
    %522 = vector.broadcast %cst_548 : f32 to vector<8x6xf32>
    %523 = arith.subf %522, %504 : vector<8x6xf32>
    %524 = arith.mulf %523, %520 : vector<8x6xf32>
    %525 = arith.addf %521, %524 : vector<8x6xf32>
    %c0_549 = arith.constant 0 : index
    %c0_550 = arith.constant 0 : index
    %526 = vector.load %arg19[%c0_549, %c0_550] : memref<1x8xf32, #tpu.memory_space<vmem>>, vector<1x8xf32>
    %cst_551 = arith.constant dense<0.000000e+00> : vector<1x6xf32>
    %527 = tpu.matmul %526, %525, %cst_551 {dimension_numbers = #tpu.dot_dimension_numbers<[1], [0], [0], [1], [0, 0, 1, 1], [], []>} : vector<1x8xf32>, vector<8x6xf32>, vector<1x6xf32> -> vector<1x6xf32>
    %c0_552 = arith.constant 0 : index
    %c0_553 = arith.constant 0 : index
    %528 = vector.load %arg20[%c0_552, %c0_553] : memref<1x1xf32, #tpu.memory_space<vmem>>, vector<1x1xf32>
    %529 = vector.broadcast %528 : vector<1x1xf32> to vector<1x6xf32>
    %530 = arith.addf %527, %529 : vector<1x6xf32>
    %c0_554 = arith.constant 0 : index
    %c1_555 = arith.constant 1 : index
    %c0_556 = arith.constant 0 : index
    %c0_557 = arith.constant 0 : index
    %531 = vector.load %arg21[%c0_554, %c1_555, %c0_556, %c0_557] : memref<1x3x1x6xf32, #tpu.memory_space<vmem>>, vector<1x1x1x6xf32>
    %532 = vector.shape_cast %531 : vector<1x1x1x6xf32> to vector<1x6xf32>
    %533 = vector.shape_cast %530 : vector<1x6xf32> to vector<1x1x1x6xf32>
    tpu.vector_store %arg21[%c0_554, %c1_555, %c0_556, %c0_557], %533 {strides = array<i32>} : memref<1x3x1x6xf32, #tpu.memory_space<vmem>>, vector<1x1x1x6xf32>,
    %c0_558 = arith.constant 0 : index
    %c0_559 = arith.constant 0 : index
    %534 = vector.load %arg22[%c0_558, %c0_559] : memref<48x6xf32, #tpu.memory_space<vmem>>, vector<1x6xf32>
    tpu.vector_store %arg22[%c0_558, %c0_559], %530 {strides = array<i32>} : memref<48x6xf32, #tpu.memory_space<vmem>>, vector<1x6xf32>,
    %c1_560 = arith.constant 1 : index
    %c0_561 = arith.constant 0 : index
    %535 = vector.load %arg22[%c1_560, %c0_561] : memref<48x6xf32, #tpu.memory_space<vmem>>, vector<8x6xf32>
    tpu.vector_store %arg22[%c1_560, %c0_561], %483 {strides = array<i32>} : memref<48x6xf32, #tpu.memory_space<vmem>>, vector<8x6xf32>,
    %c0_562 = arith.constant 0 : index
    %c0_563 = arith.constant 0 : index
    %536 = vector.load %arg22[%c0_562, %c0_563] : memref<48x6xf32, #tpu.memory_space<vmem>>, vector<9x6xf32>
    %cst_564 = arith.constant dense<0.000000e+00> : vector<9x6xf32>
    %537 = tpu.matmul %536, %0, %cst_564 {dimension_numbers = #tpu.dot_dimension_numbers<[1], [0], [0], [1], [0, 0, 1, 1], [], []>} : vector<9x6xf32>, vector<6x6xf32>, vector<9x6xf32> -> vector<9x6xf32>
    %c9_565 = arith.constant 9 : index
    %c0_566 = arith.constant 0 : index
    %538 = vector.load %arg22[%c9_565, %c0_566] : memref<48x6xf32, #tpu.memory_space<vmem>>, vector<9x6xf32>
    tpu.vector_store %arg22[%c9_565, %c0_566], %537 {strides = array<i32>} : memref<48x6xf32, #tpu.memory_space<vmem>>, vector<9x6xf32>,
    %c9_567 = arith.constant 9 : index
    %c0_568 = arith.constant 0 : index
    %539 = vector.load %arg22[%c9_567, %c0_568] : memref<48x6xf32, #tpu.memory_space<vmem>>, vector<9x6xf32>
    %cst_569 = arith.constant dense<0.000000e+00> : vector<9x6xf32>
    %540 = tpu.matmul %539, %0, %cst_569 {dimension_numbers = #tpu.dot_dimension_numbers<[1], [0], [0], [1], [0, 0, 1, 1], [], []>} : vector<9x6xf32>, vector<6x6xf32>, vector<9x6xf32> -> vector<9x6xf32>
    %c18_570 = arith.constant 18 : index
    %c0_571 = arith.constant 0 : index
    %541 = vector.load %arg22[%c18_570, %c0_571] : memref<48x6xf32, #tpu.memory_space<vmem>>, vector<9x6xf32>
    tpu.vector_store %arg22[%c18_570, %c0_571], %540 {strides = array<i32>} : memref<48x6xf32, #tpu.memory_space<vmem>>, vector<9x6xf32>,
    %c0_572 = arith.constant 0 : index
    %c0_573 = arith.constant 0 : index
    %542 = vector.load %arg22[%c0_572, %c0_573] : memref<48x6xf32, #tpu.memory_space<vmem>>, vector<27x6xf32>
    %c0_574 = arith.constant 0 : index
    %c0_575 = arith.constant 0 : index
    %543 = vector.load %arg11[%c0_574, %c0_575] : memref<16x27xf32, #tpu.memory_space<vmem>>, vector<16x27xf32>
    %cst_576 = arith.constant dense<0.000000e+00> : vector<16x6xf32>
    %544 = tpu.matmul %543, %542, %cst_576 {dimension_numbers = #tpu.dot_dimension_numbers<[1], [0], [0], [1], [0, 0, 1, 1], [], []>} : vector<16x27xf32>, vector<27x6xf32>, vector<16x6xf32> -> vector<16x6xf32>
    %c0_577 = arith.constant 0 : index
    %c0_578 = arith.constant 0 : index
    %545 = vector.load %arg12[%c0_577, %c0_578] : memref<16x1xf32, #tpu.memory_space<vmem>>, vector<16x1xf32>
    %546 = vector.broadcast %545 : vector<16x1xf32> to vector<16x6xf32>
    %547 = arith.addf %544, %546 : vector<16x6xf32>
    %548 = arith.negf %547 : vector<16x6xf32>
    %549 = math.exp %548 : vector<16x6xf32>
    %cst_579 = arith.constant 1.000000e+00 : f32
    %550 = vector.broadcast %cst_579 : f32 to vector<16x6xf32>
    %551 = arith.addf %550, %549 : vector<16x6xf32>
    %552 = arith.divf %550, %551 : vector<16x6xf32>
    %553 = vector.extract_strided_slice %552 {offsets = [0, 0], sizes = [8, 6], strides = [1, 1]} : vector<16x6xf32> to vector<8x6xf32>
    %554 = vector.extract_strided_slice %552 {offsets = [8, 0], sizes = [8, 6], strides = [1, 1]} : vector<16x6xf32> to vector<8x6xf32>
    %555 = arith.mulf %553, %483 : vector<8x6xf32>
    %c0_580 = arith.constant 0 : index
    %c0_581 = arith.constant 0 : index
    %556 = vector.load %arg22[%c0_580, %c0_581] : memref<48x6xf32, #tpu.memory_space<vmem>>, vector<1x6xf32>
    tpu.vector_store %arg22[%c0_580, %c0_581], %530 {strides = array<i32>} : memref<48x6xf32, #tpu.memory_space<vmem>>, vector<1x6xf32>,
    %c1_582 = arith.constant 1 : index
    %c0_583 = arith.constant 0 : index
    %557 = vector.load %arg22[%c1_582, %c0_583] : memref<48x6xf32, #tpu.memory_space<vmem>>, vector<8x6xf32>
    tpu.vector_store %arg22[%c1_582, %c0_583], %555 {strides = array<i32>} : memref<48x6xf32, #tpu.memory_space<vmem>>, vector<8x6xf32>,
    %c0_584 = arith.constant 0 : index
    %c0_585 = arith.constant 0 : index
    %558 = vector.load %arg22[%c0_584, %c0_585] : memref<48x6xf32, #tpu.memory_space<vmem>>, vector<9x6xf32>
    %cst_586 = arith.constant dense<0.000000e+00> : vector<9x6xf32>
    %559 = tpu.matmul %558, %0, %cst_586 {dimension_numbers = #tpu.dot_dimension_numbers<[1], [0], [0], [1], [0, 0, 1, 1], [], []>} : vector<9x6xf32>, vector<6x6xf32>, vector<9x6xf32> -> vector<9x6xf32>
    %c9_587 = arith.constant 9 : index
    %c0_588 = arith.constant 0 : index
    %560 = vector.load %arg22[%c9_587, %c0_588] : memref<48x6xf32, #tpu.memory_space<vmem>>, vector<9x6xf32>
    tpu.vector_store %arg22[%c9_587, %c0_588], %559 {strides = array<i32>} : memref<48x6xf32, #tpu.memory_space<vmem>>, vector<9x6xf32>,
    %c9_589 = arith.constant 9 : index
    %c0_590 = arith.constant 0 : index
    %561 = vector.load %arg22[%c9_589, %c0_590] : memref<48x6xf32, #tpu.memory_space<vmem>>, vector<9x6xf32>
    %cst_591 = arith.constant dense<0.000000e+00> : vector<9x6xf32>
    %562 = tpu.matmul %561, %0, %cst_591 {dimension_numbers = #tpu.dot_dimension_numbers<[1], [0], [0], [1], [0, 0, 1, 1], [], []>} : vector<9x6xf32>, vector<6x6xf32>, vector<9x6xf32> -> vector<9x6xf32>
    %c18_592 = arith.constant 18 : index
    %c0_593 = arith.constant 0 : index
    %563 = vector.load %arg22[%c18_592, %c0_593] : memref<48x6xf32, #tpu.memory_space<vmem>>, vector<9x6xf32>
    tpu.vector_store %arg22[%c18_592, %c0_593], %562 {strides = array<i32>} : memref<48x6xf32, #tpu.memory_space<vmem>>, vector<9x6xf32>,
    %c0_594 = arith.constant 0 : index
    %c0_595 = arith.constant 0 : index
    %564 = vector.load %arg22[%c0_594, %c0_595] : memref<48x6xf32, #tpu.memory_space<vmem>>, vector<27x6xf32>
    %c0_596 = arith.constant 0 : index
    %c0_597 = arith.constant 0 : index
    %565 = vector.load %arg13[%c0_596, %c0_597] : memref<8x27xf32, #tpu.memory_space<vmem>>, vector<8x27xf32>
    %cst_598 = arith.constant dense<0.000000e+00> : vector<8x6xf32>
    %566 = tpu.matmul %565, %564, %cst_598 {dimension_numbers = #tpu.dot_dimension_numbers<[1], [0], [0], [1], [0, 0, 1, 1], [], []>} : vector<8x27xf32>, vector<27x6xf32>, vector<8x6xf32> -> vector<8x6xf32>
    %c0_599 = arith.constant 0 : index
    %c0_600 = arith.constant 0 : index
    %567 = vector.load %arg14[%c0_599, %c0_600] : memref<8x1xf32, #tpu.memory_space<vmem>>, vector<8x1xf32>
    %568 = vector.broadcast %567 : vector<8x1xf32> to vector<8x6xf32>
    %569 = arith.addf %566, %568 : vector<8x6xf32>
    %570 = math.tanh %569 : vector<8x6xf32>
    %571 = arith.mulf %554, %483 : vector<8x6xf32>
    %cst_601 = arith.constant 1.000000e+00 : f32
    %572 = vector.broadcast %cst_601 : f32 to vector<8x6xf32>
    %573 = arith.subf %572, %554 : vector<8x6xf32>
    %574 = arith.mulf %573, %570 : vector<8x6xf32>
    %575 = arith.addf %571, %574 : vector<8x6xf32>
    %c0_602 = arith.constant 0 : index
    %c0_603 = arith.constant 0 : index
    %576 = vector.load %arg22[%c0_602, %c0_603] : memref<48x6xf32, #tpu.memory_space<vmem>>, vector<8x6xf32>
    tpu.vector_store %arg22[%c0_602, %c0_603], %575 {strides = array<i32>} : memref<48x6xf32, #tpu.memory_space<vmem>>, vector<8x6xf32>,
    %c8_604 = arith.constant 8 : index
    %c0_605 = arith.constant 0 : index
    %577 = vector.load %arg22[%c8_604, %c0_605] : memref<48x6xf32, #tpu.memory_space<vmem>>, vector<8x6xf32>
    tpu.vector_store %arg22[%c8_604, %c0_605], %525 {strides = array<i32>} : memref<48x6xf32, #tpu.memory_space<vmem>>, vector<8x6xf32>,
    %c0_606 = arith.constant 0 : index
    %c0_607 = arith.constant 0 : index
    %578 = vector.load %arg22[%c0_606, %c0_607] : memref<48x6xf32, #tpu.memory_space<vmem>>, vector<16x6xf32>
    %cst_608 = arith.constant dense<0.000000e+00> : vector<16x6xf32>
    %579 = tpu.matmul %578, %0, %cst_608 {dimension_numbers = #tpu.dot_dimension_numbers<[1], [0], [0], [1], [0, 0, 1, 1], [], []>} : vector<16x6xf32>, vector<6x6xf32>, vector<16x6xf32> -> vector<16x6xf32>
    %c16_609 = arith.constant 16 : index
    %c0_610 = arith.constant 0 : index
    %580 = vector.load %arg22[%c16_609, %c0_610] : memref<48x6xf32, #tpu.memory_space<vmem>>, vector<16x6xf32>
    tpu.vector_store %arg22[%c16_609, %c0_610], %579 {strides = array<i32>} : memref<48x6xf32, #tpu.memory_space<vmem>>, vector<16x6xf32>,
    %c16_611 = arith.constant 16 : index
    %c0_612 = arith.constant 0 : index
    %581 = vector.load %arg22[%c16_611, %c0_612] : memref<48x6xf32, #tpu.memory_space<vmem>>, vector<16x6xf32>
    %cst_613 = arith.constant dense<0.000000e+00> : vector<16x6xf32>
    %582 = tpu.matmul %581, %0, %cst_613 {dimension_numbers = #tpu.dot_dimension_numbers<[1], [0], [0], [1], [0, 0, 1, 1], [], []>} : vector<16x6xf32>, vector<6x6xf32>, vector<16x6xf32> -> vector<16x6xf32>
    %c32_614 = arith.constant 32 : index
    %c0_615 = arith.constant 0 : index
    %583 = vector.load %arg22[%c32_614, %c0_615] : memref<48x6xf32, #tpu.memory_space<vmem>>, vector<16x6xf32>
    tpu.vector_store %arg22[%c32_614, %c0_615], %582 {strides = array<i32>} : memref<48x6xf32, #tpu.memory_space<vmem>>, vector<16x6xf32>,
    %c0_616 = arith.constant 0 : index
    %c0_617 = arith.constant 0 : index
    %584 = vector.load %arg22[%c0_616, %c0_617] : memref<48x6xf32, #tpu.memory_space<vmem>>, vector<48x6xf32>
    %c0_618 = arith.constant 0 : index
    %c0_619 = arith.constant 0 : index
    %585 = vector.load %arg15[%c0_618, %c0_619] : memref<16x48xf32, #tpu.memory_space<vmem>>, vector<16x48xf32>
    %cst_620 = arith.constant dense<0.000000e+00> : vector<16x6xf32>
    %586 = tpu.matmul %585, %584, %cst_620 {dimension_numbers = #tpu.dot_dimension_numbers<[1], [0], [0], [1], [0, 0, 1, 1], [], []>} : vector<16x48xf32>, vector<48x6xf32>, vector<16x6xf32> -> vector<16x6xf32>
    %c0_621 = arith.constant 0 : index
    %c0_622 = arith.constant 0 : index
    %587 = vector.load %arg16[%c0_621, %c0_622] : memref<16x1xf32, #tpu.memory_space<vmem>>, vector<16x1xf32>
    %588 = vector.broadcast %587 : vector<16x1xf32> to vector<16x6xf32>
    %589 = arith.addf %586, %588 : vector<16x6xf32>
    %590 = arith.negf %589 : vector<16x6xf32>
    %591 = math.exp %590 : vector<16x6xf32>
    %cst_623 = arith.constant 1.000000e+00 : f32
    %592 = vector.broadcast %cst_623 : f32 to vector<16x6xf32>
    %593 = arith.addf %592, %591 : vector<16x6xf32>
    %594 = arith.divf %592, %593 : vector<16x6xf32>
    %595 = vector.extract_strided_slice %594 {offsets = [0, 0], sizes = [8, 6], strides = [1, 1]} : vector<16x6xf32> to vector<8x6xf32>
    %596 = vector.extract_strided_slice %594 {offsets = [8, 0], sizes = [8, 6], strides = [1, 1]} : vector<16x6xf32> to vector<8x6xf32>
    %597 = arith.mulf %595, %525 : vector<8x6xf32>
    %c0_624 = arith.constant 0 : index
    %c0_625 = arith.constant 0 : index
    %598 = vector.load %arg22[%c0_624, %c0_625] : memref<48x6xf32, #tpu.memory_space<vmem>>, vector<8x6xf32>
    tpu.vector_store %arg22[%c0_624, %c0_625], %575 {strides = array<i32>} : memref<48x6xf32, #tpu.memory_space<vmem>>, vector<8x6xf32>,
    %c8_626 = arith.constant 8 : index
    %c0_627 = arith.constant 0 : index
    %599 = vector.load %arg22[%c8_626, %c0_627] : memref<48x6xf32, #tpu.memory_space<vmem>>, vector<8x6xf32>
    tpu.vector_store %arg22[%c8_626, %c0_627], %597 {strides = array<i32>} : memref<48x6xf32, #tpu.memory_space<vmem>>, vector<8x6xf32>,
    %c0_628 = arith.constant 0 : index
    %c0_629 = arith.constant 0 : index
    %600 = vector.load %arg22[%c0_628, %c0_629] : memref<48x6xf32, #tpu.memory_space<vmem>>, vector<16x6xf32>
    %cst_630 = arith.constant dense<0.000000e+00> : vector<16x6xf32>
    %601 = tpu.matmul %600, %0, %cst_630 {dimension_numbers = #tpu.dot_dimension_numbers<[1], [0], [0], [1], [0, 0, 1, 1], [], []>} : vector<16x6xf32>, vector<6x6xf32>, vector<16x6xf32> -> vector<16x6xf32>
    %c16_631 = arith.constant 16 : index
    %c0_632 = arith.constant 0 : index
    %602 = vector.load %arg22[%c16_631, %c0_632] : memref<48x6xf32, #tpu.memory_space<vmem>>, vector<16x6xf32>
    tpu.vector_store %arg22[%c16_631, %c0_632], %601 {strides = array<i32>} : memref<48x6xf32, #tpu.memory_space<vmem>>, vector<16x6xf32>,
    %c16_633 = arith.constant 16 : index
    %c0_634 = arith.constant 0 : index
    %603 = vector.load %arg22[%c16_633, %c0_634] : memref<48x6xf32, #tpu.memory_space<vmem>>, vector<16x6xf32>
    %cst_635 = arith.constant dense<0.000000e+00> : vector<16x6xf32>
    %604 = tpu.matmul %603, %0, %cst_635 {dimension_numbers = #tpu.dot_dimension_numbers<[1], [0], [0], [1], [0, 0, 1, 1], [], []>} : vector<16x6xf32>, vector<6x6xf32>, vector<16x6xf32> -> vector<16x6xf32>
    %c32_636 = arith.constant 32 : index
    %c0_637 = arith.constant 0 : index
    %605 = vector.load %arg22[%c32_636, %c0_637] : memref<48x6xf32, #tpu.memory_space<vmem>>, vector<16x6xf32>
    tpu.vector_store %arg22[%c32_636, %c0_637], %604 {strides = array<i32>} : memref<48x6xf32, #tpu.memory_space<vmem>>, vector<16x6xf32>,
    %c0_638 = arith.constant 0 : index
    %c0_639 = arith.constant 0 : index
    %606 = vector.load %arg22[%c0_638, %c0_639] : memref<48x6xf32, #tpu.memory_space<vmem>>, vector<48x6xf32>
    %c0_640 = arith.constant 0 : index
    %c0_641 = arith.constant 0 : index
    %607 = vector.load %arg17[%c0_640, %c0_641] : memref<8x48xf32, #tpu.memory_space<vmem>>, vector<8x48xf32>
    %cst_642 = arith.constant dense<0.000000e+00> : vector<8x6xf32>
    %608 = tpu.matmul %607, %606, %cst_642 {dimension_numbers = #tpu.dot_dimension_numbers<[1], [0], [0], [1], [0, 0, 1, 1], [], []>} : vector<8x48xf32>, vector<48x6xf32>, vector<8x6xf32> -> vector<8x6xf32>
    %c0_643 = arith.constant 0 : index
    %c0_644 = arith.constant 0 : index
    %609 = vector.load %arg18[%c0_643, %c0_644] : memref<8x1xf32, #tpu.memory_space<vmem>>, vector<8x1xf32>
    %610 = vector.broadcast %609 : vector<8x1xf32> to vector<8x6xf32>
    %611 = arith.addf %608, %610 : vector<8x6xf32>
    %612 = math.tanh %611 : vector<8x6xf32>
    %613 = arith.mulf %596, %525 : vector<8x6xf32>
    %cst_645 = arith.constant 1.000000e+00 : f32
    %614 = vector.broadcast %cst_645 : f32 to vector<8x6xf32>
    %615 = arith.subf %614, %596 : vector<8x6xf32>
    %616 = arith.mulf %615, %612 : vector<8x6xf32>
    %617 = arith.addf %613, %616 : vector<8x6xf32>
    %c0_646 = arith.constant 0 : index
    %c0_647 = arith.constant 0 : index
    %618 = vector.load %arg19[%c0_646, %c0_647] : memref<1x8xf32, #tpu.memory_space<vmem>>, vector<1x8xf32>
    %cst_648 = arith.constant dense<0.000000e+00> : vector<1x6xf32>
    %619 = tpu.matmul %618, %617, %cst_648 {dimension_numbers = #tpu.dot_dimension_numbers<[1], [0], [0], [1], [0, 0, 1, 1], [], []>} : vector<1x8xf32>, vector<8x6xf32>, vector<1x6xf32> -> vector<1x6xf32>
    %c0_649 = arith.constant 0 : index
    %c0_650 = arith.constant 0 : index
    %620 = vector.load %arg20[%c0_649, %c0_650] : memref<1x1xf32, #tpu.memory_space<vmem>>, vector<1x1xf32>
    %621 = vector.broadcast %620 : vector<1x1xf32> to vector<1x6xf32>
    %622 = arith.addf %619, %621 : vector<1x6xf32>
    %c0_651 = arith.constant 0 : index
    %c2_652 = arith.constant 2 : index
    %c0_653 = arith.constant 0 : index
    %c0_654 = arith.constant 0 : index
    %623 = vector.load %arg21[%c0_651, %c2_652, %c0_653, %c0_654] : memref<1x3x1x6xf32, #tpu.memory_space<vmem>>, vector<1x1x1x6xf32>
    %624 = vector.shape_cast %623 : vector<1x1x1x6xf32> to vector<1x6xf32>
    %625 = vector.shape_cast %622 : vector<1x6xf32> to vector<1x1x1x6xf32>
    tpu.vector_store %arg21[%c0_651, %c2_652, %c0_653, %c0_654], %625 {strides = array<i32>} : memref<1x3x1x6xf32, #tpu.memory_space<vmem>>, vector<1x1x1x6xf32>,
    return
  }
  func.func @transform_0(%arg0: i32) -> (i32, i32) {
    %c0_i32 = arith.constant 0 : i32
    %c0_i32_0 = arith.constant 0 : i32
    %c0_i32_1 = arith.constant 0 : i32
    return %c0_i32, %c0_i32_0 : i32, i32
  }
  func.func @transform_1(%arg0: i32) -> (i32, i32, i32, i32) {
    %c0_i32 = arith.constant 0 : i32
    %c0_i32_0 = arith.constant 0 : i32
    %c0_i32_1 = arith.constant 0 : i32
    %c0_i32_2 = arith.constant 0 : i32
    return %arg0, %c0_i32, %c0_i32_0, %c0_i32_1 : i32, i32, i32, i32
  }
  func.func @transform_2(%arg0: i32) -> (i32, i32) {
    %c0_i32 = arith.constant 0 : i32
    %c0_i32_0 = arith.constant 0 : i32
    %c0_i32_1 = arith.constant 0 : i32
    return %c0_i32, %c0_i32_0 : i32, i32
  }
  func.func @transform_3(%arg0: i32) -> (i32, i32) {
    %c0_i32 = arith.constant 0 : i32
    %c0_i32_0 = arith.constant 0 : i32
    %c0_i32_1 = arith.constant 0 : i32
    return %c0_i32, %c0_i32_0 : i32, i32
  }
  func.func @transform_4(%arg0: i32) -> (i32, i32) {
    %c0_i32 = arith.constant 0 : i32
    %c0_i32_0 = arith.constant 0 : i32
    %c0_i32_1 = arith.constant 0 : i32
    return %c0_i32, %c0_i32_0 : i32, i32
  }
  func.func @transform_5(%arg0: i32) -> (i32, i32) {
    %c0_i32 = arith.constant 0 : i32
    %c0_i32_0 = arith.constant 0 : i32
    %c0_i32_1 = arith.constant 0 : i32
    return %c0_i32, %c0_i32_0 : i32, i32
  }
  func.func @transform_6(%arg0: i32) -> (i32, i32) {
    %c0_i32 = arith.constant 0 : i32
    %c0_i32_0 = arith.constant 0 : i32
    %c0_i32_1 = arith.constant 0 : i32
    return %c0_i32, %c0_i32_0 : i32, i32
  }
  func.func @transform_7(%arg0: i32) -> (i32, i32) {
    %c0_i32 = arith.constant 0 : i32
    %c0_i32_0 = arith.constant 0 : i32
    %c0_i32_1 = arith.constant 0 : i32
    return %c0_i32, %c0_i32_0 : i32, i32
  }
  func.func @transform_8(%arg0: i32) -> (i32, i32) {
    %c0_i32 = arith.constant 0 : i32
    %c0_i32_0 = arith.constant 0 : i32
    %c0_i32_1 = arith.constant 0 : i32
    return %c0_i32, %c0_i32_0 : i32, i32
  }
  func.func @transform_9(%arg0: i32) -> (i32, i32) {
    %c0_i32 = arith.constant 0 : i32
    %c0_i32_0 = arith.constant 0 : i32
    %c0_i32_1 = arith.constant 0 : i32
    return %c0_i32, %c0_i32_0 : i32, i32
  }
  func.func @transform_10(%arg0: i32) -> (i32, i32) {
    %c0_i32 = arith.constant 0 : i32
    %c0_i32_0 = arith.constant 0 : i32
    %c0_i32_1 = arith.constant 0 : i32
    return %c0_i32, %c0_i32_0 : i32, i32
  }
  func.func @transform_11(%arg0: i32) -> (i32, i32) {
    %c0_i32 = arith.constant 0 : i32
    %c0_i32_0 = arith.constant 0 : i32
    %c0_i32_1 = arith.constant 0 : i32
    return %c0_i32, %c0_i32_0 : i32, i32
  }
  func.func @transform_12(%arg0: i32) -> (i32, i32) {
    %c0_i32 = arith.constant 0 : i32
    %c0_i32_0 = arith.constant 0 : i32
    %c0_i32_1 = arith.constant 0 : i32
    return %c0_i32, %c0_i32_0 : i32, i32
  }
  func.func @transform_13(%arg0: i32) -> (i32, i32) {
    %c0_i32 = arith.constant 0 : i32
    %c0_i32_0 = arith.constant 0 : i32
    %c0_i32_1 = arith.constant 0 : i32
    return %c0_i32, %c0_i32_0 : i32, i32
  }
  func.func @transform_14(%arg0: i32) -> (i32, i32) {
    %c0_i32 = arith.constant 0 : i32
    %c0_i32_0 = arith.constant 0 : i32
    %c0_i32_1 = arith.constant 0 : i32
    return %c0_i32, %c0_i32_0 : i32, i32
  }
  func.func @transform_15(%arg0: i32) -> (i32, i32) {
    %c0_i32 = arith.constant 0 : i32
    %c0_i32_0 = arith.constant 0 : i32
    %c0_i32_1 = arith.constant 0 : i32
    return %c0_i32, %c0_i32_0 : i32, i32
  }
  func.func @transform_16(%arg0: i32) -> (i32, i32) {
    %c0_i32 = arith.constant 0 : i32
    %c0_i32_0 = arith.constant 0 : i32
    %c0_i32_1 = arith.constant 0 : i32
    return %c0_i32, %c0_i32_0 : i32, i32
  }
  func.func @transform_17(%arg0: i32) -> (i32, i32) {
    %c0_i32 = arith.constant 0 : i32
    %c0_i32_0 = arith.constant 0 : i32
    %c0_i32_1 = arith.constant 0 : i32
    return %c0_i32, %c0_i32_0 : i32, i32
  }
  func.func @transform_18(%arg0: i32) -> (i32, i32) {
    %c0_i32 = arith.constant 0 : i32
    %c0_i32_0 = arith.constant 0 : i32
    %c0_i32_1 = arith.constant 0 : i32
    return %c0_i32, %c0_i32_0 : i32, i32
  }
  func.func @transform_19(%arg0: i32) -> (i32, i32) {
    %c0_i32 = arith.constant 0 : i32
    %c0_i32_0 = arith.constant 0 : i32
    %c0_i32_1 = arith.constant 0 : i32
    return %c0_i32, %c0_i32_0 : i32, i32
  }
  func.func @transform_20(%arg0: i32) -> (i32, i32, i32, i32) {
    %c0_i32 = arith.constant 0 : i32
    %c0_i32_0 = arith.constant 0 : i32
    %c0_i32_1 = arith.constant 0 : i32
    %c0_i32_2 = arith.constant 0 : i32
    return %arg0, %c0_i32, %c0_i32_0, %c0_i32_1 : i32, i32, i32, i32
  }
}

</mosaic_0001>

<llo_original>
// kernel: egc_stage1_forward.4
$region0: #{egc_stage1_forward.4}
  #allocation0 [shape = 'u32[]', space=smem, size = 0x4, offset = 0x4, fixed_abs, tag = 'smem constant byte address 0x4 - core index']
  #allocation1 [shape = 'u32[72,128]{1,0:T(1,128)}', space=vmem, size = 0x9000, scoped, tag = 'internal scratch']
  %s0 = inlined_call_operand.vmem [shape: f32[102,10], index: 0, kind: input, shape index: {}]
  %s1 = inlined_call_operand.vmem [shape: f32[10,8], index: 1, kind: input, shape index: {}]
  %s2 = inlined_call_operand.vmem [shape: f32[1,8], index: 2, kind: input, shape index: {}]
  %s3 = inlined_call_operand.vmem [shape: f32[102,8], index: 3, kind: output, shape index: {}]
  %s4 = sld [smem:[#allocation0]]
  $region22: #{egc_stage1_forward.4} parent=0
    _
  %s6 = ssub.s32 1, %s4
  %s7 = scalar_select 0, %s6, %s4
  // Predicated region
  $region2: #{egc_stage1_forward.4} parent=0 // pred_check
    _
  $region3: #{egc_stage1_forward.4} parent=0 // pred_check_branch
    %9 = sbr.rel (0) target = $region5
  $region4: #{egc_stage1_forward.4} parent=0 // pred_region
    _
  $region5: #{egc_stage1_forward.4} parent=0 // pred_fallthru
    _
  // Predicated region
  $region6: #{egc_stage1_forward.4} parent=0 // pred_check
    _
  $region7: #{egc_stage1_forward.4} parent=0 // pred_check_branch
    %11 = sbr.rel (0) target = $region9
  $region8: #{egc_stage1_forward.4} parent=0 // pred_region
    _
  $region9: #{egc_stage1_forward.4} parent=0 // pred_fallthru
    _
  // Predicated region
  $region10: #{egc_stage1_forward.4} parent=0 // pred_check
    _
  $region11: #{egc_stage1_forward.4} parent=0 // pred_check_branch
    %13 = sbr.rel (0) target = $region13
  $region12: #{egc_stage1_forward.4} parent=0 // pred_region
    _
  $region13: #{egc_stage1_forward.4} parent=0 // pred_fallthru
    _
  %v14 = vld [vmem:[%s0] sm:$0xff]
  %v15 = vld [vmem:[%s0 + $0x8] sm:$0xff]
  %v16 = vld [vmem:[%s0 + $0x10] sm:$0xff]
  %v17 = vld [vmem:[%s0 + $0x18] sm:$0xff]
  %v18 = vld [vmem:[%s0 + $0x20] sm:$0xff]
  %v19 = vld [vmem:[%s0 + $0x28] sm:$0xff]
  %v20 = vld [vmem:[%s0 + $0x30] sm:$0xff]
  %v21 = vld [vmem:[%s0 + $0x38] sm:$0xff]
  %v22 = vld [vmem:[%s0 + $0x40] sm:$0xff]
  %v23 = vld [vmem:[%s0 + $0x48] sm:$0xff]
  %v24 = vld [vmem:[%s0 + $0x50] sm:$0xff]
  %v25 = vld [vmem:[%s0 + $0x58] sm:$0xff]
  %v26 = vld [vmem:[%s0 + $0x60] sm:$0x3f]
  %v27 = vld [vmem:[%s1] sm:$0xff]
  %v28 = vld [vmem:[%s1 + $0x8] sm:$0x3]
  %v29 = vld [vmem:[%s2] sm:$0x1]
  %v31 = vperm.slane %v29, 0
  %vm33 = vcmask 80896
  %v35 = vsel %vm33, %v14, 0
  %v38 = vsel %vm33, %v15, 0
  %v41 = vsel %vm33, %v16, 0
  %v44 = vsel %vm33, %v17, 0
  %v47 = vsel %vm33, %v18, 0
  %v50 = vsel %vm33, %v19, 0
  %v53 = vsel %vm33, %v20, 0
  %v56 = vsel %vm33, %v21, 0
  %v59 = vsel %vm33, %v22, 0
  %v62 = vsel %vm33, %v23, 0
  %v65 = vsel %vm33, %v24, 0
  %v68 = vsel %vm33, %v25, 0
  %v71 = vsel %vm33, %v26, 0
  %vm73 = vcmask 1041408
  %v75 = vsel %vm73, %v28, 0
  %77 = vmatpush.msra.mxu0 0.0
  %78 = vmatpush.msra.mxu0 0.0
  %79 = vmatpush.msra.mxu0 0.0
  %80 = vmatpush.msra.mxu0 0.0
  %81 = vmatpush.msra.mxu0 0.0
  %82 = vmatpush.msra.mxu0 0.0
  %83 = vmatpush.msra.mxu0 0.0
  %84 = vmatpush.msra.mxu0 0.0
  %85 = vmatpush.msra.mxu0 0.0
  %86 = vmatpush.msra.mxu0 0.0
  %87 = vmatpush.msra.mxu0 0.0
  %88 = vmatpush.msra.mxu0 0.0
  %89 = vmatpush.msra.mxu0 0.0
  %90 = vmatpush.msra.mxu0 0.0
  %91 = vmatpush.msra.mxu0 %v75
  %92 = vmatpush.msra.mxu0 %v27
  %93 = vmatmul.f32.gmra.mxu0 %v35
  %v94 = vpop.f32.mrf.mxu0
  %v95 = vadd.f32 %v31, %v94
  %96 = vmatmul.f32.gmra.mxu0 %v38
  %v97 = vpop.f32.mrf.mxu0
  %v98 = vadd.f32 %v31, %v97
  %99 = vmatmul.f32.gmra.mxu0 %v41
  %v100 = vpop.f32.mrf.mxu0
  %v101 = vadd.f32 %v31, %v100
  %102 = vmatmul.f32.gmra.mxu0 %v44
  %v103 = vpop.f32.mrf.mxu0
  %v104 = vadd.f32 %v31, %v103
  %105 = vmatmul.f32.gmra.mxu0 %v47
  %v106 = vpop.f32.mrf.mxu0
  %v107 = vadd.f32 %v31, %v106
  %108 = vmatmul.f32.gmra.mxu0 %v50
  %v109 = vpop.f32.mrf.mxu0
  %v110 = vadd.f32 %v31, %v109
  %111 = vmatmul.f32.gmra.mxu0 %v53
  %v112 = vpop.f32.mrf.mxu0
  %v113 = vadd.f32 %v31, %v112
  %114 = vmatmul.f32.gmra.mxu0 %v56
  %v115 = vpop.f32.mrf.mxu0
  %v116 = vadd.f32 %v31, %v115
  %117 = vmatmul.f32.gmra.mxu0 %v59
  %v118 = vpop.f32.mrf.mxu0
  %v119 = vadd.f32 %v31, %v118
  %120 = vmatmul.f32.gmra.mxu0 %v62
  %v121 = vpop.f32.mrf.mxu0
  %v122 = vadd.f32 %v31, %v121
  %123 = vmatmul.f32.gmra.mxu0 %v65
  %v124 = vpop.f32.mrf.mxu0
  %v125 = vadd.f32 %v31, %v124
  %126 = vmatmul.f32.gmra.mxu0 %v68
  %v127 = vpop.f32.mrf.mxu0
  %v128 = vadd.f32 %v31, %v127
  %129 = vmatmul.f32.gmra.mxu0 %v71
  %v130 = vpop.f32.mrf.mxu0
  %v131 = vadd.f32 %v31, %v130
  %132 = vdwg.mxu0
  %v133 = vmax.f32 %v95, 0.0
  %v134 = vmax.f32 %v98, 0.0
  %v135 = vmax.f32 %v101, 0.0
  %v136 = vmax.f32 %v104, 0.0
  %v137 = vmax.f32 %v107, 0.0
  %v138 = vmax.f32 %v110, 0.0
  %v139 = vmax.f32 %v113, 0.0
  %v140 = vmax.f32 %v116, 0.0
  %v141 = vmax.f32 %v119, 0.0
  %v142 = vmax.f32 %v122, 0.0
  %v143 = vmax.f32 %v125, 0.0
  %v144 = vmax.f32 %v128, 0.0
  %v145 = vmax.f32 %v131, 0.0
  %vm146 = vcmask 64512
  %v147 = vsel %vm146, %v133, 0.0
  %v148 = vsel %vm146, %v134, 0.0
  %v149 = vadd.f32 %v147, %v148
  %v150 = vsel %vm146, %v135, 0.0
  %v151 = vadd.f32 %v149, %v150
  %v152 = vsel %vm146, %v136, 0.0
  %v153 = vadd.f32 %v151, %v152
  %v154 = vsel %vm146, %v137, 0.0
  %v155 = vadd.f32 %v153, %v154
  %v156 = vsel %vm146, %v138, 0.0
  %v157 = vadd.f32 %v155, %v156
  %v158 = vsel %vm146, %v139, 0.0
  %v159 = vadd.f32 %v157, %v158
  %v160 = vsel %vm146, %v140, 0.0
  %v161 = vadd.f32 %v159, %v160
  %v162 = vsel %vm146, %v141, 0.0
  %v163 = vadd.f32 %v161, %v162
  %v164 = vsel %vm146, %v142, 0.0
  %v165 = vadd.f32 %v163, %v164
  %v166 = vsel %vm146, %v143, 0.0
  %v167 = vadd.f32 %v165, %v166
  %v168 = vsel %vm146, %v144, 0.0
  %v169 = vadd.f32 %v167, %v168
  %vm170 = vcmask 62464
  %v171 = vsel %vm170, %v145, 0.0
  %v172 = vadd.f32 %v169, %v171
  %v173 = vrot.slane %v172, 4
  %v174 = vadd.f32 %v172, %v173
  %v175 = vrot.slane %v174, 2
  %v176 = vadd.f32 %v174, %v175
  %v177 = vrot.slane %v176, 1
  %v178 = vadd.f32 %v176, %v177
  %v179 = vrcp.pop 102.0
  %v180 = vmul.f32 102.0, %v179
  %v181 = vsub.f32 1.0, %v180
  %v182 = vmul.f32 %v179, %v181
  %v183 = vadd.f32 %v179, %v182
  %vm184 = vweird.f32 %v179
  %v185 = vsel %vm184, %v179, %v183
  %v186 = vmul.f32 %v178, %v185
  %v187 = vsub.f32 %v133, %v186
  %v188 = vsub.f32 %v134, %v186
  %v189 = vsub.f32 %v135, %v186
  %v190 = vsub.f32 %v136, %v186
  %v191 = vsub.f32 %v137, %v186
  %v192 = vsub.f32 %v138, %v186
  %v193 = vsub.f32 %v139, %v186
  %v194 = vsub.f32 %v140, %v186
  %v195 = vsub.f32 %v141, %v186
  %v196 = vsub.f32 %v142, %v186
  %v197 = vsub.f32 %v143, %v186
  %v198 = vsub.f32 %v144, %v186
  %v199 = vsub.f32 %v145, %v186
  %v200 = vmul.f32 %v187, %v187
  %v201 = vmul.f32 %v188, %v188
  %v202 = vmul.f32 %v189, %v189
  %v203 = vmul.f32 %v190, %v190
  %v204 = vmul.f32 %v191, %v191
  %v205 = vmul.f32 %v192, %v192
  %v206 = vmul.f32 %v193, %v193
  %v207 = vmul.f32 %v194, %v194
  %v208 = vmul.f32 %v195, %v195
  %v209 = vmul.f32 %v196, %v196
  %v210 = vmul.f32 %v197, %v197
  %v211 = vmul.f32 %v198, %v198
  %v212 = vmul.f32 %v199, %v199
  %v213 = vsel %vm146, %v200, 0.0
  %v214 = vsel %vm146, %v201, 0.0
  %v215 = vadd.f32 %v213, %v214
  %v216 = vsel %vm146, %v202, 0.0
  %v217 = vadd.f32 %v215, %v216
  %v218 = vsel %vm146, %v203, 0.0
  %v219 = vadd.f32 %v217, %v218
  %v220 = vsel %vm146, %v204, 0.0
  %v221 = vadd.f32 %v219, %v220
  %v222 = vsel %vm146, %v205, 0.0
  %v223 = vadd.f32 %v221, %v222
  %v224 = vsel %vm146, %v206, 0.0
  %v225 = vadd.f32 %v223, %v224
  %v226 = vsel %vm146, %v207, 0.0
  %v227 = vadd.f32 %v225, %v226
  %v228 = vsel %vm146, %v208, 0.0
  %v229 = vadd.f32 %v227, %v228
  %v230 = vsel %vm146, %v209, 0.0
  %v231 = vadd.f32 %v229, %v230
  %v232 = vsel %vm146, %v210, 0.0
  %v233 = vadd.f32 %v231, %v232
  %v234 = vsel %vm146, %v211, 0.0
  %v235 = vadd.f32 %v233, %v234
  %v236 = vsel %vm170, %v212, 0.0
  %v237 = vadd.f32 %v235, %v236
  %v238 = vrot.slane %v237, 4
  %v239 = vadd.f32 %v237, %v238
  %v240 = vrot.slane %v239, 2
  %v241 = vadd.f32 %v239, %v240
  %v242 = vrot.slane %v241, 1
  %v243 = vadd.f32 %v241, %v242
  %v244 = vmul.f32 %v243, %v185
  %v245 = vadd.f32 %v244, 1e-05
  %v246 = vrsqrt.pop %v245
  %v247 = vmul.f32 %v246, %v245
  %v248 = vmul.f32 %v247, %v246
  %v249 = vmul.f32 0.5, %v248
  %v250 = vsub.f32 1.5, %v249
  %v251 = vmul.f32 %v246, %v250
  %vm252 = vweird.f32 %v245
  %vm253 = vweird.f32 %v246
  %vm254 = vmor %vm252, %vm253
  %v255 = vsel %vm254, %v246, %v251
  %v256 = vmul.f32 %v187, %v255
  %v257 = vmul.f32 %v188, %v255
  %v258 = vmul.f32 %v189, %v255
  %v259 = vmul.f32 %v190, %v255
  %v260 = vmul.f32 %v191, %v255
  %v261 = vmul.f32 %v192, %v255
  %v262 = vmul.f32 %v193, %v255
  %v263 = vmul.f32 %v194, %v255
  %v264 = vmul.f32 %v195, %v255
  %v265 = vmul.f32 %v196, %v255
  %v266 = vmul.f32 %v197, %v255
  %v267 = vmul.f32 %v198, %v255
  %v268 = vmul.f32 %v199, %v255
  %269 = vst.msk [vmem:[%s3] sm:$0xff] %vm146, %v256
  %270 = vst.msk [vmem:[%s3 + $0x8] sm:$0xff] %vm146, %v257
  %271 = vst.msk [vmem:[%s3 + $0x10] sm:$0xff] %vm146, %v258
  %272 = vst.msk [vmem:[%s3 + $0x18] sm:$0xff] %vm146, %v259
  %273 = vst.msk [vmem:[%s3 + $0x20] sm:$0xff] %vm146, %v260
  %274 = vst.msk [vmem:[%s3 + $0x28] sm:$0xff] %vm146, %v261
  %275 = vst.msk [vmem:[%s3 + $0x30] sm:$0xff] %vm146, %v262
  %276 = vst.msk [vmem:[%s3 + $0x38] sm:$0xff] %vm146, %v263
  %277 = vst.msk [vmem:[%s3 + $0x40] sm:$0xff] %vm146, %v264
  %278 = vst.msk [vmem:[%s3 + $0x48] sm:$0xff] %vm146, %v265
  %279 = vst.msk [vmem:[%s3 + $0x50] sm:$0xff] %vm146, %v266
  %280 = vst.msk [vmem:[%s3 + $0x58] sm:$0xff] %vm146, %v267
  %281 = vst.msk [vmem:[%s3 + $0x60] sm:$0x3f] %vm170, %v268
  // Predicated region
  $region14: #{egc_stage1_forward.4} parent=0 // pred_check
    _
  $region15: #{egc_stage1_forward.4} parent=0 // pred_check_branch
    %283 = sbr.rel (0) target = $region17
  $region16: #{egc_stage1_forward.4} parent=0 // pred_region
    _
  $region17: #{egc_stage1_forward.4} parent=0 // pred_fallthru
    _
  // Predicated region
  $region18: #{egc_stage1_forward.4} parent=0 // pred_check
    _
  $region19: #{egc_stage1_forward.4} parent=0 // pred_check_branch
    %285 = sbr.rel (0) target = $region21
  $region20: #{egc_stage1_forward.4} parent=0 // pred_region
    _
  $region21: #{egc_stage1_forward.4} parent=0 // pred_fallthru
    _

// kernel: egc_stage1_forward.5
$region0: #{egc_stage1_forward.5}
  #allocation0 [shape = 'u32[]', space=smem, size = 0x4, offset = 0x4, fixed_abs, tag = 'smem constant byte address 0x4 - core index']
  #allocation1 [shape = 'u32[72,128]{1,0:T(1,128)}', space=vmem, size = 0x9000, scoped, tag = 'internal scratch']
  %s0 = inlined_call_operand.vmem [shape: f32[48,80], index: 0, kind: input, shape index: {}]
  %s1 = inlined_call_operand.vmem [shape: f32[80,16], index: 1, kind: input, shape index: {}]
  %s2 = inlined_call_operand.vmem [shape: f32[1,16], index: 2, kind: input, shape index: {}]
  %s3 = inlined_call_operand.vmem [shape: f32[48,16], index: 3, kind: output, shape index: {}]
  %s4 = sld [smem:[#allocation0]]
  $region22: #{egc_stage1_forward.5} parent=0
    _
  %s6 = ssub.s32 1, %s4
  %s7 = scalar_select 0, %s6, %s4
  // Predicated region
  $region2: #{egc_stage1_forward.5} parent=0 // pred_check
    _
  $region3: #{egc_stage1_forward.5} parent=0 // pred_check_branch
    %9 = sbr.rel (0) target = $region5
  $region4: #{egc_stage1_forward.5} parent=0 // pred_region
    _
  $region5: #{egc_stage1_forward.5} parent=0 // pred_fallthru
    _
  // Predicated region
  $region6: #{egc_stage1_forward.5} parent=0 // pred_check
    _
  $region7: #{egc_stage1_forward.5} parent=0 // pred_check_branch
    %11 = sbr.rel (0) target = $region9
  $region8: #{egc_stage1_forward.5} parent=0 // pred_region
    _
  $region9: #{egc_stage1_forward.5} parent=0 // pred_fallthru
    _
  // Predicated region
  $region10: #{egc_stage1_forward.5} parent=0 // pred_check
    _
  $region11: #{egc_stage1_forward.5} parent=0 // pred_check_branch
    %13 = sbr.rel (0) target = $region13
  $region12: #{egc_stage1_forward.5} parent=0 // pred_region
    _
  $region13: #{egc_stage1_forward.5} parent=0 // pred_fallthru
    _
  %v14 = vld [vmem:[%s0] sm:$0xff]
  %v15 = vld [vmem:[%s0 + $0x8] sm:$0xff]
  %v16 = vld [vmem:[%s0 + $0x10] sm:$0xff]
  %v17 = vld [vmem:[%s0 + $0x18] sm:$0xff]
  %v18 = vld [vmem:[%s0 + $0x20] sm:$0xff]
  %v19 = vld [vmem:[%s0 + $0x28] sm:$0xff]
  %v20 = vld [vmem:[%s1] sm:$0xff]
  %v21 = vld [vmem:[%s1 + $0x8] sm:$0xff]
  %v22 = vld [vmem:[%s1 + $0x10] sm:$0xff]
  %v23 = vld [vmem:[%s1 + $0x18] sm:$0xff]
  %v24 = vld [vmem:[%s1 + $0x20] sm:$0xff]
  %v25 = vld [vmem:[%s1 + $0x28] sm:$0xff]
  %v26 = vld [vmem:[%s1 + $0x30] sm:$0xff]
  %v27 = vld [vmem:[%s1 + $0x38] sm:$0xff]
  %v28 = vld [vmem:[%s1 + $0x40] sm:$0xff]
  %v29 = vld [vmem:[%s1 + $0x48] sm:$0xff]
  %v30 = vld [vmem:[%s2] sm:$0x1]
  %v32 = vperm.slane %v30, 0
  %vm34 = vcmask 654336
  %v36 = vsel %vm34, %v14, 0
  %v39 = vsel %vm34, %v15, 0
  %v42 = vsel %vm34, %v16, 0
  %v45 = vsel %vm34, %v17, 0
  %v48 = vsel %vm34, %v18, 0
  %v51 = vsel %vm34, %v19, 0
  %53 = vmatpush.msra.mxu0 0.0
  %54 = vmatpush.msra.mxu0 0.0
  %55 = vmatpush.msra.mxu0 0.0
  %56 = vmatpush.msra.mxu0 0.0
  %57 = vmatpush.msra.mxu0 0.0
  %58 = vmatpush.msra.mxu0 0.0
  %59 = vmatpush.msra.mxu0 %v29
  %60 = vmatpush.msra.mxu0 %v28
  %61 = vmatpush.msra.mxu0 %v27
  %62 = vmatpush.msra.mxu0 %v26
  %63 = vmatpush.msra.mxu0 %v25
  %64 = vmatpush.msra.mxu0 %v24
  %65 = vmatpush.msra.mxu0 %v23
  %66 = vmatpush.msra.mxu0 %v22
  %67 = vmatpush.msra.mxu0 %v21
  %68 = vmatpush.msra.mxu0 %v20
  %69 = vmatmul.f32.gmra.mxu0 %v36
  %v70 = vpop.f32.mrf.mxu0
  %v71 = vadd.f32 %v32, %v70
  %72 = vmatmul.f32.gmra.mxu0 %v39
  %v73 = vpop.f32.mrf.mxu0
  %v74 = vadd.f32 %v32, %v73
  %75 = vmatmul.f32.gmra.mxu0 %v42
  %v76 = vpop.f32.mrf.mxu0
  %v77 = vadd.f32 %v32, %v76
  %78 = vmatmul.f32.gmra.mxu0 %v45
  %v79 = vpop.f32.mrf.mxu0
  %v80 = vadd.f32 %v32, %v79
  %81 = vmatmul.f32.gmra.mxu0 %v48
  %v82 = vpop.f32.mrf.mxu0
  %v83 = vadd.f32 %v32, %v82
  %84 = vmatmul.f32.gmra.mxu0 %v51
  %v85 = vpop.f32.mrf.mxu0
  %v86 = vadd.f32 %v32, %v85
  %87 = vdwg.mxu0
  %v88 = vmax.f32 %v71, 0.0
  %v89 = vmax.f32 %v74, 0.0
  %v90 = vmax.f32 %v77, 0.0
  %v91 = vmax.f32 %v80, 0.0
  %v92 = vmax.f32 %v83, 0.0
  %v93 = vmax.f32 %v86, 0.0
  %vm94 = vcmask 130048
  %v95 = vsel %vm94, %v88, 0.0
  %v96 = vsel %vm94, %v89, 0.0
  %v97 = vadd.f32 %v95, %v96
  %v98 = vsel %vm94, %v90, 0.0
  %v99 = vadd.f32 %v97, %v98
  %v100 = vsel %vm94, %v91, 0.0
  %v101 = vadd.f32 %v99, %v100
  %v102 = vsel %vm94, %v92, 0.0
  %v103 = vadd.f32 %v101, %v102
  %v104 = vsel %vm94, %v93, 0.0
  %v105 = vadd.f32 %v103, %v104
  %v106 = vrot.slane %v105, 4
  %v107 = vadd.f32 %v105, %v106
  %v108 = vrot.slane %v107, 2
  %v109 = vadd.f32 %v107, %v108
  %v110 = vrot.slane %v109, 1
  %v111 = vadd.f32 %v109, %v110
  %v112 = vrcp.pop 48.0
  %v113 = vmul.f32 48.0, %v112
  %v114 = vsub.f32 1.0, %v113
  %v115 = vmul.f32 %v112, %v114
  %v116 = vadd.f32 %v112, %v115
  %vm117 = vweird.f32 %v112
  %v118 = vsel %vm117, %v112, %v116
  %v119 = vmul.f32 %v111, %v118
  %v120 = vsub.f32 %v88, %v119
  %v121 = vsub.f32 %v89, %v119
  %v122 = vsub.f32 %v90, %v119
  %v123 = vsub.f32 %v91, %v119
  %v124 = vsub.f32 %v92, %v119
  %v125 = vsub.f32 %v93, %v119
  %v126 = vmul.f32 %v120, %v120
  %v127 = vmul.f32 %v121, %v121
  %v128 = vmul.f32 %v122, %v122
  %v129 = vmul.f32 %v123, %v123
  %v130 = vmul.f32 %v124, %v124
  %v131 = vmul.f32 %v125, %v125
  %v132 = vsel %vm94, %v126, 0.0
  %v133 = vsel %vm94, %v127, 0.0
  %v134 = vadd.f32 %v132, %v133
  %v135 = vsel %vm94, %v128, 0.0
  %v136 = vadd.f32 %v134, %v135
  %v137 = vsel %vm94, %v129, 0.0
  %v138 = vadd.f32 %v136, %v137
  %v139 = vsel %vm94, %v130, 0.0
  %v140 = vadd.f32 %v138, %v139
  %v141 = vsel %vm94, %v131, 0.0
  %v142 = vadd.f32 %v140, %v141
  %v143 = vrot.slane %v142, 4
  %v144 = vadd.f32 %v142, %v143
  %v145 = vrot.slane %v144, 2
  %v146 = vadd.f32 %v144, %v145
  %v147 = vrot.slane %v146, 1
  %v148 = vadd.f32 %v146, %v147
  %v149 = vmul.f32 %v148, %v118
  %v150 = vadd.f32 %v149, 1e-05
  %v151 = vrsqrt.pop %v150
  %v152 = vmul.f32 %v151, %v150
  %v153 = vmul.f32 %v152, %v151
  %v154 = vmul.f32 0.5, %v153
  %v155 = vsub.f32 1.5, %v154
  %v156 = vmul.f32 %v151, %v155
  %vm157 = vweird.f32 %v150
  %vm158 = vweird.f32 %v151
  %vm159 = vmor %vm157, %vm158
  %v160 = vsel %vm159, %v151, %v156
  %v161 = vmul.f32 %v120, %v160
  %v162 = vmul.f32 %v121, %v160
  %v163 = vmul.f32 %v122, %v160
  %v164 = vmul.f32 %v123, %v160
  %v165 = vmul.f32 %v124, %v160
  %v166 = vmul.f32 %v125, %v160
  %167 = vst.msk [vmem:[%s3] sm:$0xff] %vm94, %v161
  %168 = vst.msk [vmem:[%s3 + $0x8] sm:$0xff] %vm94, %v162
  %169 = vst.msk [vmem:[%s3 + $0x10] sm:$0xff] %vm94, %v163
  %170 = vst.msk [vmem:[%s3 + $0x18] sm:$0xff] %vm94, %v164
  %171 = vst.msk [vmem:[%s3 + $0x20] sm:$0xff] %vm94, %v165
  %172 = vst.msk [vmem:[%s3 + $0x28] sm:$0xff] %vm94, %v166
  // Predicated region
  $region14: #{egc_stage1_forward.5} parent=0 // pred_check
    _
  $region15: #{egc_stage1_forward.5} parent=0 // pred_check_branch
    %174 = sbr.rel (0) target = $region17
  $region16: #{egc_stage1_forward.5} parent=0 // pred_region
    _
  $region17: #{egc_stage1_forward.5} parent=0 // pred_fallthru
    _
  // Predicated region
  $region18: #{egc_stage1_forward.5} parent=0 // pred_check
    _
  $region19: #{egc_stage1_forward.5} parent=0 // pred_check_branch
    %176 = sbr.rel (0) target = $region21
  $region20: #{egc_stage1_forward.5} parent=0 // pred_region
    _
  $region21: #{egc_stage1_forward.5} parent=0 // pred_fallthru
    _

// kernel: egc_stage1_forward.6
$region0: #{egc_stage1_forward.6}
  #allocation0 [shape = 'u32[]', space=smem, size = 0x4, offset = 0x4, fixed_abs, tag = 'smem constant byte address 0x4 - core index']
  #allocation1 [shape = 'u32[72,128]{1,0:T(1,128)}', space=vmem, size = 0x9000, scoped, tag = 'internal scratch']
  #allocation2 [shape = 'f32[1,1]{1,0:T(1,128)S(1)}', space=vmem, size = 0x200, scoped, tag = 'scoped memory for egc_stage1_forward.6']
  %s0 = inlined_call_operand.vmem [shape: f32[6,128], index: 0, kind: input, shape index: {}]
  %s1 = inlined_call_operand.vmem [shape: f32[128,8], index: 1, kind: input, shape index: {}]
  %s2 = inlined_call_operand.vmem [shape: f32[1,8], index: 2, kind: input, shape index: {}]
  %s3 = inlined_call_operand.vmem [shape: f32[8,8], index: 3, kind: input, shape index: {}]
  %s4 = inlined_call_operand.vmem [shape: f32[8,8], index: 4, kind: input, shape index: {}]
  %s5 = inlined_call_operand.vmem [shape: f32[1,8], index: 5, kind: input, shape index: {}]
  %s6 = inlined_call_operand.vmem [shape: f32[8,1], index: 6, kind: input, shape index: {}]
  %s7 = inlined_call_operand.<no memory space> [shape: f32[1,1], index: 7, kind: input, shape index: {}]
  %s8 = inlined_call_operand.vmem [shape: f32[3,6,6], index: 8, kind: input, shape index: {}]
  %s9 = inlined_call_operand.vmem [shape: f32[6,6], index: 9, kind: output, shape index: {}]
  %s10 = sld [smem:[#allocation0]]
  $region46: #{egc_stage1_forward.6} parent=0
    _
  %s12 = ssub.s32 1, %s10
  %s13 = scalar_select 0, %s12, %s10
  %v14 = vstv %s7
  %15 = vst [vmem:[#allocation2] sm:$0x1] %v14
  // Predicated region
  $region2: #{egc_stage1_forward.6} parent=0 // pred_check
    _
  $region3: #{egc_stage1_forward.6} parent=0 // pred_check_branch
    %17 = sbr.rel (0) target = $region5
  $region4: #{egc_stage1_forward.6} parent=0 // pred_region
    _
  $region5: #{egc_stage1_forward.6} parent=0 // pred_fallthru
    _
  // Predicated region
  $region6: #{egc_stage1_forward.6} parent=0 // pred_check
    _
  $region7: #{egc_stage1_forward.6} parent=0 // pred_check_branch
    %19 = sbr.rel (0) target = $region9
  $region8: #{egc_stage1_forward.6} parent=0 // pred_region
    _
  $region9: #{egc_stage1_forward.6} parent=0 // pred_fallthru
    _
  // Predicated region
  $region10: #{egc_stage1_forward.6} parent=0 // pred_check
    _
  $region11: #{egc_stage1_forward.6} parent=0 // pred_check_branch
    %21 = sbr.rel (0) target = $region13
  $region12: #{egc_stage1_forward.6} parent=0 // pred_region
    _
  $region13: #{egc_stage1_forward.6} parent=0 // pred_fallthru
    _
  // Predicated region
  $region14: #{egc_stage1_forward.6} parent=0 // pred_check
    _
  $region15: #{egc_stage1_forward.6} parent=0 // pred_check_branch
    %23 = sbr.rel (0) target = $region17
  $region16: #{egc_stage1_forward.6} parent=0 // pred_region
    _
  $region17: #{egc_stage1_forward.6} parent=0 // pred_fallthru
    _
  // Predicated region
  $region18: #{egc_stage1_forward.6} parent=0 // pred_check
    _
  $region19: #{egc_stage1_forward.6} parent=0 // pred_check_branch
    %25 = sbr.rel (0) target = $region21
  $region20: #{egc_stage1_forward.6} parent=0 // pred_region
    _
  $region21: #{egc_stage1_forward.6} parent=0 // pred_fallthru
    _
  // Predicated region
  $region22: #{egc_stage1_forward.6} parent=0 // pred_check
    _
  $region23: #{egc_stage1_forward.6} parent=0 // pred_check_branch
    %27 = sbr.rel (0) target = $region25
  $region24: #{egc_stage1_forward.6} parent=0 // pred_region
    _
  $region25: #{egc_stage1_forward.6} parent=0 // pred_fallthru
    _
  // Predicated region
  $region26: #{egc_stage1_forward.6} parent=0 // pred_check
    _
  $region27: #{egc_stage1_forward.6} parent=0 // pred_check_branch
    %29 = sbr.rel (0) target = $region29
  $region28: #{egc_stage1_forward.6} parent=0 // pred_region
    _
  $region29: #{egc_stage1_forward.6} parent=0 // pred_fallthru
    _
  // Predicated region
  $region30: #{egc_stage1_forward.6} parent=0 // pred_check
    _
  $region31: #{egc_stage1_forward.6} parent=0 // pred_check_branch
    %31 = sbr.rel (0) target = $region33
  $region32: #{egc_stage1_forward.6} parent=0 // pred_region
    _
  $region33: #{egc_stage1_forward.6} parent=0 // pred_fallthru
    _
  // Predicated region
  $region34: #{egc_stage1_forward.6} parent=0 // pred_check
    _
  $region35: #{egc_stage1_forward.6} parent=0 // pred_check_branch
    %33 = sbr.rel (0) target = $region37
  $region36: #{egc_stage1_forward.6} parent=0 // pred_region
    _
  $region37: #{egc_stage1_forward.6} parent=0 // pred_fallthru
    _
  %v34 = vld [vmem:[%s0] sm:$0x3f]
  %v35 = vld [vmem:[%s1] sm:$0xff]
  %v36 = vld [vmem:[%s1 + $0x8] sm:$0xff]
  %v37 = vld [vmem:[%s1 + $0x10] sm:$0xff]
  %v38 = vld [vmem:[%s1 + $0x18] sm:$0xff]
  %v39 = vld [vmem:[%s1 + $0x20] sm:$0xff]
  %v40 = vld [vmem:[%s1 + $0x28] sm:$0xff]
  %v41 = vld [vmem:[%s1 + $0x30] sm:$0xff]
  %v42 = vld [vmem:[%s1 + $0x38] sm:$0xff]
  %v43 = vld [vmem:[%s1 + $0x40] sm:$0xff]
  %v44 = vld [vmem:[%s1 + $0x48] sm:$0xff]
  %v45 = vld [vmem:[%s1 + $0x50] sm:$0xff]
  %v46 = vld [vmem:[%s1 + $0x58] sm:$0xff]
  %v47 = vld [vmem:[%s1 + $0x60] sm:$0xff]
  %v48 = vld [vmem:[%s1 + $0x68] sm:$0xff]
  %v49 = vld [vmem:[%s1 + $0x70] sm:$0xff]
  %v50 = vld [vmem:[%s1 + $0x78] sm:$0xff]
  %v51 = vld [vmem:[%s2] sm:$0x1]
  %v53 = vperm.slane %v51, 0
  %55 = vmatpush.msra.mxu0 %v50
  %56 = vmatpush.msra.mxu0 %v49
  %57 = vmatpush.msra.mxu0 %v48
  %58 = vmatpush.msra.mxu0 %v47
  %59 = vmatpush.msra.mxu0 %v46
  %60 = vmatpush.msra.mxu0 %v45
  %61 = vmatpush.msra.mxu0 %v44
  %62 = vmatpush.msra.mxu0 %v43
  %63 = vmatpush.msra.mxu0 %v42
  %64 = vmatpush.msra.mxu0 %v41
  %65 = vmatpush.msra.mxu0 %v40
  %66 = vmatpush.msra.mxu0 %v39
  %67 = vmatpush.msra.mxu0 %v38
  %68 = vmatpush.msra.mxu0 %v37
  %69 = vmatpush.msra.mxu0 %v36
  %70 = vmatpush.msra.mxu0 %v35
  %71 = vmatmul.f32.gmra.mxu0 %v34
  %v72 = vpop.f32.mrf.mxu0
  %v73 = vadd.f32 %v53, %v72
  %74 = vdwg.mxu0
  %v75 = vmax.f32 %v73, 0.0
  %vm76 = vcmask 62464
  %v77 = vsel %vm76, %v75, 0.0
  %v78 = vrot.slane %v77, 4
  %v79 = vadd.f32 %v77, %v78
  %v80 = vrot.slane %v79, 2
  %v81 = vadd.f32 %v79, %v80
  %v82 = vrot.slane %v81, 1
  %v83 = vadd.f32 %v81, %v82
  %v84 = vrcp.pop 6.0
  %v85 = vmul.f32 6.0, %v84
  %v86 = vsub.f32 1.0, %v85
  %v87 = vmul.f32 %v84, %v86
  %v88 = vadd.f32 %v84, %v87
  %vm89 = vweird.f32 %v84
  %v90 = vsel %vm89, %v84, %v88
  %v91 = vmul.f32 %v83, %v90
  %v92 = vsub.f32 %v75, %v91
  %v93 = vmul.f32 %v92, %v92
  %v94 = vsel %vm76, %v93, 0.0
  %v95 = vrot.slane %v94, 4
  %v96 = vadd.f32 %v94, %v95
  %v97 = vrot.slane %v96, 2
  %v98 = vadd.f32 %v96, %v97
  %v99 = vrot.slane %v98, 1
  %v100 = vadd.f32 %v98, %v99
  %v101 = vmul.f32 %v100, %v90
  %v102 = vadd.f32 %v101, 1e-05
  %v103 = vrsqrt.pop %v102
  %v104 = vmul.f32 %v103, %v102
  %v105 = vmul.f32 %v104, %v103
  %v106 = vmul.f32 0.5, %v105
  %v107 = vsub.f32 1.5, %v106
  %v108 = vmul.f32 %v103, %v107
  %vm109 = vweird.f32 %v102
  %vm110 = vweird.f32 %v103
  %vm111 = vmor %vm109, %vm110
  %v112 = vsel %vm111, %v103, %v108
  %v113 = vmul.f32 %v92, %v112
  %v114 = vld [vmem:[%s3] sm:$0xff]
  %vm115 = vcmask 64512
  %v117 = vsel %vm115, %v113, 0
  %119 = vmatpush.msra.mxu0 0.0
  %120 = vmatpush.msra.mxu0 0.0
  %121 = vmatpush.msra.mxu0 0.0
  %122 = vmatpush.msra.mxu0 0.0
  %123 = vmatpush.msra.mxu0 0.0
  %124 = vmatpush.msra.mxu0 0.0
  %125 = vmatpush.msra.mxu0 0.0
  %126 = vmatpush.msra.mxu0 0.0
  %127 = vmatpush.msra.mxu0 0.0
  %128 = vmatpush.msra.mxu0 0.0
  %129 = vmatpush.msra.mxu0 0.0
  %130 = vmatpush.msra.mxu0 0.0
  %131 = vmatpush.msra.mxu0 0.0
  %132 = vmatpush.msra.mxu0 0.0
  %133 = vmatpush.msra.mxu0 0.0
  %134 = vmatpush.msra.mxu0 %v114
  %135 = vmatmul.f32.gmra.mxu0 %v117
  %v136 = vpop.f32.mrf.mxu0
  %v137 = vadd.f32 0.0, %v136
  %138 = vdwg.mxu0
  %v139 = vld [vmem:[%s4] sm:$0xff]
  %v140 = vld [vmem:[%s5] sm:$0x1]
  %v142 = vperm.slane %v140, 0
  %144 = vmatpush.msra.mxu0 0.0
  %145 = vmatpush.msra.mxu0 0.0
  %146 = vmatpush.msra.mxu0 0.0
  %147 = vmatpush.msra.mxu0 0.0
  %148 = vmatpush.msra.mxu0 0.0
  %149 = vmatpush.msra.mxu0 0.0
  %150 = vmatpush.msra.mxu0 0.0
  %151 = vmatpush.msra.mxu0 0.0
  %152 = vmatpush.msra.mxu0 0.0
  %153 = vmatpush.msra.mxu0 0.0
  %154 = vmatpush.msra.mxu0 0.0
  %155 = vmatpush.msra.mxu0 0.0
  %156 = vmatpush.msra.mxu0 0.0
  %157 = vmatpush.msra.mxu0 0.0
  %158 = vmatpush.msra.mxu0 0.0
  %159 = vmatpush.msra.mxu0 %v139
  %160 = vmatmul.f32.gmra.mxu0 %v117
  %v161 = vpop.f32.mrf.mxu0
  %v162 = vadd.f32 %v142, %v161
  %163 = vdwg.mxu0
  %v164 = vlaneseq
  %v165 = vand.u32 %v164, 127
  %v166 = vperm.slane %v137, 0
  %v167 = vadd.f32 %v166, %v162
  %v168 = vmax.f32 %v167, 0.0
  %v169 = vld [vmem:[%s6] sm:$0xff]
  %v170 = vld [vmem:[#allocation2] sm:$0x1]
  %v172 = vperm.slane %v170, 0
  %v175 = vsel %vm115, %v168, 0
  %177 = vmatpush.msra.mxu0 0.0
  %178 = vmatpush.msra.mxu0 0.0
  %179 = vmatpush.msra.mxu0 0.0
  %180 = vmatpush.msra.mxu0 0.0
  %181 = vmatpush.msra.mxu0 0.0
  %182 = vmatpush.msra.mxu0 0.0
  %183 = vmatpush.msra.mxu0 0.0
  %184 = vmatpush.msra.mxu0 0.0
  %185 = vmatpush.msra.mxu0 0.0
  %186 = vmatpush.msra.mxu0 0.0
  %187 = vmatpush.msra.mxu0 0.0
  %188 = vmatpush.msra.mxu0 0.0
  %189 = vmatpush.msra.mxu0 0.0
  %190 = vmatpush.msra.mxu0 0.0
  %191 = vmatpush.msra.mxu0 0.0
  %192 = vmatpush.msra.mxu0 %v169
  %193 = vmatmul.f32.gmra.mxu0 %v175
  %v194 = vpop.f32.mrf.mxu0
  %v195 = vadd.f32 %v172, %v194
  %196 = vdwg.mxu0
  %vm197 = vcmp.eq.s32.totalorder %v165, 0
  %199 = vset.pattern.permute.xlu0 0
  %200 = vperm.xlu0 %199, %v195
  %v201 = vpop.permute.xlu0 %200
  %v203 = vsel %vm197, %v201, 0.0
  %v204 = vperm.slane %v137, 1
  %v205 = vadd.f32 %v204, %v162
  %v206 = vmax.f32 %v205, 0.0
  %v208 = vsel %vm115, %v206, 0
  %210 = vmatpush.msra.mxu0 0.0
  %211 = vmatpush.msra.mxu0 0.0
  %212 = vmatpush.msra.mxu0 0.0
  %213 = vmatpush.msra.mxu0 0.0
  %214 = vmatpush.msra.mxu0 0.0
  %215 = vmatpush.msra.mxu0 0.0
  %216 = vmatpush.msra.mxu0 0.0
  %217 = vmatpush.msra.mxu0 0.0
  %218 = vmatpush.msra.mxu0 0.0
  %219 = vmatpush.msra.mxu0 0.0
  %220 = vmatpush.msra.mxu0 0.0
  %221 = vmatpush.msra.mxu0 0.0
  %222 = vmatpush.msra.mxu0 0.0
  %223 = vmatpush.msra.mxu0 0.0
  %224 = vmatpush.msra.mxu0 0.0
  %225 = vmatpush.msra.mxu0 %v169
  %226 = vmatmul.f32.gmra.mxu0 %v208
  %v227 = vpop.f32.mrf.mxu0
  %v228 = vadd.f32 %v172, %v227
  %229 = vdwg.mxu0
  %vm230 = vcmp.eq.s32.totalorder %v165, 1
  %232 = vset.pattern.permute.xlu0 0
  %233 = vperm.xlu0 %232, %v228
  %v234 = vpop.permute.xlu0 %233
  %v236 = vsel %vm230, %v234, %v203
  %v237 = vperm.slane %v137, 2
  %v238 = vadd.f32 %v237, %v162
  %v239 = vmax.f32 %v238, 0.0
  %v241 = vsel %vm115, %v239, 0
  %243 = vmatpush.msra.mxu0 0.0
  %244 = vmatpush.msra.mxu0 0.0
  %245 = vmatpush.msra.mxu0 0.0
  %246 = vmatpush.msra.mxu0 0.0
  %247 = vmatpush.msra.mxu0 0.0
  %248 = vmatpush.msra.mxu0 0.0
  %249 = vmatpush.msra.mxu0 0.0
  %250 = vmatpush.msra.mxu0 0.0
  %251 = vmatpush.msra.mxu0 0.0
  %252 = vmatpush.msra.mxu0 0.0
  %253 = vmatpush.msra.mxu0 0.0
  %254 = vmatpush.msra.mxu0 0.0
  %255 = vmatpush.msra.mxu0 0.0
  %256 = vmatpush.msra.mxu0 0.0
  %257 = vmatpush.msra.mxu0 0.0
  %258 = vmatpush.msra.mxu0 %v169
  %259 = vmatmul.f32.gmra.mxu0 %v241
  %v260 = vpop.f32.mrf.mxu0
  %v261 = vadd.f32 %v172, %v260
  %262 = vdwg.mxu0
  %vm263 = vcmp.eq.s32.totalorder %v165, 2
  %265 = vset.pattern.permute.xlu0 0
  %266 = vperm.xlu0 %265, %v261
  %v267 = vpop.permute.xlu0 %266
  %v269 = vsel %vm263, %v267, %v236
  %v270 = vperm.slane %v137, 3
  %v271 = vadd.f32 %v270, %v162
  %v272 = vmax.f32 %v271, 0.0
  %v274 = vsel %vm115, %v272, 0
  %276 = vmatpush.msra.mxu0 0.0
  %277 = vmatpush.msra.mxu0 0.0
  %278 = vmatpush.msra.mxu0 0.0
  %279 = vmatpush.msra.mxu0 0.0
  %280 = vmatpush.msra.mxu0 0.0
  %281 = vmatpush.msra.mxu0 0.0
  %282 = vmatpush.msra.mxu0 0.0
  %283 = vmatpush.msra.mxu0 0.0
  %284 = vmatpush.msra.mxu0 0.0
  %285 = vmatpush.msra.mxu0 0.0
  %286 = vmatpush.msra.mxu0 0.0
  %287 = vmatpush.msra.mxu0 0.0
  %288 = vmatpush.msra.mxu0 0.0
  %289 = vmatpush.msra.mxu0 0.0
  %290 = vmatpush.msra.mxu0 0.0
  %291 = vmatpush.msra.mxu0 %v169
  %292 = vmatmul.f32.gmra.mxu0 %v274
  %v293 = vpop.f32.mrf.mxu0
  %v294 = vadd.f32 %v172, %v293
  %295 = vdwg.mxu0
  %vm296 = vcmp.eq.s32.totalorder %v165, 3
  %298 = vset.pattern.permute.xlu0 0
  %299 = vperm.xlu0 %298, %v294
  %v300 = vpop.permute.xlu0 %299
  %v302 = vsel %vm296, %v300, %v269
  %v303 = vperm.slane %v137, 4
  %v304 = vadd.f32 %v303, %v162
  %v305 = vmax.f32 %v304, 0.0
  %v307 = vsel %vm115, %v305, 0
  %309 = vmatpush.msra.mxu0 0.0
  %310 = vmatpush.msra.mxu0 0.0
  %311 = vmatpush.msra.mxu0 0.0
  %312 = vmatpush.msra.mxu0 0.0
  %313 = vmatpush.msra.mxu0 0.0
  %314 = vmatpush.msra.mxu0 0.0
  %315 = vmatpush.msra.mxu0 0.0
  %316 = vmatpush.msra.mxu0 0.0
  %317 = vmatpush.msra.mxu0 0.0
  %318 = vmatpush.msra.mxu0 0.0
  %319 = vmatpush.msra.mxu0 0.0
  %320 = vmatpush.msra.mxu0 0.0
  %321 = vmatpush.msra.mxu0 0.0
  %322 = vmatpush.msra.mxu0 0.0
  %323 = vmatpush.msra.mxu0 0.0
  %324 = vmatpush.msra.mxu0 %v169
  %325 = vmatmul.f32.gmra.mxu0 %v307
  %v326 = vpop.f32.mrf.mxu0
  %v327 = vadd.f32 %v172, %v326
  %328 = vdwg.mxu0
  %vm329 = vcmp.eq.s32.totalorder %v165, 4
  %331 = vset.pattern.permute.xlu0 0
  %332 = vperm.xlu0 %331, %v327
  %v333 = vpop.permute.xlu0 %332
  %v335 = vsel %vm329, %v333, %v302
  %v336 = vperm.slane %v137, 5
  %v337 = vadd.f32 %v336, %v162
  %v338 = vmax.f32 %v337, 0.0
  %v340 = vsel %vm115, %v338, 0
  %342 = vmatpush.msra.mxu0 0.0
  %343 = vmatpush.msra.mxu0 0.0
  %344 = vmatpush.msra.mxu0 0.0
  %345 = vmatpush.msra.mxu0 0.0
  %346 = vmatpush.msra.mxu0 0.0
  %347 = vmatpush.msra.mxu0 0.0
  %348 = vmatpush.msra.mxu0 0.0
  %349 = vmatpush.msra.mxu0 0.0
  %350 = vmatpush.msra.mxu0 0.0
  %351 = vmatpush.msra.mxu0 0.0
  %352 = vmatpush.msra.mxu0 0.0
  %353 = vmatpush.msra.mxu0 0.0
  %354 = vmatpush.msra.mxu0 0.0
  %355 = vmatpush.msra.mxu0 0.0
  %356 = vmatpush.msra.mxu0 0.0
  %357 = vmatpush.msra.mxu0 %v169
  %358 = vmatmul.f32.gmra.mxu0 %v340
  %v359 = vpop.f32.mrf.mxu0
  %v360 = vadd.f32 %v172, %v359
  %361 = vdwg.mxu0
  %vm362 = vcmp.eq.s32.totalorder %v165, 5
  %364 = vset.pattern.permute.xlu0 0
  %365 = vperm.xlu0 %364, %v360
  %v366 = vpop.permute.xlu0 %365
  %v368 = vsel %vm362, %v366, %v335
  %v369 = vld [vmem:[%s8] sm:$0x3f]
  %v370 = vadd.f32 %v369, 1e-10
  %v371 = vlog2.pop %v370
  %v372 = vmul.f32 %v371, 0.6931472
  %v373 = vsub.f32 0.0, %v372
  %v374 = vadd.f32 %v373, 1e-10
  %v375 = vlog2.pop %v374
  %v376 = vmul.f32 %v375, 0.6931472
  %v377 = vsub.f32 0.0, %v376
  %v378 = vadd.f32 %v368, %v377
  %v379 = vrcp.pop 0.1
  %v380 = vmul.f32 0.1, %v379
  %v381 = vsub.f32 1.0, %v380
  %v382 = vmul.f32 %v379, %v381
  %v383 = vadd.f32 %v379, %v382
  %vm384 = vweird.f32 %v379
  %v385 = vsel %vm384, %v379, %v383
  %v386 = vmul.f32 %v378, %v385
  %vm387 = vcmask 46080
  %v388 = vsel %vm387, %v386, -inf
  %v389 = vrot.slane %v388, 4
  %v390 = vmax.f32 %v388, %v389
  %v391 = vrot.slane %v390, 2
  %v392 = vmax.f32 %v390, %v391
  %v393 = vrot.slane %v392, 1
  %v394 = vmax.f32 %v392, %v393
  %v395 = vsub.f32 %v386, %v394
  %v396 = vmul.f32 %v395, 1.442695
  %v397 = vpow.pop %v396
  %v398 = vsel %vm387, %v397, 0.0
  %v399 = vrot.slane %v398, 4
  %v400 = vadd.f32 %v398, %v399
  %v401 = vrot.slane %v400, 2
  %v402 = vadd.f32 %v400, %v401
  %v403 = vrot.slane %v402, 1
  %v404 = vadd.f32 %v402, %v403
  %v405 = vrcp.pop %v404
  %v406 = vmul.f32 %v404, %v405
  %v407 = vsub.f32 1.0, %v406
  %v408 = vmul.f32 %v405, %v407
  %v409 = vadd.f32 %v405, %v408
  %vm410 = vweird.f32 %v404
  %vm411 = vweird.f32 %v405
  %vm412 = vmor %vm410, %vm411
  %v413 = vsel %vm412, %v405, %v409
  %v414 = vand.u32 2147483647, %v404
  %vm415 = vcmp.eq.f32.partialorder %v414, 8.507059e+37
  %v416 = vand.u32 %v404, 2147483648
  %v417 = vor.u32 1.1754944e-38, %v416
  %v418 = vsel %vm415, %v417, %v413
  %v419 = vmul.f32 %v397, %v418
  %v420 = vadd.f32 %v419, 0.0
  %s421 = scalar_lea.vmem %s8, 8
  %v422 = vld [vmem:[%s421] sm:$0x3f]
  %v423 = vadd.f32 %v422, 1e-10
  %v424 = vlog2.pop %v423
  %v425 = vmul.f32 %v424, 0.6931472
  %v426 = vsub.f32 0.0, %v425
  %v427 = vadd.f32 %v426, 1e-10
  %v428 = vlog2.pop %v427
  %v429 = vmul.f32 %v428, 0.6931472
  %v430 = vsub.f32 0.0, %v429
  %v431 = vadd.f32 %v368, %v430
  %v432 = vmul.f32 %v431, %v385
  %v433 = vsel %vm387, %v432, -inf
  %v434 = vrot.slane %v433, 4
  %v435 = vmax.f32 %v433, %v434
  %v436 = vrot.slane %v435, 2
  %v437 = vmax.f32 %v435, %v436
  %v438 = vrot.slane %v437, 1
  %v439 = vmax.f32 %v437, %v438
  %v440 = vsub.f32 %v432, %v439
  %v441 = vmul.f32 %v440, 1.442695
  %v442 = vpow.pop %v441
  %v443 = vsel %vm387, %v442, 0.0
  %v444 = vrot.slane %v443, 4
  %v445 = vadd.f32 %v443, %v444
  %v446 = vrot.slane %v445, 2
  %v447 = vadd.f32 %v445, %v446
  %v448 = vrot.slane %v447, 1
  %v449 = vadd.f32 %v447, %v448
  %v450 = vrcp.pop %v449
  %v451 = vmul.f32 %v449, %v450
  %v452 = vsub.f32 1.0, %v451
  %v453 = vmul.f32 %v450, %v452
  %v454 = vadd.f32 %v450, %v453
  %vm455 = vweird.f32 %v449
  %vm456 = vweird.f32 %v450
  %vm457 = vmor %vm455, %vm456
  %v458 = vsel %vm457, %v450, %v454
  %v459 = vand.u32 2147483647, %v449
  %vm460 = vcmp.eq.f32.partialorder %v459, 8.507059e+37
  %v461 = vand.u32 %v449, 2147483648
  %v462 = vor.u32 1.1754944e-38, %v461
  %v463 = vsel %vm460, %v462, %v458
  %v464 = vmul.f32 %v442, %v463
  %v465 = vadd.f32 %v420, %v464
  %s466 = scalar_lea.vmem %s8, 16
  %v467 = vld [vmem:[%s466] sm:$0x3f]
  %v468 = vadd.f32 %v467, 1e-10
  %v469 = vlog2.pop %v468
  %v470 = vmul.f32 %v469, 0.6931472
  %v471 = vsub.f32 0.0, %v470
  %v472 = vadd.f32 %v471, 1e-10
  %v473 = vlog2.pop %v472
  %v474 = vmul.f32 %v473, 0.6931472
  %v475 = vsub.f32 0.0, %v474
  %v476 = vadd.f32 %v368, %v475
  %v477 = vmul.f32 %v476, %v385
  %v478 = vsel %vm387, %v477, -inf
  %v479 = vrot.slane %v478, 4
  %v480 = vmax.f32 %v478, %v479
  %v481 = vrot.slane %v480, 2
  %v482 = vmax.f32 %v480, %v481
  %v483 = vrot.slane %v482, 1
  %v484 = vmax.f32 %v482, %v483
  %v485 = vsub.f32 %v477, %v484
  %v486 = vmul.f32 %v485, 1.442695
  %v487 = vpow.pop %v486
  %v488 = vsel %vm387, %v487, 0.0
  %v489 = vrot.slane %v488, 4
  %v490 = vadd.f32 %v488, %v489
  %v491 = vrot.slane %v490, 2
  %v492 = vadd.f32 %v490, %v491
  %v493 = vrot.slane %v492, 1
  %v494 = vadd.f32 %v492, %v493
  %v495 = vrcp.pop %v494
  %v496 = vmul.f32 %v494, %v495
  %v497 = vsub.f32 1.0, %v496
  %v498 = vmul.f32 %v495, %v497
  %v499 = vadd.f32 %v495, %v498
  %vm500 = vweird.f32 %v494
  %vm501 = vweird.f32 %v495
  %vm502 = vmor %vm500, %vm501
  %v503 = vsel %vm502, %v495, %v499
  %v504 = vand.u32 2147483647, %v494
  %vm505 = vcmp.eq.f32.partialorder %v504, 8.507059e+37
  %v506 = vand.u32 %v494, 2147483648
  %v507 = vor.u32 1.1754944e-38, %v506
  %v508 = vsel %vm505, %v507, %v503
  %v509 = vmul.f32 %v487, %v508
  %v510 = vadd.f32 %v465, %v509
  %v511 = vmul.f32 %v510, 0.33333334
  %v512 = vsel %vm387, %v511, 0.0
  %v513 = vrot.slane %v512, 4
  %v514 = vadd.f32 %v512, %v513
  %v515 = vrot.slane %v514, 2
  %v516 = vadd.f32 %v514, %v515
  %v517 = vrot.slane %v516, 1
  %v518 = vadd.f32 %v516, %v517
  %v519 = vrcp.pop %v518
  %v520 = vmul.f32 %v518, %v519
  %v521 = vsub.f32 1.0, %v520
  %v522 = vmul.f32 %v519, %v521
  %v523 = vadd.f32 %v519, %v522
  %vm524 = vweird.f32 %v518
  %vm525 = vweird.f32 %v519
  %vm526 = vmor %vm524, %vm525
  %v527 = vsel %vm526, %v519, %v523
  %v528 = vand.u32 2147483647, %v518
  %vm529 = vcmp.eq.f32.partialorder %v528, 8.507059e+37
  %v530 = vand.u32 %v518, 2147483648
  %v531 = vor.u32 1.1754944e-38, %v530
  %v532 = vsel %vm529, %v531, %v527
  %v533 = vmul.f32 %v511, %v532
  %534 = vst.msk [vmem:[%s9] sm:$0x3f] %vm387, %v533
  // Predicated region
  $region38: #{egc_stage1_forward.6} parent=0 // pred_check
    _
  $region39: #{egc_stage1_forward.6} parent=0 // pred_check_branch
    %536 = sbr.rel (0) target = $region41
  $region40: #{egc_stage1_forward.6} parent=0 // pred_region
    _
  $region41: #{egc_stage1_forward.6} parent=0 // pred_fallthru
    _
  // Predicated region
  $region42: #{egc_stage1_forward.6} parent=0 // pred_check
    _
  $region43: #{egc_stage1_forward.6} parent=0 // pred_check_branch
    %538 = sbr.rel (0) target = $region45
  $region44: #{egc_stage1_forward.6} parent=0 // pred_region
    _
  $region45: #{egc_stage1_forward.6} parent=0 // pred_fallthru
    _

// kernel: egc_stage1_forward.7
$region0: #{egc_stage1_forward.7}
  #allocation0 [shape = 'u32[]', space=smem, size = 0x4, offset = 0x4, fixed_abs, tag = 'smem constant byte address 0x4 - core index']
  #allocation1 [shape = 'u32[72,128]{1,0:T(1,128)}', space=vmem, size = 0x9000, scoped, tag = 'internal scratch']
  #allocation2 [shape = 'f32[48,6]{1,0:T(8,128)}', space=vmem, size = 0x6000, scoped, tag = 'scratch operand']
  #allocation3 [shape = 'f32[1,1]{1,0:T(1,128)S(1)}', space=vmem, size = 0x200, scoped, tag = 'scoped memory for egc_stage1_forward.7']
  %s0 = inlined_call_operand.vmem [shape: f32[6,6], index: 0, kind: input, shape index: {}]
  %s1 = inlined_call_operand.vmem [shape: f32[2,4,2,6], index: 1, kind: input, shape index: {}]
  %s2 = inlined_call_operand.vmem [shape: f32[16,30], index: 2, kind: input, shape index: {}]
  %s3 = inlined_call_operand.vmem [shape: f32[16,1], index: 3, kind: input, shape index: {}]
  %s4 = inlined_call_operand.vmem [shape: f32[8,30], index: 4, kind: input, shape index: {}]
  %s5 = inlined_call_operand.vmem [shape: f32[8,1], index: 5, kind: input, shape index: {}]
  %s6 = inlined_call_operand.vmem [shape: f32[16,48], index: 6, kind: input, shape index: {}]
  %s7 = inlined_call_operand.vmem [shape: f32[16,1], index: 7, kind: input, shape index: {}]
  %s8 = inlined_call_operand.vmem [shape: f32[8,48], index: 8, kind: input, shape index: {}]
  %s9 = inlined_call_operand.vmem [shape: f32[8,1], index: 9, kind: input, shape index: {}]
  %s10 = inlined_call_operand.vmem [shape: f32[16,27], index: 10, kind: input, shape index: {}]
  %s11 = inlined_call_operand.vmem [shape: f32[16,1], index: 11, kind: input, shape index: {}]
  %s12 = inlined_call_operand.vmem [shape: f32[8,27], index: 12, kind: input, shape index: {}]
  %s13 = inlined_call_operand.vmem [shape: f32[8,1], index: 13, kind: input, shape index: {}]
  %s14 = inlined_call_operand.vmem [shape: f32[16,48], index: 14, kind: input, shape index: {}]
  %s15 = inlined_call_operand.vmem [shape: f32[16,1], index: 15, kind: input, shape index: {}]
  %s16 = inlined_call_operand.vmem [shape: f32[8,48], index: 16, kind: input, shape index: {}]
  %s17 = inlined_call_operand.vmem [shape: f32[8,1], index: 17, kind: input, shape index: {}]
  %s18 = inlined_call_operand.vmem [shape: f32[1,8], index: 18, kind: input, shape index: {}]
  %s19 = inlined_call_operand.<no memory space> [shape: f32[1,1], index: 19, kind: input, shape index: {}]
  %s20 = inlined_call_operand.vmem [shape: f32[2,3,1,6], index: 20, kind: output, shape index: {}]
  %s21 = sld [smem:[#allocation0]]
  $region113: #{egc_stage1_forward.7} parent=0
    _
  %s23 = ssub.s32 1, %s21
  %s24 = scalar_select 0, %s23, %s21
  %v25 = vstv %s19
  %26 = vst [vmem:[#allocation3] sm:$0x1] %v25
  loop: start=0, step=1, limit=4
  $region2: #{egc_stage1_forward.7} parent=0 // loop_pre_header
    _
  $region3: #{egc_stage1_forward.7} parent=0 // loop_header
    %s28 = sphi 0, %s32
    %p29 = scmp.ge.s32.totalorder %s28, 4
    %s36 = sphi 0, %s36
    %s38 = sphi 0, %s36
    %s39 = sphi 0, %s38
    %s53 = sphi 0, %s39
    %s59 = sphi 0, %s61
    %s62 = sphi 0, %s59
    %s63 = sphi 0, %s62
    %s79 = sphi 0, %s63
    %s83 = sphi 0, %s83
    %s85 = sphi 0, %s83
    %s86 = sphi 0, %s85
    %s100 = sphi 0, %s86
    %s104 = sphi 0, %s104
    %s106 = sphi 0, %s104
    %s107 = sphi 0, %s106
    %s121 = sphi 0, %s107
    %s125 = sphi 0, %s125
    %s127 = sphi 0, %s125
    %s128 = sphi 0, %s127
    %s142 = sphi 0, %s128
    %s146 = sphi 0, %s146
    %s148 = sphi 0, %s146
    %s149 = sphi 0, %s148
    %s163 = sphi 0, %s149
    %s167 = sphi 0, %s167
    %s169 = sphi 0, %s167
    %s170 = sphi 0, %s169
    %s184 = sphi 0, %s170
    %s188 = sphi 0, %s188
    %s190 = sphi 0, %s188
    %s191 = sphi 0, %s190
    %s205 = sphi 0, %s191
    %s209 = sphi 0, %s209
    %s211 = sphi 0, %s209
    %s212 = sphi 0, %s211
    %s226 = sphi 0, %s212
    %s230 = sphi 0, %s230
    %s232 = sphi 0, %s230
    %s233 = sphi 0, %s232
    %s247 = sphi 0, %s233
    %s251 = sphi 0, %s251
    %s253 = sphi 0, %s251
    %s254 = sphi 0, %s253
    %s268 = sphi 0, %s254
    %s272 = sphi 0, %s272
    %s274 = sphi 0, %s272
    %s275 = sphi 0, %s274
    %s289 = sphi 0, %s275
    %s293 = sphi 0, %s293
    %s295 = sphi 0, %s293
    %s296 = sphi 0, %s295
    %s310 = sphi 0, %s296
    %s314 = sphi 0, %s314
    %s316 = sphi 0, %s314
    %s317 = sphi 0, %s316
    %s331 = sphi 0, %s317
    %s335 = sphi 0, %s335
    %s337 = sphi 0, %s335
    %s338 = sphi 0, %s337
    %s352 = sphi 0, %s338
    %s356 = sphi 0, %s356
    %s358 = sphi 0, %s356
    %s359 = sphi 0, %s358
    %s373 = sphi 0, %s359
    %s377 = sphi 0, %s377
    %s379 = sphi 0, %s377
    %s380 = sphi 0, %s379
    %s394 = sphi 0, %s380
    %s398 = sphi 0, %s398
    %s400 = sphi 0, %s398
    %s401 = sphi 0, %s400
    %s415 = sphi 0, %s401
    %s419 = sphi 0, %s419
    %s421 = sphi 0, %s419
    %s422 = sphi 0, %s421
    %s436 = sphi 0, %s422
    %s440 = sphi 0, %s440
    %s442 = sphi 0, %s440
    %s443 = sphi 0, %s442
    %s457 = sphi 0, %s443
    %s463 = sphi 0, %s465
    %s466 = sphi 0, %s463
    %s467 = sphi 0, %s466
    %s483 = sphi 0, %s467
  $region4: #{egc_stage1_forward.7} parent=0 // loop_header_branch
    %31 = sbr.rel (%p29) target = $region8
  $region5: #{egc_stage1_forward.7} parent=0 // loop_body
    %s33 = ssub.s32 %s28, 1
    %s34 = ssub.s32 %s28, 2
    %s35 = sadd.s32 %s28, 1
    %s37 = sadd.s32 %s36, 1
    %p40 = scmp.eq.s32.totalorder %s28, 1
    %p41 = scmp.ne.s32.totalorder %s36, %s38
    %p42 = scmp.eq.s32.totalorder %s28, 0
    %p43 = por %p41, %p42
    %p44 = scmp.ne.s32.totalorder %s36, %s38
    %p45 = scmp.eq.s32.totalorder %s33, 1
    %p46 = por %p44, %p45
    %p47 = scmp.ne.s32.totalorder %s38, %s39
    %p48 = scmp.eq.s32.totalorder %s33, 0
    %p49 = por %p47, %p48
    %p50 = scmp.ne.s32.totalorder %s38, %s39
    %p51 = scmp.eq.s32.totalorder %s34, 1
    %p52 = por %p50, %p51
    %p54 = scmp.ne.s32.totalorder %s39, %s53
    %p55 = scmp.eq.s32.totalorder %s34, 0
    %p56 = por %p54, %p55
    %s57 = ssub.s32 %s28, %s35
    %p58 = scmp.eq.s32.totalorder %s57, 0
    %s60 = sadd.s32 %s59, 1
    %s61 = scalar_select %p58, %s59, %s60
    %p64 = pneg %p58
    %p65 = scmp.eq.s32.totalorder %s28, 1
    %p66 = por %p64, %p65
    %p67 = scmp.ne.s32.totalorder %s59, %s62
    %p68 = scmp.eq.s32.totalorder %s28, 0
    %p69 = por %p67, %p68
    %p70 = scmp.ne.s32.totalorder %s59, %s62
    %p71 = scmp.eq.s32.totalorder %s33, 1
    %p72 = por %p70, %p71
    %p73 = scmp.ne.s32.totalorder %s62, %s63
    %p74 = scmp.eq.s32.totalorder %s33, 0
    %p75 = por %p73, %p74
    %p76 = scmp.ne.s32.totalorder %s62, %s63
    %p77 = scmp.eq.s32.totalorder %s34, 1
    %p78 = por %p76, %p77
    %p80 = scmp.ne.s32.totalorder %s63, %s79
    %p81 = scmp.eq.s32.totalorder %s34, 0
    %p82 = por %p80, %p81
    %s84 = sadd.s32 %s83, 1
    %p87 = scmp.eq.s32.totalorder %s28, 1
    %p88 = scmp.ne.s32.totalorder %s83, %s85
    %p89 = scmp.eq.s32.totalorder %s28, 0
    %p90 = por %p88, %p89
    %p91 = scmp.ne.s32.totalorder %s83, %s85
    %p92 = scmp.eq.s32.totalorder %s33, 1
    %p93 = por %p91, %p92
    %p94 = scmp.ne.s32.totalorder %s85, %s86
    %p95 = scmp.eq.s32.totalorder %s33, 0
    %p96 = por %p94, %p95
    %p97 = scmp.ne.s32.totalorder %s85, %s86
    %p98 = scmp.eq.s32.totalorder %s34, 1
    %p99 = por %p97, %p98
    %p101 = scmp.ne.s32.totalorder %s86, %s100
    %p102 = scmp.eq.s32.totalorder %s34, 0
    %p103 = por %p101, %p102
    %s105 = sadd.s32 %s104, 1
    %p108 = scmp.eq.s32.totalorder %s28, 1
    %p109 = scmp.ne.s32.totalorder %s104, %s106
    %p110 = scmp.eq.s32.totalorder %s28, 0
    %p111 = por %p109, %p110
    %p112 = scmp.ne.s32.totalorder %s104, %s106
    %p113 = scmp.eq.s32.totalorder %s33, 1
    %p114 = por %p112, %p113
    %p115 = scmp.ne.s32.totalorder %s106, %s107
    %p116 = scmp.eq.s32.totalorder %s33, 0
    %p117 = por %p115, %p116
    %p118 = scmp.ne.s32.totalorder %s106, %s107
    %p119 = scmp.eq.s32.totalorder %s34, 1
    %p120 = por %p118, %p119
    %p122 = scmp.ne.s32.totalorder %s107, %s121
    %p123 = scmp.eq.s32.totalorder %s34, 0
    %p124 = por %p122, %p123
    %s126 = sadd.s32 %s125, 1
    %p129 = scmp.eq.s32.totalorder %s28, 1
    %p130 = scmp.ne.s32.totalorder %s125, %s127
    %p131 = scmp.eq.s32.totalorder %s28, 0
    %p132 = por %p130, %p131
    %p133 = scmp.ne.s32.totalorder %s125, %s127
    %p134 = scmp.eq.s32.totalorder %s33, 1
    %p135 = por %p133, %p134
    %p136 = scmp.ne.s32.totalorder %s127, %s128
    %p137 = scmp.eq.s32.totalorder %s33, 0
    %p138 = por %p136, %p137
    %p139 = scmp.ne.s32.totalorder %s127, %s128
    %p140 = scmp.eq.s32.totalorder %s34, 1
    %p141 = por %p139, %p140
    %p143 = scmp.ne.s32.totalorder %s128, %s142
    %p144 = scmp.eq.s32.totalorder %s34, 0
    %p145 = por %p143, %p144
    %s147 = sadd.s32 %s146, 1
    %p150 = scmp.eq.s32.totalorder %s28, 1
    %p151 = scmp.ne.s32.totalorder %s146, %s148
    %p152 = scmp.eq.s32.totalorder %s28, 0
    %p153 = por %p151, %p152
    %p154 = scmp.ne.s32.totalorder %s146, %s148
    %p155 = scmp.eq.s32.totalorder %s33, 1
    %p156 = por %p154, %p155
    %p157 = scmp.ne.s32.totalorder %s148, %s149
    %p158 = scmp.eq.s32.totalorder %s33, 0
    %p159 = por %p157, %p158
    %p160 = scmp.ne.s32.totalorder %s148, %s149
    %p161 = scmp.eq.s32.totalorder %s34, 1
    %p162 = por %p160, %p161
    %p164 = scmp.ne.s32.totalorder %s149, %s163
    %p165 = scmp.eq.s32.totalorder %s34, 0
    %p166 = por %p164, %p165
    %s168 = sadd.s32 %s167, 1
    %p171 = scmp.eq.s32.totalorder %s28, 1
    %p172 = scmp.ne.s32.totalorder %s167, %s169
    %p173 = scmp.eq.s32.totalorder %s28, 0
    %p174 = por %p172, %p173
    %p175 = scmp.ne.s32.totalorder %s167, %s169
    %p176 = scmp.eq.s32.totalorder %s33, 1
    %p177 = por %p175, %p176
    %p178 = scmp.ne.s32.totalorder %s169, %s170
    %p179 = scmp.eq.s32.totalorder %s33, 0
    %p180 = por %p178, %p179
    %p181 = scmp.ne.s32.totalorder %s169, %s170
    %p182 = scmp.eq.s32.totalorder %s34, 1
    %p183 = por %p181, %p182
    %p185 = scmp.ne.s32.totalorder %s170, %s184
    %p186 = scmp.eq.s32.totalorder %s34, 0
    %p187 = por %p185, %p186
    %s189 = sadd.s32 %s188, 1
    %p192 = scmp.eq.s32.totalorder %s28, 1
    %p193 = scmp.ne.s32.totalorder %s188, %s190
    %p194 = scmp.eq.s32.totalorder %s28, 0
    %p195 = por %p193, %p194
    %p196 = scmp.ne.s32.totalorder %s188, %s190
    %p197 = scmp.eq.s32.totalorder %s33, 1
    %p198 = por %p196, %p197
    %p199 = scmp.ne.s32.totalorder %s190, %s191
    %p200 = scmp.eq.s32.totalorder %s33, 0
    %p201 = por %p199, %p200
    %p202 = scmp.ne.s32.totalorder %s190, %s191
    %p203 = scmp.eq.s32.totalorder %s34, 1
    %p204 = por %p202, %p203
    %p206 = scmp.ne.s32.totalorder %s191, %s205
    %p207 = scmp.eq.s32.totalorder %s34, 0
    %p208 = por %p206, %p207
    %s210 = sadd.s32 %s209, 1
    %p213 = scmp.eq.s32.totalorder %s28, 1
    %p214 = scmp.ne.s32.totalorder %s209, %s211
    %p215 = scmp.eq.s32.totalorder %s28, 0
    %p216 = por %p214, %p215
    %p217 = scmp.ne.s32.totalorder %s209, %s211
    %p218 = scmp.eq.s32.totalorder %s33, 1
    %p219 = por %p217, %p218
    %p220 = scmp.ne.s32.totalorder %s211, %s212
    %p221 = scmp.eq.s32.totalorder %s33, 0
    %p222 = por %p220, %p221
    %p223 = scmp.ne.s32.totalorder %s211, %s212
    %p224 = scmp.eq.s32.totalorder %s34, 1
    %p225 = por %p223, %p224
    %p227 = scmp.ne.s32.totalorder %s212, %s226
    %p228 = scmp.eq.s32.totalorder %s34, 0
    %p229 = por %p227, %p228
    %s231 = sadd.s32 %s230, 1
    %p234 = scmp.eq.s32.totalorder %s28, 1
    %p235 = scmp.ne.s32.totalorder %s230, %s232
    %p236 = scmp.eq.s32.totalorder %s28, 0
    %p237 = por %p235, %p236
    %p238 = scmp.ne.s32.totalorder %s230, %s232
    %p239 = scmp.eq.s32.totalorder %s33, 1
    %p240 = por %p238, %p239
    %p241 = scmp.ne.s32.totalorder %s232, %s233
    %p242 = scmp.eq.s32.totalorder %s33, 0
    %p243 = por %p241, %p242
    %p244 = scmp.ne.s32.totalorder %s232, %s233
    %p245 = scmp.eq.s32.totalorder %s34, 1
    %p246 = por %p244, %p245
    %p248 = scmp.ne.s32.totalorder %s233, %s247
    %p249 = scmp.eq.s32.totalorder %s34, 0
    %p250 = por %p248, %p249
    %s252 = sadd.s32 %s251, 1
    %p255 = scmp.eq.s32.totalorder %s28, 1
    %p256 = scmp.ne.s32.totalorder %s251, %s253
    %p257 = scmp.eq.s32.totalorder %s28, 0
    %p258 = por %p256, %p257
    %p259 = scmp.ne.s32.totalorder %s251, %s253
    %p260 = scmp.eq.s32.totalorder %s33, 1
    %p261 = por %p259, %p260
    %p262 = scmp.ne.s32.totalorder %s253, %s254
    %p263 = scmp.eq.s32.totalorder %s33, 0
    %p264 = por %p262, %p263
    %p265 = scmp.ne.s32.totalorder %s253, %s254
    %p266 = scmp.eq.s32.totalorder %s34, 1
    %p267 = por %p265, %p266
    %p269 = scmp.ne.s32.totalorder %s254, %s268
    %p270 = scmp.eq.s32.totalorder %s34, 0
    %p271 = por %p269, %p270
    %s273 = sadd.s32 %s272, 1
    %p276 = scmp.eq.s32.totalorder %s28, 1
    %p277 = scmp.ne.s32.totalorder %s272, %s274
    %p278 = scmp.eq.s32.totalorder %s28, 0
    %p279 = por %p277, %p278
    %p280 = scmp.ne.s32.totalorder %s272, %s274
    %p281 = scmp.eq.s32.totalorder %s33, 1
    %p282 = por %p280, %p281
    %p283 = scmp.ne.s32.totalorder %s274, %s275
    %p284 = scmp.eq.s32.totalorder %s33, 0
    %p285 = por %p283, %p284
    %p286 = scmp.ne.s32.totalorder %s274, %s275
    %p287 = scmp.eq.s32.totalorder %s34, 1
    %p288 = por %p286, %p287
    %p290 = scmp.ne.s32.totalorder %s275, %s289
    %p291 = scmp.eq.s32.totalorder %s34, 0
    %p292 = por %p290, %p291
    %s294 = sadd.s32 %s293, 1
    %p297 = scmp.eq.s32.totalorder %s28, 1
    %p298 = scmp.ne.s32.totalorder %s293, %s295
    %p299 = scmp.eq.s32.totalorder %s28, 0
    %p300 = por %p298, %p299
    %p301 = scmp.ne.s32.totalorder %s293, %s295
    %p302 = scmp.eq.s32.totalorder %s33, 1
    %p303 = por %p301, %p302
    %p304 = scmp.ne.s32.totalorder %s295, %s296
    %p305 = scmp.eq.s32.totalorder %s33, 0
    %p306 = por %p304, %p305
    %p307 = scmp.ne.s32.totalorder %s295, %s296
    %p308 = scmp.eq.s32.totalorder %s34, 1
    %p309 = por %p307, %p308
    %p311 = scmp.ne.s32.totalorder %s296, %s310
    %p312 = scmp.eq.s32.totalorder %s34, 0
    %p313 = por %p311, %p312
    %s315 = sadd.s32 %s314, 1
    %p318 = scmp.eq.s32.totalorder %s28, 1
    %p319 = scmp.ne.s32.totalorder %s314, %s316
    %p320 = scmp.eq.s32.totalorder %s28, 0
    %p321 = por %p319, %p320
    %p322 = scmp.ne.s32.totalorder %s314, %s316
    %p323 = scmp.eq.s32.totalorder %s33, 1
    %p324 = por %p322, %p323
    %p325 = scmp.ne.s32.totalorder %s316, %s317
    %p326 = scmp.eq.s32.totalorder %s33, 0
    %p327 = por %p325, %p326
    %p328 = scmp.ne.s32.totalorder %s316, %s317
    %p329 = scmp.eq.s32.totalorder %s34, 1
    %p330 = por %p328, %p329
    %p332 = scmp.ne.s32.totalorder %s317, %s331
    %p333 = scmp.eq.s32.totalorder %s34, 0
    %p334 = por %p332, %p333
    %s336 = sadd.s32 %s335, 1
    %p339 = scmp.eq.s32.totalorder %s28, 1
    %p340 = scmp.ne.s32.totalorder %s335, %s337
    %p341 = scmp.eq.s32.totalorder %s28, 0
    %p342 = por %p340, %p341
    %p343 = scmp.ne.s32.totalorder %s335, %s337
    %p344 = scmp.eq.s32.totalorder %s33, 1
    %p345 = por %p343, %p344
    %p346 = scmp.ne.s32.totalorder %s337, %s338
    %p347 = scmp.eq.s32.totalorder %s33, 0
    %p348 = por %p346, %p347
    %p349 = scmp.ne.s32.totalorder %s337, %s338
    %p350 = scmp.eq.s32.totalorder %s34, 1
    %p351 = por %p349, %p350
    %p353 = scmp.ne.s32.totalorder %s338, %s352
    %p354 = scmp.eq.s32.totalorder %s34, 0
    %p355 = por %p353, %p354
    %s357 = sadd.s32 %s356, 1
    %p360 = scmp.eq.s32.totalorder %s28, 1
    %p361 = scmp.ne.s32.totalorder %s356, %s358
    %p362 = scmp.eq.s32.totalorder %s28, 0
    %p363 = por %p361, %p362
    %p364 = scmp.ne.s32.totalorder %s356, %s358
    %p365 = scmp.eq.s32.totalorder %s33, 1
    %p366 = por %p364, %p365
    %p367 = scmp.ne.s32.totalorder %s358, %s359
    %p368 = scmp.eq.s32.totalorder %s33, 0
    %p369 = por %p367, %p368
    %p370 = scmp.ne.s32.totalorder %s358, %s359
    %p371 = scmp.eq.s32.totalorder %s34, 1
    %p372 = por %p370, %p371
    %p374 = scmp.ne.s32.totalorder %s359, %s373
    %p375 = scmp.eq.s32.totalorder %s34, 0
    %p376 = por %p374, %p375
    %s378 = sadd.s32 %s377, 1
    %p381 = scmp.eq.s32.totalorder %s28, 1
    %p382 = scmp.ne.s32.totalorder %s377, %s379
    %p383 = scmp.eq.s32.totalorder %s28, 0
    %p384 = por %p382, %p383
    %p385 = scmp.ne.s32.totalorder %s377, %s379
    %p386 = scmp.eq.s32.totalorder %s33, 1
    %p387 = por %p385, %p386
    %p388 = scmp.ne.s32.totalorder %s379, %s380
    %p389 = scmp.eq.s32.totalorder %s33, 0
    %p390 = por %p388, %p389
    %p391 = scmp.ne.s32.totalorder %s379, %s380
    %p392 = scmp.eq.s32.totalorder %s34, 1
    %p393 = por %p391, %p392
    %p395 = scmp.ne.s32.totalorder %s380, %s394
    %p396 = scmp.eq.s32.totalorder %s34, 0
    %p397 = por %p395, %p396
    %s399 = sadd.s32 %s398, 1
    %p402 = scmp.eq.s32.totalorder %s28, 1
    %p403 = scmp.ne.s32.totalorder %s398, %s400
    %p404 = scmp.eq.s32.totalorder %s28, 0
    %p405 = por %p403, %p404
    %p406 = scmp.ne.s32.totalorder %s398, %s400
    %p407 = scmp.eq.s32.totalorder %s33, 1
    %p408 = por %p406, %p407
    %p409 = scmp.ne.s32.totalorder %s400, %s401
    %p410 = scmp.eq.s32.totalorder %s33, 0
    %p411 = por %p409, %p410
    %p412 = scmp.ne.s32.totalorder %s400, %s401
    %p413 = scmp.eq.s32.totalorder %s34, 1
    %p414 = por %p412, %p413
    %p416 = scmp.ne.s32.totalorder %s401, %s415
    %p417 = scmp.eq.s32.totalorder %s34, 0
    %p418 = por %p416, %p417
    %s420 = sadd.s32 %s419, 1
    %p423 = scmp.eq.s32.totalorder %s28, 1
    %p424 = scmp.ne.s32.totalorder %s419, %s421
    %p425 = scmp.eq.s32.totalorder %s28, 0
    %p426 = por %p424, %p425
    %p427 = scmp.ne.s32.totalorder %s419, %s421
    %p428 = scmp.eq.s32.totalorder %s33, 1
    %p429 = por %p427, %p428
    %p430 = scmp.ne.s32.totalorder %s421, %s422
    %p431 = scmp.eq.s32.totalorder %s33, 0
    %p432 = por %p430, %p431
    %p433 = scmp.ne.s32.totalorder %s421, %s422
    %p434 = scmp.eq.s32.totalorder %s34, 1
    %p435 = por %p433, %p434
    %p437 = scmp.ne.s32.totalorder %s422, %s436
    %p438 = scmp.eq.s32.totalorder %s34, 0
    %p439 = por %p437, %p438
    %s441 = sadd.s32 %s440, 1
    %p444 = scmp.eq.s32.totalorder %s28, 1
    %p445 = scmp.ne.s32.totalorder %s440, %s442
    %p446 = scmp.eq.s32.totalorder %s28, 0
    %p447 = por %p445, %p446
    %p448 = scmp.ne.s32.totalorder %s440, %s442
    %p449 = scmp.eq.s32.totalorder %s33, 1
    %p450 = por %p448, %p449
    %p451 = scmp.ne.s32.totalorder %s442, %s443
    %p452 = scmp.eq.s32.totalorder %s33, 0
    %p453 = por %p451, %p452
    %p454 = scmp.ne.s32.totalorder %s442, %s443
    %p455 = scmp.eq.s32.totalorder %s34, 1
    %p456 = por %p454, %p455
    %p458 = scmp.ne.s32.totalorder %s443, %s457
    %p459 = scmp.eq.s32.totalorder %s34, 0
    %p460 = por %p458, %p459
    %s461 = ssub.s32 %s28, %s35
    %p462 = scmp.eq.s32.totalorder %s461, 0
    %s464 = sadd.s32 %s463, 1
    %s465 = scalar_select %p462, %s463, %s464
    %p468 = pneg %p462
    %p469 = scmp.eq.s32.totalorder %s28, 1
    %p470 = por %p468, %p469
    %p471 = scmp.ne.s32.totalorder %s463, %s466
    %p472 = scmp.eq.s32.totalorder %s28, 0
    %p473 = por %p471, %p472
    %p474 = scmp.ne.s32.totalorder %s463, %s466
    %p475 = scmp.eq.s32.totalorder %s33, 1
    %p476 = por %p474, %p475
    %p477 = scmp.ne.s32.totalorder %s466, %s467
    %p478 = scmp.eq.s32.totalorder %s33, 0
    %p479 = por %p477, %p478
    %p480 = scmp.ne.s32.totalorder %s466, %s467
    %p481 = scmp.eq.s32.totalorder %s34, 1
    %p482 = por %p480, %p481
    %p484 = scmp.ne.s32.totalorder %s467, %s483
    %p485 = scmp.eq.s32.totalorder %s34, 0
    %p486 = por %p484, %p485
    %p487 = scmp.le.s32.totalorder 1, %s28
    %p488 = scmp.lt.s32.totalorder %s28, 3
    %p489 = pnand %p487, %p488
    %p490 = pneg %p489
    // Predicated region
    $region9: #{egc_stage1_forward.7} parent=5 // pred_check
      _
    $region10: #{egc_stage1_forward.7} parent=5 // pred_check_branch
      %492 = sbr.rel (%p489) target = $region12
    $region11: #{egc_stage1_forward.7} parent=5 // pred_region
      %s493 = ssub.s32 %s28, 1
      // Predicated region
      $region13: #{egc_stage1_forward.7} parent=11 // pred_check
        %p494 = pneg %p49
      $region14: #{egc_stage1_forward.7} parent=11 // pred_check_branch
        %496 = sbr.rel (%p494) target = $region16
      $region15: #{egc_stage1_forward.7} parent=11 // pred_region
        _
      $region16: #{egc_stage1_forward.7} parent=11 // pred_fallthru
        _
      // Predicated region
      $region17: #{egc_stage1_forward.7} parent=11 // pred_check
        %p497 = pneg %p96
      $region18: #{egc_stage1_forward.7} parent=11 // pred_check_branch
        %499 = sbr.rel (%p497) target = $region20
      $region19: #{egc_stage1_forward.7} parent=11 // pred_region
        _
      $region20: #{egc_stage1_forward.7} parent=11 // pred_fallthru
        _
      // Predicated region
      $region21: #{egc_stage1_forward.7} parent=11 // pred_check
        %p500 = pneg %p117
      $region22: #{egc_stage1_forward.7} parent=11 // pred_check_branch
        %502 = sbr.rel (%p500) target = $region24
      $region23: #{egc_stage1_forward.7} parent=11 // pred_region
        _
      $region24: #{egc_stage1_forward.7} parent=11 // pred_fallthru
        _
      // Predicated region
      $region25: #{egc_stage1_forward.7} parent=11 // pred_check
        %p503 = pneg %p138
      $region26: #{egc_stage1_forward.7} parent=11 // pred_check_branch
        %505 = sbr.rel (%p503) target = $region28
      $region27: #{egc_stage1_forward.7} parent=11 // pred_region
        _
      $region28: #{egc_stage1_forward.7} parent=11 // pred_fallthru
        _
      // Predicated region
      $region29: #{egc_stage1_forward.7} parent=11 // pred_check
        %p506 = pneg %p159
      $region30: #{egc_stage1_forward.7} parent=11 // pred_check_branch
        %508 = sbr.rel (%p506) target = $region32
      $region31: #{egc_stage1_forward.7} parent=11 // pred_region
        _
      $region32: #{egc_stage1_forward.7} parent=11 // pred_fallthru
        _
      // Predicated region
      $region33: #{egc_stage1_forward.7} parent=11 // pred_check
        %p509 = pneg %p180
      $region34: #{egc_stage1_forward.7} parent=11 // pred_check_branch
        %511 = sbr.rel (%p509) target = $region36
      $region35: #{egc_stage1_forward.7} parent=11 // pred_region
        _
      $region36: #{egc_stage1_forward.7} parent=11 // pred_fallthru
        _
      // Predicated region
      $region37: #{egc_stage1_forward.7} parent=11 // pred_check
        %p512 = pneg %p201
      $region38: #{egc_stage1_forward.7} parent=11 // pred_check_branch
        %514 = sbr.rel (%p512) target = $region40
      $region39: #{egc_stage1_forward.7} parent=11 // pred_region
        _
      $region40: #{egc_stage1_forward.7} parent=11 // pred_fallthru
        _
      // Predicated region
      $region41: #{egc_stage1_forward.7} parent=11 // pred_check
        %p515 = pneg %p222
      $region42: #{egc_stage1_forward.7} parent=11 // pred_check_branch
        %517 = sbr.rel (%p515) target = $region44
      $region43: #{egc_stage1_forward.7} parent=11 // pred_region
        _
      $region44: #{egc_stage1_forward.7} parent=11 // pred_fallthru
        _
      // Predicated region
      $region45: #{egc_stage1_forward.7} parent=11 // pred_check
        %p518 = pneg %p243
      $region46: #{egc_stage1_forward.7} parent=11 // pred_check_branch
        %520 = sbr.rel (%p518) target = $region48
      $region47: #{egc_stage1_forward.7} parent=11 // pred_region
        _
      $region48: #{egc_stage1_forward.7} parent=11 // pred_fallthru
        _
      // Predicated region
      $region49: #{egc_stage1_forward.7} parent=11 // pred_check
        %p521 = pneg %p264
      $region50: #{egc_stage1_forward.7} parent=11 // pred_check_branch
        %523 = sbr.rel (%p521) target = $region52
      $region51: #{egc_stage1_forward.7} parent=11 // pred_region
        _
      $region52: #{egc_stage1_forward.7} parent=11 // pred_fallthru
        _
      // Predicated region
      $region53: #{egc_stage1_forward.7} parent=11 // pred_check
        %p524 = pneg %p285
      $region54: #{egc_stage1_forward.7} parent=11 // pred_check_branch
        %526 = sbr.rel (%p524) target = $region56
      $region55: #{egc_stage1_forward.7} parent=11 // pred_region
        _
      $region56: #{egc_stage1_forward.7} parent=11 // pred_fallthru
        _
      // Predicated region
      $region57: #{egc_stage1_forward.7} parent=11 // pred_check
        %p527 = pneg %p306
      $region58: #{egc_stage1_forward.7} parent=11 // pred_check_branch
        %529 = sbr.rel (%p527) target = $region60
      $region59: #{egc_stage1_forward.7} parent=11 // pred_region
        _
      $region60: #{egc_stage1_forward.7} parent=11 // pred_fallthru
        _
      // Predicated region
      $region61: #{egc_stage1_forward.7} parent=11 // pred_check
        %p530 = pneg %p327
      $region62: #{egc_stage1_forward.7} parent=11 // pred_check_branch
        %532 = sbr.rel (%p530) target = $region64
      $region63: #{egc_stage1_forward.7} parent=11 // pred_region
        _
      $region64: #{egc_stage1_forward.7} parent=11 // pred_fallthru
        _
      // Predicated region
      $region65: #{egc_stage1_forward.7} parent=11 // pred_check
        %p533 = pneg %p348
      $region66: #{egc_stage1_forward.7} parent=11 // pred_check_branch
        %535 = sbr.rel (%p533) target = $region68
      $region67: #{egc_stage1_forward.7} parent=11 // pred_region
        _
      $region68: #{egc_stage1_forward.7} parent=11 // pred_fallthru
        _
      // Predicated region
      $region69: #{egc_stage1_forward.7} parent=11 // pred_check
        %p536 = pneg %p369
      $region70: #{egc_stage1_forward.7} parent=11 // pred_check_branch
        %538 = sbr.rel (%p536) target = $region72
      $region71: #{egc_stage1_forward.7} parent=11 // pred_region
        _
      $region72: #{egc_stage1_forward.7} parent=11 // pred_fallthru
        _
      // Predicated region
      $region73: #{egc_stage1_forward.7} parent=11 // pred_check
        %p539 = pneg %p390
      $region74: #{egc_stage1_forward.7} parent=11 // pred_check_branch
        %541 = sbr.rel (%p539) target = $region76
      $region75: #{egc_stage1_forward.7} parent=11 // pred_region
        _
      $region76: #{egc_stage1_forward.7} parent=11 // pred_fallthru
        _
      // Predicated region
      $region77: #{egc_stage1_forward.7} parent=11 // pred_check
        %p542 = pneg %p411
      $region78: #{egc_stage1_forward.7} parent=11 // pred_check_branch
        %544 = sbr.rel (%p542) target = $region80
      $region79: #{egc_stage1_forward.7} parent=11 // pred_region
        _
      $region80: #{egc_stage1_forward.7} parent=11 // pred_fallthru
        _
      // Predicated region
      $region81: #{egc_stage1_forward.7} parent=11 // pred_check
        %p545 = pneg %p432
      $region82: #{egc_stage1_forward.7} parent=11 // pred_check_branch
        %547 = sbr.rel (%p545) target = $region84
      $region83: #{egc_stage1_forward.7} parent=11 // pred_region
        _
      $region84: #{egc_stage1_forward.7} parent=11 // pred_fallthru
        _
      // Predicated region
      $region85: #{egc_stage1_forward.7} parent=11 // pred_check
        %p548 = pneg %p453
      $region86: #{egc_stage1_forward.7} parent=11 // pred_check_branch
        %550 = sbr.rel (%p548) target = $region88
      $region87: #{egc_stage1_forward.7} parent=11 // pred_region
        _
      $region88: #{egc_stage1_forward.7} parent=11 // pred_fallthru
        _
    $region12: #{egc_stage1_forward.7} parent=5 // pred_fallthru
      _
    %p551 = scmp.lt.s32.totalorder %s28, 2
    // Predicated region
    $region89: #{egc_stage1_forward.7} parent=5 // pred_check
      %p552 = pneg %p551
    $region90: #{egc_stage1_forward.7} parent=5 // pred_check_branch
      %554 = sbr.rel (%p552) target = $region92
    $region91: #{egc_stage1_forward.7} parent=5 // pred_region
      // Predicated region
      $region93: #{egc_stage1_forward.7} parent=91 // pred_check
        %p555 = pneg %p69
      $region94: #{egc_stage1_forward.7} parent=91 // pred_check_branch
        %557 = sbr.rel (%p555) target = $region96
      $region95: #{egc_stage1_forward.7} parent=91 // pred_region
        %p558 = scmp.lt.s32.totalorder %s28, 1
        %s559 = scalar_select %p558, %s28, 1
        %s560 = smul.addr %s559, 4
        %s561 = smul.addr %s560, 2
        %s562 = scalar_lea.vmem %s1, %s561
      $region96: #{egc_stage1_forward.7} parent=91 // pred_fallthru
        _
    $region92: #{egc_stage1_forward.7} parent=5 // pred_fallthru
      _
    %p563 = scmp.le.s32.totalorder 1, %s28
    %p564 = scmp.lt.s32.totalorder %s28, 3
    %p565 = pnand %p563, %p564
    %p566 = pneg %p565
    // Predicated region
    $region97: #{egc_stage1_forward.7} parent=5 // pred_check
      _
    $region98: #{egc_stage1_forward.7} parent=5 // pred_check_branch
      %568 = sbr.rel (%p565) target = $region100
    $region99: #{egc_stage1_forward.7} parent=5 // pred_region
      %s569 = ssub.s32 %s28, 1
      %p570 = pneg %p49
      %p571 = pneg %p46
      %p572 = scmp.lt.s32.totalorder %s33, 1
      %s573 = scalar_select %p572, %s33, 1
      %s574 = smul.addr %s573, 4
      %s575 = smul.addr %s574, 2
      %s576 = scalar_lea.vmem %s1, %s575
      %p577 = pneg %p75
      %p578 = pneg %p72
      %p579 = pneg %p96
      %p580 = pneg %p93
      %p581 = pneg %p117
      %p582 = pneg %p114
      %p583 = pneg %p138
      %p584 = pneg %p135
      %p585 = pneg %p159
      %p586 = pneg %p156
      %p587 = pneg %p180
      %p588 = pneg %p177
      %p589 = pneg %p201
      %p590 = pneg %p198
      %p591 = pneg %p222
      %p592 = pneg %p219
      %p593 = pneg %p243
      %p594 = pneg %p240
      %p595 = pneg %p264
      %p596 = pneg %p261
      %p597 = pneg %p285
      %p598 = pneg %p282
      %p599 = pneg %p306
      %p600 = pneg %p303
      %p601 = pneg %p327
      %p602 = pneg %p324
      %p603 = pneg %p348
      %p604 = pneg %p345
      %p605 = pneg %p369
      %p606 = pneg %p366
      %p607 = pneg %p390
      %p608 = pneg %p387
      %p609 = pneg %p411
      %p610 = pneg %p408
      %p611 = pneg %p432
      %p612 = pneg %p429
      %p613 = pneg %p453
      %p614 = pneg %p450
      %p615 = pneg %p479
      %p616 = pneg %p476
      %p617 = scmp.lt.s32.totalorder %s33, 1
      %s618 = scalar_select %p617, %s33, 1
      %s619 = smul.addr %s618, 3
      %s620 = scalar_lea.vmem %s20, %s619
      %p621 = scmp.lt.s32.totalorder %s33, 1
      %s622 = scalar_select %p621, %s33, 1
      %s623 = smul.addr %s622, 4
      %s624 = smul.addr %s623, 2
      %s625 = scalar_lea.vmem %s1, %s624
      %p626 = scmp.lt.s32.totalorder %s33, 1
      %s627 = scalar_select %p626, %s33, 1
      %s628 = smul.addr %s627, 3
      %s629 = scalar_lea.vmem %s20, %s628
      %v630 = vld [vmem:[%s0] sm:$0x3f]
      %v631 = vld [vmem:[%s625] sm:$0x3]
      %s632 = scalar_lea.vmem %s625, 2
      %v633 = vld [vmem:[%s632] sm:$0x3]
      %s634 = scalar_lea.vmem %s625, 4
      %v635 = vld [vmem:[%s634] sm:$0x3]
      %s636 = scalar_lea.vmem %s625, 6
      %v637 = vld [vmem:[%s636] sm:$0x3]
      %vm638 = vcmask 41984
      %639 = vst.msk [vmem:[#allocation2] sm:$0x3] %vm638, %v631
      %vm640 = vcmask 48128
      %641 = vst.msk [vmem:[#allocation2 + $0x2] sm:$0xff] %vm640, 0.0
      %v642 = vld [vmem:[#allocation2] sm:$0xff]
      %v643 = vld [vmem:[#allocation2 + $0x8] sm:$0x3]
      %v645 = vsel %vm640, %v642, 0
      %v648 = vsel %vm640, %v643, 0
      %vm650 = vcmask 1045504
      %v652 = vsel %vm650, %v630, 0
      %654 = vmatpush.msra.mxu0 0.0
      %655 = vmatpush.msra.mxu0 0.0
      %656 = vmatpush.msra.mxu0 0.0
      %657 = vmatpush.msra.mxu0 0.0
      %658 = vmatpush.msra.mxu0 0.0
      %659 = vmatpush.msra.mxu0 0.0
      %660 = vmatpush.msra.mxu0 0.0
      %661 = vmatpush.msra.mxu0 0.0
      %662 = vmatpush.msra.mxu0 0.0
      %663 = vmatpush.msra.mxu0 0.0
      %664 = vmatpush.msra.mxu0 0.0
      %665 = vmatpush.msra.mxu0 0.0
      %666 = vmatpush.msra.mxu0 0.0
      %667 = vmatpush.msra.mxu0 0.0
      %668 = vmatpush.msra.mxu0 0.0
      %669 = vmatpush.msra.mxu0 %v652
      %670 = vmatmul.f32.gmra.mxu0 %v645
      %v671 = vpop.f32.mrf.mxu0
      %v672 = vadd.f32 0.0, %v671
      %673 = vmatmul.f32.gmra.mxu0 %v648
      %v674 = vpop.f32.mrf.mxu0
      %v675 = vadd.f32 0.0, %v674
      %676 = vdwg.mxu0
      %677 = vst.msk [vmem:[#allocation2 + $0xa] sm:$0xff] %vm640, %v672
      %678 = vst.msk [vmem:[#allocation2 + $0x12] sm:$0x3] %vm638, %v675
      %v679 = vld [vmem:[#allocation2 + $0xa] sm:$0xff]
      %v680 = vld [vmem:[#allocation2 + $0x12] sm:$0x3]
      %v682 = vsel %vm640, %v679, 0
      %v685 = vsel %vm640, %v680, 0
      %687 = vmatpush.msra.mxu0 0.0
      %688 = vmatpush.msra.mxu0 0.0
      %689 = vmatpush.msra.mxu0 0.0
      %690 = vmatpush.msra.mxu0 0.0
      %691 = vmatpush.msra.mxu0 0.0
      %692 = vmatpush.msra.mxu0 0.0
      %693 = vmatpush.msra.mxu0 0.0
      %694 = vmatpush.msra.mxu0 0.0
      %695 = vmatpush.msra.mxu0 0.0
      %696 = vmatpush.msra.mxu0 0.0
      %697 = vmatpush.msra.mxu0 0.0
      %698 = vmatpush.msra.mxu0 0.0
      %699 = vmatpush.msra.mxu0 0.0
      %700 = vmatpush.msra.mxu0 0.0
      %701 = vmatpush.msra.mxu0 0.0
      %702 = vmatpush.msra.mxu0 %v652
      %703 = vmatmul.f32.gmra.mxu0 %v682
      %v704 = vpop.f32.mrf.mxu0
      %v705 = vadd.f32 0.0, %v704
      %706 = vmatmul.f32.gmra.mxu0 %v685
      %v707 = vpop.f32.mrf.mxu0
      %v708 = vadd.f32 0.0, %v707
      %709 = vdwg.mxu0
      %710 = vst.msk [vmem:[#allocation2 + $0x14] sm:$0xff] %vm640, %v705
      %711 = vst.msk [vmem:[#allocation2 + $0x1c] sm:$0x3] %vm638, %v708
      %v712 = vld [vmem:[#allocation2] sm:$0xff]
      %v713 = vld [vmem:[#allocation2 + $0x8] sm:$0xff]
      %v714 = vld [vmem:[#allocation2 + $0x10] sm:$0xff]
      %v715 = vld [vmem:[#allocation2 + $0x18] sm:$0x3f]
      %v716 = vld [vmem:[%s2] sm:$0xff]
      %v717 = vld [vmem:[%s2 + $0x8] sm:$0xff]
      %v718 = vld [vmem:[%s3] sm:$0xff]
      %v719 = vld [vmem:[%s3 + $0x8] sm:$0xff]
      %721 = vset.pattern.permute.xlu0 0
      %722 = vperm.xlu0 %721, %v718
      %v723 = vpop.permute.xlu0 %722
      %726 = vset.pattern.permute.xlu0 0
      %727 = vperm.xlu0 %726, %v719
      %v728 = vpop.permute.xlu0 %727
      %vm730 = vcmask 244736
      %v732 = vsel %vm730, %v716, 0
      %v735 = vsel %vm730, %v717, 0
      %v738 = vsel %vm650, %v715, 0
      %740 = vmatpush.msra.mxu0 0.0
      %741 = vmatpush.msra.mxu0 0.0
      %742 = vmatpush.msra.mxu0 0.0
      %743 = vmatpush.msra.mxu0 0.0
      %744 = vmatpush.msra.mxu0 0.0
      %745 = vmatpush.msra.mxu0 0.0
      %746 = vmatpush.msra.mxu0 0.0
      %747 = vmatpush.msra.mxu0 0.0
      %748 = vmatpush.msra.mxu0 0.0
      %749 = vmatpush.msra.mxu0 0.0
      %750 = vmatpush.msra.mxu0 0.0
      %751 = vmatpush.msra.mxu0 0.0
      %752 = vmatpush.msra.mxu0 %v738
      %753 = vmatpush.msra.mxu0 %v714
      %754 = vmatpush.msra.mxu0 %v713
      %755 = vmatpush.msra.mxu0 %v712
      %756 = vmatmul.f32.gmra.mxu0 %v732
      %v757 = vpop.f32.mrf.mxu0
      %v758 = vadd.f32 %v723, %v757
      %759 = vmatmul.f32.gmra.mxu0 %v735
      %v760 = vpop.f32.mrf.mxu0
      %v761 = vadd.f32 %v728, %v760
      %762 = vdwg.mxu0
      %v763 = vxor.u32 %v758, 2147483648
      %v764 = vxor.u32 %v761, 2147483648
      %v765 = vmul.f32 %v763, 1.442695
      %v766 = vpow.pop %v765
      %v767 = vmul.f32 %v764, 1.442695
      %v768 = vpow.pop %v767
      %v769 = vadd.f32 %v766, 1.0
      %v770 = vadd.f32 %v768, 1.0
      %v771 = vrcp.pop %v769
      %v772 = vmul.f32 %v769, %v771
      %v773 = vsub.f32 1.0, %v772
      %v774 = vmul.f32 %v771, %v773
      %v775 = vadd.f32 %v771, %v774
      %vm776 = vweird.f32 %v769
      %vm777 = vweird.f32 %v771
      %vm778 = vmor %vm776, %vm777
      %v779 = vsel %vm778, %v771, %v775
      %v780 = vand.u32 2147483647, %v769
      %vm781 = vcmp.eq.f32.partialorder %v780, 8.507059e+37
      %v782 = vand.u32 %v769, 2147483648
      %v783 = vor.u32 1.1754944e-38, %v782
      %v784 = vsel %vm781, %v783, %v779
      %v785 = vmul.f32 1.0, %v784
      %v786 = vrcp.pop %v770
      %v787 = vmul.f32 %v770, %v786
      %v788 = vsub.f32 1.0, %v787
      %v789 = vmul.f32 %v786, %v788
      %v790 = vadd.f32 %v786, %v789
      %vm791 = vweird.f32 %v770
      %vm792 = vweird.f32 %v786
      %vm793 = vmor %vm791, %vm792
      %v794 = vsel %vm793, %v786, %v790
      %v795 = vand.u32 2147483647, %v770
      %vm796 = vcmp.eq.f32.partialorder %v795, 8.507059e+37
      %v797 = vand.u32 %v770, 2147483648
      %v798 = vor.u32 1.1754944e-38, %v797
      %v799 = vsel %vm796, %v798, %v794
      %v800 = vmul.f32 1.0, %v799
      %v801 = vmul.f32 %v785, 0.0
      %802 = vst.msk [vmem:[#allocation2] sm:$0x3] %vm638, %v631
      %803 = vst.msk [vmem:[#allocation2 + $0x2] sm:$0xff] %vm640, %v801
      %v804 = vld [vmem:[#allocation2] sm:$0xff]
      %v805 = vld [vmem:[#allocation2 + $0x8] sm:$0x3]
      %v807 = vsel %vm640, %v804, 0
      %v810 = vsel %vm640, %v805, 0
      %812 = vmatpush.msra.mxu0 0.0
      %813 = vmatpush.msra.mxu0 0.0
      %814 = vmatpush.msra.mxu0 0.0
      %815 = vmatpush.msra.mxu0 0.0
      %816 = vmatpush.msra.mxu0 0.0
      %817 = vmatpush.msra.mxu0 0.0
      %818 = vmatpush.msra.mxu0 0.0
      %819 = vmatpush.msra.mxu0 0.0
      %820 = vmatpush.msra.mxu0 0.0
      %821 = vmatpush.msra.mxu0 0.0
      %822 = vmatpush.msra.mxu0 0.0
      %823 = vmatpush.msra.mxu0 0.0
      %824 = vmatpush.msra.mxu0 0.0
      %825 = vmatpush.msra.mxu0 0.0
      %826 = vmatpush.msra.mxu0 0.0
      %827 = vmatpush.msra.mxu0 %v652
      %828 = vmatmul.f32.gmra.mxu0 %v807
      %v829 = vpop.f32.mrf.mxu0
      %v830 = vadd.f32 0.0, %v829
      %831 = vmatmul.f32.gmra.mxu0 %v810
      %v832 = vpop.f32.mrf.mxu0
      %v833 = vadd.f32 0.0, %v832
      %834 = vdwg.mxu0
      %835 = vst.msk [vmem:[#allocation2 + $0xa] sm:$0xff] %vm640, %v830
      %836 = vst.msk [vmem:[#allocation2 + $0x12] sm:$0x3] %vm638, %v833
      %v837 = vld [vmem:[#allocation2 + $0xa] sm:$0xff]
      %v838 = vld [vmem:[#allocation2 + $0x12] sm:$0x3]
      %v840 = vsel %vm640, %v837, 0
      %v843 = vsel %vm640, %v838, 0
      %845 = vmatpush.msra.mxu0 0.0
      %846 = vmatpush.msra.mxu0 0.0
      %847 = vmatpush.msra.mxu0 0.0
      %848 = vmatpush.msra.mxu0 0.0
      %849 = vmatpush.msra.mxu0 0.0
      %850 = vmatpush.msra.mxu0 0.0
      %851 = vmatpush.msra.mxu0 0.0
      %852 = vmatpush.msra.mxu0 0.0
      %853 = vmatpush.msra.mxu0 0.0
      %854 = vmatpush.msra.mxu0 0.0
      %855 = vmatpush.msra.mxu0 0.0
      %856 = vmatpush.msra.mxu0 0.0
      %857 = vmatpush.msra.mxu0 0.0
      %858 = vmatpush.msra.mxu0 0.0
      %859 = vmatpush.msra.mxu0 0.0
      %860 = vmatpush.msra.mxu0 %v652
      %861 = vmatmul.f32.gmra.mxu0 %v840
      %v862 = vpop.f32.mrf.mxu0
      %v863 = vadd.f32 0.0, %v862
      %864 = vmatmul.f32.gmra.mxu0 %v843
      %v865 = vpop.f32.mrf.mxu0
      %v866 = vadd.f32 0.0, %v865
      %867 = vdwg.mxu0
      %868 = vst.msk [vmem:[#allocation2 + $0x14] sm:$0xff] %vm640, %v863
      %869 = vst.msk [vmem:[#allocation2 + $0x1c] sm:$0x3] %vm638, %v866
      %v870 = vld [vmem:[#allocation2] sm:$0xff]
      %v871 = vld [vmem:[#allocation2 + $0x8] sm:$0xff]
      %v872 = vld [vmem:[#allocation2 + $0x10] sm:$0xff]
      %v873 = vld [vmem:[#allocation2 + $0x18] sm:$0x3f]
      %v874 = vld [vmem:[%s4] sm:$0xff]
      %v875 = vld [vmem:[%s5] sm:$0xff]
      %877 = vset.pattern.permute.xlu0 0
      %878 = vperm.xlu0 %877, %v875
      %v879 = vpop.permute.xlu0 %878
      %v882 = vsel %vm730, %v874, 0
      %v885 = vsel %vm650, %v873, 0
      %887 = vmatpush.msra.mxu0 0.0
      %888 = vmatpush.msra.mxu0 0.0
      %889 = vmatpush.msra.mxu0 0.0
      %890 = vmatpush.msra.mxu0 0.0
      %891 = vmatpush.msra.mxu0 0.0
      %892 = vmatpush.msra.mxu0 0.0
      %893 = vmatpush.msra.mxu0 0.0
      %894 = vmatpush.msra.mxu0 0.0
      %895 = vmatpush.msra.mxu0 0.0
      %896 = vmatpush.msra.mxu0 0.0
      %897 = vmatpush.msra.mxu0 0.0
      %898 = vmatpush.msra.mxu0 0.0
      %899 = vmatpush.msra.mxu0 %v885
      %900 = vmatpush.msra.mxu0 %v872
      %901 = vmatpush.msra.mxu0 %v871
      %902 = vmatpush.msra.mxu0 %v870
      %903 = vmatmul.f32.gmra.mxu0 %v882
      %v904 = vpop.f32.mrf.mxu0
      %v905 = vadd.f32 %v879, %v904
      %906 = vdwg.mxu0
      %v907 = vtanh.pop %v905
      %v908 = vmul.f32 %v800, 0.0
      %v909 = vsub.f32 1.0, %v800
      %v910 = vmul.f32 %v909, %v907
      %v911 = vadd.f32 %v908, %v910
      %912 = vst.msk [vmem:[#allocation2] sm:$0x3] %vm638, %v633
      %913 = vst.msk [vmem:[#allocation2 + $0x2] sm:$0xff] %vm640, %v911
      %v914 = vld [vmem:[#allocation2] sm:$0xff]
      %v915 = vld [vmem:[#allocation2 + $0x8] sm:$0x3]
      %v917 = vsel %vm640, %v914, 0
      %v920 = vsel %vm640, %v915, 0
      %922 = vmatpush.msra.mxu0 0.0
      %923 = vmatpush.msra.mxu0 0.0
      %924 = vmatpush.msra.mxu0 0.0
      %925 = vmatpush.msra.mxu0 0.0
      %926 = vmatpush.msra.mxu0 0.0
      %927 = vmatpush.msra.mxu0 0.0
      %928 = vmatpush.msra.mxu0 0.0
      %929 = vmatpush.msra.mxu0 0.0
      %930 = vmatpush.msra.mxu0 0.0
      %931 = vmatpush.msra.mxu0 0.0
      %932 = vmatpush.msra.mxu0 0.0
      %933 = vmatpush.msra.mxu0 0.0
      %934 = vmatpush.msra.mxu0 0.0
      %935 = vmatpush.msra.mxu0 0.0
      %936 = vmatpush.msra.mxu0 0.0
      %937 = vmatpush.msra.mxu0 %v652
      %938 = vmatmul.f32.gmra.mxu0 %v917
      %v939 = vpop.f32.mrf.mxu0
      %v940 = vadd.f32 0.0, %v939
      %941 = vmatmul.f32.gmra.mxu0 %v920
      %v942 = vpop.f32.mrf.mxu0
      %v943 = vadd.f32 0.0, %v942
      %944 = vdwg.mxu0
      %945 = vst.msk [vmem:[#allocation2 + $0xa] sm:$0xff] %vm640, %v940
      %946 = vst.msk [vmem:[#allocation2 + $0x12] sm:$0x3] %vm638, %v943
      %v947 = vld [vmem:[#allocation2 + $0xa] sm:$0xff]
      %v948 = vld [vmem:[#allocation2 + $0x12] sm:$0x3]
      %v950 = vsel %vm640, %v947, 0
      %v953 = vsel %vm640, %v948, 0
      %955 = vmatpush.msra.mxu0 0.0
      %956 = vmatpush.msra.mxu0 0.0
      %957 = vmatpush.msra.mxu0 0.0
      %958 = vmatpush.msra.mxu0 0.0
      %959 = vmatpush.msra.mxu0 0.0
      %960 = vmatpush.msra.mxu0 0.0
      %961 = vmatpush.msra.mxu0 0.0
      %962 = vmatpush.msra.mxu0 0.0
      %963 = vmatpush.msra.mxu0 0.0
      %964 = vmatpush.msra.mxu0 0.0
      %965 = vmatpush.msra.mxu0 0.0
      %966 = vmatpush.msra.mxu0 0.0
      %967 = vmatpush.msra.mxu0 0.0
      %968 = vmatpush.msra.mxu0 0.0
      %969 = vmatpush.msra.mxu0 0.0
      %970 = vmatpush.msra.mxu0 %v652
      %971 = vmatmul.f32.gmra.mxu0 %v950
      %v972 = vpop.f32.mrf.mxu0
      %v973 = vadd.f32 0.0, %v972
      %974 = vmatmul.f32.gmra.mxu0 %v953
      %v975 = vpop.f32.mrf.mxu0
      %v976 = vadd.f32 0.0, %v975
      %977 = vdwg.mxu0
      %978 = vst.msk [vmem:[#allocation2 + $0x14] sm:$0xff] %vm640, %v973
      %979 = vst.msk [vmem:[#allocation2 + $0x1c] sm:$0x3] %vm638, %v976
      %v980 = vld [vmem:[#allocation2] sm:$0xff]
      %v981 = vld [vmem:[#allocation2 + $0x8] sm:$0xff]
      %v982 = vld [vmem:[#allocation2 + $0x10] sm:$0xff]
      %v983 = vld [vmem:[#allocation2 + $0x18] sm:$0x3f]
      %v984 = vld [vmem:[%s2] sm:$0xff]
      %v985 = vld [vmem:[%s2 + $0x8] sm:$0xff]
      %v986 = vld [vmem:[%s3] sm:$0xff]
      %v987 = vld [vmem:[%s3 + $0x8] sm:$0xff]
      %989 = vset.pattern.permute.xlu0 0
      %990 = vperm.xlu0 %989, %v986
      %v991 = vpop.permute.xlu0 %990
      %994 = vset.pattern.permute.xlu0 0
      %995 = vperm.xlu0 %994, %v987
      %v996 = vpop.permute.xlu0 %995
      %v999 = vsel %vm730, %v984, 0
      %v1002 = vsel %vm730, %v985, 0
      %v1005 = vsel %vm650, %v983, 0
      %1007 = vmatpush.msra.mxu0 0.0
      %1008 = vmatpush.msra.mxu0 0.0
      %1009 = vmatpush.msra.mxu0 0.0
      %1010 = vmatpush.msra.mxu0 0.0
      %1011 = vmatpush.msra.mxu0 0.0
      %1012 = vmatpush.msra.mxu0 0.0
      %1013 = vmatpush.msra.mxu0 0.0
      %1014 = vmatpush.msra.mxu0 0.0
      %1015 = vmatpush.msra.mxu0 0.0
      %1016 = vmatpush.msra.mxu0 0.0
      %1017 = vmatpush.msra.mxu0 0.0
      %1018 = vmatpush.msra.mxu0 0.0
      %1019 = vmatpush.msra.mxu0 %v1005
      %1020 = vmatpush.msra.mxu0 %v982
      %1021 = vmatpush.msra.mxu0 %v981
      %1022 = vmatpush.msra.mxu0 %v980
      %1023 = vmatmul.f32.gmra.mxu0 %v999
      %v1024 = vpop.f32.mrf.mxu0
      %v1025 = vadd.f32 %v991, %v1024
      %1026 = vmatmul.f32.gmra.mxu0 %v1002
      %v1027 = vpop.f32.mrf.mxu0
      %v1028 = vadd.f32 %v996, %v1027
      %1029 = vdwg.mxu0
      %v1030 = vxor.u32 %v1025, 2147483648
      %v1031 = vxor.u32 %v1028, 2147483648
      %v1032 = vmul.f32 %v1030, 1.442695
      %v1033 = vpow.pop %v1032
      %v1034 = vmul.f32 %v1031, 1.442695
      %v1035 = vpow.pop %v1034
      %v1036 = vadd.f32 %v1033, 1.0
      %v1037 = vadd.f32 %v1035, 1.0
      %v1038 = vrcp.pop %v1036
      %v1039 = vmul.f32 %v1036, %v1038
      %v1040 = vsub.f32 1.0, %v1039
      %v1041 = vmul.f32 %v1038, %v1040
      %v1042 = vadd.f32 %v1038, %v1041
      %vm1043 = vweird.f32 %v1036
      %vm1044 = vweird.f32 %v1038
      %vm1045 = vmor %vm1043, %vm1044
      %v1046 = vsel %vm1045, %v1038, %v1042
      %v1047 = vand.u32 2147483647, %v1036
      %vm1048 = vcmp.eq.f32.partialorder %v1047, 8.507059e+37
      %v1049 = vand.u32 %v1036, 2147483648
      %v1050 = vor.u32 1.1754944e-38, %v1049
      %v1051 = vsel %vm1048, %v1050, %v1046
      %v1052 = vmul.f32 1.0, %v1051
      %v1053 = vrcp.pop %v1037
      %v1054 = vmul.f32 %v1037, %v1053
      %v1055 = vsub.f32 1.0, %v1054
      %v1056 = vmul.f32 %v1053, %v1055
      %v1057 = vadd.f32 %v1053, %v1056
      %vm1058 = vweird.f32 %v1037
      %vm1059 = vweird.f32 %v1053
      %vm1060 = vmor %vm1058, %vm1059
      %v1061 = vsel %vm1060, %v1053, %v1057
      %v1062 = vand.u32 2147483647, %v1037
      %vm1063 = vcmp.eq.f32.partialorder %v1062, 8.507059e+37
      %v1064 = vand.u32 %v1037, 2147483648
      %v1065 = vor.u32 1.1754944e-38, %v1064
      %v1066 = vsel %vm1063, %v1065, %v1061
      %v1067 = vmul.f32 1.0, %v1066
      %v1068 = vmul.f32 %v1052, %v911
      %1069 = vst.msk [vmem:[#allocation2] sm:$0x3] %vm638, %v633
      %1070 = vst.msk [vmem:[#allocation2 + $0x2] sm:$0xff] %vm640, %v1068
      %v1071 = vld [vmem:[#allocation2] sm:$0xff]
      %v1072 = vld [vmem:[#allocation2 + $0x8] sm:$0x3]
      %v1074 = vsel %vm640, %v1071, 0
      %v1077 = vsel %vm640, %v1072, 0
      %1079 = vmatpush.msra.mxu0 0.0
      %1080 = vmatpush.msra.mxu0 0.0
      %1081 = vmatpush.msra.mxu0 0.0
      %1082 = vmatpush.msra.mxu0 0.0
      %1083 = vmatpush.msra.mxu0 0.0
      %1084 = vmatpush.msra.mxu0 0.0
      %1085 = vmatpush.msra.mxu0 0.0
      %1086 = vmatpush.msra.mxu0 0.0
      %1087 = vmatpush.msra.mxu0 0.0
      %1088 = vmatpush.msra.mxu0 0.0
      %1089 = vmatpush.msra.mxu0 0.0
      %1090 = vmatpush.msra.mxu0 0.0
      %1091 = vmatpush.msra.mxu0 0.0
      %1092 = vmatpush.msra.mxu0 0.0
      %1093 = vmatpush.msra.mxu0 0.0
      %1094 = vmatpush.msra.mxu0 %v652
      %1095 = vmatmul.f32.gmra.mxu0 %v1074
      %v1096 = vpop.f32.mrf.mxu0
      %v1097 = vadd.f32 0.0, %v1096
      %1098 = vmatmul.f32.gmra.mxu0 %v1077
      %v1099 = vpop.f32.mrf.mxu0
      %v1100 = vadd.f32 0.0, %v1099
      %1101 = vdwg.mxu0
      %1102 = vst.msk [vmem:[#allocation2 + $0xa] sm:$0xff] %vm640, %v1097
      %1103 = vst.msk [vmem:[#allocation2 + $0x12] sm:$0x3] %vm638, %v1100
      %v1104 = vld [vmem:[#allocation2 + $0xa] sm:$0xff]
      %v1105 = vld [vmem:[#allocation2 + $0x12] sm:$0x3]
      %v1107 = vsel %vm640, %v1104, 0
      %v1110 = vsel %vm640, %v1105, 0
      %1112 = vmatpush.msra.mxu0 0.0
      %1113 = vmatpush.msra.mxu0 0.0
      %1114 = vmatpush.msra.mxu0 0.0
      %1115 = vmatpush.msra.mxu0 0.0
      %1116 = vmatpush.msra.mxu0 0.0
      %1117 = vmatpush.msra.mxu0 0.0
      %1118 = vmatpush.msra.mxu0 0.0
      %1119 = vmatpush.msra.mxu0 0.0
      %1120 = vmatpush.msra.mxu0 0.0
      %1121 = vmatpush.msra.mxu0 0.0
      %1122 = vmatpush.msra.mxu0 0.0
      %1123 = vmatpush.msra.mxu0 0.0
      %1124 = vmatpush.msra.mxu0 0.0
      %1125 = vmatpush.msra.mxu0 0.0
      %1126 = vmatpush.msra.mxu0 0.0
      %1127 = vmatpush.msra.mxu0 %v652
      %1128 = vmatmul.f32.gmra.mxu0 %v1107
      %v1129 = vpop.f32.mrf.mxu0
      %v1130 = vadd.f32 0.0, %v1129
      %1131 = vmatmul.f32.gmra.mxu0 %v1110
      %v1132 = vpop.f32.mrf.mxu0
      %v1133 = vadd.f32 0.0, %v1132
      %1134 = vdwg.mxu0
      %1135 = vst.msk [vmem:[#allocation2 + $0x14] sm:$0xff] %vm640, %v1130
      %1136 = vst.msk [vmem:[#allocation2 + $0x1c] sm:$0x3] %vm638, %v1133
      %v1137 = vld [vmem:[#allocation2] sm:$0xff]
      %v1138 = vld [vmem:[#allocation2 + $0x8] sm:$0xff]
      %v1139 = vld [vmem:[#allocation2 + $0x10] sm:$0xff]
      %v1140 = vld [vmem:[#allocation2 + $0x18] sm:$0x3f]
      %v1141 = vld [vmem:[%s4] sm:$0xff]
      %v1142 = vld [vmem:[%s5] sm:$0xff]
      %1144 = vset.pattern.permute.xlu0 0
      %1145 = vperm.xlu0 %1144, %v1142
      %v1146 = vpop.permute.xlu0 %1145
      %v1149 = vsel %vm730, %v1141, 0
      %v1152 = vsel %vm650, %v1140, 0
      %1154 = vmatpush.msra.mxu0 0.0
      %1155 = vmatpush.msra.mxu0 0.0
      %1156 = vmatpush.msra.mxu0 0.0
      %1157 = vmatpush.msra.mxu0 0.0
      %1158 = vmatpush.msra.mxu0 0.0
      %1159 = vmatpush.msra.mxu0 0.0
      %1160 = vmatpush.msra.mxu0 0.0
      %1161 = vmatpush.msra.mxu0 0.0
      %1162 = vmatpush.msra.mxu0 0.0
      %1163 = vmatpush.msra.mxu0 0.0
      %1164 = vmatpush.msra.mxu0 0.0
      %1165 = vmatpush.msra.mxu0 0.0
      %1166 = vmatpush.msra.mxu0 %v1152
      %1167 = vmatpush.msra.mxu0 %v1139
      %1168 = vmatpush.msra.mxu0 %v1138
      %1169 = vmatpush.msra.mxu0 %v1137
      %1170 = vmatmul.f32.gmra.mxu0 %v1149
      %v1171 = vpop.f32.mrf.mxu0
      %v1172 = vadd.f32 %v1146, %v1171
      %1173 = vdwg.mxu0
      %v1174 = vtanh.pop %v1172
      %v1175 = vmul.f32 %v1067, %v911
      %v1176 = vsub.f32 1.0, %v1067
      %v1177 = vmul.f32 %v1176, %v1174
      %v1178 = vadd.f32 %v1175, %v1177
      %1179 = vst.msk [vmem:[#allocation2] sm:$0x3] %vm638, %v635
      %1180 = vst.msk [vmem:[#allocation2 + $0x2] sm:$0xff] %vm640, %v1178
      %v1181 = vld [vmem:[#allocation2] sm:$0xff]
      %v1182 = vld [vmem:[#allocation2 + $0x8] sm:$0x3]
      %v1184 = vsel %vm640, %v1181, 0
      %v1187 = vsel %vm640, %v1182, 0
      %1189 = vmatpush.msra.mxu0 0.0
      %1190 = vmatpush.msra.mxu0 0.0
      %1191 = vmatpush.msra.mxu0 0.0
      %1192 = vmatpush.msra.mxu0 0.0
      %1193 = vmatpush.msra.mxu0 0.0
      %1194 = vmatpush.msra.mxu0 0.0
      %1195 = vmatpush.msra.mxu0 0.0
      %1196 = vmatpush.msra.mxu0 0.0
      %1197 = vmatpush.msra.mxu0 0.0
      %1198 = vmatpush.msra.mxu0 0.0
      %1199 = vmatpush.msra.mxu0 0.0
      %1200 = vmatpush.msra.mxu0 0.0
      %1201 = vmatpush.msra.mxu0 0.0
      %1202 = vmatpush.msra.mxu0 0.0
      %1203 = vmatpush.msra.mxu0 0.0
      %1204 = vmatpush.msra.mxu0 %v652
      %1205 = vmatmul.f32.gmra.mxu0 %v1184
      %v1206 = vpop.f32.mrf.mxu0
      %v1207 = vadd.f32 0.0, %v1206
      %1208 = vmatmul.f32.gmra.mxu0 %v1187
      %v1209 = vpop.f32.mrf.mxu0
      %v1210 = vadd.f32 0.0, %v1209
      %1211 = vdwg.mxu0
      %1212 = vst.msk [vmem:[#allocation2 + $0xa] sm:$0xff] %vm640, %v1207
      %1213 = vst.msk [vmem:[#allocation2 + $0x12] sm:$0x3] %vm638, %v1210
      %v1214 = vld [vmem:[#allocation2 + $0xa] sm:$0xff]
      %v1215 = vld [vmem:[#allocation2 + $0x12] sm:$0x3]
      %v1217 = vsel %vm640, %v1214, 0
      %v1220 = vsel %vm640, %v1215, 0
      %1222 = vmatpush.msra.mxu0 0.0
      %1223 = vmatpush.msra.mxu0 0.0
      %1224 = vmatpush.msra.mxu0 0.0
      %1225 = vmatpush.msra.mxu0 0.0
      %1226 = vmatpush.msra.mxu0 0.0
      %1227 = vmatpush.msra.mxu0 0.0
      %1228 = vmatpush.msra.mxu0 0.0
      %1229 = vmatpush.msra.mxu0 0.0
      %1230 = vmatpush.msra.mxu0 0.0
      %1231 = vmatpush.msra.mxu0 0.0
      %1232 = vmatpush.msra.mxu0 0.0
      %1233 = vmatpush.msra.mxu0 0.0
      %1234 = vmatpush.msra.mxu0 0.0
      %1235 = vmatpush.msra.mxu0 0.0
      %1236 = vmatpush.msra.mxu0 0.0
      %1237 = vmatpush.msra.mxu0 %v652
      %1238 = vmatmul.f32.gmra.mxu0 %v1217
      %v1239 = vpop.f32.mrf.mxu0
      %v1240 = vadd.f32 0.0, %v1239
      %1241 = vmatmul.f32.gmra.mxu0 %v1220
      %v1242 = vpop.f32.mrf.mxu0
      %v1243 = vadd.f32 0.0, %v1242
      %1244 = vdwg.mxu0
      %1245 = vst.msk [vmem:[#allocation2 + $0x14] sm:$0xff] %vm640, %v1240
      %1246 = vst.msk [vmem:[#allocation2 + $0x1c] sm:$0x3] %vm638, %v1243
      %v1247 = vld [vmem:[#allocation2] sm:$0xff]
      %v1248 = vld [vmem:[#allocation2 + $0x8] sm:$0xff]
      %v1249 = vld [vmem:[#allocation2 + $0x10] sm:$0xff]
      %v1250 = vld [vmem:[#allocation2 + $0x18] sm:$0x3f]
      %v1251 = vld [vmem:[%s2] sm:$0xff]
      %v1252 = vld [vmem:[%s2 + $0x8] sm:$0xff]
      %v1253 = vld [vmem:[%s3] sm:$0xff]
      %v1254 = vld [vmem:[%s3 + $0x8] sm:$0xff]
      %1256 = vset.pattern.permute.xlu0 0
      %1257 = vperm.xlu0 %1256, %v1253
      %v1258 = vpop.permute.xlu0 %1257
      %1261 = vset.pattern.permute.xlu0 0
      %1262 = vperm.xlu0 %1261, %v1254
      %v1263 = vpop.permute.xlu0 %1262
      %v1266 = vsel %vm730, %v1251, 0
      %v1269 = vsel %vm730, %v1252, 0
      %v1272 = vsel %vm650, %v1250, 0
      %1274 = vmatpush.msra.mxu0 0.0
      %1275 = vmatpush.msra.mxu0 0.0
      %1276 = vmatpush.msra.mxu0 0.0
      %1277 = vmatpush.msra.mxu0 0.0
      %1278 = vmatpush.msra.mxu0 0.0
      %1279 = vmatpush.msra.mxu0 0.0
      %1280 = vmatpush.msra.mxu0 0.0
      %1281 = vmatpush.msra.mxu0 0.0
      %1282 = vmatpush.msra.mxu0 0.0
      %1283 = vmatpush.msra.mxu0 0.0
      %1284 = vmatpush.msra.mxu0 0.0
      %1285 = vmatpush.msra.mxu0 0.0
      %1286 = vmatpush.msra.mxu0 %v1272
      %1287 = vmatpush.msra.mxu0 %v1249
      %1288 = vmatpush.msra.mxu0 %v1248
      %1289 = vmatpush.msra.mxu0 %v1247
      %1290 = vmatmul.f32.gmra.mxu0 %v1266
      %v1291 = vpop.f32.mrf.mxu0
      %v1292 = vadd.f32 %v1258, %v1291
      %1293 = vmatmul.f32.gmra.mxu0 %v1269
      %v1294 = vpop.f32.mrf.mxu0
      %v1295 = vadd.f32 %v1263, %v1294
      %1296 = vdwg.mxu0
      %v1297 = vxor.u32 %v1292, 2147483648
      %v1298 = vxor.u32 %v1295, 2147483648
      %v1299 = vmul.f32 %v1297, 1.442695
      %v1300 = vpow.pop %v1299
      %v1301 = vmul.f32 %v1298, 1.442695
      %v1302 = vpow.pop %v1301
      %v1303 = vadd.f32 %v1300, 1.0
      %v1304 = vadd.f32 %v1302, 1.0
      %v1305 = vrcp.pop %v1303
      %v1306 = vmul.f32 %v1303, %v1305
      %v1307 = vsub.f32 1.0, %v1306
      %v1308 = vmul.f32 %v1305, %v1307
      %v1309 = vadd.f32 %v1305, %v1308
      %vm1310 = vweird.f32 %v1303
      %vm1311 = vweird.f32 %v1305
      %vm1312 = vmor %vm1310, %vm1311
      %v1313 = vsel %vm1312, %v1305, %v1309
      %v1314 = vand.u32 2147483647, %v1303
      %vm1315 = vcmp.eq.f32.partialorder %v1314, 8.507059e+37
      %v1316 = vand.u32 %v1303, 2147483648
      %v1317 = vor.u32 1.1754944e-38, %v1316
      %v1318 = vsel %vm1315, %v1317, %v1313
      %v1319 = vmul.f32 1.0, %v1318
      %v1320 = vrcp.pop %v1304
      %v1321 = vmul.f32 %v1304, %v1320
      %v1322 = vsub.f32 1.0, %v1321
      %v1323 = vmul.f32 %v1320, %v1322
      %v1324 = vadd.f32 %v1320, %v1323
      %vm1325 = vweird.f32 %v1304
      %vm1326 = vweird.f32 %v1320
      %vm1327 = vmor %vm1325, %vm1326
      %v1328 = vsel %vm1327, %v1320, %v1324
      %v1329 = vand.u32 2147483647, %v1304
      %vm1330 = vcmp.eq.f32.partialorder %v1329, 8.507059e+37
      %v1331 = vand.u32 %v1304, 2147483648
      %v1332 = vor.u32 1.1754944e-38, %v1331
      %v1333 = vsel %vm1330, %v1332, %v1328
      %v1334 = vmul.f32 1.0, %v1333
      %v1335 = vmul.f32 %v1319, %v1178
      %1336 = vst.msk [vmem:[#allocation2] sm:$0x3] %vm638, %v635
      %1337 = vst.msk [vmem:[#allocation2 + $0x2] sm:$0xff] %vm640, %v1335
      %v1338 = vld [vmem:[#allocation2] sm:$0xff]
      %v1339 = vld [vmem:[#allocation2 + $0x8] sm:$0x3]
      %v1341 = vsel %vm640, %v1338, 0
      %v1344 = vsel %vm640, %v1339, 0
      %1346 = vmatpush.msra.mxu0 0.0
      %1347 = vmatpush.msra.mxu0 0.0
      %1348 = vmatpush.msra.mxu0 0.0
      %1349 = vmatpush.msra.mxu0 0.0
      %1350 = vmatpush.msra.mxu0 0.0
      %1351 = vmatpush.msra.mxu0 0.0
      %1352 = vmatpush.msra.mxu0 0.0
      %1353 = vmatpush.msra.mxu0 0.0
      %1354 = vmatpush.msra.mxu0 0.0
      %1355 = vmatpush.msra.mxu0 0.0
      %1356 = vmatpush.msra.mxu0 0.0
      %1357 = vmatpush.msra.mxu0 0.0
      %1358 = vmatpush.msra.mxu0 0.0
      %1359 = vmatpush.msra.mxu0 0.0
      %1360 = vmatpush.msra.mxu0 0.0
      %1361 = vmatpush.msra.mxu0 %v652
      %1362 = vmatmul.f32.gmra.mxu0 %v1341
      %v1363 = vpop.f32.mrf.mxu0
      %v1364 = vadd.f32 0.0, %v1363
      %1365 = vmatmul.f32.gmra.mxu0 %v1344
      %v1366 = vpop.f32.mrf.mxu0
      %v1367 = vadd.f32 0.0, %v1366
      %1368 = vdwg.mxu0
      %1369 = vst.msk [vmem:[#allocation2 + $0xa] sm:$0xff] %vm640, %v1364
      %1370 = vst.msk [vmem:[#allocation2 + $0x12] sm:$0x3] %vm638, %v1367
      %v1371 = vld [vmem:[#allocation2 + $0xa] sm:$0xff]
      %v1372 = vld [vmem:[#allocation2 + $0x12] sm:$0x3]
      %v1374 = vsel %vm640, %v1371, 0
      %v1377 = vsel %vm640, %v1372, 0
      %1379 = vmatpush.msra.mxu0 0.0
      %1380 = vmatpush.msra.mxu0 0.0
      %1381 = vmatpush.msra.mxu0 0.0
      %1382 = vmatpush.msra.mxu0 0.0
      %1383 = vmatpush.msra.mxu0 0.0
      %1384 = vmatpush.msra.mxu0 0.0
      %1385 = vmatpush.msra.mxu0 0.0
      %1386 = vmatpush.msra.mxu0 0.0
      %1387 = vmatpush.msra.mxu0 0.0
      %1388 = vmatpush.msra.mxu0 0.0
      %1389 = vmatpush.msra.mxu0 0.0
      %1390 = vmatpush.msra.mxu0 0.0
      %1391 = vmatpush.msra.mxu0 0.0
      %1392 = vmatpush.msra.mxu0 0.0
      %1393 = vmatpush.msra.mxu0 0.0
      %1394 = vmatpush.msra.mxu0 %v652
      %1395 = vmatmul.f32.gmra.mxu0 %v1374
      %v1396 = vpop.f32.mrf.mxu0
      %v1397 = vadd.f32 0.0, %v1396
      %1398 = vmatmul.f32.gmra.mxu0 %v1377
      %v1399 = vpop.f32.mrf.mxu0
      %v1400 = vadd.f32 0.0, %v1399
      %1401 = vdwg.mxu0
      %1402 = vst.msk [vmem:[#allocation2 + $0x14] sm:$0xff] %vm640, %v1397
      %1403 = vst.msk [vmem:[#allocation2 + $0x1c] sm:$0x3] %vm638, %v1400
      %v1404 = vld [vmem:[#allocation2] sm:$0xff]
      %v1405 = vld [vmem:[#allocation2 + $0x8] sm:$0xff]
      %v1406 = vld [vmem:[#allocation2 + $0x10] sm:$0xff]
      %v1407 = vld [vmem:[#allocation2 + $0x18] sm:$0x3f]
      %v1408 = vld [vmem:[%s4] sm:$0xff]
      %v1409 = vld [vmem:[%s5] sm:$0xff]
      %1411 = vset.pattern.permute.xlu0 0
      %1412 = vperm.xlu0 %1411, %v1409
      %v1413 = vpop.permute.xlu0 %1412
      %v1416 = vsel %vm730, %v1408, 0
      %v1419 = vsel %vm650, %v1407, 0
      %1421 = vmatpush.msra.mxu0 0.0
      %1422 = vmatpush.msra.mxu0 0.0
      %1423 = vmatpush.msra.mxu0 0.0
      %1424 = vmatpush.msra.mxu0 0.0
      %1425 = vmatpush.msra.mxu0 0.0
      %1426 = vmatpush.msra.mxu0 0.0
      %1427 = vmatpush.msra.mxu0 0.0
      %1428 = vmatpush.msra.mxu0 0.0
      %1429 = vmatpush.msra.mxu0 0.0
      %1430 = vmatpush.msra.mxu0 0.0
      %1431 = vmatpush.msra.mxu0 0.0
      %1432 = vmatpush.msra.mxu0 0.0
      %1433 = vmatpush.msra.mxu0 %v1419
      %1434 = vmatpush.msra.mxu0 %v1406
      %1435 = vmatpush.msra.mxu0 %v1405
      %1436 = vmatpush.msra.mxu0 %v1404
      %1437 = vmatmul.f32.gmra.mxu0 %v1416
      %v1438 = vpop.f32.mrf.mxu0
      %v1439 = vadd.f32 %v1413, %v1438
      %1440 = vdwg.mxu0
      %v1441 = vtanh.pop %v1439
      %v1442 = vmul.f32 %v1334, %v1178
      %v1443 = vsub.f32 1.0, %v1334
      %v1444 = vmul.f32 %v1443, %v1441
      %v1445 = vadd.f32 %v1442, %v1444
      %1446 = vst.msk [vmem:[#allocation2] sm:$0x3] %vm638, %v637
      %1447 = vst.msk [vmem:[#allocation2 + $0x2] sm:$0xff] %vm640, %v1445
      %v1448 = vld [vmem:[#allocation2] sm:$0xff]
      %v1449 = vld [vmem:[#allocation2 + $0x8] sm:$0x3]
      %v1451 = vsel %vm640, %v1448, 0
      %v1454 = vsel %vm640, %v1449, 0
      %1456 = vmatpush.msra.mxu0 0.0
      %1457 = vmatpush.msra.mxu0 0.0
      %1458 = vmatpush.msra.mxu0 0.0
      %1459 = vmatpush.msra.mxu0 0.0
      %1460 = vmatpush.msra.mxu0 0.0
      %1461 = vmatpush.msra.mxu0 0.0
      %1462 = vmatpush.msra.mxu0 0.0
      %1463 = vmatpush.msra.mxu0 0.0
      %1464 = vmatpush.msra.mxu0 0.0
      %1465 = vmatpush.msra.mxu0 0.0
      %1466 = vmatpush.msra.mxu0 0.0
      %1467 = vmatpush.msra.mxu0 0.0
      %1468 = vmatpush.msra.mxu0 0.0
      %1469 = vmatpush.msra.mxu0 0.0
      %1470 = vmatpush.msra.mxu0 0.0
      %1471 = vmatpush.msra.mxu0 %v652
      %1472 = vmatmul.f32.gmra.mxu0 %v1451
      %v1473 = vpop.f32.mrf.mxu0
      %v1474 = vadd.f32 0.0, %v1473
      %1475 = vmatmul.f32.gmra.mxu0 %v1454
      %v1476 = vpop.f32.mrf.mxu0
      %v1477 = vadd.f32 0.0, %v1476
      %1478 = vdwg.mxu0
      %1479 = vst.msk [vmem:[#allocation2 + $0xa] sm:$0xff] %vm640, %v1474
      %1480 = vst.msk [vmem:[#allocation2 + $0x12] sm:$0x3] %vm638, %v1477
      %v1481 = vld [vmem:[#allocation2 + $0xa] sm:$0xff]
      %v1482 = vld [vmem:[#allocation2 + $0x12] sm:$0x3]
      %v1484 = vsel %vm640, %v1481, 0
      %v1487 = vsel %vm640, %v1482, 0
      %1489 = vmatpush.msra.mxu0 0.0
      %1490 = vmatpush.msra.mxu0 0.0
      %1491 = vmatpush.msra.mxu0 0.0
      %1492 = vmatpush.msra.mxu0 0.0
      %1493 = vmatpush.msra.mxu0 0.0
      %1494 = vmatpush.msra.mxu0 0.0
      %1495 = vmatpush.msra.mxu0 0.0
      %1496 = vmatpush.msra.mxu0 0.0
      %1497 = vmatpush.msra.mxu0 0.0
      %1498 = vmatpush.msra.mxu0 0.0
      %1499 = vmatpush.msra.mxu0 0.0
      %1500 = vmatpush.msra.mxu0 0.0
      %1501 = vmatpush.msra.mxu0 0.0
      %1502 = vmatpush.msra.mxu0 0.0
      %1503 = vmatpush.msra.mxu0 0.0
      %1504 = vmatpush.msra.mxu0 %v652
      %1505 = vmatmul.f32.gmra.mxu0 %v1484
      %v1506 = vpop.f32.mrf.mxu0
      %v1507 = vadd.f32 0.0, %v1506
      %1508 = vmatmul.f32.gmra.mxu0 %v1487
      %v1509 = vpop.f32.mrf.mxu0
      %v1510 = vadd.f32 0.0, %v1509
      %1511 = vdwg.mxu0
      %1512 = vst.msk [vmem:[#allocation2 + $0x14] sm:$0xff] %vm640, %v1507
      %1513 = vst.msk [vmem:[#allocation2 + $0x1c] sm:$0x3] %vm638, %v1510
      %v1514 = vld [vmem:[#allocation2] sm:$0xff]
      %v1515 = vld [vmem:[#allocation2 + $0x8] sm:$0xff]
      %v1516 = vld [vmem:[#allocation2 + $0x10] sm:$0xff]
      %v1517 = vld [vmem:[#allocation2 + $0x18] sm:$0x3f]
      %v1518 = vld [vmem:[%s2] sm:$0xff]
      %v1519 = vld [vmem:[%s2 + $0x8] sm:$0xff]
      %v1520 = vld [vmem:[%s3] sm:$0xff]
      %v1521 = vld [vmem:[%s3 + $0x8] sm:$0xff]
      %1523 = vset.pattern.permute.xlu0 0
      %1524 = vperm.xlu0 %1523, %v1520
      %v1525 = vpop.permute.xlu0 %1524
      %1528 = vset.pattern.permute.xlu0 0
      %1529 = vperm.xlu0 %1528, %v1521
      %v1530 = vpop.permute.xlu0 %1529
      %v1533 = vsel %vm730, %v1518, 0
      %v1536 = vsel %vm730, %v1519, 0
      %v1539 = vsel %vm650, %v1517, 0
      %1541 = vmatpush.msra.mxu0 0.0
      %1542 = vmatpush.msra.mxu0 0.0
      %1543 = vmatpush.msra.mxu0 0.0
      %1544 = vmatpush.msra.mxu0 0.0
      %1545 = vmatpush.msra.mxu0 0.0
      %1546 = vmatpush.msra.mxu0 0.0
      %1547 = vmatpush.msra.mxu0 0.0
      %1548 = vmatpush.msra.mxu0 0.0
      %1549 = vmatpush.msra.mxu0 0.0
      %1550 = vmatpush.msra.mxu0 0.0
      %1551 = vmatpush.msra.mxu0 0.0
      %1552 = vmatpush.msra.mxu0 0.0
      %1553 = vmatpush.msra.mxu0 %v1539
      %1554 = vmatpush.msra.mxu0 %v1516
      %1555 = vmatpush.msra.mxu0 %v1515
      %1556 = vmatpush.msra.mxu0 %v1514
      %1557 = vmatmul.f32.gmra.mxu0 %v1533
      %v1558 = vpop.f32.mrf.mxu0
      %v1559 = vadd.f32 %v1525, %v1558
      %1560 = vmatmul.f32.gmra.mxu0 %v1536
      %v1561 = vpop.f32.mrf.mxu0
      %v1562 = vadd.f32 %v1530, %v1561
      %1563 = vdwg.mxu0
      %v1564 = vxor.u32 %v1559, 2147483648
      %v1565 = vxor.u32 %v1562, 2147483648
      %v1566 = vmul.f32 %v1564, 1.442695
      %v1567 = vpow.pop %v1566
      %v1568 = vmul.f32 %v1565, 1.442695
      %v1569 = vpow.pop %v1568
      %v1570 = vadd.f32 %v1567, 1.0
      %v1571 = vadd.f32 %v1569, 1.0
      %v1572 = vrcp.pop %v1570
      %v1573 = vmul.f32 %v1570, %v1572
      %v1574 = vsub.f32 1.0, %v1573
      %v1575 = vmul.f32 %v1572, %v1574
      %v1576 = vadd.f32 %v1572, %v1575
      %vm1577 = vweird.f32 %v1570
      %vm1578 = vweird.f32 %v1572
      %vm1579 = vmor %vm1577, %vm1578
      %v1580 = vsel %vm1579, %v1572, %v1576
      %v1581 = vand.u32 2147483647, %v1570
      %vm1582 = vcmp.eq.f32.partialorder %v1581, 8.507059e+37
      %v1583 = vand.u32 %v1570, 2147483648
      %v1584 = vor.u32 1.1754944e-38, %v1583
      %v1585 = vsel %vm1582, %v1584, %v1580
      %v1586 = vmul.f32 1.0, %v1585
      %v1587 = vrcp.pop %v1571
      %v1588 = vmul.f32 %v1571, %v1587
      %v1589 = vsub.f32 1.0, %v1588
      %v1590 = vmul.f32 %v1587, %v1589
      %v1591 = vadd.f32 %v1587, %v1590
      %vm1592 = vweird.f32 %v1571
      %vm1593 = vweird.f32 %v1587
      %vm1594 = vmor %vm1592, %vm1593
      %v1595 = vsel %vm1594, %v1587, %v1591
      %v1596 = vand.u32 2147483647, %v1571
      %vm1597 = vcmp.eq.f32.partialorder %v1596, 8.507059e+37
      %v1598 = vand.u32 %v1571, 2147483648
      %v1599 = vor.u32 1.1754944e-38, %v1598
      %v1600 = vsel %vm1597, %v1599, %v1595
      %v1601 = vmul.f32 1.0, %v1600
      %v1602 = vmul.f32 %v1586, %v1445
      %1603 = vst.msk [vmem:[#allocation2] sm:$0x3] %vm638, %v637
      %1604 = vst.msk [vmem:[#allocation2 + $0x2] sm:$0xff] %vm640, %v1602
      %v1605 = vld [vmem:[#allocation2] sm:$0xff]
      %v1606 = vld [vmem:[#allocation2 + $0x8] sm:$0x3]
      %v1608 = vsel %vm640, %v1605, 0
      %v1611 = vsel %vm640, %v1606, 0
      %1613 = vmatpush.msra.mxu0 0.0
      %1614 = vmatpush.msra.mxu0 0.0
      %1615 = vmatpush.msra.mxu0 0.0
      %1616 = vmatpush.msra.mxu0 0.0
      %1617 = vmatpush.msra.mxu0 0.0
      %1618 = vmatpush.msra.mxu0 0.0
      %1619 = vmatpush.msra.mxu0 0.0
      %1620 = vmatpush.msra.mxu0 0.0
      %1621 = vmatpush.msra.mxu0 0.0
      %1622 = vmatpush.msra.mxu0 0.0
      %1623 = vmatpush.msra.mxu0 0.0
      %1624 = vmatpush.msra.mxu0 0.0
      %1625 = vmatpush.msra.mxu0 0.0
      %1626 = vmatpush.msra.mxu0 0.0
      %1627 = vmatpush.msra.mxu0 0.0
      %1628 = vmatpush.msra.mxu0 %v652
      %1629 = vmatmul.f32.gmra.mxu0 %v1608
      %v1630 = vpop.f32.mrf.mxu0
      %v1631 = vadd.f32 0.0, %v1630
      %1632 = vmatmul.f32.gmra.mxu0 %v1611
      %v1633 = vpop.f32.mrf.mxu0
      %v1634 = vadd.f32 0.0, %v1633
      %1635 = vdwg.mxu0
      %1636 = vst.msk [vmem:[#allocation2 + $0xa] sm:$0xff] %vm640, %v1631
      %1637 = vst.msk [vmem:[#allocation2 + $0x12] sm:$0x3] %vm638, %v1634
      %v1638 = vld [vmem:[#allocation2 + $0xa] sm:$0xff]
      %v1639 = vld [vmem:[#allocation2 + $0x12] sm:$0x3]
      %v1641 = vsel %vm640, %v1638, 0
      %v1644 = vsel %vm640, %v1639, 0
      %1646 = vmatpush.msra.mxu0 0.0
      %1647 = vmatpush.msra.mxu0 0.0
      %1648 = vmatpush.msra.mxu0 0.0
      %1649 = vmatpush.msra.mxu0 0.0
      %1650 = vmatpush.msra.mxu0 0.0
      %1651 = vmatpush.msra.mxu0 0.0
      %1652 = vmatpush.msra.mxu0 0.0
      %1653 = vmatpush.msra.mxu0 0.0
      %1654 = vmatpush.msra.mxu0 0.0
      %1655 = vmatpush.msra.mxu0 0.0
      %1656 = vmatpush.msra.mxu0 0.0
      %1657 = vmatpush.msra.mxu0 0.0
      %1658 = vmatpush.msra.mxu0 0.0
      %1659 = vmatpush.msra.mxu0 0.0
      %1660 = vmatpush.msra.mxu0 0.0
      %1661 = vmatpush.msra.mxu0 %v652
      %1662 = vmatmul.f32.gmra.mxu0 %v1641
      %v1663 = vpop.f32.mrf.mxu0
      %v1664 = vadd.f32 0.0, %v1663
      %1665 = vmatmul.f32.gmra.mxu0 %v1644
      %v1666 = vpop.f32.mrf.mxu0
      %v1667 = vadd.f32 0.0, %v1666
      %1668 = vdwg.mxu0
      %1669 = vst.msk [vmem:[#allocation2 + $0x14] sm:$0xff] %vm640, %v1664
      %1670 = vst.msk [vmem:[#allocation2 + $0x1c] sm:$0x3] %vm638, %v1667
      %v1671 = vld [vmem:[#allocation2] sm:$0xff]
      %v1672 = vld [vmem:[#allocation2 + $0x8] sm:$0xff]
      %v1673 = vld [vmem:[#allocation2 + $0x10] sm:$0xff]
      %v1674 = vld [vmem:[#allocation2 + $0x18] sm:$0x3f]
      %v1675 = vld [vmem:[%s4] sm:$0xff]
      %v1676 = vld [vmem:[%s5] sm:$0xff]
      %1678 = vset.pattern.permute.xlu0 0
      %1679 = vperm.xlu0 %1678, %v1676
      %v1680 = vpop.permute.xlu0 %1679
      %v1683 = vsel %vm730, %v1675, 0
      %v1686 = vsel %vm650, %v1674, 0
      %1688 = vmatpush.msra.mxu0 0.0
      %1689 = vmatpush.msra.mxu0 0.0
      %1690 = vmatpush.msra.mxu0 0.0
      %1691 = vmatpush.msra.mxu0 0.0
      %1692 = vmatpush.msra.mxu0 0.0
      %1693 = vmatpush.msra.mxu0 0.0
      %1694 = vmatpush.msra.mxu0 0.0
      %1695 = vmatpush.msra.mxu0 0.0
      %1696 = vmatpush.msra.mxu0 0.0
      %1697 = vmatpush.msra.mxu0 0.0
      %1698 = vmatpush.msra.mxu0 0.0
      %1699 = vmatpush.msra.mxu0 0.0
      %1700 = vmatpush.msra.mxu0 %v1686
      %1701 = vmatpush.msra.mxu0 %v1673
      %1702 = vmatpush.msra.mxu0 %v1672
      %1703 = vmatpush.msra.mxu0 %v1671
      %1704 = vmatmul.f32.gmra.mxu0 %v1683
      %v1705 = vpop.f32.mrf.mxu0
      %v1706 = vadd.f32 %v1680, %v1705
      %1707 = vdwg.mxu0
      %v1708 = vtanh.pop %v1706
      %v1709 = vmul.f32 %v1601, %v1445
      %v1710 = vsub.f32 1.0, %v1601
      %v1711 = vmul.f32 %v1710, %v1708
      %v1712 = vadd.f32 %v1709, %v1711
      %1713 = vst.msk [vmem:[#allocation2] sm:$0xff] %vm640, %v911
      %1714 = vst.msk [vmem:[#allocation2 + $0x8] sm:$0xff] %vm640, 0.0
      %v1715 = vld [vmem:[#allocation2] sm:$0xff]
      %v1716 = vld [vmem:[#allocation2 + $0x8] sm:$0xff]
      %v1718 = vsel %vm640, %v1715, 0
      %v1721 = vsel %vm640, %v1716, 0
      %1723 = vmatpush.msra.mxu0 0.0
      %1724 = vmatpush.msra.mxu0 0.0
      %1725 = vmatpush.msra.mxu0 0.0
      %1726 = vmatpush.msra.mxu0 0.0
      %1727 = vmatpush.msra.mxu0 0.0
      %1728 = vmatpush.msra.mxu0 0.0
      %1729 = vmatpush.msra.mxu0 0.0
      %1730 = vmatpush.msra.mxu0 0.0
      %1731 = vmatpush.msra.mxu0 0.0
      %1732 = vmatpush.msra.mxu0 0.0
      %1733 = vmatpush.msra.mxu0 0.0
      %1734 = vmatpush.msra.mxu0 0.0
      %1735 = vmatpush.msra.mxu0 0.0
      %1736 = vmatpush.msra.mxu0 0.0
      %1737 = vmatpush.msra.mxu0 0.0
      %1738 = vmatpush.msra.mxu0 %v652
      %1739 = vmatmul.f32.gmra.mxu0 %v1718
      %v1740 = vpop.f32.mrf.mxu0
      %v1741 = vadd.f32 0.0, %v1740
      %1742 = vmatmul.f32.gmra.mxu0 %v1721
      %v1743 = vpop.f32.mrf.mxu0
      %v1744 = vadd.f32 0.0, %v1743
      %1745 = vdwg.mxu0
      %1746 = vst.msk [vmem:[#allocation2 + $0x10] sm:$0xff] %vm640, %v1741
      %1747 = vst.msk [vmem:[#allocation2 + $0x18] sm:$0xff] %vm640, %v1744
      %v1748 = vld [vmem:[#allocation2 + $0x10] sm:$0xff]
      %v1749 = vld [vmem:[#allocation2 + $0x18] sm:$0xff]
      %v1751 = vsel %vm640, %v1748, 0
      %v1754 = vsel %vm640, %v1749, 0
      %1756 = vmatpush.msra.mxu0 0.0
      %1757 = vmatpush.msra.mxu0 0.0
      %1758 = vmatpush.msra.mxu0 0.0
      %1759 = vmatpush.msra.mxu0 0.0
      %1760 = vmatpush.msra.mxu0 0.0
      %1761 = vmatpush.msra.mxu0 0.0
      %1762 = vmatpush.msra.mxu0 0.0
      %1763 = vmatpush.msra.mxu0 0.0
      %1764 = vmatpush.msra.mxu0 0.0
      %1765 = vmatpush.msra.mxu0 0.0
      %1766 = vmatpush.msra.mxu0 0.0
      %1767 = vmatpush.msra.mxu0 0.0
      %1768 = vmatpush.msra.mxu0 0.0
      %1769 = vmatpush.msra.mxu0 0.0
      %1770 = vmatpush.msra.mxu0 0.0
      %1771 = vmatpush.msra.mxu0 %v652
      %1772 = vmatmul.f32.gmra.mxu0 %v1751
      %v1773 = vpop.f32.mrf.mxu0
      %v1774 = vadd.f32 0.0, %v1773
      %1775 = vmatmul.f32.gmra.mxu0 %v1754
      %v1776 = vpop.f32.mrf.mxu0
      %v1777 = vadd.f32 0.0, %v1776
      %1778 = vdwg.mxu0
      %1779 = vst.msk [vmem:[#allocation2 + $0x20] sm:$0xff] %vm640, %v1774
      %1780 = vst.msk [vmem:[#allocation2 + $0x28] sm:$0xff] %vm640, %v1777
      %v1781 = vld [vmem:[#allocation2] sm:$0xff]
      %v1782 = vld [vmem:[#allocation2 + $0x8] sm:$0xff]
      %v1783 = vld [vmem:[#allocation2 + $0x10] sm:$0xff]
      %v1784 = vld [vmem:[#allocation2 + $0x18] sm:$0xff]
      %v1785 = vld [vmem:[#allocation2 + $0x20] sm:$0xff]
      %v1786 = vld [vmem:[#allocation2 + $0x28] sm:$0xff]
      %v1787 = vld [vmem:[%s6] sm:$0xff]
      %v1788 = vld [vmem:[%s6 + $0x8] sm:$0xff]
      %v1789 = vld [vmem:[%s7] sm:$0xff]
      %v1790 = vld [vmem:[%s7 + $0x8] sm:$0xff]
      %1792 = vset.pattern.permute.xlu0 0
      %1793 = vperm.xlu0 %1792, %v1789
      %v1794 = vpop.permute.xlu0 %1793
      %1797 = vset.pattern.permute.xlu0 0
      %1798 = vperm.xlu0 %1797, %v1790
      %v1799 = vpop.permute.xlu0 %1798
      %vm1801 = vcmask 392192
      %v1803 = vsel %vm1801, %v1787, 0
      %v1806 = vsel %vm1801, %v1788, 0
      %1808 = vmatpush.msra.mxu0 0.0
      %1809 = vmatpush.msra.mxu0 0.0
      %1810 = vmatpush.msra.mxu0 0.0
      %1811 = vmatpush.msra.mxu0 0.0
      %1812 = vmatpush.msra.mxu0 0.0
      %1813 = vmatpush.msra.mxu0 0.0
      %1814 = vmatpush.msra.mxu0 0.0
      %1815 = vmatpush.msra.mxu0 0.0
      %1816 = vmatpush.msra.mxu0 0.0
      %1817 = vmatpush.msra.mxu0 0.0
      %1818 = vmatpush.msra.mxu0 %v1786
      %1819 = vmatpush.msra.mxu0 %v1785
      %1820 = vmatpush.msra.mxu0 %v1784
      %1821 = vmatpush.msra.mxu0 %v1783
      %1822 = vmatpush.msra.mxu0 %v1782
      %1823 = vmatpush.msra.mxu0 %v1781
      %1824 = vmatmul.f32.gmra.mxu0 %v1803
      %v1825 = vpop.f32.mrf.mxu0
      %v1826 = vadd.f32 %v1794, %v1825
      %1827 = vmatmul.f32.gmra.mxu0 %v1806
      %v1828 = vpop.f32.mrf.mxu0
      %v1829 = vadd.f32 %v1799, %v1828
      %1830 = vdwg.mxu0
      %v1831 = vxor.u32 %v1826, 2147483648
      %v1832 = vxor.u32 %v1829, 2147483648
      %v1833 = vmul.f32 %v1831, 1.442695
      %v1834 = vpow.pop %v1833
      %v1835 = vmul.f32 %v1832, 1.442695
      %v1836 = vpow.pop %v1835
      %v1837 = vadd.f32 %v1834, 1.0
      %v1838 = vadd.f32 %v1836, 1.0
      %v1839 = vrcp.pop %v1837
      %v1840 = vmul.f32 %v1837, %v1839
      %v1841 = vsub.f32 1.0, %v1840
      %v1842 = vmul.f32 %v1839, %v1841
      %v1843 = vadd.f32 %v1839, %v1842
      %vm1844 = vweird.f32 %v1837
      %vm1845 = vweird.f32 %v1839
      %vm1846 = vmor %vm1844, %vm1845
      %v1847 = vsel %vm1846, %v1839, %v1843
      %v1848 = vand.u32 2147483647, %v1837
      %vm1849 = vcmp.eq.f32.partialorder %v1848, 8.507059e+37
      %v1850 = vand.u32 %v1837, 2147483648
      %v1851 = vor.u32 1.1754944e-38, %v1850
      %v1852 = vsel %vm1849, %v1851, %v1847
      %v1853 = vmul.f32 1.0, %v1852
      %v1854 = vrcp.pop %v1838
      %v1855 = vmul.f32 %v1838, %v1854
      %v1856 = vsub.f32 1.0, %v1855
      %v1857 = vmul.f32 %v1854, %v1856
      %v1858 = vadd.f32 %v1854, %v1857
      %vm1859 = vweird.f32 %v1838
      %vm1860 = vweird.f32 %v1854
      %vm1861 = vmor %vm1859, %vm1860
      %v1862 = vsel %vm1861, %v1854, %v1858
      %v1863 = vand.u32 2147483647, %v1838
      %vm1864 = vcmp.eq.f32.partialorder %v1863, 8.507059e+37
      %v1865 = vand.u32 %v1838, 2147483648
      %v1866 = vor.u32 1.1754944e-38, %v1865
      %v1867 = vsel %vm1864, %v1866, %v1862
      %v1868 = vmul.f32 1.0, %v1867
      %v1869 = vmul.f32 %v1853, 0.0
      %1870 = vst.msk [vmem:[#allocation2] sm:$0xff] %vm640, %v911
      %1871 = vst.msk [vmem:[#allocation2 + $0x8] sm:$0xff] %vm640, %v1869
      %v1872 = vld [vmem:[#allocation2] sm:$0xff]
      %v1873 = vld [vmem:[#allocation2 + $0x8] sm:$0xff]
      %v1875 = vsel %vm640, %v1872, 0
      %v1878 = vsel %vm640, %v1873, 0
      %1880 = vmatpush.msra.mxu0 0.0
      %1881 = vmatpush.msra.mxu0 0.0
      %1882 = vmatpush.msra.mxu0 0.0
      %1883 = vmatpush.msra.mxu0 0.0
      %1884 = vmatpush.msra.mxu0 0.0
      %1885 = vmatpush.msra.mxu0 0.0
      %1886 = vmatpush.msra.mxu0 0.0
      %1887 = vmatpush.msra.mxu0 0.0
      %1888 = vmatpush.msra.mxu0 0.0
      %1889 = vmatpush.msra.mxu0 0.0
      %1890 = vmatpush.msra.mxu0 0.0
      %1891 = vmatpush.msra.mxu0 0.0
      %1892 = vmatpush.msra.mxu0 0.0
      %1893 = vmatpush.msra.mxu0 0.0
      %1894 = vmatpush.msra.mxu0 0.0
      %1895 = vmatpush.msra.mxu0 %v652
      %1896 = vmatmul.f32.gmra.mxu0 %v1875
      %v1897 = vpop.f32.mrf.mxu0
      %v1898 = vadd.f32 0.0, %v1897
      %1899 = vmatmul.f32.gmra.mxu0 %v1878
      %v1900 = vpop.f32.mrf.mxu0
      %v1901 = vadd.f32 0.0, %v1900
      %1902 = vdwg.mxu0
      %1903 = vst.msk [vmem:[#allocation2 + $0x10] sm:$0xff] %vm640, %v1898
      %1904 = vst.msk [vmem:[#allocation2 + $0x18] sm:$0xff] %vm640, %v1901
      %v1905 = vld [vmem:[#allocation2 + $0x10] sm:$0xff]
      %v1906 = vld [vmem:[#allocation2 + $0x18] sm:$0xff]
      %v1908 = vsel %vm640, %v1905, 0
      %v1911 = vsel %vm640, %v1906, 0
      %1913 = vmatpush.msra.mxu0 0.0
      %1914 = vmatpush.msra.mxu0 0.0
      %1915 = vmatpush.msra.mxu0 0.0
      %1916 = vmatpush.msra.mxu0 0.0
      %1917 = vmatpush.msra.mxu0 0.0
      %1918 = vmatpush.msra.mxu0 0.0
      %1919 = vmatpush.msra.mxu0 0.0
      %1920 = vmatpush.msra.mxu0 0.0
      %1921 = vmatpush.msra.mxu0 0.0
      %1922 = vmatpush.msra.mxu0 0.0
      %1923 = vmatpush.msra.mxu0 0.0
      %1924 = vmatpush.msra.mxu0 0.0
      %1925 = vmatpush.msra.mxu0 0.0
      %1926 = vmatpush.msra.mxu0 0.0
      %1927 = vmatpush.msra.mxu0 0.0
      %1928 = vmatpush.msra.mxu0 %v652
      %1929 = vmatmul.f32.gmra.mxu0 %v1908
      %v1930 = vpop.f32.mrf.mxu0
      %v1931 = vadd.f32 0.0, %v1930
      %1932 = vmatmul.f32.gmra.mxu0 %v1911
      %v1933 = vpop.f32.mrf.mxu0
      %v1934 = vadd.f32 0.0, %v1933
      %1935 = vdwg.mxu0
      %1936 = vst.msk [vmem:[#allocation2 + $0x20] sm:$0xff] %vm640, %v1931
      %1937 = vst.msk [vmem:[#allocation2 + $0x28] sm:$0xff] %vm640, %v1934
      %v1938 = vld [vmem:[#allocation2] sm:$0xff]
      %v1939 = vld [vmem:[#allocation2 + $0x8] sm:$0xff]
      %v1940 = vld [vmem:[#allocation2 + $0x10] sm:$0xff]
      %v1941 = vld [vmem:[#allocation2 + $0x18] sm:$0xff]
      %v1942 = vld [vmem:[#allocation2 + $0x20] sm:$0xff]
      %v1943 = vld [vmem:[#allocation2 + $0x28] sm:$0xff]
      %v1944 = vld [vmem:[%s8] sm:$0xff]
      %v1945 = vld [vmem:[%s9] sm:$0xff]
      %1947 = vset.pattern.permute.xlu0 0
      %1948 = vperm.xlu0 %1947, %v1945
      %v1949 = vpop.permute.xlu0 %1948
      %v1952 = vsel %vm1801, %v1944, 0
      %1954 = vmatpush.msra.mxu0 0.0
      %1955 = vmatpush.msra.mxu0 0.0
      %1956 = vmatpush.msra.mxu0 0.0
      %1957 = vmatpush.msra.mxu0 0.0
      %1958 = vmatpush.msra.mxu0 0.0
      %1959 = vmatpush.msra.mxu0 0.0
      %1960 = vmatpush.msra.mxu0 0.0
      %1961 = vmatpush.msra.mxu0 0.0
      %1962 = vmatpush.msra.mxu0 0.0
      %1963 = vmatpush.msra.mxu0 0.0
      %1964 = vmatpush.msra.mxu0 %v1943
      %1965 = vmatpush.msra.mxu0 %v1942
      %1966 = vmatpush.msra.mxu0 %v1941
      %1967 = vmatpush.msra.mxu0 %v1940
      %1968 = vmatpush.msra.mxu0 %v1939
      %1969 = vmatpush.msra.mxu0 %v1938
      %1970 = vmatmul.f32.gmra.mxu0 %v1952
      %v1971 = vpop.f32.mrf.mxu0
      %v1972 = vadd.f32 %v1949, %v1971
      %1973 = vdwg.mxu0
      %v1974 = vtanh.pop %v1972
      %v1975 = vmul.f32 %v1868, 0.0
      %v1976 = vsub.f32 1.0, %v1868
      %v1977 = vmul.f32 %v1976, %v1974
      %v1978 = vadd.f32 %v1975, %v1977
      %1979 = vst.msk [vmem:[#allocation2] sm:$0xff] %vm640, %v1178
      %1980 = vst.msk [vmem:[#allocation2 + $0x8] sm:$0xff] %vm640, %v1978
      %v1981 = vld [vmem:[#allocation2] sm:$0xff]
      %v1982 = vld [vmem:[#allocation2 + $0x8] sm:$0xff]
      %v1984 = vsel %vm640, %v1981, 0
      %v1987 = vsel %vm640, %v1982, 0
      %1989 = vmatpush.msra.mxu0 0.0
      %1990 = vmatpush.msra.mxu0 0.0
      %1991 = vmatpush.msra.mxu0 0.0
      %1992 = vmatpush.msra.mxu0 0.0
      %1993 = vmatpush.msra.mxu0 0.0
      %1994 = vmatpush.msra.mxu0 0.0
      %1995 = vmatpush.msra.mxu0 0.0
      %1996 = vmatpush.msra.mxu0 0.0
      %1997 = vmatpush.msra.mxu0 0.0
      %1998 = vmatpush.msra.mxu0 0.0
      %1999 = vmatpush.msra.mxu0 0.0
      %2000 = vmatpush.msra.mxu0 0.0
      %2001 = vmatpush.msra.mxu0 0.0
      %2002 = vmatpush.msra.mxu0 0.0
      %2003 = vmatpush.msra.mxu0 0.0
      %2004 = vmatpush.msra.mxu0 %v652
      %2005 = vmatmul.f32.gmra.mxu0 %v1984
      %v2006 = vpop.f32.mrf.mxu0
      %v2007 = vadd.f32 0.0, %v2006
      %2008 = vmatmul.f32.gmra.mxu0 %v1987
      %v2009 = vpop.f32.mrf.mxu0
      %v2010 = vadd.f32 0.0, %v2009
      %2011 = vdwg.mxu0
      %2012 = vst.msk [vmem:[#allocation2 + $0x10] sm:$0xff] %vm640, %v2007
      %2013 = vst.msk [vmem:[#allocation2 + $0x18] sm:$0xff] %vm640, %v2010
      %v2014 = vld [vmem:[#allocation2 + $0x10] sm:$0xff]
      %v2015 = vld [vmem:[#allocation2 + $0x18] sm:$0xff]
      %v2017 = vsel %vm640, %v2014, 0
      %v2020 = vsel %vm640, %v2015, 0
      %2022 = vmatpush.msra.mxu0 0.0
      %2023 = vmatpush.msra.mxu0 0.0
      %2024 = vmatpush.msra.mxu0 0.0
      %2025 = vmatpush.msra.mxu0 0.0
      %2026 = vmatpush.msra.mxu0 0.0
      %2027 = vmatpush.msra.mxu0 0.0
      %2028 = vmatpush.msra.mxu0 0.0
      %2029 = vmatpush.msra.mxu0 0.0
      %2030 = vmatpush.msra.mxu0 0.0
      %2031 = vmatpush.msra.mxu0 0.0
      %2032 = vmatpush.msra.mxu0 0.0
      %2033 = vmatpush.msra.mxu0 0.0
      %2034 = vmatpush.msra.mxu0 0.0
      %2035 = vmatpush.msra.mxu0 0.0
      %2036 = vmatpush.msra.mxu0 0.0
      %2037 = vmatpush.msra.mxu0 %v652
      %2038 = vmatmul.f32.gmra.mxu0 %v2017
      %v2039 = vpop.f32.mrf.mxu0
      %v2040 = vadd.f32 0.0, %v2039
      %2041 = vmatmul.f32.gmra.mxu0 %v2020
      %v2042 = vpop.f32.mrf.mxu0
      %v2043 = vadd.f32 0.0, %v2042
      %2044 = vdwg.mxu0
      %2045 = vst.msk [vmem:[#allocation2 + $0x20] sm:$0xff] %vm640, %v2040
      %2046 = vst.msk [vmem:[#allocation2 + $0x28] sm:$0xff] %vm640, %v2043
      %v2047 = vld [vmem:[#allocation2] sm:$0xff]
      %v2048 = vld [vmem:[#allocation2 + $0x8] sm:$0xff]
      %v2049 = vld [vmem:[#allocation2 + $0x10] sm:$0xff]
      %v2050 = vld [vmem:[#allocation2 + $0x18] sm:$0xff]
      %v2051 = vld [vmem:[#allocation2 + $0x20] sm:$0xff]
      %v2052 = vld [vmem:[#allocation2 + $0x28] sm:$0xff]
      %v2053 = vld [vmem:[%s6] sm:$0xff]
      %v2054 = vld [vmem:[%s6 + $0x8] sm:$0xff]
      %v2055 = vld [vmem:[%s7] sm:$0xff]
      %v2056 = vld [vmem:[%s7 + $0x8] sm:$0xff]
      %2058 = vset.pattern.permute.xlu0 0
      %2059 = vperm.xlu0 %2058, %v2055
      %v2060 = vpop.permute.xlu0 %2059
      %2063 = vset.pattern.permute.xlu0 0
      %2064 = vperm.xlu0 %2063, %v2056
      %v2065 = vpop.permute.xlu0 %2064
      %v2068 = vsel %vm1801, %v2053, 0
      %v2071 = vsel %vm1801, %v2054, 0
      %2073 = vmatpush.msra.mxu0 0.0
      %2074 = vmatpush.msra.mxu0 0.0
      %2075 = vmatpush.msra.mxu0 0.0
      %2076 = vmatpush.msra.mxu0 0.0
      %2077 = vmatpush.msra.mxu0 0.0
      %2078 = vmatpush.msra.mxu0 0.0
      %2079 = vmatpush.msra.mxu0 0.0
      %2080 = vmatpush.msra.mxu0 0.0
      %2081 = vmatpush.msra.mxu0 0.0
      %2082 = vmatpush.msra.mxu0 0.0
      %2083 = vmatpush.msra.mxu0 %v2052
      %2084 = vmatpush.msra.mxu0 %v2051
      %2085 = vmatpush.msra.mxu0 %v2050
      %2086 = vmatpush.msra.mxu0 %v2049
      %2087 = vmatpush.msra.mxu0 %v2048
      %2088 = vmatpush.msra.mxu0 %v2047
      %2089 = vmatmul.f32.gmra.mxu0 %v2068
      %v2090 = vpop.f32.mrf.mxu0
      %v2091 = vadd.f32 %v2060, %v2090
      %2092 = vmatmul.f32.gmra.mxu0 %v2071
      %v2093 = vpop.f32.mrf.mxu0
      %v2094 = vadd.f32 %v2065, %v2093
      %2095 = vdwg.mxu0
      %v2096 = vxor.u32 %v2091, 2147483648
      %v2097 = vxor.u32 %v2094, 2147483648
      %v2098 = vmul.f32 %v2096, 1.442695
      %v2099 = vpow.pop %v2098
      %v2100 = vmul.f32 %v2097, 1.442695
      %v2101 = vpow.pop %v2100
      %v2102 = vadd.f32 %v2099, 1.0
      %v2103 = vadd.f32 %v2101, 1.0
      %v2104 = vrcp.pop %v2102
      %v2105 = vmul.f32 %v2102, %v2104
      %v2106 = vsub.f32 1.0, %v2105
      %v2107 = vmul.f32 %v2104, %v2106
      %v2108 = vadd.f32 %v2104, %v2107
      %vm2109 = vweird.f32 %v2102
      %vm2110 = vweird.f32 %v2104
      %vm2111 = vmor %vm2109, %vm2110
      %v2112 = vsel %vm2111, %v2104, %v2108
      %v2113 = vand.u32 2147483647, %v2102
      %vm2114 = vcmp.eq.f32.partialorder %v2113, 8.507059e+37
      %v2115 = vand.u32 %v2102, 2147483648
      %v2116 = vor.u32 1.1754944e-38, %v2115
      %v2117 = vsel %vm2114, %v2116, %v2112
      %v2118 = vmul.f32 1.0, %v2117
      %v2119 = vrcp.pop %v2103
      %v2120 = vmul.f32 %v2103, %v2119
      %v2121 = vsub.f32 1.0, %v2120
      %v2122 = vmul.f32 %v2119, %v2121
      %v2123 = vadd.f32 %v2119, %v2122
      %vm2124 = vweird.f32 %v2103
      %vm2125 = vweird.f32 %v2119
      %vm2126 = vmor %vm2124, %vm2125
      %v2127 = vsel %vm2126, %v2119, %v2123
      %v2128 = vand.u32 2147483647, %v2103
      %vm2129 = vcmp.eq.f32.partialorder %v2128, 8.507059e+37
      %v2130 = vand.u32 %v2103, 2147483648
      %v2131 = vor.u32 1.1754944e-38, %v2130
      %v2132 = vsel %vm2129, %v2131, %v2127
      %v2133 = vmul.f32 1.0, %v2132
      %v2134 = vmul.f32 %v2118, %v1978
      %2135 = vst.msk [vmem:[#allocation2] sm:$0xff] %vm640, %v1178
      %2136 = vst.msk [vmem:[#allocation2 + $0x8] sm:$0xff] %vm640, %v2134
      %v2137 = vld [vmem:[#allocation2] sm:$0xff]
      %v2138 = vld [vmem:[#allocation2 + $0x8] sm:$0xff]
      %v2140 = vsel %vm640, %v2137, 0
      %v2143 = vsel %vm640, %v2138, 0
      %2145 = vmatpush.msra.mxu0 0.0
      %2146 = vmatpush.msra.mxu0 0.0
      %2147 = vmatpush.msra.mxu0 0.0
      %2148 = vmatpush.msra.mxu0 0.0
      %2149 = vmatpush.msra.mxu0 0.0
      %2150 = vmatpush.msra.mxu0 0.0
      %2151 = vmatpush.msra.mxu0 0.0
      %2152 = vmatpush.msra.mxu0 0.0
      %2153 = vmatpush.msra.mxu0 0.0
      %2154 = vmatpush.msra.mxu0 0.0
      %2155 = vmatpush.msra.mxu0 0.0
      %2156 = vmatpush.msra.mxu0 0.0
      %2157 = vmatpush.msra.mxu0 0.0
      %2158 = vmatpush.msra.mxu0 0.0
      %2159 = vmatpush.msra.mxu0 0.0
      %2160 = vmatpush.msra.mxu0 %v652
      %2161 = vmatmul.f32.gmra.mxu0 %v2140
      %v2162 = vpop.f32.mrf.mxu0
      %v2163 = vadd.f32 0.0, %v2162
      %2164 = vmatmul.f32.gmra.mxu0 %v2143
      %v2165 = vpop.f32.mrf.mxu0
      %v2166 = vadd.f32 0.0, %v2165
      %2167 = vdwg.mxu0
      %2168 = vst.msk [vmem:[#allocation2 + $0x10] sm:$0xff] %vm640, %v2163
      %2169 = vst.msk [vmem:[#allocation2 + $0x18] sm:$0xff] %vm640, %v2166
      %v2170 = vld [vmem:[#allocation2 + $0x10] sm:$0xff]
      %v2171 = vld [vmem:[#allocation2 + $0x18] sm:$0xff]
      %v2173 = vsel %vm640, %v2170, 0
      %v2176 = vsel %vm640, %v2171, 0
      %2178 = vmatpush.msra.mxu0 0.0
      %2179 = vmatpush.msra.mxu0 0.0
      %2180 = vmatpush.msra.mxu0 0.0
      %2181 = vmatpush.msra.mxu0 0.0
      %2182 = vmatpush.msra.mxu0 0.0
      %2183 = vmatpush.msra.mxu0 0.0
      %2184 = vmatpush.msra.mxu0 0.0
      %2185 = vmatpush.msra.mxu0 0.0
      %2186 = vmatpush.msra.mxu0 0.0
      %2187 = vmatpush.msra.mxu0 0.0
      %2188 = vmatpush.msra.mxu0 0.0
      %2189 = vmatpush.msra.mxu0 0.0
      %2190 = vmatpush.msra.mxu0 0.0
      %2191 = vmatpush.msra.mxu0 0.0
      %2192 = vmatpush.msra.mxu0 0.0
      %2193 = vmatpush.msra.mxu0 %v652
      %2194 = vmatmul.f32.gmra.mxu0 %v2173
      %v2195 = vpop.f32.mrf.mxu0
      %v2196 = vadd.f32 0.0, %v2195
      %2197 = vmatmul.f32.gmra.mxu0 %v2176
      %v2198 = vpop.f32.mrf.mxu0
      %v2199 = vadd.f32 0.0, %v2198
      %2200 = vdwg.mxu0
      %2201 = vst.msk [vmem:[#allocation2 + $0x20] sm:$0xff] %vm640, %v2196
      %2202 = vst.msk [vmem:[#allocation2 + $0x28] sm:$0xff] %vm640, %v2199
      %v2203 = vld [vmem:[#allocation2] sm:$0xff]
      %v2204 = vld [vmem:[#allocation2 + $0x8] sm:$0xff]
      %v2205 = vld [vmem:[#allocation2 + $0x10] sm:$0xff]
      %v2206 = vld [vmem:[#allocation2 + $0x18] sm:$0xff]
      %v2207 = vld [vmem:[#allocation2 + $0x20] sm:$0xff]
      %v2208 = vld [vmem:[#allocation2 + $0x28] sm:$0xff]
      %v2209 = vld [vmem:[%s8] sm:$0xff]
      %v2210 = vld [vmem:[%s9] sm:$0xff]
      %2212 = vset.pattern.permute.xlu0 0
      %2213 = vperm.xlu0 %2212, %v2210
      %v2214 = vpop.permute.xlu0 %2213
      %v2217 = vsel %vm1801, %v2209, 0
      %2219 = vmatpush.msra.mxu0 0.0
      %2220 = vmatpush.msra.mxu0 0.0
      %2221 = vmatpush.msra.mxu0 0.0
      %2222 = vmatpush.msra.mxu0 0.0
      %2223 = vmatpush.msra.mxu0 0.0
      %2224 = vmatpush.msra.mxu0 0.0
      %2225 = vmatpush.msra.mxu0 0.0
      %2226 = vmatpush.msra.mxu0 0.0
      %2227 = vmatpush.msra.mxu0 0.0
      %2228 = vmatpush.msra.mxu0 0.0
      %2229 = vmatpush.msra.mxu0 %v2208
      %2230 = vmatpush.msra.mxu0 %v2207
      %2231 = vmatpush.msra.mxu0 %v2206
      %2232 = vmatpush.msra.mxu0 %v2205
      %2233 = vmatpush.msra.mxu0 %v2204
      %2234 = vmatpush.msra.mxu0 %v2203
      %2235 = vmatmul.f32.gmra.mxu0 %v2217
      %v2236 = vpop.f32.mrf.mxu0
      %v2237 = vadd.f32 %v2214, %v2236
      %2238 = vdwg.mxu0
      %v2239 = vtanh.pop %v2237
      %v2240 = vmul.f32 %v2133, %v1978
      %v2241 = vsub.f32 1.0, %v2133
      %v2242 = vmul.f32 %v2241, %v2239
      %v2243 = vadd.f32 %v2240, %v2242
      %2244 = vst.msk [vmem:[#allocation2] sm:$0xff] %vm640, %v1445
      %2245 = vst.msk [vmem:[#allocation2 + $0x8] sm:$0xff] %vm640, %v2243
      %v2246 = vld [vmem:[#allocation2] sm:$0xff]
      %v2247 = vld [vmem:[#allocation2 + $0x8] sm:$0xff]
      %v2249 = vsel %vm640, %v2246, 0
      %v2252 = vsel %vm640, %v2247, 0
      %2254 = vmatpush.msra.mxu0 0.0
      %2255 = vmatpush.msra.mxu0 0.0
      %2256 = vmatpush.msra.mxu0 0.0
      %2257 = vmatpush.msra.mxu0 0.0
      %2258 = vmatpush.msra.mxu0 0.0
      %2259 = vmatpush.msra.mxu0 0.0
      %2260 = vmatpush.msra.mxu0 0.0
      %2261 = vmatpush.msra.mxu0 0.0
      %2262 = vmatpush.msra.mxu0 0.0
      %2263 = vmatpush.msra.mxu0 0.0
      %2264 = vmatpush.msra.mxu0 0.0
      %2265 = vmatpush.msra.mxu0 0.0
      %2266 = vmatpush.msra.mxu0 0.0
      %2267 = vmatpush.msra.mxu0 0.0
      %2268 = vmatpush.msra.mxu0 0.0
      %2269 = vmatpush.msra.mxu0 %v652
      %2270 = vmatmul.f32.gmra.mxu0 %v2249
      %v2271 = vpop.f32.mrf.mxu0
      %v2272 = vadd.f32 0.0, %v2271
      %2273 = vmatmul.f32.gmra.mxu0 %v2252
      %v2274 = vpop.f32.mrf.mxu0
      %v2275 = vadd.f32 0.0, %v2274
      %2276 = vdwg.mxu0
      %2277 = vst.msk [vmem:[#allocation2 + $0x10] sm:$0xff] %vm640, %v2272
      %2278 = vst.msk [vmem:[#allocation2 + $0x18] sm:$0xff] %vm640, %v2275
      %v2279 = vld [vmem:[#allocation2 + $0x10] sm:$0xff]
      %v2280 = vld [vmem:[#allocation2 + $0x18] sm:$0xff]
      %v2282 = vsel %vm640, %v2279, 0
      %v2285 = vsel %vm640, %v2280, 0
      %2287 = vmatpush.msra.mxu0 0.0
      %2288 = vmatpush.msra.mxu0 0.0
      %2289 = vmatpush.msra.mxu0 0.0
      %2290 = vmatpush.msra.mxu0 0.0
      %2291 = vmatpush.msra.mxu0 0.0
      %2292 = vmatpush.msra.mxu0 0.0
      %2293 = vmatpush.msra.mxu0 0.0
      %2294 = vmatpush.msra.mxu0 0.0
      %2295 = vmatpush.msra.mxu0 0.0
      %2296 = vmatpush.msra.mxu0 0.0
      %2297 = vmatpush.msra.mxu0 0.0
      %2298 = vmatpush.msra.mxu0 0.0
      %2299 = vmatpush.msra.mxu0 0.0
      %2300 = vmatpush.msra.mxu0 0.0
      %2301 = vmatpush.msra.mxu0 0.0
      %2302 = vmatpush.msra.mxu0 %v652
      %2303 = vmatmul.f32.gmra.mxu0 %v2282
      %v2304 = vpop.f32.mrf.mxu0
      %v2305 = vadd.f32 0.0, %v2304
      %2306 = vmatmul.f32.gmra.mxu0 %v2285
      %v2307 = vpop.f32.mrf.mxu0
      %v2308 = vadd.f32 0.0, %v2307
      %2309 = vdwg.mxu0
      %2310 = vst.msk [vmem:[#allocation2 + $0x20] sm:$0xff] %vm640, %v2305
      %2311 = vst.msk [vmem:[#allocation2 + $0x28] sm:$0xff] %vm640, %v2308
      %v2312 = vld [vmem:[#allocation2] sm:$0xff]
      %v2313 = vld [vmem:[#allocation2 + $0x8] sm:$0xff]
      %v2314 = vld [vmem:[#allocation2 + $0x10] sm:$0xff]
      %v2315 = vld [vmem:[#allocation2 + $0x18] sm:$0xff]
      %v2316 = vld [vmem:[#allocation2 + $0x20] sm:$0xff]
      %v2317 = vld [vmem:[#allocation2 + $0x28] sm:$0xff]
      %v2318 = vld [vmem:[%s6] sm:$0xff]
      %v2319 = vld [vmem:[%s6 + $0x8] sm:$0xff]
      %v2320 = vld [vmem:[%s7] sm:$0xff]
      %v2321 = vld [vmem:[%s7 + $0x8] sm:$0xff]
      %2323 = vset.pattern.permute.xlu0 0
      %2324 = vperm.xlu0 %2323, %v2320
      %v2325 = vpop.permute.xlu0 %2324
      %2328 = vset.pattern.permute.xlu0 0
      %2329 = vperm.xlu0 %2328, %v2321
      %v2330 = vpop.permute.xlu0 %2329
      %v2333 = vsel %vm1801, %v2318, 0
      %v2336 = vsel %vm1801, %v2319, 0
      %2338 = vmatpush.msra.mxu0 0.0
      %2339 = vmatpush.msra.mxu0 0.0
      %2340 = vmatpush.msra.mxu0 0.0
      %2341 = vmatpush.msra.mxu0 0.0
      %2342 = vmatpush.msra.mxu0 0.0
      %2343 = vmatpush.msra.mxu0 0.0
      %2344 = vmatpush.msra.mxu0 0.0
      %2345 = vmatpush.msra.mxu0 0.0
      %2346 = vmatpush.msra.mxu0 0.0
      %2347 = vmatpush.msra.mxu0 0.0
      %2348 = vmatpush.msra.mxu0 %v2317
      %2349 = vmatpush.msra.mxu0 %v2316
      %2350 = vmatpush.msra.mxu0 %v2315
      %2351 = vmatpush.msra.mxu0 %v2314
      %2352 = vmatpush.msra.mxu0 %v2313
      %2353 = vmatpush.msra.mxu0 %v2312
      %2354 = vmatmul.f32.gmra.mxu0 %v2333
      %v2355 = vpop.f32.mrf.mxu0
      %v2356 = vadd.f32 %v2325, %v2355
      %2357 = vmatmul.f32.gmra.mxu0 %v2336
      %v2358 = vpop.f32.mrf.mxu0
      %v2359 = vadd.f32 %v2330, %v2358
      %2360 = vdwg.mxu0
      %v2361 = vxor.u32 %v2356, 2147483648
      %v2362 = vxor.u32 %v2359, 2147483648
      %v2363 = vmul.f32 %v2361, 1.442695
      %v2364 = vpow.pop %v2363
      %v2365 = vmul.f32 %v2362, 1.442695
      %v2366 = vpow.pop %v2365
      %v2367 = vadd.f32 %v2364, 1.0
      %v2368 = vadd.f32 %v2366, 1.0
      %v2369 = vrcp.pop %v2367
      %v2370 = vmul.f32 %v2367, %v2369
      %v2371 = vsub.f32 1.0, %v2370
      %v2372 = vmul.f32 %v2369, %v2371
      %v2373 = vadd.f32 %v2369, %v2372
      %vm2374 = vweird.f32 %v2367
      %vm2375 = vweird.f32 %v2369
      %vm2376 = vmor %vm2374, %vm2375
      %v2377 = vsel %vm2376, %v2369, %v2373
      %v2378 = vand.u32 2147483647, %v2367
      %vm2379 = vcmp.eq.f32.partialorder %v2378, 8.507059e+37
      %v2380 = vand.u32 %v2367, 2147483648
      %v2381 = vor.u32 1.1754944e-38, %v2380
      %v2382 = vsel %vm2379, %v2381, %v2377
      %v2383 = vmul.f32 1.0, %v2382
      %v2384 = vrcp.pop %v2368
      %v2385 = vmul.f32 %v2368, %v2384
      %v2386 = vsub.f32 1.0, %v2385
      %v2387 = vmul.f32 %v2384, %v2386
      %v2388 = vadd.f32 %v2384, %v2387
      %vm2389 = vweird.f32 %v2368
      %vm2390 = vweird.f32 %v2384
      %vm2391 = vmor %vm2389, %vm2390
      %v2392 = vsel %vm2391, %v2384, %v2388
      %v2393 = vand.u32 2147483647, %v2368
      %vm2394 = vcmp.eq.f32.partialorder %v2393, 8.507059e+37
      %v2395 = vand.u32 %v2368, 2147483648
      %v2396 = vor.u32 1.1754944e-38, %v2395
      %v2397 = vsel %vm2394, %v2396, %v2392
      %v2398 = vmul.f32 1.0, %v2397
      %v2399 = vmul.f32 %v2383, %v2243
      %2400 = vst.msk [vmem:[#allocation2] sm:$0xff] %vm640, %v1445
      %2401 = vst.msk [vmem:[#allocation2 + $0x8] sm:$0xff] %vm640, %v2399
      %v2402 = vld [vmem:[#allocation2] sm:$0xff]
      %v2403 = vld [vmem:[#allocation2 + $0x8] sm:$0xff]
      %v2405 = vsel %vm640, %v2402, 0
      %v2408 = vsel %vm640, %v2403, 0
      %2410 = vmatpush.msra.mxu0 0.0
      %2411 = vmatpush.msra.mxu0 0.0
      %2412 = vmatpush.msra.mxu0 0.0
      %2413 = vmatpush.msra.mxu0 0.0
      %2414 = vmatpush.msra.mxu0 0.0
      %2415 = vmatpush.msra.mxu0 0.0
      %2416 = vmatpush.msra.mxu0 0.0
      %2417 = vmatpush.msra.mxu0 0.0
      %2418 = vmatpush.msra.mxu0 0.0
      %2419 = vmatpush.msra.mxu0 0.0
      %2420 = vmatpush.msra.mxu0 0.0
      %2421 = vmatpush.msra.mxu0 0.0
      %2422 = vmatpush.msra.mxu0 0.0
      %2423 = vmatpush.msra.mxu0 0.0
      %2424 = vmatpush.msra.mxu0 0.0
      %2425 = vmatpush.msra.mxu0 %v652
      %2426 = vmatmul.f32.gmra.mxu0 %v2405
      %v2427 = vpop.f32.mrf.mxu0
      %v2428 = vadd.f32 0.0, %v2427
      %2429 = vmatmul.f32.gmra.mxu0 %v2408
      %v2430 = vpop.f32.mrf.mxu0
      %v2431 = vadd.f32 0.0, %v2430
      %2432 = vdwg.mxu0
      %2433 = vst.msk [vmem:[#allocation2 + $0x10] sm:$0xff] %vm640, %v2428
      %2434 = vst.msk [vmem:[#allocation2 + $0x18] sm:$0xff] %vm640, %v2431
      %v2435 = vld [vmem:[#allocation2 + $0x10] sm:$0xff]
      %v2436 = vld [vmem:[#allocation2 + $0x18] sm:$0xff]
      %v2438 = vsel %vm640, %v2435, 0
      %v2441 = vsel %vm640, %v2436, 0
      %2443 = vmatpush.msra.mxu0 0.0
      %2444 = vmatpush.msra.mxu0 0.0
      %2445 = vmatpush.msra.mxu0 0.0
      %2446 = vmatpush.msra.mxu0 0.0
      %2447 = vmatpush.msra.mxu0 0.0
      %2448 = vmatpush.msra.mxu0 0.0
      %2449 = vmatpush.msra.mxu0 0.0
      %2450 = vmatpush.msra.mxu0 0.0
      %2451 = vmatpush.msra.mxu0 0.0
      %2452 = vmatpush.msra.mxu0 0.0
      %2453 = vmatpush.msra.mxu0 0.0
      %2454 = vmatpush.msra.mxu0 0.0
      %2455 = vmatpush.msra.mxu0 0.0
      %2456 = vmatpush.msra.mxu0 0.0
      %2457 = vmatpush.msra.mxu0 0.0
      %2458 = vmatpush.msra.mxu0 %v652
      %2459 = vmatmul.f32.gmra.mxu0 %v2438
      %v2460 = vpop.f32.mrf.mxu0
      %v2461 = vadd.f32 0.0, %v2460
      %2462 = vmatmul.f32.gmra.mxu0 %v2441
      %v2463 = vpop.f32.mrf.mxu0
      %v2464 = vadd.f32 0.0, %v2463
      %2465 = vdwg.mxu0
      %2466 = vst.msk [vmem:[#allocation2 + $0x20] sm:$0xff] %vm640, %v2461
      %2467 = vst.msk [vmem:[#allocation2 + $0x28] sm:$0xff] %vm640, %v2464
      %v2468 = vld [vmem:[#allocation2] sm:$0xff]
      %v2469 = vld [vmem:[#allocation2 + $0x8] sm:$0xff]
      %v2470 = vld [vmem:[#allocation2 + $0x10] sm:$0xff]
      %v2471 = vld [vmem:[#allocation2 + $0x18] sm:$0xff]
      %v2472 = vld [vmem:[#allocation2 + $0x20] sm:$0xff]
      %v2473 = vld [vmem:[#allocation2 + $0x28] sm:$0xff]
      %v2474 = vld [vmem:[%s8] sm:$0xff]
      %v2475 = vld [vmem:[%s9] sm:$0xff]
      %2477 = vset.pattern.permute.xlu0 0
      %2478 = vperm.xlu0 %2477, %v2475
      %v2479 = vpop.permute.xlu0 %2478
      %v2482 = vsel %vm1801, %v2474, 0
      %2484 = vmatpush.msra.mxu0 0.0
      %2485 = vmatpush.msra.mxu0 0.0
      %2486 = vmatpush.msra.mxu0 0.0
      %2487 = vmatpush.msra.mxu0 0.0
      %2488 = vmatpush.msra.mxu0 0.0
      %2489 = vmatpush.msra.mxu0 0.0
      %2490 = vmatpush.msra.mxu0 0.0
      %2491 = vmatpush.msra.mxu0 0.0
      %2492 = vmatpush.msra.mxu0 0.0
      %2493 = vmatpush.msra.mxu0 0.0
      %2494 = vmatpush.msra.mxu0 %v2473
      %2495 = vmatpush.msra.mxu0 %v2472
      %2496 = vmatpush.msra.mxu0 %v2471
      %2497 = vmatpush.msra.mxu0 %v2470
      %2498 = vmatpush.msra.mxu0 %v2469
      %2499 = vmatpush.msra.mxu0 %v2468
      %2500 = vmatmul.f32.gmra.mxu0 %v2482
      %v2501 = vpop.f32.mrf.mxu0
      %v2502 = vadd.f32 %v2479, %v2501
      %2503 = vdwg.mxu0
      %v2504 = vtanh.pop %v2502
      %v2505 = vmul.f32 %v2398, %v2243
      %v2506 = vsub.f32 1.0, %v2398
      %v2507 = vmul.f32 %v2506, %v2504
      %v2508 = vadd.f32 %v2505, %v2507
      %2509 = vst.msk [vmem:[#allocation2] sm:$0xff] %vm640, %v1712
      %2510 = vst.msk [vmem:[#allocation2 + $0x8] sm:$0xff] %vm640, %v2508
      %v2511 = vld [vmem:[#allocation2] sm:$0xff]
      %v2512 = vld [vmem:[#allocation2 + $0x8] sm:$0xff]
      %v2514 = vsel %vm640, %v2511, 0
      %v2517 = vsel %vm640, %v2512, 0
      %2519 = vmatpush.msra.mxu0 0.0
      %2520 = vmatpush.msra.mxu0 0.0
      %2521 = vmatpush.msra.mxu0 0.0
      %2522 = vmatpush.msra.mxu0 0.0
      %2523 = vmatpush.msra.mxu0 0.0
      %2524 = vmatpush.msra.mxu0 0.0
      %2525 = vmatpush.msra.mxu0 0.0
      %2526 = vmatpush.msra.mxu0 0.0
      %2527 = vmatpush.msra.mxu0 0.0
      %2528 = vmatpush.msra.mxu0 0.0
      %2529 = vmatpush.msra.mxu0 0.0
      %2530 = vmatpush.msra.mxu0 0.0
      %2531 = vmatpush.msra.mxu0 0.0
      %2532 = vmatpush.msra.mxu0 0.0
      %2533 = vmatpush.msra.mxu0 0.0
      %2534 = vmatpush.msra.mxu0 %v652
      %2535 = vmatmul.f32.gmra.mxu0 %v2514
      %v2536 = vpop.f32.mrf.mxu0
      %v2537 = vadd.f32 0.0, %v2536
      %2538 = vmatmul.f32.gmra.mxu0 %v2517
      %v2539 = vpop.f32.mrf.mxu0
      %v2540 = vadd.f32 0.0, %v2539
      %2541 = vdwg.mxu0
      %2542 = vst.msk [vmem:[#allocation2 + $0x10] sm:$0xff] %vm640, %v2537
      %2543 = vst.msk [vmem:[#allocation2 + $0x18] sm:$0xff] %vm640, %v2540
      %v2544 = vld [vmem:[#allocation2 + $0x10] sm:$0xff]
      %v2545 = vld [vmem:[#allocation2 + $0x18] sm:$0xff]
      %v2547 = vsel %vm640, %v2544, 0
      %v2550 = vsel %vm640, %v2545, 0
      %2552 = vmatpush.msra.mxu0 0.0
      %2553 = vmatpush.msra.mxu0 0.0
      %2554 = vmatpush.msra.mxu0 0.0
      %2555 = vmatpush.msra.mxu0 0.0
      %2556 = vmatpush.msra.mxu0 0.0
      %2557 = vmatpush.msra.mxu0 0.0
      %2558 = vmatpush.msra.mxu0 0.0
      %2559 = vmatpush.msra.mxu0 0.0
      %2560 = vmatpush.msra.mxu0 0.0
      %2561 = vmatpush.msra.mxu0 0.0
      %2562 = vmatpush.msra.mxu0 0.0
      %2563 = vmatpush.msra.mxu0 0.0
      %2564 = vmatpush.msra.mxu0 0.0
      %2565 = vmatpush.msra.mxu0 0.0
      %2566 = vmatpush.msra.mxu0 0.0
      %2567 = vmatpush.msra.mxu0 %v652
      %2568 = vmatmul.f32.gmra.mxu0 %v2547
      %v2569 = vpop.f32.mrf.mxu0
      %v2570 = vadd.f32 0.0, %v2569
      %2571 = vmatmul.f32.gmra.mxu0 %v2550
      %v2572 = vpop.f32.mrf.mxu0
      %v2573 = vadd.f32 0.0, %v2572
      %2574 = vdwg.mxu0
      %2575 = vst.msk [vmem:[#allocation2 + $0x20] sm:$0xff] %vm640, %v2570
      %2576 = vst.msk [vmem:[#allocation2 + $0x28] sm:$0xff] %vm640, %v2573
      %v2577 = vld [vmem:[#allocation2] sm:$0xff]
      %v2578 = vld [vmem:[#allocation2 + $0x8] sm:$0xff]
      %v2579 = vld [vmem:[#allocation2 + $0x10] sm:$0xff]
      %v2580 = vld [vmem:[#allocation2 + $0x18] sm:$0xff]
      %v2581 = vld [vmem:[#allocation2 + $0x20] sm:$0xff]
      %v2582 = vld [vmem:[#allocation2 + $0x28] sm:$0xff]
      %v2583 = vld [vmem:[%s6] sm:$0xff]
      %v2584 = vld [vmem:[%s6 + $0x8] sm:$0xff]
      %v2585 = vld [vmem:[%s7] sm:$0xff]
      %v2586 = vld [vmem:[%s7 + $0x8] sm:$0xff]
      %2588 = vset.pattern.permute.xlu0 0
      %2589 = vperm.xlu0 %2588, %v2585
      %v2590 = vpop.permute.xlu0 %2589
      %2593 = vset.pattern.permute.xlu0 0
      %2594 = vperm.xlu0 %2593, %v2586
      %v2595 = vpop.permute.xlu0 %2594
      %v2598 = vsel %vm1801, %v2583, 0
      %v2601 = vsel %vm1801, %v2584, 0
      %2603 = vmatpush.msra.mxu0 0.0
      %2604 = vmatpush.msra.mxu0 0.0
      %2605 = vmatpush.msra.mxu0 0.0
      %2606 = vmatpush.msra.mxu0 0.0
      %2607 = vmatpush.msra.mxu0 0.0
      %2608 = vmatpush.msra.mxu0 0.0
      %2609 = vmatpush.msra.mxu0 0.0
      %2610 = vmatpush.msra.mxu0 0.0
      %2611 = vmatpush.msra.mxu0 0.0
      %2612 = vmatpush.msra.mxu0 0.0
      %2613 = vmatpush.msra.mxu0 %v2582
      %2614 = vmatpush.msra.mxu0 %v2581
      %2615 = vmatpush.msra.mxu0 %v2580
      %2616 = vmatpush.msra.mxu0 %v2579
      %2617 = vmatpush.msra.mxu0 %v2578
      %2618 = vmatpush.msra.mxu0 %v2577
      %2619 = vmatmul.f32.gmra.mxu0 %v2598
      %v2620 = vpop.f32.mrf.mxu0
      %v2621 = vadd.f32 %v2590, %v2620
      %2622 = vmatmul.f32.gmra.mxu0 %v2601
      %v2623 = vpop.f32.mrf.mxu0
      %v2624 = vadd.f32 %v2595, %v2623
      %2625 = vdwg.mxu0
      %v2626 = vxor.u32 %v2621, 2147483648
      %v2627 = vxor.u32 %v2624, 2147483648
      %v2628 = vmul.f32 %v2626, 1.442695
      %v2629 = vpow.pop %v2628
      %v2630 = vmul.f32 %v2627, 1.442695
      %v2631 = vpow.pop %v2630
      %v2632 = vadd.f32 %v2629, 1.0
      %v2633 = vadd.f32 %v2631, 1.0
      %v2634 = vrcp.pop %v2632
      %v2635 = vmul.f32 %v2632, %v2634
      %v2636 = vsub.f32 1.0, %v2635
      %v2637 = vmul.f32 %v2634, %v2636
      %v2638 = vadd.f32 %v2634, %v2637
      %vm2639 = vweird.f32 %v2632
      %vm2640 = vweird.f32 %v2634
      %vm2641 = vmor %vm2639, %vm2640
      %v2642 = vsel %vm2641, %v2634, %v2638
      %v2643 = vand.u32 2147483647, %v2632
      %vm2644 = vcmp.eq.f32.partialorder %v2643, 8.507059e+37
      %v2645 = vand.u32 %v2632, 2147483648
      %v2646 = vor.u32 1.1754944e-38, %v2645
      %v2647 = vsel %vm2644, %v2646, %v2642
      %v2648 = vmul.f32 1.0, %v2647
      %v2649 = vrcp.pop %v2633
      %v2650 = vmul.f32 %v2633, %v2649
      %v2651 = vsub.f32 1.0, %v2650
      %v2652 = vmul.f32 %v2649, %v2651
      %v2653 = vadd.f32 %v2649, %v2652
      %vm2654 = vweird.f32 %v2633
      %vm2655 = vweird.f32 %v2649
      %vm2656 = vmor %vm2654, %vm2655
      %v2657 = vsel %vm2656, %v2649, %v2653
      %v2658 = vand.u32 2147483647, %v2633
      %vm2659 = vcmp.eq.f32.partialorder %v2658, 8.507059e+37
      %v2660 = vand.u32 %v2633, 2147483648
      %v2661 = vor.u32 1.1754944e-38, %v2660
      %v2662 = vsel %vm2659, %v2661, %v2657
      %v2663 = vmul.f32 1.0, %v2662
      %v2664 = vmul.f32 %v2648, %v2508
      %2665 = vst.msk [vmem:[#allocation2] sm:$0xff] %vm640, %v1712
      %2666 = vst.msk [vmem:[#allocation2 + $0x8] sm:$0xff] %vm640, %v2664
      %v2667 = vld [vmem:[#allocation2] sm:$0xff]
      %v2668 = vld [vmem:[#allocation2 + $0x8] sm:$0xff]
      %v2670 = vsel %vm640, %v2667, 0
      %v2673 = vsel %vm640, %v2668, 0
      %2675 = vmatpush.msra.mxu0 0.0
      %2676 = vmatpush.msra.mxu0 0.0
      %2677 = vmatpush.msra.mxu0 0.0
      %2678 = vmatpush.msra.mxu0 0.0
      %2679 = vmatpush.msra.mxu0 0.0
      %2680 = vmatpush.msra.mxu0 0.0
      %2681 = vmatpush.msra.mxu0 0.0
      %2682 = vmatpush.msra.mxu0 0.0
      %2683 = vmatpush.msra.mxu0 0.0
      %2684 = vmatpush.msra.mxu0 0.0
      %2685 = vmatpush.msra.mxu0 0.0
      %2686 = vmatpush.msra.mxu0 0.0
      %2687 = vmatpush.msra.mxu0 0.0
      %2688 = vmatpush.msra.mxu0 0.0
      %2689 = vmatpush.msra.mxu0 0.0
      %2690 = vmatpush.msra.mxu0 %v652
      %2691 = vmatmul.f32.gmra.mxu0 %v2670
      %v2692 = vpop.f32.mrf.mxu0
      %v2693 = vadd.f32 0.0, %v2692
      %2694 = vmatmul.f32.gmra.mxu0 %v2673
      %v2695 = vpop.f32.mrf.mxu0
      %v2696 = vadd.f32 0.0, %v2695
      %2697 = vdwg.mxu0
      %2698 = vst.msk [vmem:[#allocation2 + $0x10] sm:$0xff] %vm640, %v2693
      %2699 = vst.msk [vmem:[#allocation2 + $0x18] sm:$0xff] %vm640, %v2696
      %v2700 = vld [vmem:[#allocation2 + $0x10] sm:$0xff]
      %v2701 = vld [vmem:[#allocation2 + $0x18] sm:$0xff]
      %v2703 = vsel %vm640, %v2700, 0
      %v2706 = vsel %vm640, %v2701, 0
      %2708 = vmatpush.msra.mxu0 0.0
      %2709 = vmatpush.msra.mxu0 0.0
      %2710 = vmatpush.msra.mxu0 0.0
      %2711 = vmatpush.msra.mxu0 0.0
      %2712 = vmatpush.msra.mxu0 0.0
      %2713 = vmatpush.msra.mxu0 0.0
      %2714 = vmatpush.msra.mxu0 0.0
      %2715 = vmatpush.msra.mxu0 0.0
      %2716 = vmatpush.msra.mxu0 0.0
      %2717 = vmatpush.msra.mxu0 0.0
      %2718 = vmatpush.msra.mxu0 0.0
      %2719 = vmatpush.msra.mxu0 0.0
      %2720 = vmatpush.msra.mxu0 0.0
      %2721 = vmatpush.msra.mxu0 0.0
      %2722 = vmatpush.msra.mxu0 0.0
      %2723 = vmatpush.msra.mxu0 %v652
      %2724 = vmatmul.f32.gmra.mxu0 %v2703
      %v2725 = vpop.f32.mrf.mxu0
      %v2726 = vadd.f32 0.0, %v2725
      %2727 = vmatmul.f32.gmra.mxu0 %v2706
      %v2728 = vpop.f32.mrf.mxu0
      %v2729 = vadd.f32 0.0, %v2728
      %2730 = vdwg.mxu0
      %2731 = vst.msk [vmem:[#allocation2 + $0x20] sm:$0xff] %vm640, %v2726
      %2732 = vst.msk [vmem:[#allocation2 + $0x28] sm:$0xff] %vm640, %v2729
      %v2733 = vld [vmem:[#allocation2] sm:$0xff]
      %v2734 = vld [vmem:[#allocation2 + $0x8] sm:$0xff]
      %v2735 = vld [vmem:[#allocation2 + $0x10] sm:$0xff]
      %v2736 = vld [vmem:[#allocation2 + $0x18] sm:$0xff]
      %v2737 = vld [vmem:[#allocation2 + $0x20] sm:$0xff]
      %v2738 = vld [vmem:[#allocation2 + $0x28] sm:$0xff]
      %v2739 = vld [vmem:[%s8] sm:$0xff]
      %v2740 = vld [vmem:[%s9] sm:$0xff]
      %2742 = vset.pattern.permute.xlu0 0
      %2743 = vperm.xlu0 %2742, %v2740
      %v2744 = vpop.permute.xlu0 %2743
      %v2747 = vsel %vm1801, %v2739, 0
      %2749 = vmatpush.msra.mxu0 0.0
      %2750 = vmatpush.msra.mxu0 0.0
      %2751 = vmatpush.msra.mxu0 0.0
      %2752 = vmatpush.msra.mxu0 0.0
      %2753 = vmatpush.msra.mxu0 0.0
      %2754 = vmatpush.msra.mxu0 0.0
      %2755 = vmatpush.msra.mxu0 0.0
      %2756 = vmatpush.msra.mxu0 0.0
      %2757 = vmatpush.msra.mxu0 0.0
      %2758 = vmatpush.msra.mxu0 0.0
      %2759 = vmatpush.msra.mxu0 %v2738
      %2760 = vmatpush.msra.mxu0 %v2737
      %2761 = vmatpush.msra.mxu0 %v2736
      %2762 = vmatpush.msra.mxu0 %v2735
      %2763 = vmatpush.msra.mxu0 %v2734
      %2764 = vmatpush.msra.mxu0 %v2733
      %2765 = vmatmul.f32.gmra.mxu0 %v2747
      %v2766 = vpop.f32.mrf.mxu0
      %v2767 = vadd.f32 %v2744, %v2766
      %2768 = vdwg.mxu0
      %v2769 = vtanh.pop %v2767
      %v2770 = vmul.f32 %v2663, %v2508
      %v2771 = vsub.f32 1.0, %v2663
      %v2772 = vmul.f32 %v2771, %v2769
      %v2773 = vadd.f32 %v2770, %v2772
      %v2774 = vld [vmem:[%s636] sm:$0x3]
      %vm2775 = vcmask 40960
      %2776 = vst.msk [vmem:[#allocation2] sm:$0x1] %vm2775, %v2774
      %2777 = vst.msk [vmem:[#allocation2 + $0x1] sm:$0xff] %vm640, %v1712
      %v2778 = vld [vmem:[#allocation2] sm:$0xff]
      %v2779 = vld [vmem:[#allocation2 + $0x8] sm:$0x1]
      %v2781 = vsel %vm640, %v2778, 0
      %v2784 = vsel %vm640, %v2779, 0
      %2786 = vmatpush.msra.mxu0 0.0
      %2787 = vmatpush.msra.mxu0 0.0
      %2788 = vmatpush.msra.mxu0 0.0
      %2789 = vmatpush.msra.mxu0 0.0
      %2790 = vmatpush.msra.mxu0 0.0
      %2791 = vmatpush.msra.mxu0 0.0
      %2792 = vmatpush.msra.mxu0 0.0
      %2793 = vmatpush.msra.mxu0 0.0
      %2794 = vmatpush.msra.mxu0 0.0
      %2795 = vmatpush.msra.mxu0 0.0
      %2796 = vmatpush.msra.mxu0 0.0
      %2797 = vmatpush.msra.mxu0 0.0
      %2798 = vmatpush.msra.mxu0 0.0
      %2799 = vmatpush.msra.mxu0 0.0
      %2800 = vmatpush.msra.mxu0 0.0
      %2801 = vmatpush.msra.mxu0 %v652
      %2802 = vmatmul.f32.gmra.mxu0 %v2781
      %v2803 = vpop.f32.mrf.mxu0
      %v2804 = vadd.f32 0.0, %v2803
      %2805 = vmatmul.f32.gmra.mxu0 %v2784
      %v2806 = vpop.f32.mrf.mxu0
      %v2807 = vadd.f32 0.0, %v2806
      %2808 = vdwg.mxu0
      %2809 = vst.msk [vmem:[#allocation2 + $0x9] sm:$0xff] %vm640, %v2804
      %2810 = vst.msk [vmem:[#allocation2 + $0x11] sm:$0x1] %vm2775, %v2807
      %v2811 = vld [vmem:[#allocation2 + $0x9] sm:$0xff]
      %v2812 = vld [vmem:[#allocation2 + $0x11] sm:$0x1]
      %v2814 = vsel %vm640, %v2811, 0
      %v2817 = vsel %vm640, %v2812, 0
      %2819 = vmatpush.msra.mxu0 0.0
      %2820 = vmatpush.msra.mxu0 0.0
      %2821 = vmatpush.msra.mxu0 0.0
      %2822 = vmatpush.msra.mxu0 0.0
      %2823 = vmatpush.msra.mxu0 0.0
      %2824 = vmatpush.msra.mxu0 0.0
      %2825 = vmatpush.msra.mxu0 0.0
      %2826 = vmatpush.msra.mxu0 0.0
      %2827 = vmatpush.msra.mxu0 0.0
      %2828 = vmatpush.msra.mxu0 0.0
      %2829 = vmatpush.msra.mxu0 0.0
      %2830 = vmatpush.msra.mxu0 0.0
      %2831 = vmatpush.msra.mxu0 0.0
      %2832 = vmatpush.msra.mxu0 0.0
      %2833 = vmatpush.msra.mxu0 0.0
      %2834 = vmatpush.msra.mxu0 %v652
      %2835 = vmatmul.f32.gmra.mxu0 %v2814
      %v2836 = vpop.f32.mrf.mxu0
      %v2837 = vadd.f32 0.0, %v2836
      %2838 = vmatmul.f32.gmra.mxu0 %v2817
      %v2839 = vpop.f32.mrf.mxu0
      %v2840 = vadd.f32 0.0, %v2839
      %2841 = vdwg.mxu0
      %2842 = vst.msk [vmem:[#allocation2 + $0x12] sm:$0xff] %vm640, %v2837
      %2843 = vst.msk [vmem:[#allocation2 + $0x1a] sm:$0x1] %vm2775, %v2840
      %v2844 = vld [vmem:[#allocation2] sm:$0xff]
      %v2845 = vld [vmem:[#allocation2 + $0x8] sm:$0xff]
      %v2846 = vld [vmem:[#allocation2 + $0x10] sm:$0xff]
      %v2847 = vld [vmem:[#allocation2 + $0x18] sm:$0x7]
      %v2848 = vld [vmem:[%s10] sm:$0xff]
      %v2849 = vld [vmem:[%s10 + $0x8] sm:$0xff]
      %v2850 = vld [vmem:[%s11] sm:$0xff]
      %v2851 = vld [vmem:[%s11 + $0x8] sm:$0xff]
      %2853 = vset.pattern.permute.xlu0 0
      %2854 = vperm.xlu0 %2853, %v2850
      %v2855 = vpop.permute.xlu0 %2854
      %2858 = vset.pattern.permute.xlu0 0
      %2859 = vperm.xlu0 %2858, %v2851
      %v2860 = vpop.permute.xlu0 %2859
      %vm2862 = vcmask 220160
      %v2864 = vsel %vm2862, %v2848, 0
      %v2867 = vsel %vm2862, %v2849, 0
      %vm2869 = vcmask 1042432
      %v2871 = vsel %vm2869, %v2847, 0
      %2873 = vmatpush.msra.mxu0 0.0
      %2874 = vmatpush.msra.mxu0 0.0
      %2875 = vmatpush.msra.mxu0 0.0
      %2876 = vmatpush.msra.mxu0 0.0
      %2877 = vmatpush.msra.mxu0 0.0
      %2878 = vmatpush.msra.mxu0 0.0
      %2879 = vmatpush.msra.mxu0 0.0
      %2880 = vmatpush.msra.mxu0 0.0
      %2881 = vmatpush.msra.mxu0 0.0
      %2882 = vmatpush.msra.mxu0 0.0
      %2883 = vmatpush.msra.mxu0 0.0
      %2884 = vmatpush.msra.mxu0 0.0
      %2885 = vmatpush.msra.mxu0 %v2871
      %2886 = vmatpush.msra.mxu0 %v2846
      %2887 = vmatpush.msra.mxu0 %v2845
      %2888 = vmatpush.msra.mxu0 %v2844
      %2889 = vmatmul.f32.gmra.mxu0 %v2864
      %v2890 = vpop.f32.mrf.mxu0
      %v2891 = vadd.f32 %v2855, %v2890
      %2892 = vmatmul.f32.gmra.mxu0 %v2867
      %v2893 = vpop.f32.mrf.mxu0
      %v2894 = vadd.f32 %v2860, %v2893
      %2895 = vdwg.mxu0
      %v2896 = vxor.u32 %v2891, 2147483648
      %v2897 = vxor.u32 %v2894, 2147483648
      %v2898 = vmul.f32 %v2896, 1.442695
      %v2899 = vpow.pop %v2898
      %v2900 = vmul.f32 %v2897, 1.442695
      %v2901 = vpow.pop %v2900
      %v2902 = vadd.f32 %v2899, 1.0
      %v2903 = vadd.f32 %v2901, 1.0
      %v2904 = vrcp.pop %v2902
      %v2905 = vmul.f32 %v2902, %v2904
      %v2906 = vsub.f32 1.0, %v2905
      %v2907 = vmul.f32 %v2904, %v2906
      %v2908 = vadd.f32 %v2904, %v2907
      %vm2909 = vweird.f32 %v2902
      %vm2910 = vweird.f32 %v2904
      %vm2911 = vmor %vm2909, %vm2910
      %v2912 = vsel %vm2911, %v2904, %v2908
      %v2913 = vand.u32 2147483647, %v2902
      %vm2914 = vcmp.eq.f32.partialorder %v2913, 8.507059e+37
      %v2915 = vand.u32 %v2902, 2147483648
      %v2916 = vor.u32 1.1754944e-38, %v2915
      %v2917 = vsel %vm2914, %v2916, %v2912
      %v2918 = vmul.f32 1.0, %v2917
      %v2919 = vrcp.pop %v2903
      %v2920 = vmul.f32 %v2903, %v2919
      %v2921 = vsub.f32 1.0, %v2920
      %v2922 = vmul.f32 %v2919, %v2921
      %v2923 = vadd.f32 %v2919, %v2922
      %vm2924 = vweird.f32 %v2903
      %vm2925 = vweird.f32 %v2919
      %vm2926 = vmor %vm2924, %vm2925
      %v2927 = vsel %vm2926, %v2919, %v2923
      %v2928 = vand.u32 2147483647, %v2903
      %vm2929 = vcmp.eq.f32.partialorder %v2928, 8.507059e+37
      %v2930 = vand.u32 %v2903, 2147483648
      %v2931 = vor.u32 1.1754944e-38, %v2930
      %v2932 = vsel %vm2929, %v2931, %v2927
      %v2933 = vmul.f32 1.0, %v2932
      %v2934 = vmul.f32 %v2918, %v1712
      %2935 = vst.msk [vmem:[#allocation2] sm:$0x1] %vm2775, %v2774
      %2936 = vst.msk [vmem:[#allocation2 + $0x1] sm:$0xff] %vm640, %v2934
      %v2937 = vld [vmem:[#allocation2] sm:$0xff]
      %v2938 = vld [vmem:[#allocation2 + $0x8] sm:$0x1]
      %v2940 = vsel %vm640, %v2937, 0
      %v2943 = vsel %vm640, %v2938, 0
      %2945 = vmatpush.msra.mxu0 0.0
      %2946 = vmatpush.msra.mxu0 0.0
      %2947 = vmatpush.msra.mxu0 0.0
      %2948 = vmatpush.msra.mxu0 0.0
      %2949 = vmatpush.msra.mxu0 0.0
      %2950 = vmatpush.msra.mxu0 0.0
      %2951 = vmatpush.msra.mxu0 0.0
      %2952 = vmatpush.msra.mxu0 0.0
      %2953 = vmatpush.msra.mxu0 0.0
      %2954 = vmatpush.msra.mxu0 0.0
      %2955 = vmatpush.msra.mxu0 0.0
      %2956 = vmatpush.msra.mxu0 0.0
      %2957 = vmatpush.msra.mxu0 0.0
      %2958 = vmatpush.msra.mxu0 0.0
      %2959 = vmatpush.msra.mxu0 0.0
      %2960 = vmatpush.msra.mxu0 %v652
      %2961 = vmatmul.f32.gmra.mxu0 %v2940
      %v2962 = vpop.f32.mrf.mxu0
      %v2963 = vadd.f32 0.0, %v2962
      %2964 = vmatmul.f32.gmra.mxu0 %v2943
      %v2965 = vpop.f32.mrf.mxu0
      %v2966 = vadd.f32 0.0, %v2965
      %2967 = vdwg.mxu0
      %2968 = vst.msk [vmem:[#allocation2 + $0x9] sm:$0xff] %vm640, %v2963
      %2969 = vst.msk [vmem:[#allocation2 + $0x11] sm:$0x1] %vm2775, %v2966
      %v2970 = vld [vmem:[#allocation2 + $0x9] sm:$0xff]
      %v2971 = vld [vmem:[#allocation2 + $0x11] sm:$0x1]
      %v2973 = vsel %vm640, %v2970, 0
      %v2976 = vsel %vm640, %v2971, 0
      %2978 = vmatpush.msra.mxu0 0.0
      %2979 = vmatpush.msra.mxu0 0.0
      %2980 = vmatpush.msra.mxu0 0.0
      %2981 = vmatpush.msra.mxu0 0.0
      %2982 = vmatpush.msra.mxu0 0.0
      %2983 = vmatpush.msra.mxu0 0.0
      %2984 = vmatpush.msra.mxu0 0.0
      %2985 = vmatpush.msra.mxu0 0.0
      %2986 = vmatpush.msra.mxu0 0.0
      %2987 = vmatpush.msra.mxu0 0.0
      %2988 = vmatpush.msra.mxu0 0.0
      %2989 = vmatpush.msra.mxu0 0.0
      %2990 = vmatpush.msra.mxu0 0.0
      %2991 = vmatpush.msra.mxu0 0.0
      %2992 = vmatpush.msra.mxu0 0.0
      %2993 = vmatpush.msra.mxu0 %v652
      %2994 = vmatmul.f32.gmra.mxu0 %v2973
      %v2995 = vpop.f32.mrf.mxu0
      %v2996 = vadd.f32 0.0, %v2995
      %2997 = vmatmul.f32.gmra.mxu0 %v2976
      %v2998 = vpop.f32.mrf.mxu0
      %v2999 = vadd.f32 0.0, %v2998
      %3000 = vdwg.mxu0
      %3001 = vst.msk [vmem:[#allocation2 + $0x12] sm:$0xff] %vm640, %v2996
      %3002 = vst.msk [vmem:[#allocation2 + $0x1a] sm:$0x1] %vm2775, %v2999
      %v3003 = vld [vmem:[#allocation2] sm:$0xff]
      %v3004 = vld [vmem:[#allocation2 + $0x8] sm:$0xff]
      %v3005 = vld [vmem:[#allocation2 + $0x10] sm:$0xff]
      %v3006 = vld [vmem:[#allocation2 + $0x18] sm:$0x7]
      %v3007 = vld [vmem:[%s12] sm:$0xff]
      %v3008 = vld [vmem:[%s13] sm:$0xff]
      %3010 = vset.pattern.permute.xlu0 0
      %3011 = vperm.xlu0 %3010, %v3008
      %v3012 = vpop.permute.xlu0 %3011
      %v3015 = vsel %vm2862, %v3007, 0
      %v3018 = vsel %vm2869, %v3006, 0
      %3020 = vmatpush.msra.mxu0 0.0
      %3021 = vmatpush.msra.mxu0 0.0
      %3022 = vmatpush.msra.mxu0 0.0
      %3023 = vmatpush.msra.mxu0 0.0
      %3024 = vmatpush.msra.mxu0 0.0
      %3025 = vmatpush.msra.mxu0 0.0
      %3026 = vmatpush.msra.mxu0 0.0
      %3027 = vmatpush.msra.mxu0 0.0
      %3028 = vmatpush.msra.mxu0 0.0
      %3029 = vmatpush.msra.mxu0 0.0
      %3030 = vmatpush.msra.mxu0 0.0
      %3031 = vmatpush.msra.mxu0 0.0
      %3032 = vmatpush.msra.mxu0 %v3018
      %3033 = vmatpush.msra.mxu0 %v3005
      %3034 = vmatpush.msra.mxu0 %v3004
      %3035 = vmatpush.msra.mxu0 %v3003
      %3036 = vmatmul.f32.gmra.mxu0 %v3015
      %v3037 = vpop.f32.mrf.mxu0
      %v3038 = vadd.f32 %v3012, %v3037
      %3039 = vdwg.mxu0
      %v3040 = vtanh.pop %v3038
      %v3041 = vmul.f32 %v2933, %v1712
      %v3042 = vsub.f32 1.0, %v2933
      %v3043 = vmul.f32 %v3042, %v3040
      %v3044 = vadd.f32 %v3041, %v3043
      %3045 = vst.msk [vmem:[#allocation2] sm:$0xff] %vm640, %v3044
      %3046 = vst.msk [vmem:[#allocation2 + $0x8] sm:$0xff] %vm640, %v2773
      %v3047 = vld [vmem:[#allocation2] sm:$0xff]
      %v3048 = vld [vmem:[#allocation2 + $0x8] sm:$0xff]
      %v3050 = vsel %vm640, %v3047, 0
      %v3053 = vsel %vm640, %v3048, 0
      %3055 = vmatpush.msra.mxu0 0.0
      %3056 = vmatpush.msra.mxu0 0.0
      %3057 = vmatpush.msra.mxu0 0.0
      %3058 = vmatpush.msra.mxu0 0.0
      %3059 = vmatpush.msra.mxu0 0.0
      %3060 = vmatpush.msra.mxu0 0.0
      %3061 = vmatpush.msra.mxu0 0.0
      %3062 = vmatpush.msra.mxu0 0.0
      %3063 = vmatpush.msra.mxu0 0.0
      %3064 = vmatpush.msra.mxu0 0.0
      %3065 = vmatpush.msra.mxu0 0.0
      %3066 = vmatpush.msra.mxu0 0.0
      %3067 = vmatpush.msra.mxu0 0.0
      %3068 = vmatpush.msra.mxu0 0.0
      %3069 = vmatpush.msra.mxu0 0.0
      %3070 = vmatpush.msra.mxu0 %v652
      %3071 = vmatmul.f32.gmra.mxu0 %v3050
      %v3072 = vpop.f32.mrf.mxu0
      %v3073 = vadd.f32 0.0, %v3072
      %3074 = vmatmul.f32.gmra.mxu0 %v3053
      %v3075 = vpop.f32.mrf.mxu0
      %v3076 = vadd.f32 0.0, %v3075
      %3077 = vdwg.mxu0
      %3078 = vst.msk [vmem:[#allocation2 + $0x10] sm:$0xff] %vm640, %v3073
      %3079 = vst.msk [vmem:[#allocation2 + $0x18] sm:$0xff] %vm640, %v3076
      %v3080 = vld [vmem:[#allocation2 + $0x10] sm:$0xff]
      %v3081 = vld [vmem:[#allocation2 + $0x18] sm:$0xff]
      %v3083 = vsel %vm640, %v3080, 0
      %v3086 = vsel %vm640, %v3081, 0
      %3088 = vmatpush.msra.mxu0 0.0
      %3089 = vmatpush.msra.mxu0 0.0
      %3090 = vmatpush.msra.mxu0 0.0
      %3091 = vmatpush.msra.mxu0 0.0
      %3092 = vmatpush.msra.mxu0 0.0
      %3093 = vmatpush.msra.mxu0 0.0
      %3094 = vmatpush.msra.mxu0 0.0
      %3095 = vmatpush.msra.mxu0 0.0
      %3096 = vmatpush.msra.mxu0 0.0
      %3097 = vmatpush.msra.mxu0 0.0
      %3098 = vmatpush.msra.mxu0 0.0
      %3099 = vmatpush.msra.mxu0 0.0
      %3100 = vmatpush.msra.mxu0 0.0
      %3101 = vmatpush.msra.mxu0 0.0
      %3102 = vmatpush.msra.mxu0 0.0
      %3103 = vmatpush.msra.mxu0 %v652
      %3104 = vmatmul.f32.gmra.mxu0 %v3083
      %v3105 = vpop.f32.mrf.mxu0
      %v3106 = vadd.f32 0.0, %v3105
      %3107 = vmatmul.f32.gmra.mxu0 %v3086
      %v3108 = vpop.f32.mrf.mxu0
      %v3109 = vadd.f32 0.0, %v3108
      %3110 = vdwg.mxu0
      %3111 = vst.msk [vmem:[#allocation2 + $0x20] sm:$0xff] %vm640, %v3106
      %3112 = vst.msk [vmem:[#allocation2 + $0x28] sm:$0xff] %vm640, %v3109
      %v3113 = vld [vmem:[#allocation2] sm:$0xff]
      %v3114 = vld [vmem:[#allocation2 + $0x8] sm:$0xff]
      %v3115 = vld [vmem:[#allocation2 + $0x10] sm:$0xff]
      %v3116 = vld [vmem:[#allocation2 + $0x18] sm:$0xff]
      %v3117 = vld [vmem:[#allocation2 + $0x20] sm:$0xff]
      %v3118 = vld [vmem:[#allocation2 + $0x28] sm:$0xff]
      %v3119 = vld [vmem:[%s14] sm:$0xff]
      %v3120 = vld [vmem:[%s14 + $0x8] sm:$0xff]
      %v3121 = vld [vmem:[%s15] sm:$0xff]
      %v3122 = vld [vmem:[%s15 + $0x8] sm:$0xff]
      %3124 = vset.pattern.permute.xlu0 0
      %3125 = vperm.xlu0 %3124, %v3121
      %v3126 = vpop.permute.xlu0 %3125
      %3129 = vset.pattern.permute.xlu0 0
      %3130 = vperm.xlu0 %3129, %v3122
      %v3131 = vpop.permute.xlu0 %3130
      %v3134 = vsel %vm1801, %v3119, 0
      %v3137 = vsel %vm1801, %v3120, 0
      %3139 = vmatpush.msra.mxu0 0.0
      %3140 = vmatpush.msra.mxu0 0.0
      %3141 = vmatpush.msra.mxu0 0.0
      %3142 = vmatpush.msra.mxu0 0.0
      %3143 = vmatpush.msra.mxu0 0.0
      %3144 = vmatpush.msra.mxu0 0.0
      %3145 = vmatpush.msra.mxu0 0.0
      %3146 = vmatpush.msra.mxu0 0.0
      %3147 = vmatpush.msra.mxu0 0.0
      %3148 = vmatpush.msra.mxu0 0.0
      %3149 = vmatpush.msra.mxu0 %v3118
      %3150 = vmatpush.msra.mxu0 %v3117
      %3151 = vmatpush.msra.mxu0 %v3116
      %3152 = vmatpush.msra.mxu0 %v3115
      %3153 = vmatpush.msra.mxu0 %v3114
      %3154 = vmatpush.msra.mxu0 %v3113
      %3155 = vmatmul.f32.gmra.mxu0 %v3134
      %v3156 = vpop.f32.mrf.mxu0
      %v3157 = vadd.f32 %v3126, %v3156
      %3158 = vmatmul.f32.gmra.mxu0 %v3137
      %v3159 = vpop.f32.mrf.mxu0
      %v3160 = vadd.f32 %v3131, %v3159
      %3161 = vdwg.mxu0
      %v3162 = vxor.u32 %v3157, 2147483648
      %v3163 = vxor.u32 %v3160, 2147483648
      %v3164 = vmul.f32 %v3162, 1.442695
      %v3165 = vpow.pop %v3164
      %v3166 = vmul.f32 %v3163, 1.442695
      %v3167 = vpow.pop %v3166
      %v3168 = vadd.f32 %v3165, 1.0
      %v3169 = vadd.f32 %v3167, 1.0
      %v3170 = vrcp.pop %v3168
      %v3171 = vmul.f32 %v3168, %v3170
      %v3172 = vsub.f32 1.0, %v3171
      %v3173 = vmul.f32 %v3170, %v3172
      %v3174 = vadd.f32 %v3170, %v3173
      %vm3175 = vweird.f32 %v3168
      %vm3176 = vweird.f32 %v3170
      %vm3177 = vmor %vm3175, %vm3176
      %v3178 = vsel %vm3177, %v3170, %v3174
      %v3179 = vand.u32 2147483647, %v3168
      %vm3180 = vcmp.eq.f32.partialorder %v3179, 8.507059e+37
      %v3181 = vand.u32 %v3168, 2147483648
      %v3182 = vor.u32 1.1754944e-38, %v3181
      %v3183 = vsel %vm3180, %v3182, %v3178
      %v3184 = vmul.f32 1.0, %v3183
      %v3185 = vrcp.pop %v3169
      %v3186 = vmul.f32 %v3169, %v3185
      %v3187 = vsub.f32 1.0, %v3186
      %v3188 = vmul.f32 %v3185, %v3187
      %v3189 = vadd.f32 %v3185, %v3188
      %vm3190 = vweird.f32 %v3169
      %vm3191 = vweird.f32 %v3185
      %vm3192 = vmor %vm3190, %vm3191
      %v3193 = vsel %vm3192, %v3185, %v3189
      %v3194 = vand.u32 2147483647, %v3169
      %vm3195 = vcmp.eq.f32.partialorder %v3194, 8.507059e+37
      %v3196 = vand.u32 %v3169, 2147483648
      %v3197 = vor.u32 1.1754944e-38, %v3196
      %v3198 = vsel %vm3195, %v3197, %v3193
      %v3199 = vmul.f32 1.0, %v3198
      %v3200 = vmul.f32 %v3184, %v2773
      %3201 = vst.msk [vmem:[#allocation2] sm:$0xff] %vm640, %v3044
      %3202 = vst.msk [vmem:[#allocation2 + $0x8] sm:$0xff] %vm640, %v3200
      %v3203 = vld [vmem:[#allocation2] sm:$0xff]
      %v3204 = vld [vmem:[#allocation2 + $0x8] sm:$0xff]
      %v3206 = vsel %vm640, %v3203, 0
      %v3209 = vsel %vm640, %v3204, 0
      %3211 = vmatpush.msra.mxu0 0.0
      %3212 = vmatpush.msra.mxu0 0.0
      %3213 = vmatpush.msra.mxu0 0.0
      %3214 = vmatpush.msra.mxu0 0.0
      %3215 = vmatpush.msra.mxu0 0.0
      %3216 = vmatpush.msra.mxu0 0.0
      %3217 = vmatpush.msra.mxu0 0.0
      %3218 = vmatpush.msra.mxu0 0.0
      %3219 = vmatpush.msra.mxu0 0.0
      %3220 = vmatpush.msra.mxu0 0.0
      %3221 = vmatpush.msra.mxu0 0.0
      %3222 = vmatpush.msra.mxu0 0.0
      %3223 = vmatpush.msra.mxu0 0.0
      %3224 = vmatpush.msra.mxu0 0.0
      %3225 = vmatpush.msra.mxu0 0.0
      %3226 = vmatpush.msra.mxu0 %v652
      %3227 = vmatmul.f32.gmra.mxu0 %v3206
      %v3228 = vpop.f32.mrf.mxu0
      %v3229 = vadd.f32 0.0, %v3228
      %3230 = vmatmul.f32.gmra.mxu0 %v3209
      %v3231 = vpop.f32.mrf.mxu0
      %v3232 = vadd.f32 0.0, %v3231
      %3233 = vdwg.mxu0
      %3234 = vst.msk [vmem:[#allocation2 + $0x10] sm:$0xff] %vm640, %v3229
      %3235 = vst.msk [vmem:[#allocation2 + $0x18] sm:$0xff] %vm640, %v3232
      %v3236 = vld [vmem:[#allocation2 + $0x10] sm:$0xff]
      %v3237 = vld [vmem:[#allocation2 + $0x18] sm:$0xff]
      %v3239 = vsel %vm640, %v3236, 0
      %v3242 = vsel %vm640, %v3237, 0
      %3244 = vmatpush.msra.mxu0 0.0
      %3245 = vmatpush.msra.mxu0 0.0
      %3246 = vmatpush.msra.mxu0 0.0
      %3247 = vmatpush.msra.mxu0 0.0
      %3248 = vmatpush.msra.mxu0 0.0
      %3249 = vmatpush.msra.mxu0 0.0
      %3250 = vmatpush.msra.mxu0 0.0
      %3251 = vmatpush.msra.mxu0 0.0
      %3252 = vmatpush.msra.mxu0 0.0
      %3253 = vmatpush.msra.mxu0 0.0
      %3254 = vmatpush.msra.mxu0 0.0
      %3255 = vmatpush.msra.mxu0 0.0
      %3256 = vmatpush.msra.mxu0 0.0
      %3257 = vmatpush.msra.mxu0 0.0
      %3258 = vmatpush.msra.mxu0 0.0
      %3259 = vmatpush.msra.mxu0 %v652
      %3260 = vmatmul.f32.gmra.mxu0 %v3239
      %v3261 = vpop.f32.mrf.mxu0
      %v3262 = vadd.f32 0.0, %v3261
      %3263 = vmatmul.f32.gmra.mxu0 %v3242
      %v3264 = vpop.f32.mrf.mxu0
      %v3265 = vadd.f32 0.0, %v3264
      %3266 = vdwg.mxu0
      %3267 = vst.msk [vmem:[#allocation2 + $0x20] sm:$0xff] %vm640, %v3262
      %3268 = vst.msk [vmem:[#allocation2 + $0x28] sm:$0xff] %vm640, %v3265
      %v3269 = vld [vmem:[#allocation2] sm:$0xff]
      %v3270 = vld [vmem:[#allocation2 + $0x8] sm:$0xff]
      %v3271 = vld [vmem:[#allocation2 + $0x10] sm:$0xff]
      %v3272 = vld [vmem:[#allocation2 + $0x18] sm:$0xff]
      %v3273 = vld [vmem:[#allocation2 + $0x20] sm:$0xff]
      %v3274 = vld [vmem:[#allocation2 + $0x28] sm:$0xff]
      %v3275 = vld [vmem:[%s16] sm:$0xff]
      %v3276 = vld [vmem:[%s17] sm:$0xff]
      %3278 = vset.pattern.permute.xlu0 0
      %3279 = vperm.xlu0 %3278, %v3276
      %v3280 = vpop.permute.xlu0 %3279
      %v3283 = vsel %vm1801, %v3275, 0
      %3285 = vmatpush.msra.mxu0 0.0
      %3286 = vmatpush.msra.mxu0 0.0
      %3287 = vmatpush.msra.mxu0 0.0
      %3288 = vmatpush.msra.mxu0 0.0
      %3289 = vmatpush.msra.mxu0 0.0
      %3290 = vmatpush.msra.mxu0 0.0
      %3291 = vmatpush.msra.mxu0 0.0
      %3292 = vmatpush.msra.mxu0 0.0
      %3293 = vmatpush.msra.mxu0 0.0
      %3294 = vmatpush.msra.mxu0 0.0
      %3295 = vmatpush.msra.mxu0 %v3274
      %3296 = vmatpush.msra.mxu0 %v3273
      %3297 = vmatpush.msra.mxu0 %v3272
      %3298 = vmatpush.msra.mxu0 %v3271
      %3299 = vmatpush.msra.mxu0 %v3270
      %3300 = vmatpush.msra.mxu0 %v3269
      %3301 = vmatmul.f32.gmra.mxu0 %v3283
      %v3302 = vpop.f32.mrf.mxu0
      %v3303 = vadd.f32 %v3280, %v3302
      %3304 = vdwg.mxu0
      %v3305 = vtanh.pop %v3303
      %v3306 = vmul.f32 %v3199, %v2773
      %v3307 = vsub.f32 1.0, %v3199
      %v3308 = vmul.f32 %v3307, %v3305
      %v3309 = vadd.f32 %v3306, %v3308
      %v3310 = vld [vmem:[%s18] sm:$0x1]
      %v3311 = vld [vmem:[#allocation3] sm:$0x1]
      %3313 = vset.pattern.permute.xlu0 0
      %3314 = vperm.xlu0 %3313, %v3311
      %v3315 = vpop.permute.xlu0 %3314
      %v3317 = vperm.slane %v3315, 0
      %vm3318 = vcmask 64512
      %v3320 = vsel %vm3318, %v3310, 0
      %3322 = vmatpush.msra.mxu0 0.0
      %3323 = vmatpush.msra.mxu0 0.0
      %3324 = vmatpush.msra.mxu0 0.0
      %3325 = vmatpush.msra.mxu0 0.0
      %3326 = vmatpush.msra.mxu0 0.0
      %3327 = vmatpush.msra.mxu0 0.0
      %3328 = vmatpush.msra.mxu0 0.0
      %3329 = vmatpush.msra.mxu0 0.0
      %3330 = vmatpush.msra.mxu0 0.0
      %3331 = vmatpush.msra.mxu0 0.0
      %3332 = vmatpush.msra.mxu0 0.0
      %3333 = vmatpush.msra.mxu0 0.0
      %3334 = vmatpush.msra.mxu0 0.0
      %3335 = vmatpush.msra.mxu0 0.0
      %3336 = vmatpush.msra.mxu0 0.0
      %3337 = vmatpush.msra.mxu0 %v3309
      %3338 = vmatmul.f32.gmra.mxu0 %v3320
      %v3339 = vpop.f32.mrf.mxu0
      %v3340 = vadd.f32 %v3317, %v3339
      %3341 = vdwg.mxu0
      %3342 = vst.msk [vmem:[%s629] sm:$0x1] %vm2775, %v3340
      %3343 = vst.msk [vmem:[#allocation2] sm:$0x1] %vm2775, %v3340
      %3344 = vst.msk [vmem:[#allocation2 + $0x1] sm:$0xff] %vm640, %v3044
      %v3345 = vld [vmem:[#allocation2] sm:$0xff]
      %v3346 = vld [vmem:[#allocation2 + $0x8] sm:$0x1]
      %v3348 = vsel %vm640, %v3345, 0
      %v3351 = vsel %vm640, %v3346, 0
      %3353 = vmatpush.msra.mxu0 0.0
      %3354 = vmatpush.msra.mxu0 0.0
      %3355 = vmatpush.msra.mxu0 0.0
      %3356 = vmatpush.msra.mxu0 0.0
      %3357 = vmatpush.msra.mxu0 0.0
      %3358 = vmatpush.msra.mxu0 0.0
      %3359 = vmatpush.msra.mxu0 0.0
      %3360 = vmatpush.msra.mxu0 0.0
      %3361 = vmatpush.msra.mxu0 0.0
      %3362 = vmatpush.msra.mxu0 0.0
      %3363 = vmatpush.msra.mxu0 0.0
      %3364 = vmatpush.msra.mxu0 0.0
      %3365 = vmatpush.msra.mxu0 0.0
      %3366 = vmatpush.msra.mxu0 0.0
      %3367 = vmatpush.msra.mxu0 0.0
      %3368 = vmatpush.msra.mxu0 %v652
      %3369 = vmatmul.f32.gmra.mxu0 %v3348
      %v3370 = vpop.f32.mrf.mxu0
      %v3371 = vadd.f32 0.0, %v3370
      %3372 = vmatmul.f32.gmra.mxu0 %v3351
      %v3373 = vpop.f32.mrf.mxu0
      %v3374 = vadd.f32 0.0, %v3373
      %3375 = vdwg.mxu0
      %3376 = vst.msk [vmem:[#allocation2 + $0x9] sm:$0xff] %vm640, %v3371
      %3377 = vst.msk [vmem:[#allocation2 + $0x11] sm:$0x1] %vm2775, %v3374
      %v3378 = vld [vmem:[#allocation2 + $0x9] sm:$0xff]
      %v3379 = vld [vmem:[#allocation2 + $0x11] sm:$0x1]
      %v3381 = vsel %vm640, %v3378, 0
      %v3384 = vsel %vm640, %v3379, 0
      %3386 = vmatpush.msra.mxu0 0.0
      %3387 = vmatpush.msra.mxu0 0.0
      %3388 = vmatpush.msra.mxu0 0.0
      %3389 = vmatpush.msra.mxu0 0.0
      %3390 = vmatpush.msra.mxu0 0.0
      %3391 = vmatpush.msra.mxu0 0.0
      %3392 = vmatpush.msra.mxu0 0.0
      %3393 = vmatpush.msra.mxu0 0.0
      %3394 = vmatpush.msra.mxu0 0.0
      %3395 = vmatpush.msra.mxu0 0.0
      %3396 = vmatpush.msra.mxu0 0.0
      %3397 = vmatpush.msra.mxu0 0.0
      %3398 = vmatpush.msra.mxu0 0.0
      %3399 = vmatpush.msra.mxu0 0.0
      %3400 = vmatpush.msra.mxu0 0.0
      %3401 = vmatpush.msra.mxu0 %v652
      %3402 = vmatmul.f32.gmra.mxu0 %v3381
      %v3403 = vpop.f32.mrf.mxu0
      %v3404 = vadd.f32 0.0, %v3403
      %3405 = vmatmul.f32.gmra.mxu0 %v3384
      %v3406 = vpop.f32.mrf.mxu0
      %v3407 = vadd.f32 0.0, %v3406
      %3408 = vdwg.mxu0
      %3409 = vst.msk [vmem:[#allocation2 + $0x12] sm:$0xff] %vm640, %v3404
      %3410 = vst.msk [vmem:[#allocation2 + $0x1a] sm:$0x1] %vm2775, %v3407
      %v3411 = vld [vmem:[#allocation2] sm:$0xff]
      %v3412 = vld [vmem:[#allocation2 + $0x8] sm:$0xff]
      %v3413 = vld [vmem:[#allocation2 + $0x10] sm:$0xff]
      %v3414 = vld [vmem:[#allocation2 + $0x18] sm:$0x7]
      %v3415 = vld [vmem:[%s10] sm:$0xff]
      %v3416 = vld [vmem:[%s10 + $0x8] sm:$0xff]
      %v3417 = vld [vmem:[%s11] sm:$0xff]
      %v3418 = vld [vmem:[%s11 + $0x8] sm:$0xff]
      %3420 = vset.pattern.permute.xlu0 0
      %3421 = vperm.xlu0 %3420, %v3417
      %v3422 = vpop.permute.xlu0 %3421
      %3425 = vset.pattern.permute.xlu0 0
      %3426 = vperm.xlu0 %3425, %v3418
      %v3427 = vpop.permute.xlu0 %3426
      %v3430 = vsel %vm2862, %v3415, 0
      %v3433 = vsel %vm2862, %v3416, 0
      %v3436 = vsel %vm2869, %v3414, 0
      %3438 = vmatpush.msra.mxu0 0.0
      %3439 = vmatpush.msra.mxu0 0.0
      %3440 = vmatpush.msra.mxu0 0.0
      %3441 = vmatpush.msra.mxu0 0.0
      %3442 = vmatpush.msra.mxu0 0.0
      %3443 = vmatpush.msra.mxu0 0.0
      %3444 = vmatpush.msra.mxu0 0.0
      %3445 = vmatpush.msra.mxu0 0.0
      %3446 = vmatpush.msra.mxu0 0.0
      %3447 = vmatpush.msra.mxu0 0.0
      %3448 = vmatpush.msra.mxu0 0.0
      %3449 = vmatpush.msra.mxu0 0.0
      %3450 = vmatpush.msra.mxu0 %v3436
      %3451 = vmatpush.msra.mxu0 %v3413
      %3452 = vmatpush.msra.mxu0 %v3412
      %3453 = vmatpush.msra.mxu0 %v3411
      %3454 = vmatmul.f32.gmra.mxu0 %v3430
      %v3455 = vpop.f32.mrf.mxu0
      %v3456 = vadd.f32 %v3422, %v3455
      %3457 = vmatmul.f32.gmra.mxu0 %v3433
      %v3458 = vpop.f32.mrf.mxu0
      %v3459 = vadd.f32 %v3427, %v3458
      %3460 = vdwg.mxu0
      %v3461 = vxor.u32 %v3456, 2147483648
      %v3462 = vxor.u32 %v3459, 2147483648
      %v3463 = vmul.f32 %v3461, 1.442695
      %v3464 = vpow.pop %v3463
      %v3465 = vmul.f32 %v3462, 1.442695
      %v3466 = vpow.pop %v3465
      %v3467 = vadd.f32 %v3464, 1.0
      %v3468 = vadd.f32 %v3466, 1.0
      %v3469 = vrcp.pop %v3467
      %v3470 = vmul.f32 %v3467, %v3469
      %v3471 = vsub.f32 1.0, %v3470
      %v3472 = vmul.f32 %v3469, %v3471
      %v3473 = vadd.f32 %v3469, %v3472
      %vm3474 = vweird.f32 %v3467
      %vm3475 = vweird.f32 %v3469
      %vm3476 = vmor %vm3474, %vm3475
      %v3477 = vsel %vm3476, %v3469, %v3473
      %v3478 = vand.u32 2147483647, %v3467
      %vm3479 = vcmp.eq.f32.partialorder %v3478, 8.507059e+37
      %v3480 = vand.u32 %v3467, 2147483648
      %v3481 = vor.u32 1.1754944e-38, %v3480
      %v3482 = vsel %vm3479, %v3481, %v3477
      %v3483 = vmul.f32 1.0, %v3482
      %v3484 = vrcp.pop %v3468
      %v3485 = vmul.f32 %v3468, %v3484
      %v3486 = vsub.f32 1.0, %v3485
      %v3487 = vmul.f32 %v3484, %v3486
      %v3488 = vadd.f32 %v3484, %v3487
      %vm3489 = vweird.f32 %v3468
      %vm3490 = vweird.f32 %v3484
      %vm3491 = vmor %vm3489, %vm3490
      %v3492 = vsel %vm3491, %v3484, %v3488
      %v3493 = vand.u32 2147483647, %v3468
      %vm3494 = vcmp.eq.f32.partialorder %v3493, 8.507059e+37
      %v3495 = vand.u32 %v3468, 2147483648
      %v3496 = vor.u32 1.1754944e-38, %v3495
      %v3497 = vsel %vm3494, %v3496, %v3492
      %v3498 = vmul.f32 1.0, %v3497
      %v3499 = vmul.f32 %v3483, %v3044
      %3500 = vst.msk [vmem:[#allocation2] sm:$0x1] %vm2775, %v3340
      %3501 = vst.msk [vmem:[#allocation2 + $0x1] sm:$0xff] %vm640, %v3499
      %v3502 = vld [vmem:[#allocation2] sm:$0xff]
      %v3503 = vld [vmem:[#allocation2 + $0x8] sm:$0x1]
      %v3505 = vsel %vm640, %v3502, 0
      %v3508 = vsel %vm640, %v3503, 0
      %3510 = vmatpush.msra.mxu0 0.0
      %3511 = vmatpush.msra.mxu0 0.0
      %3512 = vmatpush.msra.mxu0 0.0
      %3513 = vmatpush.msra.mxu0 0.0
      %3514 = vmatpush.msra.mxu0 0.0
      %3515 = vmatpush.msra.mxu0 0.0
      %3516 = vmatpush.msra.mxu0 0.0
      %3517 = vmatpush.msra.mxu0 0.0
      %3518 = vmatpush.msra.mxu0 0.0
      %3519 = vmatpush.msra.mxu0 0.0
      %3520 = vmatpush.msra.mxu0 0.0
      %3521 = vmatpush.msra.mxu0 0.0
      %3522 = vmatpush.msra.mxu0 0.0
      %3523 = vmatpush.msra.mxu0 0.0
      %3524 = vmatpush.msra.mxu0 0.0
      %3525 = vmatpush.msra.mxu0 %v652
      %3526 = vmatmul.f32.gmra.mxu0 %v3505
      %v3527 = vpop.f32.mrf.mxu0
      %v3528 = vadd.f32 0.0, %v3527
      %3529 = vmatmul.f32.gmra.mxu0 %v3508
      %v3530 = vpop.f32.mrf.mxu0
      %v3531 = vadd.f32 0.0, %v3530
      %3532 = vdwg.mxu0
      %3533 = vst.msk [vmem:[#allocation2 + $0x9] sm:$0xff] %vm640, %v3528
      %3534 = vst.msk [vmem:[#allocation2 + $0x11] sm:$0x1] %vm2775, %v3531
      %v3535 = vld [vmem:[#allocation2 + $0x9] sm:$0xff]
      %v3536 = vld [vmem:[#allocation2 + $0x11] sm:$0x1]
      %v3538 = vsel %vm640, %v3535, 0
      %v3541 = vsel %vm640, %v3536, 0
      %3543 = vmatpush.msra.mxu0 0.0
      %3544 = vmatpush.msra.mxu0 0.0
      %3545 = vmatpush.msra.mxu0 0.0
      %3546 = vmatpush.msra.mxu0 0.0
      %3547 = vmatpush.msra.mxu0 0.0
      %3548 = vmatpush.msra.mxu0 0.0
      %3549 = vmatpush.msra.mxu0 0.0
      %3550 = vmatpush.msra.mxu0 0.0
      %3551 = vmatpush.msra.mxu0 0.0
      %3552 = vmatpush.msra.mxu0 0.0
      %3553 = vmatpush.msra.mxu0 0.0
      %3554 = vmatpush.msra.mxu0 0.0
      %3555 = vmatpush.msra.mxu0 0.0
      %3556 = vmatpush.msra.mxu0 0.0
      %3557 = vmatpush.msra.mxu0 0.0
      %3558 = vmatpush.msra.mxu0 %v652
      %3559 = vmatmul.f32.gmra.mxu0 %v3538
      %v3560 = vpop.f32.mrf.mxu0
      %v3561 = vadd.f32 0.0, %v3560
      %3562 = vmatmul.f32.gmra.mxu0 %v3541
      %v3563 = vpop.f32.mrf.mxu0
      %v3564 = vadd.f32 0.0, %v3563
      %3565 = vdwg.mxu0
      %3566 = vst.msk [vmem:[#allocation2 + $0x12] sm:$0xff] %vm640, %v3561
      %3567 = vst.msk [vmem:[#allocation2 + $0x1a] sm:$0x1] %vm2775, %v3564
      %v3568 = vld [vmem:[#allocation2] sm:$0xff]
      %v3569 = vld [vmem:[#allocation2 + $0x8] sm:$0xff]
      %v3570 = vld [vmem:[#allocation2 + $0x10] sm:$0xff]
      %v3571 = vld [vmem:[#allocation2 + $0x18] sm:$0x7]
      %v3572 = vld [vmem:[%s12] sm:$0xff]
      %v3573 = vld [vmem:[%s13] sm:$0xff]
      %3575 = vset.pattern.permute.xlu0 0
      %3576 = vperm.xlu0 %3575, %v3573
      %v3577 = vpop.permute.xlu0 %3576
      %v3580 = vsel %vm2862, %v3572, 0
      %v3583 = vsel %vm2869, %v3571, 0
      %3585 = vmatpush.msra.mxu0 0.0
      %3586 = vmatpush.msra.mxu0 0.0
      %3587 = vmatpush.msra.mxu0 0.0
      %3588 = vmatpush.msra.mxu0 0.0
      %3589 = vmatpush.msra.mxu0 0.0
      %3590 = vmatpush.msra.mxu0 0.0
      %3591 = vmatpush.msra.mxu0 0.0
      %3592 = vmatpush.msra.mxu0 0.0
      %3593 = vmatpush.msra.mxu0 0.0
      %3594 = vmatpush.msra.mxu0 0.0
      %3595 = vmatpush.msra.mxu0 0.0
      %3596 = vmatpush.msra.mxu0 0.0
      %3597 = vmatpush.msra.mxu0 %v3583
      %3598 = vmatpush.msra.mxu0 %v3570
      %3599 = vmatpush.msra.mxu0 %v3569
      %3600 = vmatpush.msra.mxu0 %v3568
      %3601 = vmatmul.f32.gmra.mxu0 %v3580
      %v3602 = vpop.f32.mrf.mxu0
      %v3603 = vadd.f32 %v3577, %v3602
      %3604 = vdwg.mxu0
      %v3605 = vtanh.pop %v3603
      %v3606 = vmul.f32 %v3498, %v3044
      %v3607 = vsub.f32 1.0, %v3498
      %v3608 = vmul.f32 %v3607, %v3605
      %v3609 = vadd.f32 %v3606, %v3608
      %3610 = vst.msk [vmem:[#allocation2] sm:$0xff] %vm640, %v3609
      %3611 = vst.msk [vmem:[#allocation2 + $0x8] sm:$0xff] %vm640, %v3309
      %v3612 = vld [vmem:[#allocation2] sm:$0xff]
      %v3613 = vld [vmem:[#allocation2 + $0x8] sm:$0xff]
      %v3615 = vsel %vm640, %v3612, 0
      %v3618 = vsel %vm640, %v3613, 0
      %3620 = vmatpush.msra.mxu0 0.0
      %3621 = vmatpush.msra.mxu0 0.0
      %3622 = vmatpush.msra.mxu0 0.0
      %3623 = vmatpush.msra.mxu0 0.0
      %3624 = vmatpush.msra.mxu0 0.0
      %3625 = vmatpush.msra.mxu0 0.0
      %3626 = vmatpush.msra.mxu0 0.0
      %3627 = vmatpush.msra.mxu0 0.0
      %3628 = vmatpush.msra.mxu0 0.0
      %3629 = vmatpush.msra.mxu0 0.0
      %3630 = vmatpush.msra.mxu0 0.0
      %3631 = vmatpush.msra.mxu0 0.0
      %3632 = vmatpush.msra.mxu0 0.0
      %3633 = vmatpush.msra.mxu0 0.0
      %3634 = vmatpush.msra.mxu0 0.0
      %3635 = vmatpush.msra.mxu0 %v652
      %3636 = vmatmul.f32.gmra.mxu0 %v3615
      %v3637 = vpop.f32.mrf.mxu0
      %v3638 = vadd.f32 0.0, %v3637
      %3639 = vmatmul.f32.gmra.mxu0 %v3618
      %v3640 = vpop.f32.mrf.mxu0
      %v3641 = vadd.f32 0.0, %v3640
      %3642 = vdwg.mxu0
      %3643 = vst.msk [vmem:[#allocation2 + $0x10] sm:$0xff] %vm640, %v3638
      %3644 = vst.msk [vmem:[#allocation2 + $0x18] sm:$0xff] %vm640, %v3641
      %v3645 = vld [vmem:[#allocation2 + $0x10] sm:$0xff]
      %v3646 = vld [vmem:[#allocation2 + $0x18] sm:$0xff]
      %v3648 = vsel %vm640, %v3645, 0
      %v3651 = vsel %vm640, %v3646, 0
      %3653 = vmatpush.msra.mxu0 0.0
      %3654 = vmatpush.msra.mxu0 0.0
      %3655 = vmatpush.msra.mxu0 0.0
      %3656 = vmatpush.msra.mxu0 0.0
      %3657 = vmatpush.msra.mxu0 0.0
      %3658 = vmatpush.msra.mxu0 0.0
      %3659 = vmatpush.msra.mxu0 0.0
      %3660 = vmatpush.msra.mxu0 0.0
      %3661 = vmatpush.msra.mxu0 0.0
      %3662 = vmatpush.msra.mxu0 0.0
      %3663 = vmatpush.msra.mxu0 0.0
      %3664 = vmatpush.msra.mxu0 0.0
      %3665 = vmatpush.msra.mxu0 0.0
      %3666 = vmatpush.msra.mxu0 0.0
      %3667 = vmatpush.msra.mxu0 0.0
      %3668 = vmatpush.msra.mxu0 %v652
      %3669 = vmatmul.f32.gmra.mxu0 %v3648
      %v3670 = vpop.f32.mrf.mxu0
      %v3671 = vadd.f32 0.0, %v3670
      %3672 = vmatmul.f32.gmra.mxu0 %v3651
      %v3673 = vpop.f32.mrf.mxu0
      %v3674 = vadd.f32 0.0, %v3673
      %3675 = vdwg.mxu0
      %3676 = vst.msk [vmem:[#allocation2 + $0x20] sm:$0xff] %vm640, %v3671
      %3677 = vst.msk [vmem:[#allocation2 + $0x28] sm:$0xff] %vm640, %v3674
      %v3678 = vld [vmem:[#allocation2] sm:$0xff]
      %v3679 = vld [vmem:[#allocation2 + $0x8] sm:$0xff]
      %v3680 = vld [vmem:[#allocation2 + $0x10] sm:$0xff]
      %v3681 = vld [vmem:[#allocation2 + $0x18] sm:$0xff]
      %v3682 = vld [vmem:[#allocation2 + $0x20] sm:$0xff]
      %v3683 = vld [vmem:[#allocation2 + $0x28] sm:$0xff]
      %v3684 = vld [vmem:[%s14] sm:$0xff]
      %v3685 = vld [vmem:[%s14 + $0x8] sm:$0xff]
      %v3686 = vld [vmem:[%s15] sm:$0xff]
      %v3687 = vld [vmem:[%s15 + $0x8] sm:$0xff]
      %3689 = vset.pattern.permute.xlu0 0
      %3690 = vperm.xlu0 %3689, %v3686
      %v3691 = vpop.permute.xlu0 %3690
      %3694 = vset.pattern.permute.xlu0 0
      %3695 = vperm.xlu0 %3694, %v3687
      %v3696 = vpop.permute.xlu0 %3695
      %v3699 = vsel %vm1801, %v3684, 0
      %v3702 = vsel %vm1801, %v3685, 0
      %3704 = vmatpush.msra.mxu0 0.0
      %3705 = vmatpush.msra.mxu0 0.0
      %3706 = vmatpush.msra.mxu0 0.0
      %3707 = vmatpush.msra.mxu0 0.0
      %3708 = vmatpush.msra.mxu0 0.0
      %3709 = vmatpush.msra.mxu0 0.0
      %3710 = vmatpush.msra.mxu0 0.0
      %3711 = vmatpush.msra.mxu0 0.0
      %3712 = vmatpush.msra.mxu0 0.0
      %3713 = vmatpush.msra.mxu0 0.0
      %3714 = vmatpush.msra.mxu0 %v3683
      %3715 = vmatpush.msra.mxu0 %v3682
      %3716 = vmatpush.msra.mxu0 %v3681
      %3717 = vmatpush.msra.mxu0 %v3680
      %3718 = vmatpush.msra.mxu0 %v3679
      %3719 = vmatpush.msra.mxu0 %v3678
      %3720 = vmatmul.f32.gmra.mxu0 %v3699
      %v3721 = vpop.f32.mrf.mxu0
      %v3722 = vadd.f32 %v3691, %v3721
      %3723 = vmatmul.f32.gmra.mxu0 %v3702
      %v3724 = vpop.f32.mrf.mxu0
      %v3725 = vadd.f32 %v3696, %v3724
      %3726 = vdwg.mxu0
      %v3727 = vxor.u32 %v3722, 2147483648
      %v3728 = vxor.u32 %v3725, 2147483648
      %v3729 = vmul.f32 %v3727, 1.442695
      %v3730 = vpow.pop %v3729
      %v3731 = vmul.f32 %v3728, 1.442695
      %v3732 = vpow.pop %v3731
      %v3733 = vadd.f32 %v3730, 1.0
      %v3734 = vadd.f32 %v3732, 1.0
      %v3735 = vrcp.pop %v3733
      %v3736 = vmul.f32 %v3733, %v3735
      %v3737 = vsub.f32 1.0, %v3736
      %v3738 = vmul.f32 %v3735, %v3737
      %v3739 = vadd.f32 %v3735, %v3738
      %vm3740 = vweird.f32 %v3733
      %vm3741 = vweird.f32 %v3735
      %vm3742 = vmor %vm3740, %vm3741
      %v3743 = vsel %vm3742, %v3735, %v3739
      %v3744 = vand.u32 2147483647, %v3733
      %vm3745 = vcmp.eq.f32.partialorder %v3744, 8.507059e+37
      %v3746 = vand.u32 %v3733, 2147483648
      %v3747 = vor.u32 1.1754944e-38, %v3746
      %v3748 = vsel %vm3745, %v3747, %v3743
      %v3749 = vmul.f32 1.0, %v3748
      %v3750 = vrcp.pop %v3734
      %v3751 = vmul.f32 %v3734, %v3750
      %v3752 = vsub.f32 1.0, %v3751
      %v3753 = vmul.f32 %v3750, %v3752
      %v3754 = vadd.f32 %v3750, %v3753
      %vm3755 = vweird.f32 %v3734
      %vm3756 = vweird.f32 %v3750
      %vm3757 = vmor %vm3755, %vm3756
      %v3758 = vsel %vm3757, %v3750, %v3754
      %v3759 = vand.u32 2147483647, %v3734
      %vm3760 = vcmp.eq.f32.partialorder %v3759, 8.507059e+37
      %v3761 = vand.u32 %v3734, 2147483648
      %v3762 = vor.u32 1.1754944e-38, %v3761
      %v3763 = vsel %vm3760, %v3762, %v3758
      %v3764 = vmul.f32 1.0, %v3763
      %v3765 = vmul.f32 %v3749, %v3309
      %3766 = vst.msk [vmem:[#allocation2] sm:$0xff] %vm640, %v3609
      %3767 = vst.msk [vmem:[#allocation2 + $0x8] sm:$0xff] %vm640, %v3765
      %v3768 = vld [vmem:[#allocation2] sm:$0xff]
      %v3769 = vld [vmem:[#allocation2 + $0x8] sm:$0xff]
      %v3771 = vsel %vm640, %v3768, 0
      %v3774 = vsel %vm640, %v3769, 0
      %3776 = vmatpush.msra.mxu0 0.0
      %3777 = vmatpush.msra.mxu0 0.0
      %3778 = vmatpush.msra.mxu0 0.0
      %3779 = vmatpush.msra.mxu0 0.0
      %3780 = vmatpush.msra.mxu0 0.0
      %3781 = vmatpush.msra.mxu0 0.0
      %3782 = vmatpush.msra.mxu0 0.0
      %3783 = vmatpush.msra.mxu0 0.0
      %3784 = vmatpush.msra.mxu0 0.0
      %3785 = vmatpush.msra.mxu0 0.0
      %3786 = vmatpush.msra.mxu0 0.0
      %3787 = vmatpush.msra.mxu0 0.0
      %3788 = vmatpush.msra.mxu0 0.0
      %3789 = vmatpush.msra.mxu0 0.0
      %3790 = vmatpush.msra.mxu0 0.0
      %3791 = vmatpush.msra.mxu0 %v652
      %3792 = vmatmul.f32.gmra.mxu0 %v3771
      %v3793 = vpop.f32.mrf.mxu0
      %v3794 = vadd.f32 0.0, %v3793
      %3795 = vmatmul.f32.gmra.mxu0 %v3774
      %v3796 = vpop.f32.mrf.mxu0
      %v3797 = vadd.f32 0.0, %v3796
      %3798 = vdwg.mxu0
      %3799 = vst.msk [vmem:[#allocation2 + $0x10] sm:$0xff] %vm640, %v3794
      %3800 = vst.msk [vmem:[#allocation2 + $0x18] sm:$0xff] %vm640, %v3797
      %v3801 = vld [vmem:[#allocation2 + $0x10] sm:$0xff]
      %v3802 = vld [vmem:[#allocation2 + $0x18] sm:$0xff]
      %v3804 = vsel %vm640, %v3801, 0
      %v3807 = vsel %vm640, %v3802, 0
      %3809 = vmatpush.msra.mxu0 0.0
      %3810 = vmatpush.msra.mxu0 0.0
      %3811 = vmatpush.msra.mxu0 0.0
      %3812 = vmatpush.msra.mxu0 0.0
      %3813 = vmatpush.msra.mxu0 0.0
      %3814 = vmatpush.msra.mxu0 0.0
      %3815 = vmatpush.msra.mxu0 0.0
      %3816 = vmatpush.msra.mxu0 0.0
      %3817 = vmatpush.msra.mxu0 0.0
      %3818 = vmatpush.msra.mxu0 0.0
      %3819 = vmatpush.msra.mxu0 0.0
      %3820 = vmatpush.msra.mxu0 0.0
      %3821 = vmatpush.msra.mxu0 0.0
      %3822 = vmatpush.msra.mxu0 0.0
      %3823 = vmatpush.msra.mxu0 0.0
      %3824 = vmatpush.msra.mxu0 %v652
      %3825 = vmatmul.f32.gmra.mxu0 %v3804
      %v3826 = vpop.f32.mrf.mxu0
      %v3827 = vadd.f32 0.0, %v3826
      %3828 = vmatmul.f32.gmra.mxu0 %v3807
      %v3829 = vpop.f32.mrf.mxu0
      %v3830 = vadd.f32 0.0, %v3829
      %3831 = vdwg.mxu0
      %3832 = vst.msk [vmem:[#allocation2 + $0x20] sm:$0xff] %vm640, %v3827
      %3833 = vst.msk [vmem:[#allocation2 + $0x28] sm:$0xff] %vm640, %v3830
      %v3834 = vld [vmem:[#allocation2] sm:$0xff]
      %v3835 = vld [vmem:[#allocation2 + $0x8] sm:$0xff]
      %v3836 = vld [vmem:[#allocation2 + $0x10] sm:$0xff]
      %v3837 = vld [vmem:[#allocation2 + $0x18] sm:$0xff]
      %v3838 = vld [vmem:[#allocation2 + $0x20] sm:$0xff]
      %v3839 = vld [vmem:[#allocation2 + $0x28] sm:$0xff]
      %v3840 = vld [vmem:[%s16] sm:$0xff]
      %v3841 = vld [vmem:[%s17] sm:$0xff]
      %3843 = vset.pattern.permute.xlu0 0
      %3844 = vperm.xlu0 %3843, %v3841
      %v3845 = vpop.permute.xlu0 %3844
      %v3848 = vsel %vm1801, %v3840, 0
      %3850 = vmatpush.msra.mxu0 0.0
      %3851 = vmatpush.msra.mxu0 0.0
      %3852 = vmatpush.msra.mxu0 0.0
      %3853 = vmatpush.msra.mxu0 0.0
      %3854 = vmatpush.msra.mxu0 0.0
      %3855 = vmatpush.msra.mxu0 0.0
      %3856 = vmatpush.msra.mxu0 0.0
      %3857 = vmatpush.msra.mxu0 0.0
      %3858 = vmatpush.msra.mxu0 0.0
      %3859 = vmatpush.msra.mxu0 0.0
      %3860 = vmatpush.msra.mxu0 %v3839
      %3861 = vmatpush.msra.mxu0 %v3838
      %3862 = vmatpush.msra.mxu0 %v3837
      %3863 = vmatpush.msra.mxu0 %v3836
      %3864 = vmatpush.msra.mxu0 %v3835
      %3865 = vmatpush.msra.mxu0 %v3834
      %3866 = vmatmul.f32.gmra.mxu0 %v3848
      %v3867 = vpop.f32.mrf.mxu0
      %v3868 = vadd.f32 %v3845, %v3867
      %3869 = vdwg.mxu0
      %v3870 = vtanh.pop %v3868
      %v3871 = vmul.f32 %v3764, %v3309
      %v3872 = vsub.f32 1.0, %v3764
      %v3873 = vmul.f32 %v3872, %v3870
      %v3874 = vadd.f32 %v3871, %v3873
      %v3875 = vld [vmem:[%s18] sm:$0x1]
      %v3876 = vld [vmem:[#allocation3] sm:$0x1]
      %3878 = vset.pattern.permute.xlu0 0
      %3879 = vperm.xlu0 %3878, %v3876
      %v3880 = vpop.permute.xlu0 %3879
      %v3882 = vperm.slane %v3880, 0
      %v3884 = vsel %vm3318, %v3875, 0
      %3886 = vmatpush.msra.mxu0 0.0
      %3887 = vmatpush.msra.mxu0 0.0
      %3888 = vmatpush.msra.mxu0 0.0
      %3889 = vmatpush.msra.mxu0 0.0
      %3890 = vmatpush.msra.mxu0 0.0
      %3891 = vmatpush.msra.mxu0 0.0
      %3892 = vmatpush.msra.mxu0 0.0
      %3893 = vmatpush.msra.mxu0 0.0
      %3894 = vmatpush.msra.mxu0 0.0
      %3895 = vmatpush.msra.mxu0 0.0
      %3896 = vmatpush.msra.mxu0 0.0
      %3897 = vmatpush.msra.mxu0 0.0
      %3898 = vmatpush.msra.mxu0 0.0
      %3899 = vmatpush.msra.mxu0 0.0
      %3900 = vmatpush.msra.mxu0 0.0
      %3901 = vmatpush.msra.mxu0 %v3874
      %3902 = vmatmul.f32.gmra.mxu0 %v3884
      %v3903 = vpop.f32.mrf.mxu0
      %v3904 = vadd.f32 %v3882, %v3903
      %3905 = vdwg.mxu0
      %s3906 = scalar_lea.vmem %s629, 1
      %3907 = vst.msk [vmem:[%s3906] sm:$0x1] %vm2775, %v3904
      %3908 = vst.msk [vmem:[#allocation2] sm:$0x1] %vm2775, %v3904
      %3909 = vst.msk [vmem:[#allocation2 + $0x1] sm:$0xff] %vm640, %v3609
      %v3910 = vld [vmem:[#allocation2] sm:$0xff]
      %v3911 = vld [vmem:[#allocation2 + $0x8] sm:$0x1]
      %v3913 = vsel %vm640, %v3910, 0
      %v3916 = vsel %vm640, %v3911, 0
      %3918 = vmatpush.msra.mxu0 0.0
      %3919 = vmatpush.msra.mxu0 0.0
      %3920 = vmatpush.msra.mxu0 0.0
      %3921 = vmatpush.msra.mxu0 0.0
      %3922 = vmatpush.msra.mxu0 0.0
      %3923 = vmatpush.msra.mxu0 0.0
      %3924 = vmatpush.msra.mxu0 0.0
      %3925 = vmatpush.msra.mxu0 0.0
      %3926 = vmatpush.msra.mxu0 0.0
      %3927 = vmatpush.msra.mxu0 0.0
      %3928 = vmatpush.msra.mxu0 0.0
      %3929 = vmatpush.msra.mxu0 0.0
      %3930 = vmatpush.msra.mxu0 0.0
      %3931 = vmatpush.msra.mxu0 0.0
      %3932 = vmatpush.msra.mxu0 0.0
      %3933 = vmatpush.msra.mxu0 %v652
      %3934 = vmatmul.f32.gmra.mxu0 %v3913
      %v3935 = vpop.f32.mrf.mxu0
      %v3936 = vadd.f32 0.0, %v3935
      %3937 = vmatmul.f32.gmra.mxu0 %v3916
      %v3938 = vpop.f32.mrf.mxu0
      %v3939 = vadd.f32 0.0, %v3938
      %3940 = vdwg.mxu0
      %3941 = vst.msk [vmem:[#allocation2 + $0x9] sm:$0xff] %vm640, %v3936
      %3942 = vst.msk [vmem:[#allocation2 + $0x11] sm:$0x1] %vm2775, %v3939
      %v3943 = vld [vmem:[#allocation2 + $0x9] sm:$0xff]
      %v3944 = vld [vmem:[#allocation2 + $0x11] sm:$0x1]
      %v3946 = vsel %vm640, %v3943, 0
      %v3949 = vsel %vm640, %v3944, 0
      %3951 = vmatpush.msra.mxu0 0.0
      %3952 = vmatpush.msra.mxu0 0.0
      %3953 = vmatpush.msra.mxu0 0.0
      %3954 = vmatpush.msra.mxu0 0.0
      %3955 = vmatpush.msra.mxu0 0.0
      %3956 = vmatpush.msra.mxu0 0.0
      %3957 = vmatpush.msra.mxu0 0.0
      %3958 = vmatpush.msra.mxu0 0.0
      %3959 = vmatpush.msra.mxu0 0.0
      %3960 = vmatpush.msra.mxu0 0.0
      %3961 = vmatpush.msra.mxu0 0.0
      %3962 = vmatpush.msra.mxu0 0.0
      %3963 = vmatpush.msra.mxu0 0.0
      %3964 = vmatpush.msra.mxu0 0.0
      %3965 = vmatpush.msra.mxu0 0.0
      %3966 = vmatpush.msra.mxu0 %v652
      %3967 = vmatmul.f32.gmra.mxu0 %v3946
      %v3968 = vpop.f32.mrf.mxu0
      %v3969 = vadd.f32 0.0, %v3968
      %3970 = vmatmul.f32.gmra.mxu0 %v3949
      %v3971 = vpop.f32.mrf.mxu0
      %v3972 = vadd.f32 0.0, %v3971
      %3973 = vdwg.mxu0
      %3974 = vst.msk [vmem:[#allocation2 + $0x12] sm:$0xff] %vm640, %v3969
      %3975 = vst.msk [vmem:[#allocation2 + $0x1a] sm:$0x1] %vm2775, %v3972
      %v3976 = vld [vmem:[#allocation2] sm:$0xff]
      %v3977 = vld [vmem:[#allocation2 + $0x8] sm:$0xff]
      %v3978 = vld [vmem:[#allocation2 + $0x10] sm:$0xff]
      %v3979 = vld [vmem:[#allocation2 + $0x18] sm:$0x7]
      %v3980 = vld [vmem:[%s10] sm:$0xff]
      %v3981 = vld [vmem:[%s10 + $0x8] sm:$0xff]
      %v3982 = vld [vmem:[%s11] sm:$0xff]
      %v3983 = vld [vmem:[%s11 + $0x8] sm:$0xff]
      %3985 = vset.pattern.permute.xlu0 0
      %3986 = vperm.xlu0 %3985, %v3982
      %v3987 = vpop.permute.xlu0 %3986
      %3990 = vset.pattern.permute.xlu0 0
      %3991 = vperm.xlu0 %3990, %v3983
      %v3992 = vpop.permute.xlu0 %3991
      %v3995 = vsel %vm2862, %v3980, 0
      %v3998 = vsel %vm2862, %v3981, 0
      %v4001 = vsel %vm2869, %v3979, 0
      %4003 = vmatpush.msra.mxu0 0.0
      %4004 = vmatpush.msra.mxu0 0.0
      %4005 = vmatpush.msra.mxu0 0.0
      %4006 = vmatpush.msra.mxu0 0.0
      %4007 = vmatpush.msra.mxu0 0.0
      %4008 = vmatpush.msra.mxu0 0.0
      %4009 = vmatpush.msra.mxu0 0.0
      %4010 = vmatpush.msra.mxu0 0.0
      %4011 = vmatpush.msra.mxu0 0.0
      %4012 = vmatpush.msra.mxu0 0.0
      %4013 = vmatpush.msra.mxu0 0.0
      %4014 = vmatpush.msra.mxu0 0.0
      %4015 = vmatpush.msra.mxu0 %v4001
      %4016 = vmatpush.msra.mxu0 %v3978
      %4017 = vmatpush.msra.mxu0 %v3977
      %4018 = vmatpush.msra.mxu0 %v3976
      %4019 = vmatmul.f32.gmra.mxu0 %v3995
      %v4020 = vpop.f32.mrf.mxu0
      %v4021 = vadd.f32 %v3987, %v4020
      %4022 = vmatmul.f32.gmra.mxu0 %v3998
      %v4023 = vpop.f32.mrf.mxu0
      %v4024 = vadd.f32 %v3992, %v4023
      %4025 = vdwg.mxu0
      %v4026 = vxor.u32 %v4021, 2147483648
      %v4027 = vxor.u32 %v4024, 2147483648
      %v4028 = vmul.f32 %v4026, 1.442695
      %v4029 = vpow.pop %v4028
      %v4030 = vmul.f32 %v4027, 1.442695
      %v4031 = vpow.pop %v4030
      %v4032 = vadd.f32 %v4029, 1.0
      %v4033 = vadd.f32 %v4031, 1.0
      %v4034 = vrcp.pop %v4032
      %v4035 = vmul.f32 %v4032, %v4034
      %v4036 = vsub.f32 1.0, %v4035
      %v4037 = vmul.f32 %v4034, %v4036
      %v4038 = vadd.f32 %v4034, %v4037
      %vm4039 = vweird.f32 %v4032
      %vm4040 = vweird.f32 %v4034
      %vm4041 = vmor %vm4039, %vm4040
      %v4042 = vsel %vm4041, %v4034, %v4038
      %v4043 = vand.u32 2147483647, %v4032
      %vm4044 = vcmp.eq.f32.partialorder %v4043, 8.507059e+37
      %v4045 = vand.u32 %v4032, 2147483648
      %v4046 = vor.u32 1.1754944e-38, %v4045
      %v4047 = vsel %vm4044, %v4046, %v4042
      %v4048 = vmul.f32 1.0, %v4047
      %v4049 = vrcp.pop %v4033
      %v4050 = vmul.f32 %v4033, %v4049
      %v4051 = vsub.f32 1.0, %v4050
      %v4052 = vmul.f32 %v4049, %v4051
      %v4053 = vadd.f32 %v4049, %v4052
      %vm4054 = vweird.f32 %v4033
      %vm4055 = vweird.f32 %v4049
      %vm4056 = vmor %vm4054, %vm4055
      %v4057 = vsel %vm4056, %v4049, %v4053
      %v4058 = vand.u32 2147483647, %v4033
      %vm4059 = vcmp.eq.f32.partialorder %v4058, 8.507059e+37
      %v4060 = vand.u32 %v4033, 2147483648
      %v4061 = vor.u32 1.1754944e-38, %v4060
      %v4062 = vsel %vm4059, %v4061, %v4057
      %v4063 = vmul.f32 1.0, %v4062
      %v4064 = vmul.f32 %v4048, %v3609
      %4065 = vst.msk [vmem:[#allocation2] sm:$0x1] %vm2775, %v3904
      %4066 = vst.msk [vmem:[#allocation2 + $0x1] sm:$0xff] %vm640, %v4064
      %v4067 = vld [vmem:[#allocation2] sm:$0xff]
      %v4068 = vld [vmem:[#allocation2 + $0x8] sm:$0x1]
      %v4070 = vsel %vm640, %v4067, 0
      %v4073 = vsel %vm640, %v4068, 0
      %4075 = vmatpush.msra.mxu0 0.0
      %4076 = vmatpush.msra.mxu0 0.0
      %4077 = vmatpush.msra.mxu0 0.0
      %4078 = vmatpush.msra.mxu0 0.0
      %4079 = vmatpush.msra.mxu0 0.0
      %4080 = vmatpush.msra.mxu0 0.0
      %4081 = vmatpush.msra.mxu0 0.0
      %4082 = vmatpush.msra.mxu0 0.0
      %4083 = vmatpush.msra.mxu0 0.0
      %4084 = vmatpush.msra.mxu0 0.0
      %4085 = vmatpush.msra.mxu0 0.0
      %4086 = vmatpush.msra.mxu0 0.0
      %4087 = vmatpush.msra.mxu0 0.0
      %4088 = vmatpush.msra.mxu0 0.0
      %4089 = vmatpush.msra.mxu0 0.0
      %4090 = vmatpush.msra.mxu0 %v652
      %4091 = vmatmul.f32.gmra.mxu0 %v4070
      %v4092 = vpop.f32.mrf.mxu0
      %v4093 = vadd.f32 0.0, %v4092
      %4094 = vmatmul.f32.gmra.mxu0 %v4073
      %v4095 = vpop.f32.mrf.mxu0
      %v4096 = vadd.f32 0.0, %v4095
      %4097 = vdwg.mxu0
      %4098 = vst.msk [vmem:[#allocation2 + $0x9] sm:$0xff] %vm640, %v4093
      %4099 = vst.msk [vmem:[#allocation2 + $0x11] sm:$0x1] %vm2775, %v4096
      %v4100 = vld [vmem:[#allocation2 + $0x9] sm:$0xff]
      %v4101 = vld [vmem:[#allocation2 + $0x11] sm:$0x1]
      %v4103 = vsel %vm640, %v4100, 0
      %v4106 = vsel %vm640, %v4101, 0
      %4108 = vmatpush.msra.mxu0 0.0
      %4109 = vmatpush.msra.mxu0 0.0
      %4110 = vmatpush.msra.mxu0 0.0
      %4111 = vmatpush.msra.mxu0 0.0
      %4112 = vmatpush.msra.mxu0 0.0
      %4113 = vmatpush.msra.mxu0 0.0
      %4114 = vmatpush.msra.mxu0 0.0
      %4115 = vmatpush.msra.mxu0 0.0
      %4116 = vmatpush.msra.mxu0 0.0
      %4117 = vmatpush.msra.mxu0 0.0
      %4118 = vmatpush.msra.mxu0 0.0
      %4119 = vmatpush.msra.mxu0 0.0
      %4120 = vmatpush.msra.mxu0 0.0
      %4121 = vmatpush.msra.mxu0 0.0
      %4122 = vmatpush.msra.mxu0 0.0
      %4123 = vmatpush.msra.mxu0 %v652
      %4124 = vmatmul.f32.gmra.mxu0 %v4103
      %v4125 = vpop.f32.mrf.mxu0
      %v4126 = vadd.f32 0.0, %v4125
      %4127 = vmatmul.f32.gmra.mxu0 %v4106
      %v4128 = vpop.f32.mrf.mxu0
      %v4129 = vadd.f32 0.0, %v4128
      %4130 = vdwg.mxu0
      %4131 = vst.msk [vmem:[#allocation2 + $0x12] sm:$0xff] %vm640, %v4126
      %4132 = vst.msk [vmem:[#allocation2 + $0x1a] sm:$0x1] %vm2775, %v4129
      %v4133 = vld [vmem:[#allocation2] sm:$0xff]
      %v4134 = vld [vmem:[#allocation2 + $0x8] sm:$0xff]
      %v4135 = vld [vmem:[#allocation2 + $0x10] sm:$0xff]
      %v4136 = vld [vmem:[#allocation2 + $0x18] sm:$0x7]
      %v4137 = vld [vmem:[%s12] sm:$0xff]
      %v4138 = vld [vmem:[%s13] sm:$0xff]
      %4140 = vset.pattern.permute.xlu0 0
      %4141 = vperm.xlu0 %4140, %v4138
      %v4142 = vpop.permute.xlu0 %4141
      %v4145 = vsel %vm2862, %v4137, 0
      %v4148 = vsel %vm2869, %v4136, 0
      %4150 = vmatpush.msra.mxu0 0.0
      %4151 = vmatpush.msra.mxu0 0.0
      %4152 = vmatpush.msra.mxu0 0.0
      %4153 = vmatpush.msra.mxu0 0.0
      %4154 = vmatpush.msra.mxu0 0.0
      %4155 = vmatpush.msra.mxu0 0.0
      %4156 = vmatpush.msra.mxu0 0.0
      %4157 = vmatpush.msra.mxu0 0.0
      %4158 = vmatpush.msra.mxu0 0.0
      %4159 = vmatpush.msra.mxu0 0.0
      %4160 = vmatpush.msra.mxu0 0.0
      %4161 = vmatpush.msra.mxu0 0.0
      %4162 = vmatpush.msra.mxu0 %v4148
      %4163 = vmatpush.msra.mxu0 %v4135
      %4164 = vmatpush.msra.mxu0 %v4134
      %4165 = vmatpush.msra.mxu0 %v4133
      %4166 = vmatmul.f32.gmra.mxu0 %v4145
      %v4167 = vpop.f32.mrf.mxu0
      %v4168 = vadd.f32 %v4142, %v4167
      %4169 = vdwg.mxu0
      %v4170 = vtanh.pop %v4168
      %v4171 = vmul.f32 %v4063, %v3609
      %v4172 = vsub.f32 1.0, %v4063
      %v4173 = vmul.f32 %v4172, %v4170
      %v4174 = vadd.f32 %v4171, %v4173
      %4175 = vst.msk [vmem:[#allocation2] sm:$0xff] %vm640, %v4174
      %4176 = vst.msk [vmem:[#allocation2 + $0x8] sm:$0xff] %vm640, %v3874
      %v4177 = vld [vmem:[#allocation2] sm:$0xff]
      %v4178 = vld [vmem:[#allocation2 + $0x8] sm:$0xff]
      %v4180 = vsel %vm640, %v4177, 0
      %v4183 = vsel %vm640, %v4178, 0
      %4185 = vmatpush.msra.mxu0 0.0
      %4186 = vmatpush.msra.mxu0 0.0
      %4187 = vmatpush.msra.mxu0 0.0
      %4188 = vmatpush.msra.mxu0 0.0
      %4189 = vmatpush.msra.mxu0 0.0
      %4190 = vmatpush.msra.mxu0 0.0
      %4191 = vmatpush.msra.mxu0 0.0
      %4192 = vmatpush.msra.mxu0 0.0
      %4193 = vmatpush.msra.mxu0 0.0
      %4194 = vmatpush.msra.mxu0 0.0
      %4195 = vmatpush.msra.mxu0 0.0
      %4196 = vmatpush.msra.mxu0 0.0
      %4197 = vmatpush.msra.mxu0 0.0
      %4198 = vmatpush.msra.mxu0 0.0
      %4199 = vmatpush.msra.mxu0 0.0
      %4200 = vmatpush.msra.mxu0 %v652
      %4201 = vmatmul.f32.gmra.mxu0 %v4180
      %v4202 = vpop.f32.mrf.mxu0
      %v4203 = vadd.f32 0.0, %v4202
      %4204 = vmatmul.f32.gmra.mxu0 %v4183
      %v4205 = vpop.f32.mrf.mxu0
      %v4206 = vadd.f32 0.0, %v4205
      %4207 = vdwg.mxu0
      %4208 = vst.msk [vmem:[#allocation2 + $0x10] sm:$0xff] %vm640, %v4203
      %4209 = vst.msk [vmem:[#allocation2 + $0x18] sm:$0xff] %vm640, %v4206
      %v4210 = vld [vmem:[#allocation2 + $0x10] sm:$0xff]
      %v4211 = vld [vmem:[#allocation2 + $0x18] sm:$0xff]
      %v4213 = vsel %vm640, %v4210, 0
      %v4216 = vsel %vm640, %v4211, 0
      %4218 = vmatpush.msra.mxu0 0.0
      %4219 = vmatpush.msra.mxu0 0.0
      %4220 = vmatpush.msra.mxu0 0.0
      %4221 = vmatpush.msra.mxu0 0.0
      %4222 = vmatpush.msra.mxu0 0.0
      %4223 = vmatpush.msra.mxu0 0.0
      %4224 = vmatpush.msra.mxu0 0.0
      %4225 = vmatpush.msra.mxu0 0.0
      %4226 = vmatpush.msra.mxu0 0.0
      %4227 = vmatpush.msra.mxu0 0.0
      %4228 = vmatpush.msra.mxu0 0.0
      %4229 = vmatpush.msra.mxu0 0.0
      %4230 = vmatpush.msra.mxu0 0.0
      %4231 = vmatpush.msra.mxu0 0.0
      %4232 = vmatpush.msra.mxu0 0.0
      %4233 = vmatpush.msra.mxu0 %v652
      %4234 = vmatmul.f32.gmra.mxu0 %v4213
      %v4235 = vpop.f32.mrf.mxu0
      %v4236 = vadd.f32 0.0, %v4235
      %4237 = vmatmul.f32.gmra.mxu0 %v4216
      %v4238 = vpop.f32.mrf.mxu0
      %v4239 = vadd.f32 0.0, %v4238
      %4240 = vdwg.mxu0
      %4241 = vst.msk [vmem:[#allocation2 + $0x20] sm:$0xff] %vm640, %v4236
      %4242 = vst.msk [vmem:[#allocation2 + $0x28] sm:$0xff] %vm640, %v4239
      %v4243 = vld [vmem:[#allocation2] sm:$0xff]
      %v4244 = vld [vmem:[#allocation2 + $0x8] sm:$0xff]
      %v4245 = vld [vmem:[#allocation2 + $0x10] sm:$0xff]
      %v4246 = vld [vmem:[#allocation2 + $0x18] sm:$0xff]
      %v4247 = vld [vmem:[#allocation2 + $0x20] sm:$0xff]
      %v4248 = vld [vmem:[#allocation2 + $0x28] sm:$0xff]
      %v4249 = vld [vmem:[%s14] sm:$0xff]
      %v4250 = vld [vmem:[%s14 + $0x8] sm:$0xff]
      %v4251 = vld [vmem:[%s15] sm:$0xff]
      %v4252 = vld [vmem:[%s15 + $0x8] sm:$0xff]
      %4254 = vset.pattern.permute.xlu0 0
      %4255 = vperm.xlu0 %4254, %v4251
      %v4256 = vpop.permute.xlu0 %4255
      %4259 = vset.pattern.permute.xlu0 0
      %4260 = vperm.xlu0 %4259, %v4252
      %v4261 = vpop.permute.xlu0 %4260
      %v4264 = vsel %vm1801, %v4249, 0
      %v4267 = vsel %vm1801, %v4250, 0
      %4269 = vmatpush.msra.mxu0 0.0
      %4270 = vmatpush.msra.mxu0 0.0
      %4271 = vmatpush.msra.mxu0 0.0
      %4272 = vmatpush.msra.mxu0 0.0
      %4273 = vmatpush.msra.mxu0 0.0
      %4274 = vmatpush.msra.mxu0 0.0
      %4275 = vmatpush.msra.mxu0 0.0
      %4276 = vmatpush.msra.mxu0 0.0
      %4277 = vmatpush.msra.mxu0 0.0
      %4278 = vmatpush.msra.mxu0 0.0
      %4279 = vmatpush.msra.mxu0 %v4248
      %4280 = vmatpush.msra.mxu0 %v4247
      %4281 = vmatpush.msra.mxu0 %v4246
      %4282 = vmatpush.msra.mxu0 %v4245
      %4283 = vmatpush.msra.mxu0 %v4244
      %4284 = vmatpush.msra.mxu0 %v4243
      %4285 = vmatmul.f32.gmra.mxu0 %v4264
      %v4286 = vpop.f32.mrf.mxu0
      %v4287 = vadd.f32 %v4256, %v4286
      %4288 = vmatmul.f32.gmra.mxu0 %v4267
      %v4289 = vpop.f32.mrf.mxu0
      %v4290 = vadd.f32 %v4261, %v4289
      %4291 = vdwg.mxu0
      %v4292 = vxor.u32 %v4287, 2147483648
      %v4293 = vxor.u32 %v4290, 2147483648
      %v4294 = vmul.f32 %v4292, 1.442695
      %v4295 = vpow.pop %v4294
      %v4296 = vmul.f32 %v4293, 1.442695
      %v4297 = vpow.pop %v4296
      %v4298 = vadd.f32 %v4295, 1.0
      %v4299 = vadd.f32 %v4297, 1.0
      %v4300 = vrcp.pop %v4298
      %v4301 = vmul.f32 %v4298, %v4300
      %v4302 = vsub.f32 1.0, %v4301
      %v4303 = vmul.f32 %v4300, %v4302
      %v4304 = vadd.f32 %v4300, %v4303
      %vm4305 = vweird.f32 %v4298
      %vm4306 = vweird.f32 %v4300
      %vm4307 = vmor %vm4305, %vm4306
      %v4308 = vsel %vm4307, %v4300, %v4304
      %v4309 = vand.u32 2147483647, %v4298
      %vm4310 = vcmp.eq.f32.partialorder %v4309, 8.507059e+37
      %v4311 = vand.u32 %v4298, 2147483648
      %v4312 = vor.u32 1.1754944e-38, %v4311
      %v4313 = vsel %vm4310, %v4312, %v4308
      %v4314 = vmul.f32 1.0, %v4313
      %v4315 = vrcp.pop %v4299
      %v4316 = vmul.f32 %v4299, %v4315
      %v4317 = vsub.f32 1.0, %v4316
      %v4318 = vmul.f32 %v4315, %v4317
      %v4319 = vadd.f32 %v4315, %v4318
      %vm4320 = vweird.f32 %v4299
      %vm4321 = vweird.f32 %v4315
      %vm4322 = vmor %vm4320, %vm4321
      %v4323 = vsel %vm4322, %v4315, %v4319
      %v4324 = vand.u32 2147483647, %v4299
      %vm4325 = vcmp.eq.f32.partialorder %v4324, 8.507059e+37
      %v4326 = vand.u32 %v4299, 2147483648
      %v4327 = vor.u32 1.1754944e-38, %v4326
      %v4328 = vsel %vm4325, %v4327, %v4323
      %v4329 = vmul.f32 1.0, %v4328
      %v4330 = vmul.f32 %v4314, %v3874
      %4331 = vst.msk [vmem:[#allocation2] sm:$0xff] %vm640, %v4174
      %4332 = vst.msk [vmem:[#allocation2 + $0x8] sm:$0xff] %vm640, %v4330
      %v4333 = vld [vmem:[#allocation2] sm:$0xff]
      %v4334 = vld [vmem:[#allocation2 + $0x8] sm:$0xff]
      %v4336 = vsel %vm640, %v4333, 0
      %v4339 = vsel %vm640, %v4334, 0
      %4341 = vmatpush.msra.mxu0 0.0
      %4342 = vmatpush.msra.mxu0 0.0
      %4343 = vmatpush.msra.mxu0 0.0
      %4344 = vmatpush.msra.mxu0 0.0
      %4345 = vmatpush.msra.mxu0 0.0
      %4346 = vmatpush.msra.mxu0 0.0
      %4347 = vmatpush.msra.mxu0 0.0
      %4348 = vmatpush.msra.mxu0 0.0
      %4349 = vmatpush.msra.mxu0 0.0
      %4350 = vmatpush.msra.mxu0 0.0
      %4351 = vmatpush.msra.mxu0 0.0
      %4352 = vmatpush.msra.mxu0 0.0
      %4353 = vmatpush.msra.mxu0 0.0
      %4354 = vmatpush.msra.mxu0 0.0
      %4355 = vmatpush.msra.mxu0 0.0
      %4356 = vmatpush.msra.mxu0 %v652
      %4357 = vmatmul.f32.gmra.mxu0 %v4336
      %v4358 = vpop.f32.mrf.mxu0
      %v4359 = vadd.f32 0.0, %v4358
      %4360 = vmatmul.f32.gmra.mxu0 %v4339
      %v4361 = vpop.f32.mrf.mxu0
      %v4362 = vadd.f32 0.0, %v4361
      %4363 = vdwg.mxu0
      %4364 = vst.msk [vmem:[#allocation2 + $0x10] sm:$0xff] %vm640, %v4359
      %4365 = vst.msk [vmem:[#allocation2 + $0x18] sm:$0xff] %vm640, %v4362
      %v4366 = vld [vmem:[#allocation2 + $0x10] sm:$0xff]
      %v4367 = vld [vmem:[#allocation2 + $0x18] sm:$0xff]
      %v4369 = vsel %vm640, %v4366, 0
      %v4372 = vsel %vm640, %v4367, 0
      %4374 = vmatpush.msra.mxu0 0.0
      %4375 = vmatpush.msra.mxu0 0.0
      %4376 = vmatpush.msra.mxu0 0.0
      %4377 = vmatpush.msra.mxu0 0.0
      %4378 = vmatpush.msra.mxu0 0.0
      %4379 = vmatpush.msra.mxu0 0.0
      %4380 = vmatpush.msra.mxu0 0.0
      %4381 = vmatpush.msra.mxu0 0.0
      %4382 = vmatpush.msra.mxu0 0.0
      %4383 = vmatpush.msra.mxu0 0.0
      %4384 = vmatpush.msra.mxu0 0.0
      %4385 = vmatpush.msra.mxu0 0.0
      %4386 = vmatpush.msra.mxu0 0.0
      %4387 = vmatpush.msra.mxu0 0.0
      %4388 = vmatpush.msra.mxu0 0.0
      %4389 = vmatpush.msra.mxu0 %v652
      %4390 = vmatmul.f32.gmra.mxu0 %v4369
      %v4391 = vpop.f32.mrf.mxu0
      %v4392 = vadd.f32 0.0, %v4391
      %4393 = vmatmul.f32.gmra.mxu0 %v4372
      %v4394 = vpop.f32.mrf.mxu0
      %v4395 = vadd.f32 0.0, %v4394
      %4396 = vdwg.mxu0
      %4397 = vst.msk [vmem:[#allocation2 + $0x20] sm:$0xff] %vm640, %v4392
      %4398 = vst.msk [vmem:[#allocation2 + $0x28] sm:$0xff] %vm640, %v4395
      %v4399 = vld [vmem:[#allocation2] sm:$0xff]
      %v4400 = vld [vmem:[#allocation2 + $0x8] sm:$0xff]
      %v4401 = vld [vmem:[#allocation2 + $0x10] sm:$0xff]
      %v4402 = vld [vmem:[#allocation2 + $0x18] sm:$0xff]
      %v4403 = vld [vmem:[#allocation2 + $0x20] sm:$0xff]
      %v4404 = vld [vmem:[#allocation2 + $0x28] sm:$0xff]
      %v4405 = vld [vmem:[%s16] sm:$0xff]
      %v4406 = vld [vmem:[%s17] sm:$0xff]
      %4408 = vset.pattern.permute.xlu0 0
      %4409 = vperm.xlu0 %4408, %v4406
      %v4410 = vpop.permute.xlu0 %4409
      %v4413 = vsel %vm1801, %v4405, 0
      %4415 = vmatpush.msra.mxu0 0.0
      %4416 = vmatpush.msra.mxu0 0.0
      %4417 = vmatpush.msra.mxu0 0.0
      %4418 = vmatpush.msra.mxu0 0.0
      %4419 = vmatpush.msra.mxu0 0.0
      %4420 = vmatpush.msra.mxu0 0.0
      %4421 = vmatpush.msra.mxu0 0.0
      %4422 = vmatpush.msra.mxu0 0.0
      %4423 = vmatpush.msra.mxu0 0.0
      %4424 = vmatpush.msra.mxu0 0.0
      %4425 = vmatpush.msra.mxu0 %v4404
      %4426 = vmatpush.msra.mxu0 %v4403
      %4427 = vmatpush.msra.mxu0 %v4402
      %4428 = vmatpush.msra.mxu0 %v4401
      %4429 = vmatpush.msra.mxu0 %v4400
      %4430 = vmatpush.msra.mxu0 %v4399
      %4431 = vmatmul.f32.gmra.mxu0 %v4413
      %v4432 = vpop.f32.mrf.mxu0
      %v4433 = vadd.f32 %v4410, %v4432
      %4434 = vdwg.mxu0
      %v4435 = vtanh.pop %v4433
      %v4436 = vmul.f32 %v4329, %v3874
      %v4437 = vsub.f32 1.0, %v4329
      %v4438 = vmul.f32 %v4437, %v4435
      %v4439 = vadd.f32 %v4436, %v4438
      %v4440 = vld [vmem:[%s18] sm:$0x1]
      %v4441 = vld [vmem:[#allocation3] sm:$0x1]
      %4443 = vset.pattern.permute.xlu0 0
      %4444 = vperm.xlu0 %4443, %v4441
      %v4445 = vpop.permute.xlu0 %4444
      %v4447 = vperm.slane %v4445, 0
      %v4449 = vsel %vm3318, %v4440, 0
      %4451 = vmatpush.msra.mxu0 0.0
      %4452 = vmatpush.msra.mxu0 0.0
      %4453 = vmatpush.msra.mxu0 0.0
      %4454 = vmatpush.msra.mxu0 0.0
      %4455 = vmatpush.msra.mxu0 0.0
      %4456 = vmatpush.msra.mxu0 0.0
      %4457 = vmatpush.msra.mxu0 0.0
      %4458 = vmatpush.msra.mxu0 0.0
      %4459 = vmatpush.msra.mxu0 0.0
      %4460 = vmatpush.msra.mxu0 0.0
      %4461 = vmatpush.msra.mxu0 0.0
      %4462 = vmatpush.msra.mxu0 0.0
      %4463 = vmatpush.msra.mxu0 0.0
      %4464 = vmatpush.msra.mxu0 0.0
      %4465 = vmatpush.msra.mxu0 0.0
      %4466 = vmatpush.msra.mxu0 %v4439
      %4467 = vmatmul.f32.gmra.mxu0 %v4449
      %v4468 = vpop.f32.mrf.mxu0
      %v4469 = vadd.f32 %v4447, %v4468
      %4470 = vdwg.mxu0
      %s4471 = scalar_lea.vmem %s629, 2
      %4472 = vst.msk [vmem:[%s4471] sm:$0x1] %vm2775, %v4469
      %p4473 = scmp.lt.s32.totalorder %s33, 1
      %s4474 = scalar_select %p4473, %s33, 1
      %s4475 = smul.addr %s4474, 3
      %s4476 = scalar_lea.vmem %s20, %s4475
      // Predicated region
      $region101: #{egc_stage1_forward.7} parent=99 // pred_check
        %p4477 = pneg %p476
      $region102: #{egc_stage1_forward.7} parent=99 // pred_check_branch
        %4479 = sbr.rel (%p4477) target = $region104
      $region103: #{egc_stage1_forward.7} parent=99 // pred_region
        _
      $region104: #{egc_stage1_forward.7} parent=99 // pred_fallthru
        _
    $region100: #{egc_stage1_forward.7} parent=5 // pred_fallthru
      _
    %p4480 = scmp.le.s32.totalorder 2, %s28
    // Predicated region
    $region105: #{egc_stage1_forward.7} parent=5 // pred_check
      %p4481 = pneg %p4480
    $region106: #{egc_stage1_forward.7} parent=5 // pred_check_branch
      %4483 = sbr.rel (%p4481) target = $region108
    $region107: #{egc_stage1_forward.7} parent=5 // pred_region
      %s4484 = ssub.s32 %s28, 2
      // Predicated region
      $region109: #{egc_stage1_forward.7} parent=107 // pred_check
        %p4485 = pneg %p482
      $region110: #{egc_stage1_forward.7} parent=107 // pred_check_branch
        %4487 = sbr.rel (%p4485) target = $region112
      $region111: #{egc_stage1_forward.7} parent=107 // pred_region
        %p4488 = scmp.lt.s32.totalorder %s34, 1
        %s4489 = scalar_select %p4488, %s34, 1
        %s4490 = smul.addr %s4489, 3
        %s4491 = scalar_lea.vmem %s20, %s4490
      $region112: #{egc_stage1_forward.7} parent=107 // pred_fallthru
        _
    $region108: #{egc_stage1_forward.7} parent=5 // pred_fallthru
      _
  $region6: #{egc_stage1_forward.7} parent=0 // loop_footer
    %s32 = sadd.s32 1, %s28
  $region7: #{egc_stage1_forward.7} parent=0 // loop_footer_branch
    %27 = sbr.rel target = $region3
  $region8: #{egc_stage1_forward.7} parent=0 // loop_exit
    _

</llo_original>
